<compile_context>
chip_gen: v5e
topology: v5e:2x2
jax: 0.10.0
libtpu: 0.0.40
codegen_flags: <defaults>
</compile_context>

<pallas_src>
import functools

import jax
import jax.numpy as jnp
from jax.experimental import pallas as pl
from jax.experimental.pallas import tpu as pltpu


# ----------------------------------------------------------------------------- helpers
def _round_up(x, m):
    return -(-x // m) * m


def _padded_bytes(block_shape, itemsize):
    """VMEM bytes of a block after (8, 128) tile padding of its last two dims."""
    s = [int(v) for v in block_shape]
    if len(s) >= 1:
        s[-1] = _round_up(s[-1], 128)
    if len(s) >= 2:
        s[-2] = _round_up(s[-2], 8)
    n = 1
    for v in s:
        n *= v
    return n * itemsize


def _vmem_capacity_bytes():
    try:
        return int(pltpu.get_tpu_info().vmem_capacity_bytes)
    except Exception:
        return 64 << 20          # conservative: one v7x TensorCore


def _vmem_limit(needed_bytes, capacity_bytes):
    limit = max(needed_bytes + (4 << 20), 16 << 20)
    limit = min(limit, (capacity_bytes * 3) // 4)
    return int(max(limit, needed_bytes))


def _pick_d_tile(D, HW, itemsize, budget_bytes):
    """Largest legal depth tile (multiple of 8 or full D) fitting the budget."""
    if _padded_bytes((D, HW), itemsize) <= budget_bytes:
        return D
    best = D
    for cand in range(8, D, 8):
        if D % cand == 0 and _padded_bytes((cand, HW), itemsize) <= budget_bytes:
            best = cand
    return best


# ----------------------------------------------------------------- kernel 1: vert_weight
def _vert_weight_kernel(feat_ref, w1_ref, b1_ref, w2_ref, b2_ref, vw_ref,
                        xpad_ref, hpad_ref, *, cin, mid, h, w):
    """Grid (B,). Per batch element: conv3x3+BN+ReLU -> conv3x3(Cout=1) -> softmax(H)."""
    f32 = jnp.float32
    h2, w2 = h + 2, w + 2

    # Zero only the 1-pixel halo of the padded scratches; interiors are fully
    # overwritten below.  Runs every step: with a "parallel" batch axis each
    # core owns its own scratch instance, so no cross-step init is assumed.
    xpad_ref[:, 0:1, :] = jnp.zeros((cin, 1, w2), f32)
    xpad_ref[:, h + 1:h + 2, :] = jnp.zeros((cin, 1, w2), f32)
    xpad_ref[:, :, 0:1] = jnp.zeros((cin, h2, 1), f32)
    xpad_ref[:, :, w + 1:w + 2] = jnp.zeros((cin, h2, 1), f32)
    hpad_ref[:, 0:1, :] = jnp.zeros((mid, 1, w2), f32)
    hpad_ref[:, h + 1:h + 2, :] = jnp.zeros((mid, 1, w2), f32)
    hpad_ref[:, :, 0:1] = jnp.zeros((mid, h2, 1), f32)
    hpad_ref[:, :, w + 1:w + 2] = jnp.zeros((mid, h2, 1), f32)

    # In-kernel halo fill (no wrapper jnp.pad, no extra HBM round trip).
    xpad_ref[:, 1:h + 1, 1:w + 1] = feat_ref[0].astype(f32)

    # conv1 (3x3, pad 1) with eval-mode BN folded, then ReLU.
    # Channel-first shifted-window FMAs on the VPU; scalar weights from SMEM.
    acc = [None] * mid
    for ci in range(cin):
        for k in range(9):
            dh, dw = k // 3, k % 3
            win = xpad_ref[ci, dh:dh + h, dw:dw + w]                 # (h, w)
            base = (k * cin + ci) * mid
            for m in range(mid):
                term = win * w1_ref[base + m]
                acc[m] = term if acc[m] is None else acc[m] + term
    for m in range(mid):
        hid = jnp.maximum(acc[m] + b1_ref[m], 0.0)
        hpad_ref[m:m + 1, 1:h + 1, 1:w + 1] = hid[None, :, :]

    # conv2 (3x3, pad 1, Cout=1): shifted-window FMAs, single output map.
    logits = None
    for m in range(mid):
        for k in range(9):
            dh, dw = k // 3, k % 3
            term = hpad_ref[m, dh:dh + h, dw:dw + w] * w2_ref[k * mid + m]
            logits = term if logits is None else logits + term
    logits = logits + b2_ref[0]                                      # (h, w)

    # Softmax over the height axis (exact divide: once per batch, ~free).
    mx = jnp.max(logits, axis=0, keepdims=True)
    e = jnp.exp(logits - mx)
    vw_ref[0] = e / jnp.sum(e, axis=0, keepdims=True)


def _vert_weight(feat, w1f, b1f, w2f, b2f):
    """feat: (B, Cin, H, W). Returns vert_weight (B, H, W) float32."""
    B, Cin, H, W = feat.shape
    Mid = b1f.shape[0]
    kernel = functools.partial(_vert_weight_kernel, cin=Cin, mid=Mid, h=H, w=W)

    cap = _vmem_capacity_bytes()
    needed = (2 * (_padded_bytes((Cin, H, W), feat.dtype.itemsize)
                   + _padded_bytes((H, W), 4))
              + _padded_bytes((Cin, H + 2, W + 2), 4)
              + _padded_bytes((Mid, H + 2, W + 2), 4))
    vmem_limit = _vmem_limit(needed, cap)

    smem_spec = pl.BlockSpec(memory_space=pltpu.MemorySpace.SMEM)
    return pl.pallas_call(
        kernel,
        out_shape=jax.ShapeDtypeStruct((B, H, W), jnp.float32),
        grid_spec=pltpu.PrefetchScalarGridSpec(
            num_scalar_prefetch=0,
            grid=(B,),
            in_specs=[
                pl.BlockSpec((1, Cin, H, W), lambda b: (b, 0, 0, 0)),
                smem_spec,   # w1 folded (9*Cin*Mid,)
                smem_spec,   # b1 folded (Mid,)
                smem_spec,   # w2 (9*Mid,)
                smem_spec,   # b2 (1,)
            ],
            out_specs=pl.BlockSpec((1, H, W), lambda b: (b, 0, 0)),
            scratch_shapes=[
                pltpu.VMEM((Cin, H + 2, W + 2), jnp.float32),   # padded feat halo
                pltpu.VMEM((Mid, H + 2, W + 2), jnp.float32),   # padded hidden halo
            ],
        ),
        compiler_params=pltpu.CompilerParams(
            dimension_semantics=("parallel",),
            vmem_limit_bytes=vmem_limit,
        ),
    )(feat, w1f, b1f, w2f, b2f)


# --------------------------------------------------------- kernel 2: streaming reduction
def _depth_reduce_kernel(vw_ref, depth_ref, out_ref, *, h, w):
    """Grid (B, n_d). out = sum_h depth[:, h, :] * vert_weight[h, :] for this D tile."""
    d = depth_ref[0].astype(jnp.float32)         # (td, h*w), lane-dense
    weighted = d * vw_ref[0]                     # (1, h*w) broadcast over rows
    acc = weighted[:, 0:w]
    for i in range(1, h):
        acc = acc + weighted[:, i * w:(i + 1) * w]
    out_ref[0] = acc                             # (td, w)


def _weighted_reduce(vw, depth, d_tile=None):
    """vw: (B, H, W) f32; depth: (B, D, H, W). Returns (B, D, W) f32."""
    B, D = depth.shape[0], depth.shape[1]
    H, W = vw.shape[1], vw.shape[2]
    HW = H * W

    depth_flat = depth.reshape(B, D, HW)         # free contiguous view
    vw_flat = vw.reshape(B, 1, HW)               # free contiguous view

    cap = _vmem_capacity_bytes()
    itemsize = depth.dtype.itemsize
    blk_budget = min(8 << 20, cap // 8)
    if d_tile is not None and D % d_tile == 0 and (d_tile % 8 == 0 or d_tile == D):
        td = d_tile
    else:
        td = _pick_d_tile(D, HW, itemsize, blk_budget)
    n_d = D // td

    needed = 2 * (_padded_bytes((td, HW), itemsize)
                  + _padded_bytes((1, HW), 4)
                  + _padded_bytes((td, W), 4))
    vmem_limit = _vmem_limit(needed, cap)

    kernel = functools.partial(_depth_reduce_kernel, h=H, w=W)
    return pl.pallas_call(
        kernel,
        out_shape=jax.ShapeDtypeStruct((B, D, W), jnp.float32),
        grid_spec=pltpu.PrefetchScalarGridSpec(
            num_scalar_prefetch=0,
            grid=(B, n_d),
            in_specs=[
                pl.BlockSpec((1, 1, HW), lambda b, d: (b, 0, 0)),
                pl.BlockSpec((1, td, HW), lambda b, d: (b, d, 0)),
            ],
            out_specs=pl.BlockSpec((1, td, W), lambda b, d: (b, d, 0)),
        ),
        compiler_params=pltpu.CompilerParams(
            # No cross-step scratch dependencies -> both axes parallel
            # (megacore / v7x 2-TC sharding even at tiny batch).
            dimension_semantics=("parallel", "parallel"),
            vmem_limit_bytes=vmem_limit,
        ),
    )(vw_flat, depth_flat)


# ------------------------------------------------------------------------------ wrapper
def depth_reducer_forward(feat, depth, w1, b1, w2, b2,
                          bn_gamma, bn_beta, bn_mean, bn_var,
                          bn_eps=1e-5, d_tile=None):
    """feat: (B, Cin, H, W) NCHW (PyTorch-native, producer dtype);
    depth: (B, D, H, W) (producer dtype; bf16 accepted natively).
    Returns (B, D, W) float32 == (depth * softmax_H(vert_weighter(feat))).sum(H)."""
    # Fold eval-mode BatchNorm into conv1; flatten weights for SMEM scalar access.
    scale = bn_gamma / jnp.sqrt(bn_var + bn_eps)                       # (Mid,)
    w1f = (w1 * scale[None, None, None, :]).reshape(-1).astype(jnp.float32)  # (9*Cin*Mid,)
    b1f = ((b1 - bn_mean) * scale + bn_beta).astype(jnp.float32)             # (Mid,)
    w2f = w2[..., 0].reshape(-1).astype(jnp.float32)                         # (9*Mid,)
    b2f = jnp.reshape(jnp.asarray(b2, jnp.float32), (1,))

    vw = _vert_weight(feat, w1f, b1f, w2f, b2f)            # (B, H, W) f32
    return _weighted_reduce(vw, depth, d_tile=d_tile)      # (B, D, W) f32


# ---------------------------------------------------------------------------- reference
def _reference(feat_nchw, depth, w1, b1, w2, b2, g, beta, mean, var, eps=1e-5):
    """Pure-JAX reference mirroring the PyTorch module (eval-mode BN)."""
    feat = jnp.transpose(feat_nchw, (0, 2, 3, 1))                      # NHWC
    dn = ("NHWC", "HWIO", "NHWC")
    x = jax.lax.conv_general_dilated(feat, w1, (1, 1), "SAME",
                                     dimension_numbers=dn) + b1
    x = (x - mean) / jnp.sqrt(var + eps) * g + beta
    x = jnp.maximum(x, 0.0)
    x = jax.lax.conv_general_dilated(x, w2, (1, 1), "SAME",
                                     dimension_numbers=dn) + b2
    logits = x[..., 0]                                                 # (B, H, W)
    vw = jax.nn.softmax(logits, axis=1)                                # softmax over H
    return jnp.sum(depth * vw[:, None, :, :], axis=2)                  # (B, D, W)


if __name__ == "__main__":
    B, Cin, Mid, H, W, D = 2, 4, 8, 16, 16, 16

    key = jax.random.PRNGKey(0)
    ks = jax.random.split(key, 10)
    feat = jax.random.normal(ks[0], (B, Cin, H, W), jnp.float32)       # NCHW
    depth = jax.nn.softmax(
        jax.random.normal(ks[1], (B, D, H, W), jnp.float32), axis=1)

    # Deterministic synthetic parameters (shapes from the module __init__).
    w1 = 0.1 * jax.random.normal(ks[2], (3, 3, Cin, Mid), jnp.float32)   # HWIO
    b1 = 0.1 * jax.random.normal(ks[3], (Mid,), jnp.float32)
    w2 = 0.1 * jax.random.normal(ks[4], (3, 3, Mid, 1), jnp.float32)     # HWIO
    b2 = jnp.float32(0.05)
    bn_gamma = 1.0 + 0.1 * jax.random.normal(ks[5], (Mid,), jnp.float32)
    bn_beta = 0.1 * jax.random.normal(ks[6], (Mid,), jnp.float32)
    bn_mean = 0.1 * jax.random.normal(ks[7], (Mid,), jnp.float32)
    bn_var = jnp.abs(1.0 + 0.1 * jax.random.normal(ks[8], (Mid,), jnp.float32))

    out = depth_reducer_forward(feat, depth, w1, b1, w2, b2,
                                bn_gamma, bn_beta, bn_mean, bn_var)
    out = jax.block_until_ready(out)
    assert out.shape == (B, D, W), out.shape

    ref = _reference(feat, depth, w1, b1, w2, b2,
                     bn_gamma, bn_beta, bn_mean, bn_var)
    max_err = float(jnp.max(jnp.abs(out - ref)))
    if not (max_err < 1e-3):
        raise AssertionError(f"kernel/reference mismatch, max abs err = {max_err}")

    print("KERNEL_OK")
</pallas_src>

<mosaic_0001>
module attributes {stable_mosaic.version = 11 : i64} {
  func.func @_vert_weight_kernel(%arg0: i32, %arg1: memref<1x4x16x16xf32, #tpu.memory_space<vmem>>, %arg2: memref<288xf32, #tpu.memory_space<smem>>, %arg3: memref<8xf32, #tpu.memory_space<smem>>, %arg4: memref<72xf32, #tpu.memory_space<smem>>, %arg5: memref<1xf32, #tpu.memory_space<smem>>, %arg6: memref<1x16x16xf32, #tpu.memory_space<vmem>>, %arg7: memref<4x18x18xf32, #tpu.memory_space<vmem>>, %arg8: memref<8x18x18xf32, #tpu.memory_space<vmem>>) attributes {dimension_semantics = [#tpu.dimension_semantics<parallel>], iteration_bounds = array<i64: 2>, scalar_prefetch = 0 : i64, scratch_operands = 2 : i64, tpu.core_type = #tpu.core_type<tc>, window_params = [{transform_indices = @transform_0, window_bounds = array<i64: 1, 4, 16, 16>}, {transform_indices = @transform_1, window_bounds = array<i64: 288>}, {transform_indices = @transform_2, window_bounds = array<i64: 8>}, {transform_indices = @transform_3, window_bounds = array<i64: 72>}, {transform_indices = @transform_4, window_bounds = array<i64: 1>}, {transform_indices = @transform_5, window_bounds = array<i64: 1, 16, 16>}]} {
    %cst = arith.constant 0.000000e+00 : f32
    %0 = vector.broadcast %cst : f32 to vector<4x1x18xf32>
    %c0 = arith.constant 0 : index
    %c0_0 = arith.constant 0 : index
    %c0_1 = arith.constant 0 : index
    %1 = vector.load %arg7[%c0, %c0_0, %c0_1] : memref<4x18x18xf32, #tpu.memory_space<vmem>>, vector<4x1x18xf32>
    tpu.vector_store %arg7[%c0, %c0_0, %c0_1], %0 {strides = array<i32>} : memref<4x18x18xf32, #tpu.memory_space<vmem>>, vector<4x1x18xf32>,
    %cst_2 = arith.constant 0.000000e+00 : f32
    %2 = vector.broadcast %cst_2 : f32 to vector<4x1x18xf32>
    %c0_3 = arith.constant 0 : index
    %c17 = arith.constant 17 : index
    %c0_4 = arith.constant 0 : index
    %3 = vector.load %arg7[%c0_3, %c17, %c0_4] : memref<4x18x18xf32, #tpu.memory_space<vmem>>, vector<4x1x18xf32>
    tpu.vector_store %arg7[%c0_3, %c17, %c0_4], %2 {strides = array<i32>} : memref<4x18x18xf32, #tpu.memory_space<vmem>>, vector<4x1x18xf32>,
    %cst_5 = arith.constant 0.000000e+00 : f32
    %4 = vector.broadcast %cst_5 : f32 to vector<4x18x1xf32>
    %c0_6 = arith.constant 0 : index
    %c0_7 = arith.constant 0 : index
    %c0_8 = arith.constant 0 : index
    %5 = vector.load %arg7[%c0_6, %c0_7, %c0_8] : memref<4x18x18xf32, #tpu.memory_space<vmem>>, vector<4x18x1xf32>
    tpu.vector_store %arg7[%c0_6, %c0_7, %c0_8], %4 {strides = array<i32>} : memref<4x18x18xf32, #tpu.memory_space<vmem>>, vector<4x18x1xf32>,
    %cst_9 = arith.constant 0.000000e+00 : f32
    %6 = vector.broadcast %cst_9 : f32 to vector<4x18x1xf32>
    %c0_10 = arith.constant 0 : index
    %c0_11 = arith.constant 0 : index
    %c17_12 = arith.constant 17 : index
    %7 = vector.load %arg7[%c0_10, %c0_11, %c17_12] : memref<4x18x18xf32, #tpu.memory_space<vmem>>, vector<4x18x1xf32>
    tpu.vector_store %arg7[%c0_10, %c0_11, %c17_12], %6 {strides = array<i32>} : memref<4x18x18xf32, #tpu.memory_space<vmem>>, vector<4x18x1xf32>,
    %cst_13 = arith.constant 0.000000e+00 : f32
    %8 = vector.broadcast %cst_13 : f32 to vector<8x1x18xf32>
    %c0_14 = arith.constant 0 : index
    %c0_15 = arith.constant 0 : index
    %c0_16 = arith.constant 0 : index
    %9 = vector.load %arg8[%c0_14, %c0_15, %c0_16] : memref<8x18x18xf32, #tpu.memory_space<vmem>>, vector<8x1x18xf32>
    tpu.vector_store %arg8[%c0_14, %c0_15, %c0_16], %8 {strides = array<i32>} : memref<8x18x18xf32, #tpu.memory_space<vmem>>, vector<8x1x18xf32>,
    %cst_17 = arith.constant 0.000000e+00 : f32
    %10 = vector.broadcast %cst_17 : f32 to vector<8x1x18xf32>
    %c0_18 = arith.constant 0 : index
    %c17_19 = arith.constant 17 : index
    %c0_20 = arith.constant 0 : index
    %11 = vector.load %arg8[%c0_18, %c17_19, %c0_20] : memref<8x18x18xf32, #tpu.memory_space<vmem>>, vector<8x1x18xf32>
    tpu.vector_store %arg8[%c0_18, %c17_19, %c0_20], %10 {strides = array<i32>} : memref<8x18x18xf32, #tpu.memory_space<vmem>>, vector<8x1x18xf32>,
    %cst_21 = arith.constant 0.000000e+00 : f32
    %12 = vector.broadcast %cst_21 : f32 to vector<8x18x1xf32>
    %c0_22 = arith.constant 0 : index
    %c0_23 = arith.constant 0 : index
    %c0_24 = arith.constant 0 : index
    %13 = vector.load %arg8[%c0_22, %c0_23, %c0_24] : memref<8x18x18xf32, #tpu.memory_space<vmem>>, vector<8x18x1xf32>
    tpu.vector_store %arg8[%c0_22, %c0_23, %c0_24], %12 {strides = array<i32>} : memref<8x18x18xf32, #tpu.memory_space<vmem>>, vector<8x18x1xf32>,
    %cst_25 = arith.constant 0.000000e+00 : f32
    %14 = vector.broadcast %cst_25 : f32 to vector<8x18x1xf32>
    %c0_26 = arith.constant 0 : index
    %c0_27 = arith.constant 0 : index
    %c17_28 = arith.constant 17 : index
    %15 = vector.load %arg8[%c0_26, %c0_27, %c17_28] : memref<8x18x18xf32, #tpu.memory_space<vmem>>, vector<8x18x1xf32>
    tpu.vector_store %arg8[%c0_26, %c0_27, %c17_28], %14 {strides = array<i32>} : memref<8x18x18xf32, #tpu.memory_space<vmem>>, vector<8x18x1xf32>,
    %c0_29 = arith.constant 0 : index
    %c0_30 = arith.constant 0 : index
    %c0_31 = arith.constant 0 : index
    %c0_32 = arith.constant 0 : index
    %16 = vector.load %arg1[%c0_29, %c0_30, %c0_31, %c0_32] : memref<1x4x16x16xf32, #tpu.memory_space<vmem>>, vector<1x4x16x16xf32>
    %17 = vector.shape_cast %16 : vector<1x4x16x16xf32> to vector<4x16x16xf32>
    %c0_33 = arith.constant 0 : index
    %c1 = arith.constant 1 : index
    %c1_34 = arith.constant 1 : index
    %18 = vector.load %arg7[%c0_33, %c1, %c1_34] : memref<4x18x18xf32, #tpu.memory_space<vmem>>, vector<4x16x16xf32>
    tpu.vector_store %arg7[%c0_33, %c1, %c1_34], %17 {strides = array<i32>} : memref<4x18x18xf32, #tpu.memory_space<vmem>>, vector<4x16x16xf32>,
    %c0_35 = arith.constant 0 : index
    %c0_36 = arith.constant 0 : index
    %c0_37 = arith.constant 0 : index
    %19 = vector.load %arg7[%c0_35, %c0_36, %c0_37] : memref<4x18x18xf32, #tpu.memory_space<vmem>>, vector<1x16x16xf32>
    %20 = vector.shape_cast %19 : vector<1x16x16xf32> to vector<16x16xf32>
    %c0_38 = arith.constant 0 : index
    %21 = memref.load %arg2[%c0_38] : memref<288xf32, #tpu.memory_space<smem>>
    %22 = vector.broadcast %21 : f32 to vector<16x16xf32>
    %23 = arith.mulf %20, %22 : vector<16x16xf32>
    %c1_39 = arith.constant 1 : index
    %24 = memref.load %arg2[%c1_39] : memref<288xf32, #tpu.memory_space<smem>>
    %25 = vector.broadcast %24 : f32 to vector<16x16xf32>
    %26 = arith.mulf %20, %25 : vector<16x16xf32>
    %c2 = arith.constant 2 : index
    %27 = memref.load %arg2[%c2] : memref<288xf32, #tpu.memory_space<smem>>
    %28 = vector.broadcast %27 : f32 to vector<16x16xf32>
    %29 = arith.mulf %20, %28 : vector<16x16xf32>
    %c3 = arith.constant 3 : index
    %30 = memref.load %arg2[%c3] : memref<288xf32, #tpu.memory_space<smem>>
    %31 = vector.broadcast %30 : f32 to vector<16x16xf32>
    %32 = arith.mulf %20, %31 : vector<16x16xf32>
    %c4 = arith.constant 4 : index
    %33 = memref.load %arg2[%c4] : memref<288xf32, #tpu.memory_space<smem>>
    %34 = vector.broadcast %33 : f32 to vector<16x16xf32>
    %35 = arith.mulf %20, %34 : vector<16x16xf32>
    %c5 = arith.constant 5 : index
    %36 = memref.load %arg2[%c5] : memref<288xf32, #tpu.memory_space<smem>>
    %37 = vector.broadcast %36 : f32 to vector<16x16xf32>
    %38 = arith.mulf %20, %37 : vector<16x16xf32>
    %c6 = arith.constant 6 : index
    %39 = memref.load %arg2[%c6] : memref<288xf32, #tpu.memory_space<smem>>
    %40 = vector.broadcast %39 : f32 to vector<16x16xf32>
    %41 = arith.mulf %20, %40 : vector<16x16xf32>
    %c7 = arith.constant 7 : index
    %42 = memref.load %arg2[%c7] : memref<288xf32, #tpu.memory_space<smem>>
    %43 = vector.broadcast %42 : f32 to vector<16x16xf32>
    %44 = arith.mulf %20, %43 : vector<16x16xf32>
    %c0_40 = arith.constant 0 : index
    %c0_41 = arith.constant 0 : index
    %c1_42 = arith.constant 1 : index
    %45 = vector.load %arg7[%c0_40, %c0_41, %c1_42] : memref<4x18x18xf32, #tpu.memory_space<vmem>>, vector<1x16x16xf32>
    %46 = vector.shape_cast %45 : vector<1x16x16xf32> to vector<16x16xf32>
    %c32 = arith.constant 32 : index
    %47 = memref.load %arg2[%c32] : memref<288xf32, #tpu.memory_space<smem>>
    %48 = vector.broadcast %47 : f32 to vector<16x16xf32>
    %49 = arith.mulf %46, %48 : vector<16x16xf32>
    %50 = arith.addf %23, %49 : vector<16x16xf32>
    %c33 = arith.constant 33 : index
    %51 = memref.load %arg2[%c33] : memref<288xf32, #tpu.memory_space<smem>>
    %52 = vector.broadcast %51 : f32 to vector<16x16xf32>
    %53 = arith.mulf %46, %52 : vector<16x16xf32>
    %54 = arith.addf %26, %53 : vector<16x16xf32>
    %c34 = arith.constant 34 : index
    %55 = memref.load %arg2[%c34] : memref<288xf32, #tpu.memory_space<smem>>
    %56 = vector.broadcast %55 : f32 to vector<16x16xf32>
    %57 = arith.mulf %46, %56 : vector<16x16xf32>
    %58 = arith.addf %29, %57 : vector<16x16xf32>
    %c35 = arith.constant 35 : index
    %59 = memref.load %arg2[%c35] : memref<288xf32, #tpu.memory_space<smem>>
    %60 = vector.broadcast %59 : f32 to vector<16x16xf32>
    %61 = arith.mulf %46, %60 : vector<16x16xf32>
    %62 = arith.addf %32, %61 : vector<16x16xf32>
    %c36 = arith.constant 36 : index
    %63 = memref.load %arg2[%c36] : memref<288xf32, #tpu.memory_space<smem>>
    %64 = vector.broadcast %63 : f32 to vector<16x16xf32>
    %65 = arith.mulf %46, %64 : vector<16x16xf32>
    %66 = arith.addf %35, %65 : vector<16x16xf32>
    %c37 = arith.constant 37 : index
    %67 = memref.load %arg2[%c37] : memref<288xf32, #tpu.memory_space<smem>>
    %68 = vector.broadcast %67 : f32 to vector<16x16xf32>
    %69 = arith.mulf %46, %68 : vector<16x16xf32>
    %70 = arith.addf %38, %69 : vector<16x16xf32>
    %c38 = arith.constant 38 : index
    %71 = memref.load %arg2[%c38] : memref<288xf32, #tpu.memory_space<smem>>
    %72 = vector.broadcast %71 : f32 to vector<16x16xf32>
    %73 = arith.mulf %46, %72 : vector<16x16xf32>
    %74 = arith.addf %41, %73 : vector<16x16xf32>
    %c39 = arith.constant 39 : index
    %75 = memref.load %arg2[%c39] : memref<288xf32, #tpu.memory_space<smem>>
    %76 = vector.broadcast %75 : f32 to vector<16x16xf32>
    %77 = arith.mulf %46, %76 : vector<16x16xf32>
    %78 = arith.addf %44, %77 : vector<16x16xf32>
    %c0_43 = arith.constant 0 : index
    %c0_44 = arith.constant 0 : index
    %c2_45 = arith.constant 2 : index
    %79 = vector.load %arg7[%c0_43, %c0_44, %c2_45] : memref<4x18x18xf32, #tpu.memory_space<vmem>>, vector<1x16x16xf32>
    %80 = vector.shape_cast %79 : vector<1x16x16xf32> to vector<16x16xf32>
    %c64 = arith.constant 64 : index
    %81 = memref.load %arg2[%c64] : memref<288xf32, #tpu.memory_space<smem>>
    %82 = vector.broadcast %81 : f32 to vector<16x16xf32>
    %83 = arith.mulf %80, %82 : vector<16x16xf32>
    %84 = arith.addf %50, %83 : vector<16x16xf32>
    %c65 = arith.constant 65 : index
    %85 = memref.load %arg2[%c65] : memref<288xf32, #tpu.memory_space<smem>>
    %86 = vector.broadcast %85 : f32 to vector<16x16xf32>
    %87 = arith.mulf %80, %86 : vector<16x16xf32>
    %88 = arith.addf %54, %87 : vector<16x16xf32>
    %c66 = arith.constant 66 : index
    %89 = memref.load %arg2[%c66] : memref<288xf32, #tpu.memory_space<smem>>
    %90 = vector.broadcast %89 : f32 to vector<16x16xf32>
    %91 = arith.mulf %80, %90 : vector<16x16xf32>
    %92 = arith.addf %58, %91 : vector<16x16xf32>
    %c67 = arith.constant 67 : index
    %93 = memref.load %arg2[%c67] : memref<288xf32, #tpu.memory_space<smem>>
    %94 = vector.broadcast %93 : f32 to vector<16x16xf32>
    %95 = arith.mulf %80, %94 : vector<16x16xf32>
    %96 = arith.addf %62, %95 : vector<16x16xf32>
    %c68 = arith.constant 68 : index
    %97 = memref.load %arg2[%c68] : memref<288xf32, #tpu.memory_space<smem>>
    %98 = vector.broadcast %97 : f32 to vector<16x16xf32>
    %99 = arith.mulf %80, %98 : vector<16x16xf32>
    %100 = arith.addf %66, %99 : vector<16x16xf32>
    %c69 = arith.constant 69 : index
    %101 = memref.load %arg2[%c69] : memref<288xf32, #tpu.memory_space<smem>>
    %102 = vector.broadcast %101 : f32 to vector<16x16xf32>
    %103 = arith.mulf %80, %102 : vector<16x16xf32>
    %104 = arith.addf %70, %103 : vector<16x16xf32>
    %c70 = arith.constant 70 : index
    %105 = memref.load %arg2[%c70] : memref<288xf32, #tpu.memory_space<smem>>
    %106 = vector.broadcast %105 : f32 to vector<16x16xf32>
    %107 = arith.mulf %80, %106 : vector<16x16xf32>
    %108 = arith.addf %74, %107 : vector<16x16xf32>
    %c71 = arith.constant 71 : index
    %109 = memref.load %arg2[%c71] : memref<288xf32, #tpu.memory_space<smem>>
    %110 = vector.broadcast %109 : f32 to vector<16x16xf32>
    %111 = arith.mulf %80, %110 : vector<16x16xf32>
    %112 = arith.addf %78, %111 : vector<16x16xf32>
    %c0_46 = arith.constant 0 : index
    %c1_47 = arith.constant 1 : index
    %c0_48 = arith.constant 0 : index
    %113 = vector.load %arg7[%c0_46, %c1_47, %c0_48] : memref<4x18x18xf32, #tpu.memory_space<vmem>>, vector<1x16x16xf32>
    %114 = vector.shape_cast %113 : vector<1x16x16xf32> to vector<16x16xf32>
    %c96 = arith.constant 96 : index
    %115 = memref.load %arg2[%c96] : memref<288xf32, #tpu.memory_space<smem>>
    %116 = vector.broadcast %115 : f32 to vector<16x16xf32>
    %117 = arith.mulf %114, %116 : vector<16x16xf32>
    %118 = arith.addf %84, %117 : vector<16x16xf32>
    %c97 = arith.constant 97 : index
    %119 = memref.load %arg2[%c97] : memref<288xf32, #tpu.memory_space<smem>>
    %120 = vector.broadcast %119 : f32 to vector<16x16xf32>
    %121 = arith.mulf %114, %120 : vector<16x16xf32>
    %122 = arith.addf %88, %121 : vector<16x16xf32>
    %c98 = arith.constant 98 : index
    %123 = memref.load %arg2[%c98] : memref<288xf32, #tpu.memory_space<smem>>
    %124 = vector.broadcast %123 : f32 to vector<16x16xf32>
    %125 = arith.mulf %114, %124 : vector<16x16xf32>
    %126 = arith.addf %92, %125 : vector<16x16xf32>
    %c99 = arith.constant 99 : index
    %127 = memref.load %arg2[%c99] : memref<288xf32, #tpu.memory_space<smem>>
    %128 = vector.broadcast %127 : f32 to vector<16x16xf32>
    %129 = arith.mulf %114, %128 : vector<16x16xf32>
    %130 = arith.addf %96, %129 : vector<16x16xf32>
    %c100 = arith.constant 100 : index
    %131 = memref.load %arg2[%c100] : memref<288xf32, #tpu.memory_space<smem>>
    %132 = vector.broadcast %131 : f32 to vector<16x16xf32>
    %133 = arith.mulf %114, %132 : vector<16x16xf32>
    %134 = arith.addf %100, %133 : vector<16x16xf32>
    %c101 = arith.constant 101 : index
    %135 = memref.load %arg2[%c101] : memref<288xf32, #tpu.memory_space<smem>>
    %136 = vector.broadcast %135 : f32 to vector<16x16xf32>
    %137 = arith.mulf %114, %136 : vector<16x16xf32>
    %138 = arith.addf %104, %137 : vector<16x16xf32>
    %c102 = arith.constant 102 : index
    %139 = memref.load %arg2[%c102] : memref<288xf32, #tpu.memory_space<smem>>
    %140 = vector.broadcast %139 : f32 to vector<16x16xf32>
    %141 = arith.mulf %114, %140 : vector<16x16xf32>
    %142 = arith.addf %108, %141 : vector<16x16xf32>
    %c103 = arith.constant 103 : index
    %143 = memref.load %arg2[%c103] : memref<288xf32, #tpu.memory_space<smem>>
    %144 = vector.broadcast %143 : f32 to vector<16x16xf32>
    %145 = arith.mulf %114, %144 : vector<16x16xf32>
    %146 = arith.addf %112, %145 : vector<16x16xf32>
    %c0_49 = arith.constant 0 : index
    %c1_50 = arith.constant 1 : index
    %c1_51 = arith.constant 1 : index
    %147 = vector.load %arg7[%c0_49, %c1_50, %c1_51] : memref<4x18x18xf32, #tpu.memory_space<vmem>>, vector<1x16x16xf32>
    %148 = vector.shape_cast %147 : vector<1x16x16xf32> to vector<16x16xf32>
    %c128 = arith.constant 128 : index
    %149 = memref.load %arg2[%c128] : memref<288xf32, #tpu.memory_space<smem>>
    %150 = vector.broadcast %149 : f32 to vector<16x16xf32>
    %151 = arith.mulf %148, %150 : vector<16x16xf32>
    %152 = arith.addf %118, %151 : vector<16x16xf32>
    %c129 = arith.constant 129 : index
    %153 = memref.load %arg2[%c129] : memref<288xf32, #tpu.memory_space<smem>>
    %154 = vector.broadcast %153 : f32 to vector<16x16xf32>
    %155 = arith.mulf %148, %154 : vector<16x16xf32>
    %156 = arith.addf %122, %155 : vector<16x16xf32>
    %c130 = arith.constant 130 : index
    %157 = memref.load %arg2[%c130] : memref<288xf32, #tpu.memory_space<smem>>
    %158 = vector.broadcast %157 : f32 to vector<16x16xf32>
    %159 = arith.mulf %148, %158 : vector<16x16xf32>
    %160 = arith.addf %126, %159 : vector<16x16xf32>
    %c131 = arith.constant 131 : index
    %161 = memref.load %arg2[%c131] : memref<288xf32, #tpu.memory_space<smem>>
    %162 = vector.broadcast %161 : f32 to vector<16x16xf32>
    %163 = arith.mulf %148, %162 : vector<16x16xf32>
    %164 = arith.addf %130, %163 : vector<16x16xf32>
    %c132 = arith.constant 132 : index
    %165 = memref.load %arg2[%c132] : memref<288xf32, #tpu.memory_space<smem>>
    %166 = vector.broadcast %165 : f32 to vector<16x16xf32>
    %167 = arith.mulf %148, %166 : vector<16x16xf32>
    %168 = arith.addf %134, %167 : vector<16x16xf32>
    %c133 = arith.constant 133 : index
    %169 = memref.load %arg2[%c133] : memref<288xf32, #tpu.memory_space<smem>>
    %170 = vector.broadcast %169 : f32 to vector<16x16xf32>
    %171 = arith.mulf %148, %170 : vector<16x16xf32>
    %172 = arith.addf %138, %171 : vector<16x16xf32>
    %c134 = arith.constant 134 : index
    %173 = memref.load %arg2[%c134] : memref<288xf32, #tpu.memory_space<smem>>
    %174 = vector.broadcast %173 : f32 to vector<16x16xf32>
    %175 = arith.mulf %148, %174 : vector<16x16xf32>
    %176 = arith.addf %142, %175 : vector<16x16xf32>
    %c135 = arith.constant 135 : index
    %177 = memref.load %arg2[%c135] : memref<288xf32, #tpu.memory_space<smem>>
    %178 = vector.broadcast %177 : f32 to vector<16x16xf32>
    %179 = arith.mulf %148, %178 : vector<16x16xf32>
    %180 = arith.addf %146, %179 : vector<16x16xf32>
    %c0_52 = arith.constant 0 : index
    %c1_53 = arith.constant 1 : index
    %c2_54 = arith.constant 2 : index
    %181 = vector.load %arg7[%c0_52, %c1_53, %c2_54] : memref<4x18x18xf32, #tpu.memory_space<vmem>>, vector<1x16x16xf32>
    %182 = vector.shape_cast %181 : vector<1x16x16xf32> to vector<16x16xf32>
    %c160 = arith.constant 160 : index
    %183 = memref.load %arg2[%c160] : memref<288xf32, #tpu.memory_space<smem>>
    %184 = vector.broadcast %183 : f32 to vector<16x16xf32>
    %185 = arith.mulf %182, %184 : vector<16x16xf32>
    %186 = arith.addf %152, %185 : vector<16x16xf32>
    %c161 = arith.constant 161 : index
    %187 = memref.load %arg2[%c161] : memref<288xf32, #tpu.memory_space<smem>>
    %188 = vector.broadcast %187 : f32 to vector<16x16xf32>
    %189 = arith.mulf %182, %188 : vector<16x16xf32>
    %190 = arith.addf %156, %189 : vector<16x16xf32>
    %c162 = arith.constant 162 : index
    %191 = memref.load %arg2[%c162] : memref<288xf32, #tpu.memory_space<smem>>
    %192 = vector.broadcast %191 : f32 to vector<16x16xf32>
    %193 = arith.mulf %182, %192 : vector<16x16xf32>
    %194 = arith.addf %160, %193 : vector<16x16xf32>
    %c163 = arith.constant 163 : index
    %195 = memref.load %arg2[%c163] : memref<288xf32, #tpu.memory_space<smem>>
    %196 = vector.broadcast %195 : f32 to vector<16x16xf32>
    %197 = arith.mulf %182, %196 : vector<16x16xf32>
    %198 = arith.addf %164, %197 : vector<16x16xf32>
    %c164 = arith.constant 164 : index
    %199 = memref.load %arg2[%c164] : memref<288xf32, #tpu.memory_space<smem>>
    %200 = vector.broadcast %199 : f32 to vector<16x16xf32>
    %201 = arith.mulf %182, %200 : vector<16x16xf32>
    %202 = arith.addf %168, %201 : vector<16x16xf32>
    %c165 = arith.constant 165 : index
    %203 = memref.load %arg2[%c165] : memref<288xf32, #tpu.memory_space<smem>>
    %204 = vector.broadcast %203 : f32 to vector<16x16xf32>
    %205 = arith.mulf %182, %204 : vector<16x16xf32>
    %206 = arith.addf %172, %205 : vector<16x16xf32>
    %c166 = arith.constant 166 : index
    %207 = memref.load %arg2[%c166] : memref<288xf32, #tpu.memory_space<smem>>
    %208 = vector.broadcast %207 : f32 to vector<16x16xf32>
    %209 = arith.mulf %182, %208 : vector<16x16xf32>
    %210 = arith.addf %176, %209 : vector<16x16xf32>
    %c167 = arith.constant 167 : index
    %211 = memref.load %arg2[%c167] : memref<288xf32, #tpu.memory_space<smem>>
    %212 = vector.broadcast %211 : f32 to vector<16x16xf32>
    %213 = arith.mulf %182, %212 : vector<16x16xf32>
    %214 = arith.addf %180, %213 : vector<16x16xf32>
    %c0_55 = arith.constant 0 : index
    %c2_56 = arith.constant 2 : index
    %c0_57 = arith.constant 0 : index
    %215 = vector.load %arg7[%c0_55, %c2_56, %c0_57] : memref<4x18x18xf32, #tpu.memory_space<vmem>>, vector<1x16x16xf32>
    %216 = vector.shape_cast %215 : vector<1x16x16xf32> to vector<16x16xf32>
    %c192 = arith.constant 192 : index
    %217 = memref.load %arg2[%c192] : memref<288xf32, #tpu.memory_space<smem>>
    %218 = vector.broadcast %217 : f32 to vector<16x16xf32>
    %219 = arith.mulf %216, %218 : vector<16x16xf32>
    %220 = arith.addf %186, %219 : vector<16x16xf32>
    %c193 = arith.constant 193 : index
    %221 = memref.load %arg2[%c193] : memref<288xf32, #tpu.memory_space<smem>>
    %222 = vector.broadcast %221 : f32 to vector<16x16xf32>
    %223 = arith.mulf %216, %222 : vector<16x16xf32>
    %224 = arith.addf %190, %223 : vector<16x16xf32>
    %c194 = arith.constant 194 : index
    %225 = memref.load %arg2[%c194] : memref<288xf32, #tpu.memory_space<smem>>
    %226 = vector.broadcast %225 : f32 to vector<16x16xf32>
    %227 = arith.mulf %216, %226 : vector<16x16xf32>
    %228 = arith.addf %194, %227 : vector<16x16xf32>
    %c195 = arith.constant 195 : index
    %229 = memref.load %arg2[%c195] : memref<288xf32, #tpu.memory_space<smem>>
    %230 = vector.broadcast %229 : f32 to vector<16x16xf32>
    %231 = arith.mulf %216, %230 : vector<16x16xf32>
    %232 = arith.addf %198, %231 : vector<16x16xf32>
    %c196 = arith.constant 196 : index
    %233 = memref.load %arg2[%c196] : memref<288xf32, #tpu.memory_space<smem>>
    %234 = vector.broadcast %233 : f32 to vector<16x16xf32>
    %235 = arith.mulf %216, %234 : vector<16x16xf32>
    %236 = arith.addf %202, %235 : vector<16x16xf32>
    %c197 = arith.constant 197 : index
    %237 = memref.load %arg2[%c197] : memref<288xf32, #tpu.memory_space<smem>>
    %238 = vector.broadcast %237 : f32 to vector<16x16xf32>
    %239 = arith.mulf %216, %238 : vector<16x16xf32>
    %240 = arith.addf %206, %239 : vector<16x16xf32>
    %c198 = arith.constant 198 : index
    %241 = memref.load %arg2[%c198] : memref<288xf32, #tpu.memory_space<smem>>
    %242 = vector.broadcast %241 : f32 to vector<16x16xf32>
    %243 = arith.mulf %216, %242 : vector<16x16xf32>
    %244 = arith.addf %210, %243 : vector<16x16xf32>
    %c199 = arith.constant 199 : index
    %245 = memref.load %arg2[%c199] : memref<288xf32, #tpu.memory_space<smem>>
    %246 = vector.broadcast %245 : f32 to vector<16x16xf32>
    %247 = arith.mulf %216, %246 : vector<16x16xf32>
    %248 = arith.addf %214, %247 : vector<16x16xf32>
    %c0_58 = arith.constant 0 : index
    %c2_59 = arith.constant 2 : index
    %c1_60 = arith.constant 1 : index
    %249 = vector.load %arg7[%c0_58, %c2_59, %c1_60] : memref<4x18x18xf32, #tpu.memory_space<vmem>>, vector<1x16x16xf32>
    %250 = vector.shape_cast %249 : vector<1x16x16xf32> to vector<16x16xf32>
    %c224 = arith.constant 224 : index
    %251 = memref.load %arg2[%c224] : memref<288xf32, #tpu.memory_space<smem>>
    %252 = vector.broadcast %251 : f32 to vector<16x16xf32>
    %253 = arith.mulf %250, %252 : vector<16x16xf32>
    %254 = arith.addf %220, %253 : vector<16x16xf32>
    %c225 = arith.constant 225 : index
    %255 = memref.load %arg2[%c225] : memref<288xf32, #tpu.memory_space<smem>>
    %256 = vector.broadcast %255 : f32 to vector<16x16xf32>
    %257 = arith.mulf %250, %256 : vector<16x16xf32>
    %258 = arith.addf %224, %257 : vector<16x16xf32>
    %c226 = arith.constant 226 : index
    %259 = memref.load %arg2[%c226] : memref<288xf32, #tpu.memory_space<smem>>
    %260 = vector.broadcast %259 : f32 to vector<16x16xf32>
    %261 = arith.mulf %250, %260 : vector<16x16xf32>
    %262 = arith.addf %228, %261 : vector<16x16xf32>
    %c227 = arith.constant 227 : index
    %263 = memref.load %arg2[%c227] : memref<288xf32, #tpu.memory_space<smem>>
    %264 = vector.broadcast %263 : f32 to vector<16x16xf32>
    %265 = arith.mulf %250, %264 : vector<16x16xf32>
    %266 = arith.addf %232, %265 : vector<16x16xf32>
    %c228 = arith.constant 228 : index
    %267 = memref.load %arg2[%c228] : memref<288xf32, #tpu.memory_space<smem>>
    %268 = vector.broadcast %267 : f32 to vector<16x16xf32>
    %269 = arith.mulf %250, %268 : vector<16x16xf32>
    %270 = arith.addf %236, %269 : vector<16x16xf32>
    %c229 = arith.constant 229 : index
    %271 = memref.load %arg2[%c229] : memref<288xf32, #tpu.memory_space<smem>>
    %272 = vector.broadcast %271 : f32 to vector<16x16xf32>
    %273 = arith.mulf %250, %272 : vector<16x16xf32>
    %274 = arith.addf %240, %273 : vector<16x16xf32>
    %c230 = arith.constant 230 : index
    %275 = memref.load %arg2[%c230] : memref<288xf32, #tpu.memory_space<smem>>
    %276 = vector.broadcast %275 : f32 to vector<16x16xf32>
    %277 = arith.mulf %250, %276 : vector<16x16xf32>
    %278 = arith.addf %244, %277 : vector<16x16xf32>
    %c231 = arith.constant 231 : index
    %279 = memref.load %arg2[%c231] : memref<288xf32, #tpu.memory_space<smem>>
    %280 = vector.broadcast %279 : f32 to vector<16x16xf32>
    %281 = arith.mulf %250, %280 : vector<16x16xf32>
    %282 = arith.addf %248, %281 : vector<16x16xf32>
    %c0_61 = arith.constant 0 : index
    %c2_62 = arith.constant 2 : index
    %c2_63 = arith.constant 2 : index
    %283 = vector.load %arg7[%c0_61, %c2_62, %c2_63] : memref<4x18x18xf32, #tpu.memory_space<vmem>>, vector<1x16x16xf32>
    %284 = vector.shape_cast %283 : vector<1x16x16xf32> to vector<16x16xf32>
    %c256 = arith.constant 256 : index
    %285 = memref.load %arg2[%c256] : memref<288xf32, #tpu.memory_space<smem>>
    %286 = vector.broadcast %285 : f32 to vector<16x16xf32>
    %287 = arith.mulf %284, %286 : vector<16x16xf32>
    %288 = arith.addf %254, %287 : vector<16x16xf32>
    %c257 = arith.constant 257 : index
    %289 = memref.load %arg2[%c257] : memref<288xf32, #tpu.memory_space<smem>>
    %290 = vector.broadcast %289 : f32 to vector<16x16xf32>
    %291 = arith.mulf %284, %290 : vector<16x16xf32>
    %292 = arith.addf %258, %291 : vector<16x16xf32>
    %c258 = arith.constant 258 : index
    %293 = memref.load %arg2[%c258] : memref<288xf32, #tpu.memory_space<smem>>
    %294 = vector.broadcast %293 : f32 to vector<16x16xf32>
    %295 = arith.mulf %284, %294 : vector<16x16xf32>
    %296 = arith.addf %262, %295 : vector<16x16xf32>
    %c259 = arith.constant 259 : index
    %297 = memref.load %arg2[%c259] : memref<288xf32, #tpu.memory_space<smem>>
    %298 = vector.broadcast %297 : f32 to vector<16x16xf32>
    %299 = arith.mulf %284, %298 : vector<16x16xf32>
    %300 = arith.addf %266, %299 : vector<16x16xf32>
    %c260 = arith.constant 260 : index
    %301 = memref.load %arg2[%c260] : memref<288xf32, #tpu.memory_space<smem>>
    %302 = vector.broadcast %301 : f32 to vector<16x16xf32>
    %303 = arith.mulf %284, %302 : vector<16x16xf32>
    %304 = arith.addf %270, %303 : vector<16x16xf32>
    %c261 = arith.constant 261 : index
    %305 = memref.load %arg2[%c261] : memref<288xf32, #tpu.memory_space<smem>>
    %306 = vector.broadcast %305 : f32 to vector<16x16xf32>
    %307 = arith.mulf %284, %306 : vector<16x16xf32>
    %308 = arith.addf %274, %307 : vector<16x16xf32>
    %c262 = arith.constant 262 : index
    %309 = memref.load %arg2[%c262] : memref<288xf32, #tpu.memory_space<smem>>
    %310 = vector.broadcast %309 : f32 to vector<16x16xf32>
    %311 = arith.mulf %284, %310 : vector<16x16xf32>
    %312 = arith.addf %278, %311 : vector<16x16xf32>
    %c263 = arith.constant 263 : index
    %313 = memref.load %arg2[%c263] : memref<288xf32, #tpu.memory_space<smem>>
    %314 = vector.broadcast %313 : f32 to vector<16x16xf32>
    %315 = arith.mulf %284, %314 : vector<16x16xf32>
    %316 = arith.addf %282, %315 : vector<16x16xf32>
    %c1_64 = arith.constant 1 : index
    %c0_65 = arith.constant 0 : index
    %c0_66 = arith.constant 0 : index
    %317 = vector.load %arg7[%c1_64, %c0_65, %c0_66] : memref<4x18x18xf32, #tpu.memory_space<vmem>>, vector<1x16x16xf32>
    %318 = vector.shape_cast %317 : vector<1x16x16xf32> to vector<16x16xf32>
    %c8 = arith.constant 8 : index
    %319 = memref.load %arg2[%c8] : memref<288xf32, #tpu.memory_space<smem>>
    %320 = vector.broadcast %319 : f32 to vector<16x16xf32>
    %321 = arith.mulf %318, %320 : vector<16x16xf32>
    %322 = arith.addf %288, %321 : vector<16x16xf32>
    %c9 = arith.constant 9 : index
    %323 = memref.load %arg2[%c9] : memref<288xf32, #tpu.memory_space<smem>>
    %324 = vector.broadcast %323 : f32 to vector<16x16xf32>
    %325 = arith.mulf %318, %324 : vector<16x16xf32>
    %326 = arith.addf %292, %325 : vector<16x16xf32>
    %c10 = arith.constant 10 : index
    %327 = memref.load %arg2[%c10] : memref<288xf32, #tpu.memory_space<smem>>
    %328 = vector.broadcast %327 : f32 to vector<16x16xf32>
    %329 = arith.mulf %318, %328 : vector<16x16xf32>
    %330 = arith.addf %296, %329 : vector<16x16xf32>
    %c11 = arith.constant 11 : index
    %331 = memref.load %arg2[%c11] : memref<288xf32, #tpu.memory_space<smem>>
    %332 = vector.broadcast %331 : f32 to vector<16x16xf32>
    %333 = arith.mulf %318, %332 : vector<16x16xf32>
    %334 = arith.addf %300, %333 : vector<16x16xf32>
    %c12 = arith.constant 12 : index
    %335 = memref.load %arg2[%c12] : memref<288xf32, #tpu.memory_space<smem>>
    %336 = vector.broadcast %335 : f32 to vector<16x16xf32>
    %337 = arith.mulf %318, %336 : vector<16x16xf32>
    %338 = arith.addf %304, %337 : vector<16x16xf32>
    %c13 = arith.constant 13 : index
    %339 = memref.load %arg2[%c13] : memref<288xf32, #tpu.memory_space<smem>>
    %340 = vector.broadcast %339 : f32 to vector<16x16xf32>
    %341 = arith.mulf %318, %340 : vector<16x16xf32>
    %342 = arith.addf %308, %341 : vector<16x16xf32>
    %c14 = arith.constant 14 : index
    %343 = memref.load %arg2[%c14] : memref<288xf32, #tpu.memory_space<smem>>
    %344 = vector.broadcast %343 : f32 to vector<16x16xf32>
    %345 = arith.mulf %318, %344 : vector<16x16xf32>
    %346 = arith.addf %312, %345 : vector<16x16xf32>
    %c15 = arith.constant 15 : index
    %347 = memref.load %arg2[%c15] : memref<288xf32, #tpu.memory_space<smem>>
    %348 = vector.broadcast %347 : f32 to vector<16x16xf32>
    %349 = arith.mulf %318, %348 : vector<16x16xf32>
    %350 = arith.addf %316, %349 : vector<16x16xf32>
    %c1_67 = arith.constant 1 : index
    %c0_68 = arith.constant 0 : index
    %c1_69 = arith.constant 1 : index
    %351 = vector.load %arg7[%c1_67, %c0_68, %c1_69] : memref<4x18x18xf32, #tpu.memory_space<vmem>>, vector<1x16x16xf32>
    %352 = vector.shape_cast %351 : vector<1x16x16xf32> to vector<16x16xf32>
    %c40 = arith.constant 40 : index
    %353 = memref.load %arg2[%c40] : memref<288xf32, #tpu.memory_space<smem>>
    %354 = vector.broadcast %353 : f32 to vector<16x16xf32>
    %355 = arith.mulf %352, %354 : vector<16x16xf32>
    %356 = arith.addf %322, %355 : vector<16x16xf32>
    %c41 = arith.constant 41 : index
    %357 = memref.load %arg2[%c41] : memref<288xf32, #tpu.memory_space<smem>>
    %358 = vector.broadcast %357 : f32 to vector<16x16xf32>
    %359 = arith.mulf %352, %358 : vector<16x16xf32>
    %360 = arith.addf %326, %359 : vector<16x16xf32>
    %c42 = arith.constant 42 : index
    %361 = memref.load %arg2[%c42] : memref<288xf32, #tpu.memory_space<smem>>
    %362 = vector.broadcast %361 : f32 to vector<16x16xf32>
    %363 = arith.mulf %352, %362 : vector<16x16xf32>
    %364 = arith.addf %330, %363 : vector<16x16xf32>
    %c43 = arith.constant 43 : index
    %365 = memref.load %arg2[%c43] : memref<288xf32, #tpu.memory_space<smem>>
    %366 = vector.broadcast %365 : f32 to vector<16x16xf32>
    %367 = arith.mulf %352, %366 : vector<16x16xf32>
    %368 = arith.addf %334, %367 : vector<16x16xf32>
    %c44 = arith.constant 44 : index
    %369 = memref.load %arg2[%c44] : memref<288xf32, #tpu.memory_space<smem>>
    %370 = vector.broadcast %369 : f32 to vector<16x16xf32>
    %371 = arith.mulf %352, %370 : vector<16x16xf32>
    %372 = arith.addf %338, %371 : vector<16x16xf32>
    %c45 = arith.constant 45 : index
    %373 = memref.load %arg2[%c45] : memref<288xf32, #tpu.memory_space<smem>>
    %374 = vector.broadcast %373 : f32 to vector<16x16xf32>
    %375 = arith.mulf %352, %374 : vector<16x16xf32>
    %376 = arith.addf %342, %375 : vector<16x16xf32>
    %c46 = arith.constant 46 : index
    %377 = memref.load %arg2[%c46] : memref<288xf32, #tpu.memory_space<smem>>
    %378 = vector.broadcast %377 : f32 to vector<16x16xf32>
    %379 = arith.mulf %352, %378 : vector<16x16xf32>
    %380 = arith.addf %346, %379 : vector<16x16xf32>
    %c47 = arith.constant 47 : index
    %381 = memref.load %arg2[%c47] : memref<288xf32, #tpu.memory_space<smem>>
    %382 = vector.broadcast %381 : f32 to vector<16x16xf32>
    %383 = arith.mulf %352, %382 : vector<16x16xf32>
    %384 = arith.addf %350, %383 : vector<16x16xf32>
    %c1_70 = arith.constant 1 : index
    %c0_71 = arith.constant 0 : index
    %c2_72 = arith.constant 2 : index
    %385 = vector.load %arg7[%c1_70, %c0_71, %c2_72] : memref<4x18x18xf32, #tpu.memory_space<vmem>>, vector<1x16x16xf32>
    %386 = vector.shape_cast %385 : vector<1x16x16xf32> to vector<16x16xf32>
    %c72 = arith.constant 72 : index
    %387 = memref.load %arg2[%c72] : memref<288xf32, #tpu.memory_space<smem>>
    %388 = vector.broadcast %387 : f32 to vector<16x16xf32>
    %389 = arith.mulf %386, %388 : vector<16x16xf32>
    %390 = arith.addf %356, %389 : vector<16x16xf32>
    %c73 = arith.constant 73 : index
    %391 = memref.load %arg2[%c73] : memref<288xf32, #tpu.memory_space<smem>>
    %392 = vector.broadcast %391 : f32 to vector<16x16xf32>
    %393 = arith.mulf %386, %392 : vector<16x16xf32>
    %394 = arith.addf %360, %393 : vector<16x16xf32>
    %c74 = arith.constant 74 : index
    %395 = memref.load %arg2[%c74] : memref<288xf32, #tpu.memory_space<smem>>
    %396 = vector.broadcast %395 : f32 to vector<16x16xf32>
    %397 = arith.mulf %386, %396 : vector<16x16xf32>
    %398 = arith.addf %364, %397 : vector<16x16xf32>
    %c75 = arith.constant 75 : index
    %399 = memref.load %arg2[%c75] : memref<288xf32, #tpu.memory_space<smem>>
    %400 = vector.broadcast %399 : f32 to vector<16x16xf32>
    %401 = arith.mulf %386, %400 : vector<16x16xf32>
    %402 = arith.addf %368, %401 : vector<16x16xf32>
    %c76 = arith.constant 76 : index
    %403 = memref.load %arg2[%c76] : memref<288xf32, #tpu.memory_space<smem>>
    %404 = vector.broadcast %403 : f32 to vector<16x16xf32>
    %405 = arith.mulf %386, %404 : vector<16x16xf32>
    %406 = arith.addf %372, %405 : vector<16x16xf32>
    %c77 = arith.constant 77 : index
    %407 = memref.load %arg2[%c77] : memref<288xf32, #tpu.memory_space<smem>>
    %408 = vector.broadcast %407 : f32 to vector<16x16xf32>
    %409 = arith.mulf %386, %408 : vector<16x16xf32>
    %410 = arith.addf %376, %409 : vector<16x16xf32>
    %c78 = arith.constant 78 : index
    %411 = memref.load %arg2[%c78] : memref<288xf32, #tpu.memory_space<smem>>
    %412 = vector.broadcast %411 : f32 to vector<16x16xf32>
    %413 = arith.mulf %386, %412 : vector<16x16xf32>
    %414 = arith.addf %380, %413 : vector<16x16xf32>
    %c79 = arith.constant 79 : index
    %415 = memref.load %arg2[%c79] : memref<288xf32, #tpu.memory_space<smem>>
    %416 = vector.broadcast %415 : f32 to vector<16x16xf32>
    %417 = arith.mulf %386, %416 : vector<16x16xf32>
    %418 = arith.addf %384, %417 : vector<16x16xf32>
    %c1_73 = arith.constant 1 : index
    %c1_74 = arith.constant 1 : index
    %c0_75 = arith.constant 0 : index
    %419 = vector.load %arg7[%c1_73, %c1_74, %c0_75] : memref<4x18x18xf32, #tpu.memory_space<vmem>>, vector<1x16x16xf32>
    %420 = vector.shape_cast %419 : vector<1x16x16xf32> to vector<16x16xf32>
    %c104 = arith.constant 104 : index
    %421 = memref.load %arg2[%c104] : memref<288xf32, #tpu.memory_space<smem>>
    %422 = vector.broadcast %421 : f32 to vector<16x16xf32>
    %423 = arith.mulf %420, %422 : vector<16x16xf32>
    %424 = arith.addf %390, %423 : vector<16x16xf32>
    %c105 = arith.constant 105 : index
    %425 = memref.load %arg2[%c105] : memref<288xf32, #tpu.memory_space<smem>>
    %426 = vector.broadcast %425 : f32 to vector<16x16xf32>
    %427 = arith.mulf %420, %426 : vector<16x16xf32>
    %428 = arith.addf %394, %427 : vector<16x16xf32>
    %c106 = arith.constant 106 : index
    %429 = memref.load %arg2[%c106] : memref<288xf32, #tpu.memory_space<smem>>
    %430 = vector.broadcast %429 : f32 to vector<16x16xf32>
    %431 = arith.mulf %420, %430 : vector<16x16xf32>
    %432 = arith.addf %398, %431 : vector<16x16xf32>
    %c107 = arith.constant 107 : index
    %433 = memref.load %arg2[%c107] : memref<288xf32, #tpu.memory_space<smem>>
    %434 = vector.broadcast %433 : f32 to vector<16x16xf32>
    %435 = arith.mulf %420, %434 : vector<16x16xf32>
    %436 = arith.addf %402, %435 : vector<16x16xf32>
    %c108 = arith.constant 108 : index
    %437 = memref.load %arg2[%c108] : memref<288xf32, #tpu.memory_space<smem>>
    %438 = vector.broadcast %437 : f32 to vector<16x16xf32>
    %439 = arith.mulf %420, %438 : vector<16x16xf32>
    %440 = arith.addf %406, %439 : vector<16x16xf32>
    %c109 = arith.constant 109 : index
    %441 = memref.load %arg2[%c109] : memref<288xf32, #tpu.memory_space<smem>>
    %442 = vector.broadcast %441 : f32 to vector<16x16xf32>
    %443 = arith.mulf %420, %442 : vector<16x16xf32>
    %444 = arith.addf %410, %443 : vector<16x16xf32>
    %c110 = arith.constant 110 : index
    %445 = memref.load %arg2[%c110] : memref<288xf32, #tpu.memory_space<smem>>
    %446 = vector.broadcast %445 : f32 to vector<16x16xf32>
    %447 = arith.mulf %420, %446 : vector<16x16xf32>
    %448 = arith.addf %414, %447 : vector<16x16xf32>
    %c111 = arith.constant 111 : index
    %449 = memref.load %arg2[%c111] : memref<288xf32, #tpu.memory_space<smem>>
    %450 = vector.broadcast %449 : f32 to vector<16x16xf32>
    %451 = arith.mulf %420, %450 : vector<16x16xf32>
    %452 = arith.addf %418, %451 : vector<16x16xf32>
    %c1_76 = arith.constant 1 : index
    %c1_77 = arith.constant 1 : index
    %c1_78 = arith.constant 1 : index
    %453 = vector.load %arg7[%c1_76, %c1_77, %c1_78] : memref<4x18x18xf32, #tpu.memory_space<vmem>>, vector<1x16x16xf32>
    %454 = vector.shape_cast %453 : vector<1x16x16xf32> to vector<16x16xf32>
    %c136 = arith.constant 136 : index
    %455 = memref.load %arg2[%c136] : memref<288xf32, #tpu.memory_space<smem>>
    %456 = vector.broadcast %455 : f32 to vector<16x16xf32>
    %457 = arith.mulf %454, %456 : vector<16x16xf32>
    %458 = arith.addf %424, %457 : vector<16x16xf32>
    %c137 = arith.constant 137 : index
    %459 = memref.load %arg2[%c137] : memref<288xf32, #tpu.memory_space<smem>>
    %460 = vector.broadcast %459 : f32 to vector<16x16xf32>
    %461 = arith.mulf %454, %460 : vector<16x16xf32>
    %462 = arith.addf %428, %461 : vector<16x16xf32>
    %c138 = arith.constant 138 : index
    %463 = memref.load %arg2[%c138] : memref<288xf32, #tpu.memory_space<smem>>
    %464 = vector.broadcast %463 : f32 to vector<16x16xf32>
    %465 = arith.mulf %454, %464 : vector<16x16xf32>
    %466 = arith.addf %432, %465 : vector<16x16xf32>
    %c139 = arith.constant 139 : index
    %467 = memref.load %arg2[%c139] : memref<288xf32, #tpu.memory_space<smem>>
    %468 = vector.broadcast %467 : f32 to vector<16x16xf32>
    %469 = arith.mulf %454, %468 : vector<16x16xf32>
    %470 = arith.addf %436, %469 : vector<16x16xf32>
    %c140 = arith.constant 140 : index
    %471 = memref.load %arg2[%c140] : memref<288xf32, #tpu.memory_space<smem>>
    %472 = vector.broadcast %471 : f32 to vector<16x16xf32>
    %473 = arith.mulf %454, %472 : vector<16x16xf32>
    %474 = arith.addf %440, %473 : vector<16x16xf32>
    %c141 = arith.constant 141 : index
    %475 = memref.load %arg2[%c141] : memref<288xf32, #tpu.memory_space<smem>>
    %476 = vector.broadcast %475 : f32 to vector<16x16xf32>
    %477 = arith.mulf %454, %476 : vector<16x16xf32>
    %478 = arith.addf %444, %477 : vector<16x16xf32>
    %c142 = arith.constant 142 : index
    %479 = memref.load %arg2[%c142] : memref<288xf32, #tpu.memory_space<smem>>
    %480 = vector.broadcast %479 : f32 to vector<16x16xf32>
    %481 = arith.mulf %454, %480 : vector<16x16xf32>
    %482 = arith.addf %448, %481 : vector<16x16xf32>
    %c143 = arith.constant 143 : index
    %483 = memref.load %arg2[%c143] : memref<288xf32, #tpu.memory_space<smem>>
    %484 = vector.broadcast %483 : f32 to vector<16x16xf32>
    %485 = arith.mulf %454, %484 : vector<16x16xf32>
    %486 = arith.addf %452, %485 : vector<16x16xf32>
    %c1_79 = arith.constant 1 : index
    %c1_80 = arith.constant 1 : index
    %c2_81 = arith.constant 2 : index
    %487 = vector.load %arg7[%c1_79, %c1_80, %c2_81] : memref<4x18x18xf32, #tpu.memory_space<vmem>>, vector<1x16x16xf32>
    %488 = vector.shape_cast %487 : vector<1x16x16xf32> to vector<16x16xf32>
    %c168 = arith.constant 168 : index
    %489 = memref.load %arg2[%c168] : memref<288xf32, #tpu.memory_space<smem>>
    %490 = vector.broadcast %489 : f32 to vector<16x16xf32>
    %491 = arith.mulf %488, %490 : vector<16x16xf32>
    %492 = arith.addf %458, %491 : vector<16x16xf32>
    %c169 = arith.constant 169 : index
    %493 = memref.load %arg2[%c169] : memref<288xf32, #tpu.memory_space<smem>>
    %494 = vector.broadcast %493 : f32 to vector<16x16xf32>
    %495 = arith.mulf %488, %494 : vector<16x16xf32>
    %496 = arith.addf %462, %495 : vector<16x16xf32>
    %c170 = arith.constant 170 : index
    %497 = memref.load %arg2[%c170] : memref<288xf32, #tpu.memory_space<smem>>
    %498 = vector.broadcast %497 : f32 to vector<16x16xf32>
    %499 = arith.mulf %488, %498 : vector<16x16xf32>
    %500 = arith.addf %466, %499 : vector<16x16xf32>
    %c171 = arith.constant 171 : index
    %501 = memref.load %arg2[%c171] : memref<288xf32, #tpu.memory_space<smem>>
    %502 = vector.broadcast %501 : f32 to vector<16x16xf32>
    %503 = arith.mulf %488, %502 : vector<16x16xf32>
    %504 = arith.addf %470, %503 : vector<16x16xf32>
    %c172 = arith.constant 172 : index
    %505 = memref.load %arg2[%c172] : memref<288xf32, #tpu.memory_space<smem>>
    %506 = vector.broadcast %505 : f32 to vector<16x16xf32>
    %507 = arith.mulf %488, %506 : vector<16x16xf32>
    %508 = arith.addf %474, %507 : vector<16x16xf32>
    %c173 = arith.constant 173 : index
    %509 = memref.load %arg2[%c173] : memref<288xf32, #tpu.memory_space<smem>>
    %510 = vector.broadcast %509 : f32 to vector<16x16xf32>
    %511 = arith.mulf %488, %510 : vector<16x16xf32>
    %512 = arith.addf %478, %511 : vector<16x16xf32>
    %c174 = arith.constant 174 : index
    %513 = memref.load %arg2[%c174] : memref<288xf32, #tpu.memory_space<smem>>
    %514 = vector.broadcast %513 : f32 to vector<16x16xf32>
    %515 = arith.mulf %488, %514 : vector<16x16xf32>
    %516 = arith.addf %482, %515 : vector<16x16xf32>
    %c175 = arith.constant 175 : index
    %517 = memref.load %arg2[%c175] : memref<288xf32, #tpu.memory_space<smem>>
    %518 = vector.broadcast %517 : f32 to vector<16x16xf32>
    %519 = arith.mulf %488, %518 : vector<16x16xf32>
    %520 = arith.addf %486, %519 : vector<16x16xf32>
    %c1_82 = arith.constant 1 : index
    %c2_83 = arith.constant 2 : index
    %c0_84 = arith.constant 0 : index
    %521 = vector.load %arg7[%c1_82, %c2_83, %c0_84] : memref<4x18x18xf32, #tpu.memory_space<vmem>>, vector<1x16x16xf32>
    %522 = vector.shape_cast %521 : vector<1x16x16xf32> to vector<16x16xf32>
    %c200 = arith.constant 200 : index
    %523 = memref.load %arg2[%c200] : memref<288xf32, #tpu.memory_space<smem>>
    %524 = vector.broadcast %523 : f32 to vector<16x16xf32>
    %525 = arith.mulf %522, %524 : vector<16x16xf32>
    %526 = arith.addf %492, %525 : vector<16x16xf32>
    %c201 = arith.constant 201 : index
    %527 = memref.load %arg2[%c201] : memref<288xf32, #tpu.memory_space<smem>>
    %528 = vector.broadcast %527 : f32 to vector<16x16xf32>
    %529 = arith.mulf %522, %528 : vector<16x16xf32>
    %530 = arith.addf %496, %529 : vector<16x16xf32>
    %c202 = arith.constant 202 : index
    %531 = memref.load %arg2[%c202] : memref<288xf32, #tpu.memory_space<smem>>
    %532 = vector.broadcast %531 : f32 to vector<16x16xf32>
    %533 = arith.mulf %522, %532 : vector<16x16xf32>
    %534 = arith.addf %500, %533 : vector<16x16xf32>
    %c203 = arith.constant 203 : index
    %535 = memref.load %arg2[%c203] : memref<288xf32, #tpu.memory_space<smem>>
    %536 = vector.broadcast %535 : f32 to vector<16x16xf32>
    %537 = arith.mulf %522, %536 : vector<16x16xf32>
    %538 = arith.addf %504, %537 : vector<16x16xf32>
    %c204 = arith.constant 204 : index
    %539 = memref.load %arg2[%c204] : memref<288xf32, #tpu.memory_space<smem>>
    %540 = vector.broadcast %539 : f32 to vector<16x16xf32>
    %541 = arith.mulf %522, %540 : vector<16x16xf32>
    %542 = arith.addf %508, %541 : vector<16x16xf32>
    %c205 = arith.constant 205 : index
    %543 = memref.load %arg2[%c205] : memref<288xf32, #tpu.memory_space<smem>>
    %544 = vector.broadcast %543 : f32 to vector<16x16xf32>
    %545 = arith.mulf %522, %544 : vector<16x16xf32>
    %546 = arith.addf %512, %545 : vector<16x16xf32>
    %c206 = arith.constant 206 : index
    %547 = memref.load %arg2[%c206] : memref<288xf32, #tpu.memory_space<smem>>
    %548 = vector.broadcast %547 : f32 to vector<16x16xf32>
    %549 = arith.mulf %522, %548 : vector<16x16xf32>
    %550 = arith.addf %516, %549 : vector<16x16xf32>
    %c207 = arith.constant 207 : index
    %551 = memref.load %arg2[%c207] : memref<288xf32, #tpu.memory_space<smem>>
    %552 = vector.broadcast %551 : f32 to vector<16x16xf32>
    %553 = arith.mulf %522, %552 : vector<16x16xf32>
    %554 = arith.addf %520, %553 : vector<16x16xf32>
    %c1_85 = arith.constant 1 : index
    %c2_86 = arith.constant 2 : index
    %c1_87 = arith.constant 1 : index
    %555 = vector.load %arg7[%c1_85, %c2_86, %c1_87] : memref<4x18x18xf32, #tpu.memory_space<vmem>>, vector<1x16x16xf32>
    %556 = vector.shape_cast %555 : vector<1x16x16xf32> to vector<16x16xf32>
    %c232 = arith.constant 232 : index
    %557 = memref.load %arg2[%c232] : memref<288xf32, #tpu.memory_space<smem>>
    %558 = vector.broadcast %557 : f32 to vector<16x16xf32>
    %559 = arith.mulf %556, %558 : vector<16x16xf32>
    %560 = arith.addf %526, %559 : vector<16x16xf32>
    %c233 = arith.constant 233 : index
    %561 = memref.load %arg2[%c233] : memref<288xf32, #tpu.memory_space<smem>>
    %562 = vector.broadcast %561 : f32 to vector<16x16xf32>
    %563 = arith.mulf %556, %562 : vector<16x16xf32>
    %564 = arith.addf %530, %563 : vector<16x16xf32>
    %c234 = arith.constant 234 : index
    %565 = memref.load %arg2[%c234] : memref<288xf32, #tpu.memory_space<smem>>
    %566 = vector.broadcast %565 : f32 to vector<16x16xf32>
    %567 = arith.mulf %556, %566 : vector<16x16xf32>
    %568 = arith.addf %534, %567 : vector<16x16xf32>
    %c235 = arith.constant 235 : index
    %569 = memref.load %arg2[%c235] : memref<288xf32, #tpu.memory_space<smem>>
    %570 = vector.broadcast %569 : f32 to vector<16x16xf32>
    %571 = arith.mulf %556, %570 : vector<16x16xf32>
    %572 = arith.addf %538, %571 : vector<16x16xf32>
    %c236 = arith.constant 236 : index
    %573 = memref.load %arg2[%c236] : memref<288xf32, #tpu.memory_space<smem>>
    %574 = vector.broadcast %573 : f32 to vector<16x16xf32>
    %575 = arith.mulf %556, %574 : vector<16x16xf32>
    %576 = arith.addf %542, %575 : vector<16x16xf32>
    %c237 = arith.constant 237 : index
    %577 = memref.load %arg2[%c237] : memref<288xf32, #tpu.memory_space<smem>>
    %578 = vector.broadcast %577 : f32 to vector<16x16xf32>
    %579 = arith.mulf %556, %578 : vector<16x16xf32>
    %580 = arith.addf %546, %579 : vector<16x16xf32>
    %c238 = arith.constant 238 : index
    %581 = memref.load %arg2[%c238] : memref<288xf32, #tpu.memory_space<smem>>
    %582 = vector.broadcast %581 : f32 to vector<16x16xf32>
    %583 = arith.mulf %556, %582 : vector<16x16xf32>
    %584 = arith.addf %550, %583 : vector<16x16xf32>
    %c239 = arith.constant 239 : index
    %585 = memref.load %arg2[%c239] : memref<288xf32, #tpu.memory_space<smem>>
    %586 = vector.broadcast %585 : f32 to vector<16x16xf32>
    %587 = arith.mulf %556, %586 : vector<16x16xf32>
    %588 = arith.addf %554, %587 : vector<16x16xf32>
    %c1_88 = arith.constant 1 : index
    %c2_89 = arith.constant 2 : index
    %c2_90 = arith.constant 2 : index
    %589 = vector.load %arg7[%c1_88, %c2_89, %c2_90] : memref<4x18x18xf32, #tpu.memory_space<vmem>>, vector<1x16x16xf32>
    %590 = vector.shape_cast %589 : vector<1x16x16xf32> to vector<16x16xf32>
    %c264 = arith.constant 264 : index
    %591 = memref.load %arg2[%c264] : memref<288xf32, #tpu.memory_space<smem>>
    %592 = vector.broadcast %591 : f32 to vector<16x16xf32>
    %593 = arith.mulf %590, %592 : vector<16x16xf32>
    %594 = arith.addf %560, %593 : vector<16x16xf32>
    %c265 = arith.constant 265 : index
    %595 = memref.load %arg2[%c265] : memref<288xf32, #tpu.memory_space<smem>>
    %596 = vector.broadcast %595 : f32 to vector<16x16xf32>
    %597 = arith.mulf %590, %596 : vector<16x16xf32>
    %598 = arith.addf %564, %597 : vector<16x16xf32>
    %c266 = arith.constant 266 : index
    %599 = memref.load %arg2[%c266] : memref<288xf32, #tpu.memory_space<smem>>
    %600 = vector.broadcast %599 : f32 to vector<16x16xf32>
    %601 = arith.mulf %590, %600 : vector<16x16xf32>
    %602 = arith.addf %568, %601 : vector<16x16xf32>
    %c267 = arith.constant 267 : index
    %603 = memref.load %arg2[%c267] : memref<288xf32, #tpu.memory_space<smem>>
    %604 = vector.broadcast %603 : f32 to vector<16x16xf32>
    %605 = arith.mulf %590, %604 : vector<16x16xf32>
    %606 = arith.addf %572, %605 : vector<16x16xf32>
    %c268 = arith.constant 268 : index
    %607 = memref.load %arg2[%c268] : memref<288xf32, #tpu.memory_space<smem>>
    %608 = vector.broadcast %607 : f32 to vector<16x16xf32>
    %609 = arith.mulf %590, %608 : vector<16x16xf32>
    %610 = arith.addf %576, %609 : vector<16x16xf32>
    %c269 = arith.constant 269 : index
    %611 = memref.load %arg2[%c269] : memref<288xf32, #tpu.memory_space<smem>>
    %612 = vector.broadcast %611 : f32 to vector<16x16xf32>
    %613 = arith.mulf %590, %612 : vector<16x16xf32>
    %614 = arith.addf %580, %613 : vector<16x16xf32>
    %c270 = arith.constant 270 : index
    %615 = memref.load %arg2[%c270] : memref<288xf32, #tpu.memory_space<smem>>
    %616 = vector.broadcast %615 : f32 to vector<16x16xf32>
    %617 = arith.mulf %590, %616 : vector<16x16xf32>
    %618 = arith.addf %584, %617 : vector<16x16xf32>
    %c271 = arith.constant 271 : index
    %619 = memref.load %arg2[%c271] : memref<288xf32, #tpu.memory_space<smem>>
    %620 = vector.broadcast %619 : f32 to vector<16x16xf32>
    %621 = arith.mulf %590, %620 : vector<16x16xf32>
    %622 = arith.addf %588, %621 : vector<16x16xf32>
    %c2_91 = arith.constant 2 : index
    %c0_92 = arith.constant 0 : index
    %c0_93 = arith.constant 0 : index
    %623 = vector.load %arg7[%c2_91, %c0_92, %c0_93] : memref<4x18x18xf32, #tpu.memory_space<vmem>>, vector<1x16x16xf32>
    %624 = vector.shape_cast %623 : vector<1x16x16xf32> to vector<16x16xf32>
    %c16 = arith.constant 16 : index
    %625 = memref.load %arg2[%c16] : memref<288xf32, #tpu.memory_space<smem>>
    %626 = vector.broadcast %625 : f32 to vector<16x16xf32>
    %627 = arith.mulf %624, %626 : vector<16x16xf32>
    %628 = arith.addf %594, %627 : vector<16x16xf32>
    %c17_94 = arith.constant 17 : index
    %629 = memref.load %arg2[%c17_94] : memref<288xf32, #tpu.memory_space<smem>>
    %630 = vector.broadcast %629 : f32 to vector<16x16xf32>
    %631 = arith.mulf %624, %630 : vector<16x16xf32>
    %632 = arith.addf %598, %631 : vector<16x16xf32>
    %c18 = arith.constant 18 : index
    %633 = memref.load %arg2[%c18] : memref<288xf32, #tpu.memory_space<smem>>
    %634 = vector.broadcast %633 : f32 to vector<16x16xf32>
    %635 = arith.mulf %624, %634 : vector<16x16xf32>
    %636 = arith.addf %602, %635 : vector<16x16xf32>
    %c19 = arith.constant 19 : index
    %637 = memref.load %arg2[%c19] : memref<288xf32, #tpu.memory_space<smem>>
    %638 = vector.broadcast %637 : f32 to vector<16x16xf32>
    %639 = arith.mulf %624, %638 : vector<16x16xf32>
    %640 = arith.addf %606, %639 : vector<16x16xf32>
    %c20 = arith.constant 20 : index
    %641 = memref.load %arg2[%c20] : memref<288xf32, #tpu.memory_space<smem>>
    %642 = vector.broadcast %641 : f32 to vector<16x16xf32>
    %643 = arith.mulf %624, %642 : vector<16x16xf32>
    %644 = arith.addf %610, %643 : vector<16x16xf32>
    %c21 = arith.constant 21 : index
    %645 = memref.load %arg2[%c21] : memref<288xf32, #tpu.memory_space<smem>>
    %646 = vector.broadcast %645 : f32 to vector<16x16xf32>
    %647 = arith.mulf %624, %646 : vector<16x16xf32>
    %648 = arith.addf %614, %647 : vector<16x16xf32>
    %c22 = arith.constant 22 : index
    %649 = memref.load %arg2[%c22] : memref<288xf32, #tpu.memory_space<smem>>
    %650 = vector.broadcast %649 : f32 to vector<16x16xf32>
    %651 = arith.mulf %624, %650 : vector<16x16xf32>
    %652 = arith.addf %618, %651 : vector<16x16xf32>
    %c23 = arith.constant 23 : index
    %653 = memref.load %arg2[%c23] : memref<288xf32, #tpu.memory_space<smem>>
    %654 = vector.broadcast %653 : f32 to vector<16x16xf32>
    %655 = arith.mulf %624, %654 : vector<16x16xf32>
    %656 = arith.addf %622, %655 : vector<16x16xf32>
    %c2_95 = arith.constant 2 : index
    %c0_96 = arith.constant 0 : index
    %c1_97 = arith.constant 1 : index
    %657 = vector.load %arg7[%c2_95, %c0_96, %c1_97] : memref<4x18x18xf32, #tpu.memory_space<vmem>>, vector<1x16x16xf32>
    %658 = vector.shape_cast %657 : vector<1x16x16xf32> to vector<16x16xf32>
    %c48 = arith.constant 48 : index
    %659 = memref.load %arg2[%c48] : memref<288xf32, #tpu.memory_space<smem>>
    %660 = vector.broadcast %659 : f32 to vector<16x16xf32>
    %661 = arith.mulf %658, %660 : vector<16x16xf32>
    %662 = arith.addf %628, %661 : vector<16x16xf32>
    %c49 = arith.constant 49 : index
    %663 = memref.load %arg2[%c49] : memref<288xf32, #tpu.memory_space<smem>>
    %664 = vector.broadcast %663 : f32 to vector<16x16xf32>
    %665 = arith.mulf %658, %664 : vector<16x16xf32>
    %666 = arith.addf %632, %665 : vector<16x16xf32>
    %c50 = arith.constant 50 : index
    %667 = memref.load %arg2[%c50] : memref<288xf32, #tpu.memory_space<smem>>
    %668 = vector.broadcast %667 : f32 to vector<16x16xf32>
    %669 = arith.mulf %658, %668 : vector<16x16xf32>
    %670 = arith.addf %636, %669 : vector<16x16xf32>
    %c51 = arith.constant 51 : index
    %671 = memref.load %arg2[%c51] : memref<288xf32, #tpu.memory_space<smem>>
    %672 = vector.broadcast %671 : f32 to vector<16x16xf32>
    %673 = arith.mulf %658, %672 : vector<16x16xf32>
    %674 = arith.addf %640, %673 : vector<16x16xf32>
    %c52 = arith.constant 52 : index
    %675 = memref.load %arg2[%c52] : memref<288xf32, #tpu.memory_space<smem>>
    %676 = vector.broadcast %675 : f32 to vector<16x16xf32>
    %677 = arith.mulf %658, %676 : vector<16x16xf32>
    %678 = arith.addf %644, %677 : vector<16x16xf32>
    %c53 = arith.constant 53 : index
    %679 = memref.load %arg2[%c53] : memref<288xf32, #tpu.memory_space<smem>>
    %680 = vector.broadcast %679 : f32 to vector<16x16xf32>
    %681 = arith.mulf %658, %680 : vector<16x16xf32>
    %682 = arith.addf %648, %681 : vector<16x16xf32>
    %c54 = arith.constant 54 : index
    %683 = memref.load %arg2[%c54] : memref<288xf32, #tpu.memory_space<smem>>
    %684 = vector.broadcast %683 : f32 to vector<16x16xf32>
    %685 = arith.mulf %658, %684 : vector<16x16xf32>
    %686 = arith.addf %652, %685 : vector<16x16xf32>
    %c55 = arith.constant 55 : index
    %687 = memref.load %arg2[%c55] : memref<288xf32, #tpu.memory_space<smem>>
    %688 = vector.broadcast %687 : f32 to vector<16x16xf32>
    %689 = arith.mulf %658, %688 : vector<16x16xf32>
    %690 = arith.addf %656, %689 : vector<16x16xf32>
    %c2_98 = arith.constant 2 : index
    %c0_99 = arith.constant 0 : index
    %c2_100 = arith.constant 2 : index
    %691 = vector.load %arg7[%c2_98, %c0_99, %c2_100] : memref<4x18x18xf32, #tpu.memory_space<vmem>>, vector<1x16x16xf32>
    %692 = vector.shape_cast %691 : vector<1x16x16xf32> to vector<16x16xf32>
    %c80 = arith.constant 80 : index
    %693 = memref.load %arg2[%c80] : memref<288xf32, #tpu.memory_space<smem>>
    %694 = vector.broadcast %693 : f32 to vector<16x16xf32>
    %695 = arith.mulf %692, %694 : vector<16x16xf32>
    %696 = arith.addf %662, %695 : vector<16x16xf32>
    %c81 = arith.constant 81 : index
    %697 = memref.load %arg2[%c81] : memref<288xf32, #tpu.memory_space<smem>>
    %698 = vector.broadcast %697 : f32 to vector<16x16xf32>
    %699 = arith.mulf %692, %698 : vector<16x16xf32>
    %700 = arith.addf %666, %699 : vector<16x16xf32>
    %c82 = arith.constant 82 : index
    %701 = memref.load %arg2[%c82] : memref<288xf32, #tpu.memory_space<smem>>
    %702 = vector.broadcast %701 : f32 to vector<16x16xf32>
    %703 = arith.mulf %692, %702 : vector<16x16xf32>
    %704 = arith.addf %670, %703 : vector<16x16xf32>
    %c83 = arith.constant 83 : index
    %705 = memref.load %arg2[%c83] : memref<288xf32, #tpu.memory_space<smem>>
    %706 = vector.broadcast %705 : f32 to vector<16x16xf32>
    %707 = arith.mulf %692, %706 : vector<16x16xf32>
    %708 = arith.addf %674, %707 : vector<16x16xf32>
    %c84 = arith.constant 84 : index
    %709 = memref.load %arg2[%c84] : memref<288xf32, #tpu.memory_space<smem>>
    %710 = vector.broadcast %709 : f32 to vector<16x16xf32>
    %711 = arith.mulf %692, %710 : vector<16x16xf32>
    %712 = arith.addf %678, %711 : vector<16x16xf32>
    %c85 = arith.constant 85 : index
    %713 = memref.load %arg2[%c85] : memref<288xf32, #tpu.memory_space<smem>>
    %714 = vector.broadcast %713 : f32 to vector<16x16xf32>
    %715 = arith.mulf %692, %714 : vector<16x16xf32>
    %716 = arith.addf %682, %715 : vector<16x16xf32>
    %c86 = arith.constant 86 : index
    %717 = memref.load %arg2[%c86] : memref<288xf32, #tpu.memory_space<smem>>
    %718 = vector.broadcast %717 : f32 to vector<16x16xf32>
    %719 = arith.mulf %692, %718 : vector<16x16xf32>
    %720 = arith.addf %686, %719 : vector<16x16xf32>
    %c87 = arith.constant 87 : index
    %721 = memref.load %arg2[%c87] : memref<288xf32, #tpu.memory_space<smem>>
    %722 = vector.broadcast %721 : f32 to vector<16x16xf32>
    %723 = arith.mulf %692, %722 : vector<16x16xf32>
    %724 = arith.addf %690, %723 : vector<16x16xf32>
    %c2_101 = arith.constant 2 : index
    %c1_102 = arith.constant 1 : index
    %c0_103 = arith.constant 0 : index
    %725 = vector.load %arg7[%c2_101, %c1_102, %c0_103] : memref<4x18x18xf32, #tpu.memory_space<vmem>>, vector<1x16x16xf32>
    %726 = vector.shape_cast %725 : vector<1x16x16xf32> to vector<16x16xf32>
    %c112 = arith.constant 112 : index
    %727 = memref.load %arg2[%c112] : memref<288xf32, #tpu.memory_space<smem>>
    %728 = vector.broadcast %727 : f32 to vector<16x16xf32>
    %729 = arith.mulf %726, %728 : vector<16x16xf32>
    %730 = arith.addf %696, %729 : vector<16x16xf32>
    %c113 = arith.constant 113 : index
    %731 = memref.load %arg2[%c113] : memref<288xf32, #tpu.memory_space<smem>>
    %732 = vector.broadcast %731 : f32 to vector<16x16xf32>
    %733 = arith.mulf %726, %732 : vector<16x16xf32>
    %734 = arith.addf %700, %733 : vector<16x16xf32>
    %c114 = arith.constant 114 : index
    %735 = memref.load %arg2[%c114] : memref<288xf32, #tpu.memory_space<smem>>
    %736 = vector.broadcast %735 : f32 to vector<16x16xf32>
    %737 = arith.mulf %726, %736 : vector<16x16xf32>
    %738 = arith.addf %704, %737 : vector<16x16xf32>
    %c115 = arith.constant 115 : index
    %739 = memref.load %arg2[%c115] : memref<288xf32, #tpu.memory_space<smem>>
    %740 = vector.broadcast %739 : f32 to vector<16x16xf32>
    %741 = arith.mulf %726, %740 : vector<16x16xf32>
    %742 = arith.addf %708, %741 : vector<16x16xf32>
    %c116 = arith.constant 116 : index
    %743 = memref.load %arg2[%c116] : memref<288xf32, #tpu.memory_space<smem>>
    %744 = vector.broadcast %743 : f32 to vector<16x16xf32>
    %745 = arith.mulf %726, %744 : vector<16x16xf32>
    %746 = arith.addf %712, %745 : vector<16x16xf32>
    %c117 = arith.constant 117 : index
    %747 = memref.load %arg2[%c117] : memref<288xf32, #tpu.memory_space<smem>>
    %748 = vector.broadcast %747 : f32 to vector<16x16xf32>
    %749 = arith.mulf %726, %748 : vector<16x16xf32>
    %750 = arith.addf %716, %749 : vector<16x16xf32>
    %c118 = arith.constant 118 : index
    %751 = memref.load %arg2[%c118] : memref<288xf32, #tpu.memory_space<smem>>
    %752 = vector.broadcast %751 : f32 to vector<16x16xf32>
    %753 = arith.mulf %726, %752 : vector<16x16xf32>
    %754 = arith.addf %720, %753 : vector<16x16xf32>
    %c119 = arith.constant 119 : index
    %755 = memref.load %arg2[%c119] : memref<288xf32, #tpu.memory_space<smem>>
    %756 = vector.broadcast %755 : f32 to vector<16x16xf32>
    %757 = arith.mulf %726, %756 : vector<16x16xf32>
    %758 = arith.addf %724, %757 : vector<16x16xf32>
    %c2_104 = arith.constant 2 : index
    %c1_105 = arith.constant 1 : index
    %c1_106 = arith.constant 1 : index
    %759 = vector.load %arg7[%c2_104, %c1_105, %c1_106] : memref<4x18x18xf32, #tpu.memory_space<vmem>>, vector<1x16x16xf32>
    %760 = vector.shape_cast %759 : vector<1x16x16xf32> to vector<16x16xf32>
    %c144 = arith.constant 144 : index
    %761 = memref.load %arg2[%c144] : memref<288xf32, #tpu.memory_space<smem>>
    %762 = vector.broadcast %761 : f32 to vector<16x16xf32>
    %763 = arith.mulf %760, %762 : vector<16x16xf32>
    %764 = arith.addf %730, %763 : vector<16x16xf32>
    %c145 = arith.constant 145 : index
    %765 = memref.load %arg2[%c145] : memref<288xf32, #tpu.memory_space<smem>>
    %766 = vector.broadcast %765 : f32 to vector<16x16xf32>
    %767 = arith.mulf %760, %766 : vector<16x16xf32>
    %768 = arith.addf %734, %767 : vector<16x16xf32>
    %c146 = arith.constant 146 : index
    %769 = memref.load %arg2[%c146] : memref<288xf32, #tpu.memory_space<smem>>
    %770 = vector.broadcast %769 : f32 to vector<16x16xf32>
    %771 = arith.mulf %760, %770 : vector<16x16xf32>
    %772 = arith.addf %738, %771 : vector<16x16xf32>
    %c147 = arith.constant 147 : index
    %773 = memref.load %arg2[%c147] : memref<288xf32, #tpu.memory_space<smem>>
    %774 = vector.broadcast %773 : f32 to vector<16x16xf32>
    %775 = arith.mulf %760, %774 : vector<16x16xf32>
    %776 = arith.addf %742, %775 : vector<16x16xf32>
    %c148 = arith.constant 148 : index
    %777 = memref.load %arg2[%c148] : memref<288xf32, #tpu.memory_space<smem>>
    %778 = vector.broadcast %777 : f32 to vector<16x16xf32>
    %779 = arith.mulf %760, %778 : vector<16x16xf32>
    %780 = arith.addf %746, %779 : vector<16x16xf32>
    %c149 = arith.constant 149 : index
    %781 = memref.load %arg2[%c149] : memref<288xf32, #tpu.memory_space<smem>>
    %782 = vector.broadcast %781 : f32 to vector<16x16xf32>
    %783 = arith.mulf %760, %782 : vector<16x16xf32>
    %784 = arith.addf %750, %783 : vector<16x16xf32>
    %c150 = arith.constant 150 : index
    %785 = memref.load %arg2[%c150] : memref<288xf32, #tpu.memory_space<smem>>
    %786 = vector.broadcast %785 : f32 to vector<16x16xf32>
    %787 = arith.mulf %760, %786 : vector<16x16xf32>
    %788 = arith.addf %754, %787 : vector<16x16xf32>
    %c151 = arith.constant 151 : index
    %789 = memref.load %arg2[%c151] : memref<288xf32, #tpu.memory_space<smem>>
    %790 = vector.broadcast %789 : f32 to vector<16x16xf32>
    %791 = arith.mulf %760, %790 : vector<16x16xf32>
    %792 = arith.addf %758, %791 : vector<16x16xf32>
    %c2_107 = arith.constant 2 : index
    %c1_108 = arith.constant 1 : index
    %c2_109 = arith.constant 2 : index
    %793 = vector.load %arg7[%c2_107, %c1_108, %c2_109] : memref<4x18x18xf32, #tpu.memory_space<vmem>>, vector<1x16x16xf32>
    %794 = vector.shape_cast %793 : vector<1x16x16xf32> to vector<16x16xf32>
    %c176 = arith.constant 176 : index
    %795 = memref.load %arg2[%c176] : memref<288xf32, #tpu.memory_space<smem>>
    %796 = vector.broadcast %795 : f32 to vector<16x16xf32>
    %797 = arith.mulf %794, %796 : vector<16x16xf32>
    %798 = arith.addf %764, %797 : vector<16x16xf32>
    %c177 = arith.constant 177 : index
    %799 = memref.load %arg2[%c177] : memref<288xf32, #tpu.memory_space<smem>>
    %800 = vector.broadcast %799 : f32 to vector<16x16xf32>
    %801 = arith.mulf %794, %800 : vector<16x16xf32>
    %802 = arith.addf %768, %801 : vector<16x16xf32>
    %c178 = arith.constant 178 : index
    %803 = memref.load %arg2[%c178] : memref<288xf32, #tpu.memory_space<smem>>
    %804 = vector.broadcast %803 : f32 to vector<16x16xf32>
    %805 = arith.mulf %794, %804 : vector<16x16xf32>
    %806 = arith.addf %772, %805 : vector<16x16xf32>
    %c179 = arith.constant 179 : index
    %807 = memref.load %arg2[%c179] : memref<288xf32, #tpu.memory_space<smem>>
    %808 = vector.broadcast %807 : f32 to vector<16x16xf32>
    %809 = arith.mulf %794, %808 : vector<16x16xf32>
    %810 = arith.addf %776, %809 : vector<16x16xf32>
    %c180 = arith.constant 180 : index
    %811 = memref.load %arg2[%c180] : memref<288xf32, #tpu.memory_space<smem>>
    %812 = vector.broadcast %811 : f32 to vector<16x16xf32>
    %813 = arith.mulf %794, %812 : vector<16x16xf32>
    %814 = arith.addf %780, %813 : vector<16x16xf32>
    %c181 = arith.constant 181 : index
    %815 = memref.load %arg2[%c181] : memref<288xf32, #tpu.memory_space<smem>>
    %816 = vector.broadcast %815 : f32 to vector<16x16xf32>
    %817 = arith.mulf %794, %816 : vector<16x16xf32>
    %818 = arith.addf %784, %817 : vector<16x16xf32>
    %c182 = arith.constant 182 : index
    %819 = memref.load %arg2[%c182] : memref<288xf32, #tpu.memory_space<smem>>
    %820 = vector.broadcast %819 : f32 to vector<16x16xf32>
    %821 = arith.mulf %794, %820 : vector<16x16xf32>
    %822 = arith.addf %788, %821 : vector<16x16xf32>
    %c183 = arith.constant 183 : index
    %823 = memref.load %arg2[%c183] : memref<288xf32, #tpu.memory_space<smem>>
    %824 = vector.broadcast %823 : f32 to vector<16x16xf32>
    %825 = arith.mulf %794, %824 : vector<16x16xf32>
    %826 = arith.addf %792, %825 : vector<16x16xf32>
    %c2_110 = arith.constant 2 : index
    %c2_111 = arith.constant 2 : index
    %c0_112 = arith.constant 0 : index
    %827 = vector.load %arg7[%c2_110, %c2_111, %c0_112] : memref<4x18x18xf32, #tpu.memory_space<vmem>>, vector<1x16x16xf32>
    %828 = vector.shape_cast %827 : vector<1x16x16xf32> to vector<16x16xf32>
    %c208 = arith.constant 208 : index
    %829 = memref.load %arg2[%c208] : memref<288xf32, #tpu.memory_space<smem>>
    %830 = vector.broadcast %829 : f32 to vector<16x16xf32>
    %831 = arith.mulf %828, %830 : vector<16x16xf32>
    %832 = arith.addf %798, %831 : vector<16x16xf32>
    %c209 = arith.constant 209 : index
    %833 = memref.load %arg2[%c209] : memref<288xf32, #tpu.memory_space<smem>>
    %834 = vector.broadcast %833 : f32 to vector<16x16xf32>
    %835 = arith.mulf %828, %834 : vector<16x16xf32>
    %836 = arith.addf %802, %835 : vector<16x16xf32>
    %c210 = arith.constant 210 : index
    %837 = memref.load %arg2[%c210] : memref<288xf32, #tpu.memory_space<smem>>
    %838 = vector.broadcast %837 : f32 to vector<16x16xf32>
    %839 = arith.mulf %828, %838 : vector<16x16xf32>
    %840 = arith.addf %806, %839 : vector<16x16xf32>
    %c211 = arith.constant 211 : index
    %841 = memref.load %arg2[%c211] : memref<288xf32, #tpu.memory_space<smem>>
    %842 = vector.broadcast %841 : f32 to vector<16x16xf32>
    %843 = arith.mulf %828, %842 : vector<16x16xf32>
    %844 = arith.addf %810, %843 : vector<16x16xf32>
    %c212 = arith.constant 212 : index
    %845 = memref.load %arg2[%c212] : memref<288xf32, #tpu.memory_space<smem>>
    %846 = vector.broadcast %845 : f32 to vector<16x16xf32>
    %847 = arith.mulf %828, %846 : vector<16x16xf32>
    %848 = arith.addf %814, %847 : vector<16x16xf32>
    %c213 = arith.constant 213 : index
    %849 = memref.load %arg2[%c213] : memref<288xf32, #tpu.memory_space<smem>>
    %850 = vector.broadcast %849 : f32 to vector<16x16xf32>
    %851 = arith.mulf %828, %850 : vector<16x16xf32>
    %852 = arith.addf %818, %851 : vector<16x16xf32>
    %c214 = arith.constant 214 : index
    %853 = memref.load %arg2[%c214] : memref<288xf32, #tpu.memory_space<smem>>
    %854 = vector.broadcast %853 : f32 to vector<16x16xf32>
    %855 = arith.mulf %828, %854 : vector<16x16xf32>
    %856 = arith.addf %822, %855 : vector<16x16xf32>
    %c215 = arith.constant 215 : index
    %857 = memref.load %arg2[%c215] : memref<288xf32, #tpu.memory_space<smem>>
    %858 = vector.broadcast %857 : f32 to vector<16x16xf32>
    %859 = arith.mulf %828, %858 : vector<16x16xf32>
    %860 = arith.addf %826, %859 : vector<16x16xf32>
    %c2_113 = arith.constant 2 : index
    %c2_114 = arith.constant 2 : index
    %c1_115 = arith.constant 1 : index
    %861 = vector.load %arg7[%c2_113, %c2_114, %c1_115] : memref<4x18x18xf32, #tpu.memory_space<vmem>>, vector<1x16x16xf32>
    %862 = vector.shape_cast %861 : vector<1x16x16xf32> to vector<16x16xf32>
    %c240 = arith.constant 240 : index
    %863 = memref.load %arg2[%c240] : memref<288xf32, #tpu.memory_space<smem>>
    %864 = vector.broadcast %863 : f32 to vector<16x16xf32>
    %865 = arith.mulf %862, %864 : vector<16x16xf32>
    %866 = arith.addf %832, %865 : vector<16x16xf32>
    %c241 = arith.constant 241 : index
    %867 = memref.load %arg2[%c241] : memref<288xf32, #tpu.memory_space<smem>>
    %868 = vector.broadcast %867 : f32 to vector<16x16xf32>
    %869 = arith.mulf %862, %868 : vector<16x16xf32>
    %870 = arith.addf %836, %869 : vector<16x16xf32>
    %c242 = arith.constant 242 : index
    %871 = memref.load %arg2[%c242] : memref<288xf32, #tpu.memory_space<smem>>
    %872 = vector.broadcast %871 : f32 to vector<16x16xf32>
    %873 = arith.mulf %862, %872 : vector<16x16xf32>
    %874 = arith.addf %840, %873 : vector<16x16xf32>
    %c243 = arith.constant 243 : index
    %875 = memref.load %arg2[%c243] : memref<288xf32, #tpu.memory_space<smem>>
    %876 = vector.broadcast %875 : f32 to vector<16x16xf32>
    %877 = arith.mulf %862, %876 : vector<16x16xf32>
    %878 = arith.addf %844, %877 : vector<16x16xf32>
    %c244 = arith.constant 244 : index
    %879 = memref.load %arg2[%c244] : memref<288xf32, #tpu.memory_space<smem>>
    %880 = vector.broadcast %879 : f32 to vector<16x16xf32>
    %881 = arith.mulf %862, %880 : vector<16x16xf32>
    %882 = arith.addf %848, %881 : vector<16x16xf32>
    %c245 = arith.constant 245 : index
    %883 = memref.load %arg2[%c245] : memref<288xf32, #tpu.memory_space<smem>>
    %884 = vector.broadcast %883 : f32 to vector<16x16xf32>
    %885 = arith.mulf %862, %884 : vector<16x16xf32>
    %886 = arith.addf %852, %885 : vector<16x16xf32>
    %c246 = arith.constant 246 : index
    %887 = memref.load %arg2[%c246] : memref<288xf32, #tpu.memory_space<smem>>
    %888 = vector.broadcast %887 : f32 to vector<16x16xf32>
    %889 = arith.mulf %862, %888 : vector<16x16xf32>
    %890 = arith.addf %856, %889 : vector<16x16xf32>
    %c247 = arith.constant 247 : index
    %891 = memref.load %arg2[%c247] : memref<288xf32, #tpu.memory_space<smem>>
    %892 = vector.broadcast %891 : f32 to vector<16x16xf32>
    %893 = arith.mulf %862, %892 : vector<16x16xf32>
    %894 = arith.addf %860, %893 : vector<16x16xf32>
    %c2_116 = arith.constant 2 : index
    %c2_117 = arith.constant 2 : index
    %c2_118 = arith.constant 2 : index
    %895 = vector.load %arg7[%c2_116, %c2_117, %c2_118] : memref<4x18x18xf32, #tpu.memory_space<vmem>>, vector<1x16x16xf32>
    %896 = vector.shape_cast %895 : vector<1x16x16xf32> to vector<16x16xf32>
    %c272 = arith.constant 272 : index
    %897 = memref.load %arg2[%c272] : memref<288xf32, #tpu.memory_space<smem>>
    %898 = vector.broadcast %897 : f32 to vector<16x16xf32>
    %899 = arith.mulf %896, %898 : vector<16x16xf32>
    %900 = arith.addf %866, %899 : vector<16x16xf32>
    %c273 = arith.constant 273 : index
    %901 = memref.load %arg2[%c273] : memref<288xf32, #tpu.memory_space<smem>>
    %902 = vector.broadcast %901 : f32 to vector<16x16xf32>
    %903 = arith.mulf %896, %902 : vector<16x16xf32>
    %904 = arith.addf %870, %903 : vector<16x16xf32>
    %c274 = arith.constant 274 : index
    %905 = memref.load %arg2[%c274] : memref<288xf32, #tpu.memory_space<smem>>
    %906 = vector.broadcast %905 : f32 to vector<16x16xf32>
    %907 = arith.mulf %896, %906 : vector<16x16xf32>
    %908 = arith.addf %874, %907 : vector<16x16xf32>
    %c275 = arith.constant 275 : index
    %909 = memref.load %arg2[%c275] : memref<288xf32, #tpu.memory_space<smem>>
    %910 = vector.broadcast %909 : f32 to vector<16x16xf32>
    %911 = arith.mulf %896, %910 : vector<16x16xf32>
    %912 = arith.addf %878, %911 : vector<16x16xf32>
    %c276 = arith.constant 276 : index
    %913 = memref.load %arg2[%c276] : memref<288xf32, #tpu.memory_space<smem>>
    %914 = vector.broadcast %913 : f32 to vector<16x16xf32>
    %915 = arith.mulf %896, %914 : vector<16x16xf32>
    %916 = arith.addf %882, %915 : vector<16x16xf32>
    %c277 = arith.constant 277 : index
    %917 = memref.load %arg2[%c277] : memref<288xf32, #tpu.memory_space<smem>>
    %918 = vector.broadcast %917 : f32 to vector<16x16xf32>
    %919 = arith.mulf %896, %918 : vector<16x16xf32>
    %920 = arith.addf %886, %919 : vector<16x16xf32>
    %c278 = arith.constant 278 : index
    %921 = memref.load %arg2[%c278] : memref<288xf32, #tpu.memory_space<smem>>
    %922 = vector.broadcast %921 : f32 to vector<16x16xf32>
    %923 = arith.mulf %896, %922 : vector<16x16xf32>
    %924 = arith.addf %890, %923 : vector<16x16xf32>
    %c279 = arith.constant 279 : index
    %925 = memref.load %arg2[%c279] : memref<288xf32, #tpu.memory_space<smem>>
    %926 = vector.broadcast %925 : f32 to vector<16x16xf32>
    %927 = arith.mulf %896, %926 : vector<16x16xf32>
    %928 = arith.addf %894, %927 : vector<16x16xf32>
    %c3_119 = arith.constant 3 : index
    %c0_120 = arith.constant 0 : index
    %c0_121 = arith.constant 0 : index
    %929 = vector.load %arg7[%c3_119, %c0_120, %c0_121] : memref<4x18x18xf32, #tpu.memory_space<vmem>>, vector<1x16x16xf32>
    %930 = vector.shape_cast %929 : vector<1x16x16xf32> to vector<16x16xf32>
    %c24 = arith.constant 24 : index
    %931 = memref.load %arg2[%c24] : memref<288xf32, #tpu.memory_space<smem>>
    %932 = vector.broadcast %931 : f32 to vector<16x16xf32>
    %933 = arith.mulf %930, %932 : vector<16x16xf32>
    %934 = arith.addf %900, %933 : vector<16x16xf32>
    %c25 = arith.constant 25 : index
    %935 = memref.load %arg2[%c25] : memref<288xf32, #tpu.memory_space<smem>>
    %936 = vector.broadcast %935 : f32 to vector<16x16xf32>
    %937 = arith.mulf %930, %936 : vector<16x16xf32>
    %938 = arith.addf %904, %937 : vector<16x16xf32>
    %c26 = arith.constant 26 : index
    %939 = memref.load %arg2[%c26] : memref<288xf32, #tpu.memory_space<smem>>
    %940 = vector.broadcast %939 : f32 to vector<16x16xf32>
    %941 = arith.mulf %930, %940 : vector<16x16xf32>
    %942 = arith.addf %908, %941 : vector<16x16xf32>
    %c27 = arith.constant 27 : index
    %943 = memref.load %arg2[%c27] : memref<288xf32, #tpu.memory_space<smem>>
    %944 = vector.broadcast %943 : f32 to vector<16x16xf32>
    %945 = arith.mulf %930, %944 : vector<16x16xf32>
    %946 = arith.addf %912, %945 : vector<16x16xf32>
    %c28 = arith.constant 28 : index
    %947 = memref.load %arg2[%c28] : memref<288xf32, #tpu.memory_space<smem>>
    %948 = vector.broadcast %947 : f32 to vector<16x16xf32>
    %949 = arith.mulf %930, %948 : vector<16x16xf32>
    %950 = arith.addf %916, %949 : vector<16x16xf32>
    %c29 = arith.constant 29 : index
    %951 = memref.load %arg2[%c29] : memref<288xf32, #tpu.memory_space<smem>>
    %952 = vector.broadcast %951 : f32 to vector<16x16xf32>
    %953 = arith.mulf %930, %952 : vector<16x16xf32>
    %954 = arith.addf %920, %953 : vector<16x16xf32>
    %c30 = arith.constant 30 : index
    %955 = memref.load %arg2[%c30] : memref<288xf32, #tpu.memory_space<smem>>
    %956 = vector.broadcast %955 : f32 to vector<16x16xf32>
    %957 = arith.mulf %930, %956 : vector<16x16xf32>
    %958 = arith.addf %924, %957 : vector<16x16xf32>
    %c31 = arith.constant 31 : index
    %959 = memref.load %arg2[%c31] : memref<288xf32, #tpu.memory_space<smem>>
    %960 = vector.broadcast %959 : f32 to vector<16x16xf32>
    %961 = arith.mulf %930, %960 : vector<16x16xf32>
    %962 = arith.addf %928, %961 : vector<16x16xf32>
    %c3_122 = arith.constant 3 : index
    %c0_123 = arith.constant 0 : index
    %c1_124 = arith.constant 1 : index
    %963 = vector.load %arg7[%c3_122, %c0_123, %c1_124] : memref<4x18x18xf32, #tpu.memory_space<vmem>>, vector<1x16x16xf32>
    %964 = vector.shape_cast %963 : vector<1x16x16xf32> to vector<16x16xf32>
    %c56 = arith.constant 56 : index
    %965 = memref.load %arg2[%c56] : memref<288xf32, #tpu.memory_space<smem>>
    %966 = vector.broadcast %965 : f32 to vector<16x16xf32>
    %967 = arith.mulf %964, %966 : vector<16x16xf32>
    %968 = arith.addf %934, %967 : vector<16x16xf32>
    %c57 = arith.constant 57 : index
    %969 = memref.load %arg2[%c57] : memref<288xf32, #tpu.memory_space<smem>>
    %970 = vector.broadcast %969 : f32 to vector<16x16xf32>
    %971 = arith.mulf %964, %970 : vector<16x16xf32>
    %972 = arith.addf %938, %971 : vector<16x16xf32>
    %c58 = arith.constant 58 : index
    %973 = memref.load %arg2[%c58] : memref<288xf32, #tpu.memory_space<smem>>
    %974 = vector.broadcast %973 : f32 to vector<16x16xf32>
    %975 = arith.mulf %964, %974 : vector<16x16xf32>
    %976 = arith.addf %942, %975 : vector<16x16xf32>
    %c59 = arith.constant 59 : index
    %977 = memref.load %arg2[%c59] : memref<288xf32, #tpu.memory_space<smem>>
    %978 = vector.broadcast %977 : f32 to vector<16x16xf32>
    %979 = arith.mulf %964, %978 : vector<16x16xf32>
    %980 = arith.addf %946, %979 : vector<16x16xf32>
    %c60 = arith.constant 60 : index
    %981 = memref.load %arg2[%c60] : memref<288xf32, #tpu.memory_space<smem>>
    %982 = vector.broadcast %981 : f32 to vector<16x16xf32>
    %983 = arith.mulf %964, %982 : vector<16x16xf32>
    %984 = arith.addf %950, %983 : vector<16x16xf32>
    %c61 = arith.constant 61 : index
    %985 = memref.load %arg2[%c61] : memref<288xf32, #tpu.memory_space<smem>>
    %986 = vector.broadcast %985 : f32 to vector<16x16xf32>
    %987 = arith.mulf %964, %986 : vector<16x16xf32>
    %988 = arith.addf %954, %987 : vector<16x16xf32>
    %c62 = arith.constant 62 : index
    %989 = memref.load %arg2[%c62] : memref<288xf32, #tpu.memory_space<smem>>
    %990 = vector.broadcast %989 : f32 to vector<16x16xf32>
    %991 = arith.mulf %964, %990 : vector<16x16xf32>
    %992 = arith.addf %958, %991 : vector<16x16xf32>
    %c63 = arith.constant 63 : index
    %993 = memref.load %arg2[%c63] : memref<288xf32, #tpu.memory_space<smem>>
    %994 = vector.broadcast %993 : f32 to vector<16x16xf32>
    %995 = arith.mulf %964, %994 : vector<16x16xf32>
    %996 = arith.addf %962, %995 : vector<16x16xf32>
    %c3_125 = arith.constant 3 : index
    %c0_126 = arith.constant 0 : index
    %c2_127 = arith.constant 2 : index
    %997 = vector.load %arg7[%c3_125, %c0_126, %c2_127] : memref<4x18x18xf32, #tpu.memory_space<vmem>>, vector<1x16x16xf32>
    %998 = vector.shape_cast %997 : vector<1x16x16xf32> to vector<16x16xf32>
    %c88 = arith.constant 88 : index
    %999 = memref.load %arg2[%c88] : memref<288xf32, #tpu.memory_space<smem>>
    %1000 = vector.broadcast %999 : f32 to vector<16x16xf32>
    %1001 = arith.mulf %998, %1000 : vector<16x16xf32>
    %1002 = arith.addf %968, %1001 : vector<16x16xf32>
    %c89 = arith.constant 89 : index
    %1003 = memref.load %arg2[%c89] : memref<288xf32, #tpu.memory_space<smem>>
    %1004 = vector.broadcast %1003 : f32 to vector<16x16xf32>
    %1005 = arith.mulf %998, %1004 : vector<16x16xf32>
    %1006 = arith.addf %972, %1005 : vector<16x16xf32>
    %c90 = arith.constant 90 : index
    %1007 = memref.load %arg2[%c90] : memref<288xf32, #tpu.memory_space<smem>>
    %1008 = vector.broadcast %1007 : f32 to vector<16x16xf32>
    %1009 = arith.mulf %998, %1008 : vector<16x16xf32>
    %1010 = arith.addf %976, %1009 : vector<16x16xf32>
    %c91 = arith.constant 91 : index
    %1011 = memref.load %arg2[%c91] : memref<288xf32, #tpu.memory_space<smem>>
    %1012 = vector.broadcast %1011 : f32 to vector<16x16xf32>
    %1013 = arith.mulf %998, %1012 : vector<16x16xf32>
    %1014 = arith.addf %980, %1013 : vector<16x16xf32>
    %c92 = arith.constant 92 : index
    %1015 = memref.load %arg2[%c92] : memref<288xf32, #tpu.memory_space<smem>>
    %1016 = vector.broadcast %1015 : f32 to vector<16x16xf32>
    %1017 = arith.mulf %998, %1016 : vector<16x16xf32>
    %1018 = arith.addf %984, %1017 : vector<16x16xf32>
    %c93 = arith.constant 93 : index
    %1019 = memref.load %arg2[%c93] : memref<288xf32, #tpu.memory_space<smem>>
    %1020 = vector.broadcast %1019 : f32 to vector<16x16xf32>
    %1021 = arith.mulf %998, %1020 : vector<16x16xf32>
    %1022 = arith.addf %988, %1021 : vector<16x16xf32>
    %c94 = arith.constant 94 : index
    %1023 = memref.load %arg2[%c94] : memref<288xf32, #tpu.memory_space<smem>>
    %1024 = vector.broadcast %1023 : f32 to vector<16x16xf32>
    %1025 = arith.mulf %998, %1024 : vector<16x16xf32>
    %1026 = arith.addf %992, %1025 : vector<16x16xf32>
    %c95 = arith.constant 95 : index
    %1027 = memref.load %arg2[%c95] : memref<288xf32, #tpu.memory_space<smem>>
    %1028 = vector.broadcast %1027 : f32 to vector<16x16xf32>
    %1029 = arith.mulf %998, %1028 : vector<16x16xf32>
    %1030 = arith.addf %996, %1029 : vector<16x16xf32>
    %c3_128 = arith.constant 3 : index
    %c1_129 = arith.constant 1 : index
    %c0_130 = arith.constant 0 : index
    %1031 = vector.load %arg7[%c3_128, %c1_129, %c0_130] : memref<4x18x18xf32, #tpu.memory_space<vmem>>, vector<1x16x16xf32>
    %1032 = vector.shape_cast %1031 : vector<1x16x16xf32> to vector<16x16xf32>
    %c120 = arith.constant 120 : index
    %1033 = memref.load %arg2[%c120] : memref<288xf32, #tpu.memory_space<smem>>
    %1034 = vector.broadcast %1033 : f32 to vector<16x16xf32>
    %1035 = arith.mulf %1032, %1034 : vector<16x16xf32>
    %1036 = arith.addf %1002, %1035 : vector<16x16xf32>
    %c121 = arith.constant 121 : index
    %1037 = memref.load %arg2[%c121] : memref<288xf32, #tpu.memory_space<smem>>
    %1038 = vector.broadcast %1037 : f32 to vector<16x16xf32>
    %1039 = arith.mulf %1032, %1038 : vector<16x16xf32>
    %1040 = arith.addf %1006, %1039 : vector<16x16xf32>
    %c122 = arith.constant 122 : index
    %1041 = memref.load %arg2[%c122] : memref<288xf32, #tpu.memory_space<smem>>
    %1042 = vector.broadcast %1041 : f32 to vector<16x16xf32>
    %1043 = arith.mulf %1032, %1042 : vector<16x16xf32>
    %1044 = arith.addf %1010, %1043 : vector<16x16xf32>
    %c123 = arith.constant 123 : index
    %1045 = memref.load %arg2[%c123] : memref<288xf32, #tpu.memory_space<smem>>
    %1046 = vector.broadcast %1045 : f32 to vector<16x16xf32>
    %1047 = arith.mulf %1032, %1046 : vector<16x16xf32>
    %1048 = arith.addf %1014, %1047 : vector<16x16xf32>
    %c124 = arith.constant 124 : index
    %1049 = memref.load %arg2[%c124] : memref<288xf32, #tpu.memory_space<smem>>
    %1050 = vector.broadcast %1049 : f32 to vector<16x16xf32>
    %1051 = arith.mulf %1032, %1050 : vector<16x16xf32>
    %1052 = arith.addf %1018, %1051 : vector<16x16xf32>
    %c125 = arith.constant 125 : index
    %1053 = memref.load %arg2[%c125] : memref<288xf32, #tpu.memory_space<smem>>
    %1054 = vector.broadcast %1053 : f32 to vector<16x16xf32>
    %1055 = arith.mulf %1032, %1054 : vector<16x16xf32>
    %1056 = arith.addf %1022, %1055 : vector<16x16xf32>
    %c126 = arith.constant 126 : index
    %1057 = memref.load %arg2[%c126] : memref<288xf32, #tpu.memory_space<smem>>
    %1058 = vector.broadcast %1057 : f32 to vector<16x16xf32>
    %1059 = arith.mulf %1032, %1058 : vector<16x16xf32>
    %1060 = arith.addf %1026, %1059 : vector<16x16xf32>
    %c127 = arith.constant 127 : index
    %1061 = memref.load %arg2[%c127] : memref<288xf32, #tpu.memory_space<smem>>
    %1062 = vector.broadcast %1061 : f32 to vector<16x16xf32>
    %1063 = arith.mulf %1032, %1062 : vector<16x16xf32>
    %1064 = arith.addf %1030, %1063 : vector<16x16xf32>
    %c3_131 = arith.constant 3 : index
    %c1_132 = arith.constant 1 : index
    %c1_133 = arith.constant 1 : index
    %1065 = vector.load %arg7[%c3_131, %c1_132, %c1_133] : memref<4x18x18xf32, #tpu.memory_space<vmem>>, vector<1x16x16xf32>
    %1066 = vector.shape_cast %1065 : vector<1x16x16xf32> to vector<16x16xf32>
    %c152 = arith.constant 152 : index
    %1067 = memref.load %arg2[%c152] : memref<288xf32, #tpu.memory_space<smem>>
    %1068 = vector.broadcast %1067 : f32 to vector<16x16xf32>
    %1069 = arith.mulf %1066, %1068 : vector<16x16xf32>
    %1070 = arith.addf %1036, %1069 : vector<16x16xf32>
    %c153 = arith.constant 153 : index
    %1071 = memref.load %arg2[%c153] : memref<288xf32, #tpu.memory_space<smem>>
    %1072 = vector.broadcast %1071 : f32 to vector<16x16xf32>
    %1073 = arith.mulf %1066, %1072 : vector<16x16xf32>
    %1074 = arith.addf %1040, %1073 : vector<16x16xf32>
    %c154 = arith.constant 154 : index
    %1075 = memref.load %arg2[%c154] : memref<288xf32, #tpu.memory_space<smem>>
    %1076 = vector.broadcast %1075 : f32 to vector<16x16xf32>
    %1077 = arith.mulf %1066, %1076 : vector<16x16xf32>
    %1078 = arith.addf %1044, %1077 : vector<16x16xf32>
    %c155 = arith.constant 155 : index
    %1079 = memref.load %arg2[%c155] : memref<288xf32, #tpu.memory_space<smem>>
    %1080 = vector.broadcast %1079 : f32 to vector<16x16xf32>
    %1081 = arith.mulf %1066, %1080 : vector<16x16xf32>
    %1082 = arith.addf %1048, %1081 : vector<16x16xf32>
    %c156 = arith.constant 156 : index
    %1083 = memref.load %arg2[%c156] : memref<288xf32, #tpu.memory_space<smem>>
    %1084 = vector.broadcast %1083 : f32 to vector<16x16xf32>
    %1085 = arith.mulf %1066, %1084 : vector<16x16xf32>
    %1086 = arith.addf %1052, %1085 : vector<16x16xf32>
    %c157 = arith.constant 157 : index
    %1087 = memref.load %arg2[%c157] : memref<288xf32, #tpu.memory_space<smem>>
    %1088 = vector.broadcast %1087 : f32 to vector<16x16xf32>
    %1089 = arith.mulf %1066, %1088 : vector<16x16xf32>
    %1090 = arith.addf %1056, %1089 : vector<16x16xf32>
    %c158 = arith.constant 158 : index
    %1091 = memref.load %arg2[%c158] : memref<288xf32, #tpu.memory_space<smem>>
    %1092 = vector.broadcast %1091 : f32 to vector<16x16xf32>
    %1093 = arith.mulf %1066, %1092 : vector<16x16xf32>
    %1094 = arith.addf %1060, %1093 : vector<16x16xf32>
    %c159 = arith.constant 159 : index
    %1095 = memref.load %arg2[%c159] : memref<288xf32, #tpu.memory_space<smem>>
    %1096 = vector.broadcast %1095 : f32 to vector<16x16xf32>
    %1097 = arith.mulf %1066, %1096 : vector<16x16xf32>
    %1098 = arith.addf %1064, %1097 : vector<16x16xf32>
    %c3_134 = arith.constant 3 : index
    %c1_135 = arith.constant 1 : index
    %c2_136 = arith.constant 2 : index
    %1099 = vector.load %arg7[%c3_134, %c1_135, %c2_136] : memref<4x18x18xf32, #tpu.memory_space<vmem>>, vector<1x16x16xf32>
    %1100 = vector.shape_cast %1099 : vector<1x16x16xf32> to vector<16x16xf32>
    %c184 = arith.constant 184 : index
    %1101 = memref.load %arg2[%c184] : memref<288xf32, #tpu.memory_space<smem>>
    %1102 = vector.broadcast %1101 : f32 to vector<16x16xf32>
    %1103 = arith.mulf %1100, %1102 : vector<16x16xf32>
    %1104 = arith.addf %1070, %1103 : vector<16x16xf32>
    %c185 = arith.constant 185 : index
    %1105 = memref.load %arg2[%c185] : memref<288xf32, #tpu.memory_space<smem>>
    %1106 = vector.broadcast %1105 : f32 to vector<16x16xf32>
    %1107 = arith.mulf %1100, %1106 : vector<16x16xf32>
    %1108 = arith.addf %1074, %1107 : vector<16x16xf32>
    %c186 = arith.constant 186 : index
    %1109 = memref.load %arg2[%c186] : memref<288xf32, #tpu.memory_space<smem>>
    %1110 = vector.broadcast %1109 : f32 to vector<16x16xf32>
    %1111 = arith.mulf %1100, %1110 : vector<16x16xf32>
    %1112 = arith.addf %1078, %1111 : vector<16x16xf32>
    %c187 = arith.constant 187 : index
    %1113 = memref.load %arg2[%c187] : memref<288xf32, #tpu.memory_space<smem>>
    %1114 = vector.broadcast %1113 : f32 to vector<16x16xf32>
    %1115 = arith.mulf %1100, %1114 : vector<16x16xf32>
    %1116 = arith.addf %1082, %1115 : vector<16x16xf32>
    %c188 = arith.constant 188 : index
    %1117 = memref.load %arg2[%c188] : memref<288xf32, #tpu.memory_space<smem>>
    %1118 = vector.broadcast %1117 : f32 to vector<16x16xf32>
    %1119 = arith.mulf %1100, %1118 : vector<16x16xf32>
    %1120 = arith.addf %1086, %1119 : vector<16x16xf32>
    %c189 = arith.constant 189 : index
    %1121 = memref.load %arg2[%c189] : memref<288xf32, #tpu.memory_space<smem>>
    %1122 = vector.broadcast %1121 : f32 to vector<16x16xf32>
    %1123 = arith.mulf %1100, %1122 : vector<16x16xf32>
    %1124 = arith.addf %1090, %1123 : vector<16x16xf32>
    %c190 = arith.constant 190 : index
    %1125 = memref.load %arg2[%c190] : memref<288xf32, #tpu.memory_space<smem>>
    %1126 = vector.broadcast %1125 : f32 to vector<16x16xf32>
    %1127 = arith.mulf %1100, %1126 : vector<16x16xf32>
    %1128 = arith.addf %1094, %1127 : vector<16x16xf32>
    %c191 = arith.constant 191 : index
    %1129 = memref.load %arg2[%c191] : memref<288xf32, #tpu.memory_space<smem>>
    %1130 = vector.broadcast %1129 : f32 to vector<16x16xf32>
    %1131 = arith.mulf %1100, %1130 : vector<16x16xf32>
    %1132 = arith.addf %1098, %1131 : vector<16x16xf32>
    %c3_137 = arith.constant 3 : index
    %c2_138 = arith.constant 2 : index
    %c0_139 = arith.constant 0 : index
    %1133 = vector.load %arg7[%c3_137, %c2_138, %c0_139] : memref<4x18x18xf32, #tpu.memory_space<vmem>>, vector<1x16x16xf32>
    %1134 = vector.shape_cast %1133 : vector<1x16x16xf32> to vector<16x16xf32>
    %c216 = arith.constant 216 : index
    %1135 = memref.load %arg2[%c216] : memref<288xf32, #tpu.memory_space<smem>>
    %1136 = vector.broadcast %1135 : f32 to vector<16x16xf32>
    %1137 = arith.mulf %1134, %1136 : vector<16x16xf32>
    %1138 = arith.addf %1104, %1137 : vector<16x16xf32>
    %c217 = arith.constant 217 : index
    %1139 = memref.load %arg2[%c217] : memref<288xf32, #tpu.memory_space<smem>>
    %1140 = vector.broadcast %1139 : f32 to vector<16x16xf32>
    %1141 = arith.mulf %1134, %1140 : vector<16x16xf32>
    %1142 = arith.addf %1108, %1141 : vector<16x16xf32>
    %c218 = arith.constant 218 : index
    %1143 = memref.load %arg2[%c218] : memref<288xf32, #tpu.memory_space<smem>>
    %1144 = vector.broadcast %1143 : f32 to vector<16x16xf32>
    %1145 = arith.mulf %1134, %1144 : vector<16x16xf32>
    %1146 = arith.addf %1112, %1145 : vector<16x16xf32>
    %c219 = arith.constant 219 : index
    %1147 = memref.load %arg2[%c219] : memref<288xf32, #tpu.memory_space<smem>>
    %1148 = vector.broadcast %1147 : f32 to vector<16x16xf32>
    %1149 = arith.mulf %1134, %1148 : vector<16x16xf32>
    %1150 = arith.addf %1116, %1149 : vector<16x16xf32>
    %c220 = arith.constant 220 : index
    %1151 = memref.load %arg2[%c220] : memref<288xf32, #tpu.memory_space<smem>>
    %1152 = vector.broadcast %1151 : f32 to vector<16x16xf32>
    %1153 = arith.mulf %1134, %1152 : vector<16x16xf32>
    %1154 = arith.addf %1120, %1153 : vector<16x16xf32>
    %c221 = arith.constant 221 : index
    %1155 = memref.load %arg2[%c221] : memref<288xf32, #tpu.memory_space<smem>>
    %1156 = vector.broadcast %1155 : f32 to vector<16x16xf32>
    %1157 = arith.mulf %1134, %1156 : vector<16x16xf32>
    %1158 = arith.addf %1124, %1157 : vector<16x16xf32>
    %c222 = arith.constant 222 : index
    %1159 = memref.load %arg2[%c222] : memref<288xf32, #tpu.memory_space<smem>>
    %1160 = vector.broadcast %1159 : f32 to vector<16x16xf32>
    %1161 = arith.mulf %1134, %1160 : vector<16x16xf32>
    %1162 = arith.addf %1128, %1161 : vector<16x16xf32>
    %c223 = arith.constant 223 : index
    %1163 = memref.load %arg2[%c223] : memref<288xf32, #tpu.memory_space<smem>>
    %1164 = vector.broadcast %1163 : f32 to vector<16x16xf32>
    %1165 = arith.mulf %1134, %1164 : vector<16x16xf32>
    %1166 = arith.addf %1132, %1165 : vector<16x16xf32>
    %c3_140 = arith.constant 3 : index
    %c2_141 = arith.constant 2 : index
    %c1_142 = arith.constant 1 : index
    %1167 = vector.load %arg7[%c3_140, %c2_141, %c1_142] : memref<4x18x18xf32, #tpu.memory_space<vmem>>, vector<1x16x16xf32>
    %1168 = vector.shape_cast %1167 : vector<1x16x16xf32> to vector<16x16xf32>
    %c248 = arith.constant 248 : index
    %1169 = memref.load %arg2[%c248] : memref<288xf32, #tpu.memory_space<smem>>
    %1170 = vector.broadcast %1169 : f32 to vector<16x16xf32>
    %1171 = arith.mulf %1168, %1170 : vector<16x16xf32>
    %1172 = arith.addf %1138, %1171 : vector<16x16xf32>
    %c249 = arith.constant 249 : index
    %1173 = memref.load %arg2[%c249] : memref<288xf32, #tpu.memory_space<smem>>
    %1174 = vector.broadcast %1173 : f32 to vector<16x16xf32>
    %1175 = arith.mulf %1168, %1174 : vector<16x16xf32>
    %1176 = arith.addf %1142, %1175 : vector<16x16xf32>
    %c250 = arith.constant 250 : index
    %1177 = memref.load %arg2[%c250] : memref<288xf32, #tpu.memory_space<smem>>
    %1178 = vector.broadcast %1177 : f32 to vector<16x16xf32>
    %1179 = arith.mulf %1168, %1178 : vector<16x16xf32>
    %1180 = arith.addf %1146, %1179 : vector<16x16xf32>
    %c251 = arith.constant 251 : index
    %1181 = memref.load %arg2[%c251] : memref<288xf32, #tpu.memory_space<smem>>
    %1182 = vector.broadcast %1181 : f32 to vector<16x16xf32>
    %1183 = arith.mulf %1168, %1182 : vector<16x16xf32>
    %1184 = arith.addf %1150, %1183 : vector<16x16xf32>
    %c252 = arith.constant 252 : index
    %1185 = memref.load %arg2[%c252] : memref<288xf32, #tpu.memory_space<smem>>
    %1186 = vector.broadcast %1185 : f32 to vector<16x16xf32>
    %1187 = arith.mulf %1168, %1186 : vector<16x16xf32>
    %1188 = arith.addf %1154, %1187 : vector<16x16xf32>
    %c253 = arith.constant 253 : index
    %1189 = memref.load %arg2[%c253] : memref<288xf32, #tpu.memory_space<smem>>
    %1190 = vector.broadcast %1189 : f32 to vector<16x16xf32>
    %1191 = arith.mulf %1168, %1190 : vector<16x16xf32>
    %1192 = arith.addf %1158, %1191 : vector<16x16xf32>
    %c254 = arith.constant 254 : index
    %1193 = memref.load %arg2[%c254] : memref<288xf32, #tpu.memory_space<smem>>
    %1194 = vector.broadcast %1193 : f32 to vector<16x16xf32>
    %1195 = arith.mulf %1168, %1194 : vector<16x16xf32>
    %1196 = arith.addf %1162, %1195 : vector<16x16xf32>
    %c255 = arith.constant 255 : index
    %1197 = memref.load %arg2[%c255] : memref<288xf32, #tpu.memory_space<smem>>
    %1198 = vector.broadcast %1197 : f32 to vector<16x16xf32>
    %1199 = arith.mulf %1168, %1198 : vector<16x16xf32>
    %1200 = arith.addf %1166, %1199 : vector<16x16xf32>
    %c3_143 = arith.constant 3 : index
    %c2_144 = arith.constant 2 : index
    %c2_145 = arith.constant 2 : index
    %1201 = vector.load %arg7[%c3_143, %c2_144, %c2_145] : memref<4x18x18xf32, #tpu.memory_space<vmem>>, vector<1x16x16xf32>
    %1202 = vector.shape_cast %1201 : vector<1x16x16xf32> to vector<16x16xf32>
    %c280 = arith.constant 280 : index
    %1203 = memref.load %arg2[%c280] : memref<288xf32, #tpu.memory_space<smem>>
    %1204 = vector.broadcast %1203 : f32 to vector<16x16xf32>
    %1205 = arith.mulf %1202, %1204 : vector<16x16xf32>
    %1206 = arith.addf %1172, %1205 : vector<16x16xf32>
    %c281 = arith.constant 281 : index
    %1207 = memref.load %arg2[%c281] : memref<288xf32, #tpu.memory_space<smem>>
    %1208 = vector.broadcast %1207 : f32 to vector<16x16xf32>
    %1209 = arith.mulf %1202, %1208 : vector<16x16xf32>
    %1210 = arith.addf %1176, %1209 : vector<16x16xf32>
    %c282 = arith.constant 282 : index
    %1211 = memref.load %arg2[%c282] : memref<288xf32, #tpu.memory_space<smem>>
    %1212 = vector.broadcast %1211 : f32 to vector<16x16xf32>
    %1213 = arith.mulf %1202, %1212 : vector<16x16xf32>
    %1214 = arith.addf %1180, %1213 : vector<16x16xf32>
    %c283 = arith.constant 283 : index
    %1215 = memref.load %arg2[%c283] : memref<288xf32, #tpu.memory_space<smem>>
    %1216 = vector.broadcast %1215 : f32 to vector<16x16xf32>
    %1217 = arith.mulf %1202, %1216 : vector<16x16xf32>
    %1218 = arith.addf %1184, %1217 : vector<16x16xf32>
    %c284 = arith.constant 284 : index
    %1219 = memref.load %arg2[%c284] : memref<288xf32, #tpu.memory_space<smem>>
    %1220 = vector.broadcast %1219 : f32 to vector<16x16xf32>
    %1221 = arith.mulf %1202, %1220 : vector<16x16xf32>
    %1222 = arith.addf %1188, %1221 : vector<16x16xf32>
    %c285 = arith.constant 285 : index
    %1223 = memref.load %arg2[%c285] : memref<288xf32, #tpu.memory_space<smem>>
    %1224 = vector.broadcast %1223 : f32 to vector<16x16xf32>
    %1225 = arith.mulf %1202, %1224 : vector<16x16xf32>
    %1226 = arith.addf %1192, %1225 : vector<16x16xf32>
    %c286 = arith.constant 286 : index
    %1227 = memref.load %arg2[%c286] : memref<288xf32, #tpu.memory_space<smem>>
    %1228 = vector.broadcast %1227 : f32 to vector<16x16xf32>
    %1229 = arith.mulf %1202, %1228 : vector<16x16xf32>
    %1230 = arith.addf %1196, %1229 : vector<16x16xf32>
    %c287 = arith.constant 287 : index
    %1231 = memref.load %arg2[%c287] : memref<288xf32, #tpu.memory_space<smem>>
    %1232 = vector.broadcast %1231 : f32 to vector<16x16xf32>
    %1233 = arith.mulf %1202, %1232 : vector<16x16xf32>
    %1234 = arith.addf %1200, %1233 : vector<16x16xf32>
    %c0_146 = arith.constant 0 : index
    %1235 = memref.load %arg3[%c0_146] : memref<8xf32, #tpu.memory_space<smem>>
    %1236 = vector.broadcast %1235 : f32 to vector<16x16xf32>
    %1237 = arith.addf %1206, %1236 : vector<16x16xf32>
    %cst_147 = arith.constant 0.000000e+00 : f32
    %1238 = vector.broadcast %cst_147 : f32 to vector<16x16xf32>
    %1239 = arith.maximumf %1237, %1238 : vector<16x16xf32>
    %1240 = vector.shape_cast %1239 : vector<16x16xf32> to vector<1x16x16xf32>
    %c0_148 = arith.constant 0 : index
    %c1_149 = arith.constant 1 : index
    %c1_150 = arith.constant 1 : index
    %1241 = vector.load %arg8[%c0_148, %c1_149, %c1_150] : memref<8x18x18xf32, #tpu.memory_space<vmem>>, vector<1x16x16xf32>
    tpu.vector_store %arg8[%c0_148, %c1_149, %c1_150], %1240 {strides = array<i32>} : memref<8x18x18xf32, #tpu.memory_space<vmem>>, vector<1x16x16xf32>,
    %c1_151 = arith.constant 1 : index
    %1242 = memref.load %arg3[%c1_151] : memref<8xf32, #tpu.memory_space<smem>>
    %1243 = vector.broadcast %1242 : f32 to vector<16x16xf32>
    %1244 = arith.addf %1210, %1243 : vector<16x16xf32>
    %cst_152 = arith.constant 0.000000e+00 : f32
    %1245 = vector.broadcast %cst_152 : f32 to vector<16x16xf32>
    %1246 = arith.maximumf %1244, %1245 : vector<16x16xf32>
    %1247 = vector.shape_cast %1246 : vector<16x16xf32> to vector<1x16x16xf32>
    %c1_153 = arith.constant 1 : index
    %c1_154 = arith.constant 1 : index
    %c1_155 = arith.constant 1 : index
    %1248 = vector.load %arg8[%c1_153, %c1_154, %c1_155] : memref<8x18x18xf32, #tpu.memory_space<vmem>>, vector<1x16x16xf32>
    tpu.vector_store %arg8[%c1_153, %c1_154, %c1_155], %1247 {strides = array<i32>} : memref<8x18x18xf32, #tpu.memory_space<vmem>>, vector<1x16x16xf32>,
    %c2_156 = arith.constant 2 : index
    %1249 = memref.load %arg3[%c2_156] : memref<8xf32, #tpu.memory_space<smem>>
    %1250 = vector.broadcast %1249 : f32 to vector<16x16xf32>
    %1251 = arith.addf %1214, %1250 : vector<16x16xf32>
    %cst_157 = arith.constant 0.000000e+00 : f32
    %1252 = vector.broadcast %cst_157 : f32 to vector<16x16xf32>
    %1253 = arith.maximumf %1251, %1252 : vector<16x16xf32>
    %1254 = vector.shape_cast %1253 : vector<16x16xf32> to vector<1x16x16xf32>
    %c2_158 = arith.constant 2 : index
    %c1_159 = arith.constant 1 : index
    %c1_160 = arith.constant 1 : index
    %1255 = vector.load %arg8[%c2_158, %c1_159, %c1_160] : memref<8x18x18xf32, #tpu.memory_space<vmem>>, vector<1x16x16xf32>
    tpu.vector_store %arg8[%c2_158, %c1_159, %c1_160], %1254 {strides = array<i32>} : memref<8x18x18xf32, #tpu.memory_space<vmem>>, vector<1x16x16xf32>,
    %c3_161 = arith.constant 3 : index
    %1256 = memref.load %arg3[%c3_161] : memref<8xf32, #tpu.memory_space<smem>>
    %1257 = vector.broadcast %1256 : f32 to vector<16x16xf32>
    %1258 = arith.addf %1218, %1257 : vector<16x16xf32>
    %cst_162 = arith.constant 0.000000e+00 : f32
    %1259 = vector.broadcast %cst_162 : f32 to vector<16x16xf32>
    %1260 = arith.maximumf %1258, %1259 : vector<16x16xf32>
    %1261 = vector.shape_cast %1260 : vector<16x16xf32> to vector<1x16x16xf32>
    %c3_163 = arith.constant 3 : index
    %c1_164 = arith.constant 1 : index
    %c1_165 = arith.constant 1 : index
    %1262 = vector.load %arg8[%c3_163, %c1_164, %c1_165] : memref<8x18x18xf32, #tpu.memory_space<vmem>>, vector<1x16x16xf32>
    tpu.vector_store %arg8[%c3_163, %c1_164, %c1_165], %1261 {strides = array<i32>} : memref<8x18x18xf32, #tpu.memory_space<vmem>>, vector<1x16x16xf32>,
    %c4_166 = arith.constant 4 : index
    %1263 = memref.load %arg3[%c4_166] : memref<8xf32, #tpu.memory_space<smem>>
    %1264 = vector.broadcast %1263 : f32 to vector<16x16xf32>
    %1265 = arith.addf %1222, %1264 : vector<16x16xf32>
    %cst_167 = arith.constant 0.000000e+00 : f32
    %1266 = vector.broadcast %cst_167 : f32 to vector<16x16xf32>
    %1267 = arith.maximumf %1265, %1266 : vector<16x16xf32>
    %1268 = vector.shape_cast %1267 : vector<16x16xf32> to vector<1x16x16xf32>
    %c4_168 = arith.constant 4 : index
    %c1_169 = arith.constant 1 : index
    %c1_170 = arith.constant 1 : index
    %1269 = vector.load %arg8[%c4_168, %c1_169, %c1_170] : memref<8x18x18xf32, #tpu.memory_space<vmem>>, vector<1x16x16xf32>
    tpu.vector_store %arg8[%c4_168, %c1_169, %c1_170], %1268 {strides = array<i32>} : memref<8x18x18xf32, #tpu.memory_space<vmem>>, vector<1x16x16xf32>,
    %c5_171 = arith.constant 5 : index
    %1270 = memref.load %arg3[%c5_171] : memref<8xf32, #tpu.memory_space<smem>>
    %1271 = vector.broadcast %1270 : f32 to vector<16x16xf32>
    %1272 = arith.addf %1226, %1271 : vector<16x16xf32>
    %cst_172 = arith.constant 0.000000e+00 : f32
    %1273 = vector.broadcast %cst_172 : f32 to vector<16x16xf32>
    %1274 = arith.maximumf %1272, %1273 : vector<16x16xf32>
    %1275 = vector.shape_cast %1274 : vector<16x16xf32> to vector<1x16x16xf32>
    %c5_173 = arith.constant 5 : index
    %c1_174 = arith.constant 1 : index
    %c1_175 = arith.constant 1 : index
    %1276 = vector.load %arg8[%c5_173, %c1_174, %c1_175] : memref<8x18x18xf32, #tpu.memory_space<vmem>>, vector<1x16x16xf32>
    tpu.vector_store %arg8[%c5_173, %c1_174, %c1_175], %1275 {strides = array<i32>} : memref<8x18x18xf32, #tpu.memory_space<vmem>>, vector<1x16x16xf32>,
    %c6_176 = arith.constant 6 : index
    %1277 = memref.load %arg3[%c6_176] : memref<8xf32, #tpu.memory_space<smem>>
    %1278 = vector.broadcast %1277 : f32 to vector<16x16xf32>
    %1279 = arith.addf %1230, %1278 : vector<16x16xf32>
    %cst_177 = arith.constant 0.000000e+00 : f32
    %1280 = vector.broadcast %cst_177 : f32 to vector<16x16xf32>
    %1281 = arith.maximumf %1279, %1280 : vector<16x16xf32>
    %1282 = vector.shape_cast %1281 : vector<16x16xf32> to vector<1x16x16xf32>
    %c6_178 = arith.constant 6 : index
    %c1_179 = arith.constant 1 : index
    %c1_180 = arith.constant 1 : index
    %1283 = vector.load %arg8[%c6_178, %c1_179, %c1_180] : memref<8x18x18xf32, #tpu.memory_space<vmem>>, vector<1x16x16xf32>
    tpu.vector_store %arg8[%c6_178, %c1_179, %c1_180], %1282 {strides = array<i32>} : memref<8x18x18xf32, #tpu.memory_space<vmem>>, vector<1x16x16xf32>,
    %c7_181 = arith.constant 7 : index
    %1284 = memref.load %arg3[%c7_181] : memref<8xf32, #tpu.memory_space<smem>>
    %1285 = vector.broadcast %1284 : f32 to vector<16x16xf32>
    %1286 = arith.addf %1234, %1285 : vector<16x16xf32>
    %cst_182 = arith.constant 0.000000e+00 : f32
    %1287 = vector.broadcast %cst_182 : f32 to vector<16x16xf32>
    %1288 = arith.maximumf %1286, %1287 : vector<16x16xf32>
    %1289 = vector.shape_cast %1288 : vector<16x16xf32> to vector<1x16x16xf32>
    %c7_183 = arith.constant 7 : index
    %c1_184 = arith.constant 1 : index
    %c1_185 = arith.constant 1 : index
    %1290 = vector.load %arg8[%c7_183, %c1_184, %c1_185] : memref<8x18x18xf32, #tpu.memory_space<vmem>>, vector<1x16x16xf32>
    tpu.vector_store %arg8[%c7_183, %c1_184, %c1_185], %1289 {strides = array<i32>} : memref<8x18x18xf32, #tpu.memory_space<vmem>>, vector<1x16x16xf32>,
    %c0_186 = arith.constant 0 : index
    %c0_187 = arith.constant 0 : index
    %c0_188 = arith.constant 0 : index
    %1291 = vector.load %arg8[%c0_186, %c0_187, %c0_188] : memref<8x18x18xf32, #tpu.memory_space<vmem>>, vector<1x16x16xf32>
    %1292 = vector.shape_cast %1291 : vector<1x16x16xf32> to vector<16x16xf32>
    %c0_189 = arith.constant 0 : index
    %1293 = memref.load %arg4[%c0_189] : memref<72xf32, #tpu.memory_space<smem>>
    %1294 = vector.broadcast %1293 : f32 to vector<16x16xf32>
    %1295 = arith.mulf %1292, %1294 : vector<16x16xf32>
    %c0_190 = arith.constant 0 : index
    %c0_191 = arith.constant 0 : index
    %c1_192 = arith.constant 1 : index
    %1296 = vector.load %arg8[%c0_190, %c0_191, %c1_192] : memref<8x18x18xf32, #tpu.memory_space<vmem>>, vector<1x16x16xf32>
    %1297 = vector.shape_cast %1296 : vector<1x16x16xf32> to vector<16x16xf32>
    %c8_193 = arith.constant 8 : index
    %1298 = memref.load %arg4[%c8_193] : memref<72xf32, #tpu.memory_space<smem>>
    %1299 = vector.broadcast %1298 : f32 to vector<16x16xf32>
    %1300 = arith.mulf %1297, %1299 : vector<16x16xf32>
    %1301 = arith.addf %1295, %1300 : vector<16x16xf32>
    %c0_194 = arith.constant 0 : index
    %c0_195 = arith.constant 0 : index
    %c2_196 = arith.constant 2 : index
    %1302 = vector.load %arg8[%c0_194, %c0_195, %c2_196] : memref<8x18x18xf32, #tpu.memory_space<vmem>>, vector<1x16x16xf32>
    %1303 = vector.shape_cast %1302 : vector<1x16x16xf32> to vector<16x16xf32>
    %c16_197 = arith.constant 16 : index
    %1304 = memref.load %arg4[%c16_197] : memref<72xf32, #tpu.memory_space<smem>>
    %1305 = vector.broadcast %1304 : f32 to vector<16x16xf32>
    %1306 = arith.mulf %1303, %1305 : vector<16x16xf32>
    %1307 = arith.addf %1301, %1306 : vector<16x16xf32>
    %c0_198 = arith.constant 0 : index
    %c1_199 = arith.constant 1 : index
    %c0_200 = arith.constant 0 : index
    %1308 = vector.load %arg8[%c0_198, %c1_199, %c0_200] : memref<8x18x18xf32, #tpu.memory_space<vmem>>, vector<1x16x16xf32>
    %1309 = vector.shape_cast %1308 : vector<1x16x16xf32> to vector<16x16xf32>
    %c24_201 = arith.constant 24 : index
    %1310 = memref.load %arg4[%c24_201] : memref<72xf32, #tpu.memory_space<smem>>
    %1311 = vector.broadcast %1310 : f32 to vector<16x16xf32>
    %1312 = arith.mulf %1309, %1311 : vector<16x16xf32>
    %1313 = arith.addf %1307, %1312 : vector<16x16xf32>
    %c0_202 = arith.constant 0 : index
    %c1_203 = arith.constant 1 : index
    %c1_204 = arith.constant 1 : index
    %1314 = vector.load %arg8[%c0_202, %c1_203, %c1_204] : memref<8x18x18xf32, #tpu.memory_space<vmem>>, vector<1x16x16xf32>
    %1315 = vector.shape_cast %1314 : vector<1x16x16xf32> to vector<16x16xf32>
    %c32_205 = arith.constant 32 : index
    %1316 = memref.load %arg4[%c32_205] : memref<72xf32, #tpu.memory_space<smem>>
    %1317 = vector.broadcast %1316 : f32 to vector<16x16xf32>
    %1318 = arith.mulf %1315, %1317 : vector<16x16xf32>
    %1319 = arith.addf %1313, %1318 : vector<16x16xf32>
    %c0_206 = arith.constant 0 : index
    %c1_207 = arith.constant 1 : index
    %c2_208 = arith.constant 2 : index
    %1320 = vector.load %arg8[%c0_206, %c1_207, %c2_208] : memref<8x18x18xf32, #tpu.memory_space<vmem>>, vector<1x16x16xf32>
    %1321 = vector.shape_cast %1320 : vector<1x16x16xf32> to vector<16x16xf32>
    %c40_209 = arith.constant 40 : index
    %1322 = memref.load %arg4[%c40_209] : memref<72xf32, #tpu.memory_space<smem>>
    %1323 = vector.broadcast %1322 : f32 to vector<16x16xf32>
    %1324 = arith.mulf %1321, %1323 : vector<16x16xf32>
    %1325 = arith.addf %1319, %1324 : vector<16x16xf32>
    %c0_210 = arith.constant 0 : index
    %c2_211 = arith.constant 2 : index
    %c0_212 = arith.constant 0 : index
    %1326 = vector.load %arg8[%c0_210, %c2_211, %c0_212] : memref<8x18x18xf32, #tpu.memory_space<vmem>>, vector<1x16x16xf32>
    %1327 = vector.shape_cast %1326 : vector<1x16x16xf32> to vector<16x16xf32>
    %c48_213 = arith.constant 48 : index
    %1328 = memref.load %arg4[%c48_213] : memref<72xf32, #tpu.memory_space<smem>>
    %1329 = vector.broadcast %1328 : f32 to vector<16x16xf32>
    %1330 = arith.mulf %1327, %1329 : vector<16x16xf32>
    %1331 = arith.addf %1325, %1330 : vector<16x16xf32>
    %c0_214 = arith.constant 0 : index
    %c2_215 = arith.constant 2 : index
    %c1_216 = arith.constant 1 : index
    %1332 = vector.load %arg8[%c0_214, %c2_215, %c1_216] : memref<8x18x18xf32, #tpu.memory_space<vmem>>, vector<1x16x16xf32>
    %1333 = vector.shape_cast %1332 : vector<1x16x16xf32> to vector<16x16xf32>
    %c56_217 = arith.constant 56 : index
    %1334 = memref.load %arg4[%c56_217] : memref<72xf32, #tpu.memory_space<smem>>
    %1335 = vector.broadcast %1334 : f32 to vector<16x16xf32>
    %1336 = arith.mulf %1333, %1335 : vector<16x16xf32>
    %1337 = arith.addf %1331, %1336 : vector<16x16xf32>
    %c0_218 = arith.constant 0 : index
    %c2_219 = arith.constant 2 : index
    %c2_220 = arith.constant 2 : index
    %1338 = vector.load %arg8[%c0_218, %c2_219, %c2_220] : memref<8x18x18xf32, #tpu.memory_space<vmem>>, vector<1x16x16xf32>
    %1339 = vector.shape_cast %1338 : vector<1x16x16xf32> to vector<16x16xf32>
    %c64_221 = arith.constant 64 : index
    %1340 = memref.load %arg4[%c64_221] : memref<72xf32, #tpu.memory_space<smem>>
    %1341 = vector.broadcast %1340 : f32 to vector<16x16xf32>
    %1342 = arith.mulf %1339, %1341 : vector<16x16xf32>
    %1343 = arith.addf %1337, %1342 : vector<16x16xf32>
    %c1_222 = arith.constant 1 : index
    %c0_223 = arith.constant 0 : index
    %c0_224 = arith.constant 0 : index
    %1344 = vector.load %arg8[%c1_222, %c0_223, %c0_224] : memref<8x18x18xf32, #tpu.memory_space<vmem>>, vector<1x16x16xf32>
    %1345 = vector.shape_cast %1344 : vector<1x16x16xf32> to vector<16x16xf32>
    %c1_225 = arith.constant 1 : index
    %1346 = memref.load %arg4[%c1_225] : memref<72xf32, #tpu.memory_space<smem>>
    %1347 = vector.broadcast %1346 : f32 to vector<16x16xf32>
    %1348 = arith.mulf %1345, %1347 : vector<16x16xf32>
    %1349 = arith.addf %1343, %1348 : vector<16x16xf32>
    %c1_226 = arith.constant 1 : index
    %c0_227 = arith.constant 0 : index
    %c1_228 = arith.constant 1 : index
    %1350 = vector.load %arg8[%c1_226, %c0_227, %c1_228] : memref<8x18x18xf32, #tpu.memory_space<vmem>>, vector<1x16x16xf32>
    %1351 = vector.shape_cast %1350 : vector<1x16x16xf32> to vector<16x16xf32>
    %c9_229 = arith.constant 9 : index
    %1352 = memref.load %arg4[%c9_229] : memref<72xf32, #tpu.memory_space<smem>>
    %1353 = vector.broadcast %1352 : f32 to vector<16x16xf32>
    %1354 = arith.mulf %1351, %1353 : vector<16x16xf32>
    %1355 = arith.addf %1349, %1354 : vector<16x16xf32>
    %c1_230 = arith.constant 1 : index
    %c0_231 = arith.constant 0 : index
    %c2_232 = arith.constant 2 : index
    %1356 = vector.load %arg8[%c1_230, %c0_231, %c2_232] : memref<8x18x18xf32, #tpu.memory_space<vmem>>, vector<1x16x16xf32>
    %1357 = vector.shape_cast %1356 : vector<1x16x16xf32> to vector<16x16xf32>
    %c17_233 = arith.constant 17 : index
    %1358 = memref.load %arg4[%c17_233] : memref<72xf32, #tpu.memory_space<smem>>
    %1359 = vector.broadcast %1358 : f32 to vector<16x16xf32>
    %1360 = arith.mulf %1357, %1359 : vector<16x16xf32>
    %1361 = arith.addf %1355, %1360 : vector<16x16xf32>
    %c1_234 = arith.constant 1 : index
    %c1_235 = arith.constant 1 : index
    %c0_236 = arith.constant 0 : index
    %1362 = vector.load %arg8[%c1_234, %c1_235, %c0_236] : memref<8x18x18xf32, #tpu.memory_space<vmem>>, vector<1x16x16xf32>
    %1363 = vector.shape_cast %1362 : vector<1x16x16xf32> to vector<16x16xf32>
    %c25_237 = arith.constant 25 : index
    %1364 = memref.load %arg4[%c25_237] : memref<72xf32, #tpu.memory_space<smem>>
    %1365 = vector.broadcast %1364 : f32 to vector<16x16xf32>
    %1366 = arith.mulf %1363, %1365 : vector<16x16xf32>
    %1367 = arith.addf %1361, %1366 : vector<16x16xf32>
    %c1_238 = arith.constant 1 : index
    %c1_239 = arith.constant 1 : index
    %c1_240 = arith.constant 1 : index
    %1368 = vector.load %arg8[%c1_238, %c1_239, %c1_240] : memref<8x18x18xf32, #tpu.memory_space<vmem>>, vector<1x16x16xf32>
    %1369 = vector.shape_cast %1368 : vector<1x16x16xf32> to vector<16x16xf32>
    %c33_241 = arith.constant 33 : index
    %1370 = memref.load %arg4[%c33_241] : memref<72xf32, #tpu.memory_space<smem>>
    %1371 = vector.broadcast %1370 : f32 to vector<16x16xf32>
    %1372 = arith.mulf %1369, %1371 : vector<16x16xf32>
    %1373 = arith.addf %1367, %1372 : vector<16x16xf32>
    %c1_242 = arith.constant 1 : index
    %c1_243 = arith.constant 1 : index
    %c2_244 = arith.constant 2 : index
    %1374 = vector.load %arg8[%c1_242, %c1_243, %c2_244] : memref<8x18x18xf32, #tpu.memory_space<vmem>>, vector<1x16x16xf32>
    %1375 = vector.shape_cast %1374 : vector<1x16x16xf32> to vector<16x16xf32>
    %c41_245 = arith.constant 41 : index
    %1376 = memref.load %arg4[%c41_245] : memref<72xf32, #tpu.memory_space<smem>>
    %1377 = vector.broadcast %1376 : f32 to vector<16x16xf32>
    %1378 = arith.mulf %1375, %1377 : vector<16x16xf32>
    %1379 = arith.addf %1373, %1378 : vector<16x16xf32>
    %c1_246 = arith.constant 1 : index
    %c2_247 = arith.constant 2 : index
    %c0_248 = arith.constant 0 : index
    %1380 = vector.load %arg8[%c1_246, %c2_247, %c0_248] : memref<8x18x18xf32, #tpu.memory_space<vmem>>, vector<1x16x16xf32>
    %1381 = vector.shape_cast %1380 : vector<1x16x16xf32> to vector<16x16xf32>
    %c49_249 = arith.constant 49 : index
    %1382 = memref.load %arg4[%c49_249] : memref<72xf32, #tpu.memory_space<smem>>
    %1383 = vector.broadcast %1382 : f32 to vector<16x16xf32>
    %1384 = arith.mulf %1381, %1383 : vector<16x16xf32>
    %1385 = arith.addf %1379, %1384 : vector<16x16xf32>
    %c1_250 = arith.constant 1 : index
    %c2_251 = arith.constant 2 : index
    %c1_252 = arith.constant 1 : index
    %1386 = vector.load %arg8[%c1_250, %c2_251, %c1_252] : memref<8x18x18xf32, #tpu.memory_space<vmem>>, vector<1x16x16xf32>
    %1387 = vector.shape_cast %1386 : vector<1x16x16xf32> to vector<16x16xf32>
    %c57_253 = arith.constant 57 : index
    %1388 = memref.load %arg4[%c57_253] : memref<72xf32, #tpu.memory_space<smem>>
    %1389 = vector.broadcast %1388 : f32 to vector<16x16xf32>
    %1390 = arith.mulf %1387, %1389 : vector<16x16xf32>
    %1391 = arith.addf %1385, %1390 : vector<16x16xf32>
    %c1_254 = arith.constant 1 : index
    %c2_255 = arith.constant 2 : index
    %c2_256 = arith.constant 2 : index
    %1392 = vector.load %arg8[%c1_254, %c2_255, %c2_256] : memref<8x18x18xf32, #tpu.memory_space<vmem>>, vector<1x16x16xf32>
    %1393 = vector.shape_cast %1392 : vector<1x16x16xf32> to vector<16x16xf32>
    %c65_257 = arith.constant 65 : index
    %1394 = memref.load %arg4[%c65_257] : memref<72xf32, #tpu.memory_space<smem>>
    %1395 = vector.broadcast %1394 : f32 to vector<16x16xf32>
    %1396 = arith.mulf %1393, %1395 : vector<16x16xf32>
    %1397 = arith.addf %1391, %1396 : vector<16x16xf32>
    %c2_258 = arith.constant 2 : index
    %c0_259 = arith.constant 0 : index
    %c0_260 = arith.constant 0 : index
    %1398 = vector.load %arg8[%c2_258, %c0_259, %c0_260] : memref<8x18x18xf32, #tpu.memory_space<vmem>>, vector<1x16x16xf32>
    %1399 = vector.shape_cast %1398 : vector<1x16x16xf32> to vector<16x16xf32>
    %c2_261 = arith.constant 2 : index
    %1400 = memref.load %arg4[%c2_261] : memref<72xf32, #tpu.memory_space<smem>>
    %1401 = vector.broadcast %1400 : f32 to vector<16x16xf32>
    %1402 = arith.mulf %1399, %1401 : vector<16x16xf32>
    %1403 = arith.addf %1397, %1402 : vector<16x16xf32>
    %c2_262 = arith.constant 2 : index
    %c0_263 = arith.constant 0 : index
    %c1_264 = arith.constant 1 : index
    %1404 = vector.load %arg8[%c2_262, %c0_263, %c1_264] : memref<8x18x18xf32, #tpu.memory_space<vmem>>, vector<1x16x16xf32>
    %1405 = vector.shape_cast %1404 : vector<1x16x16xf32> to vector<16x16xf32>
    %c10_265 = arith.constant 10 : index
    %1406 = memref.load %arg4[%c10_265] : memref<72xf32, #tpu.memory_space<smem>>
    %1407 = vector.broadcast %1406 : f32 to vector<16x16xf32>
    %1408 = arith.mulf %1405, %1407 : vector<16x16xf32>
    %1409 = arith.addf %1403, %1408 : vector<16x16xf32>
    %c2_266 = arith.constant 2 : index
    %c0_267 = arith.constant 0 : index
    %c2_268 = arith.constant 2 : index
    %1410 = vector.load %arg8[%c2_266, %c0_267, %c2_268] : memref<8x18x18xf32, #tpu.memory_space<vmem>>, vector<1x16x16xf32>
    %1411 = vector.shape_cast %1410 : vector<1x16x16xf32> to vector<16x16xf32>
    %c18_269 = arith.constant 18 : index
    %1412 = memref.load %arg4[%c18_269] : memref<72xf32, #tpu.memory_space<smem>>
    %1413 = vector.broadcast %1412 : f32 to vector<16x16xf32>
    %1414 = arith.mulf %1411, %1413 : vector<16x16xf32>
    %1415 = arith.addf %1409, %1414 : vector<16x16xf32>
    %c2_270 = arith.constant 2 : index
    %c1_271 = arith.constant 1 : index
    %c0_272 = arith.constant 0 : index
    %1416 = vector.load %arg8[%c2_270, %c1_271, %c0_272] : memref<8x18x18xf32, #tpu.memory_space<vmem>>, vector<1x16x16xf32>
    %1417 = vector.shape_cast %1416 : vector<1x16x16xf32> to vector<16x16xf32>
    %c26_273 = arith.constant 26 : index
    %1418 = memref.load %arg4[%c26_273] : memref<72xf32, #tpu.memory_space<smem>>
    %1419 = vector.broadcast %1418 : f32 to vector<16x16xf32>
    %1420 = arith.mulf %1417, %1419 : vector<16x16xf32>
    %1421 = arith.addf %1415, %1420 : vector<16x16xf32>
    %c2_274 = arith.constant 2 : index
    %c1_275 = arith.constant 1 : index
    %c1_276 = arith.constant 1 : index
    %1422 = vector.load %arg8[%c2_274, %c1_275, %c1_276] : memref<8x18x18xf32, #tpu.memory_space<vmem>>, vector<1x16x16xf32>
    %1423 = vector.shape_cast %1422 : vector<1x16x16xf32> to vector<16x16xf32>
    %c34_277 = arith.constant 34 : index
    %1424 = memref.load %arg4[%c34_277] : memref<72xf32, #tpu.memory_space<smem>>
    %1425 = vector.broadcast %1424 : f32 to vector<16x16xf32>
    %1426 = arith.mulf %1423, %1425 : vector<16x16xf32>
    %1427 = arith.addf %1421, %1426 : vector<16x16xf32>
    %c2_278 = arith.constant 2 : index
    %c1_279 = arith.constant 1 : index
    %c2_280 = arith.constant 2 : index
    %1428 = vector.load %arg8[%c2_278, %c1_279, %c2_280] : memref<8x18x18xf32, #tpu.memory_space<vmem>>, vector<1x16x16xf32>
    %1429 = vector.shape_cast %1428 : vector<1x16x16xf32> to vector<16x16xf32>
    %c42_281 = arith.constant 42 : index
    %1430 = memref.load %arg4[%c42_281] : memref<72xf32, #tpu.memory_space<smem>>
    %1431 = vector.broadcast %1430 : f32 to vector<16x16xf32>
    %1432 = arith.mulf %1429, %1431 : vector<16x16xf32>
    %1433 = arith.addf %1427, %1432 : vector<16x16xf32>
    %c2_282 = arith.constant 2 : index
    %c2_283 = arith.constant 2 : index
    %c0_284 = arith.constant 0 : index
    %1434 = vector.load %arg8[%c2_282, %c2_283, %c0_284] : memref<8x18x18xf32, #tpu.memory_space<vmem>>, vector<1x16x16xf32>
    %1435 = vector.shape_cast %1434 : vector<1x16x16xf32> to vector<16x16xf32>
    %c50_285 = arith.constant 50 : index
    %1436 = memref.load %arg4[%c50_285] : memref<72xf32, #tpu.memory_space<smem>>
    %1437 = vector.broadcast %1436 : f32 to vector<16x16xf32>
    %1438 = arith.mulf %1435, %1437 : vector<16x16xf32>
    %1439 = arith.addf %1433, %1438 : vector<16x16xf32>
    %c2_286 = arith.constant 2 : index
    %c2_287 = arith.constant 2 : index
    %c1_288 = arith.constant 1 : index
    %1440 = vector.load %arg8[%c2_286, %c2_287, %c1_288] : memref<8x18x18xf32, #tpu.memory_space<vmem>>, vector<1x16x16xf32>
    %1441 = vector.shape_cast %1440 : vector<1x16x16xf32> to vector<16x16xf32>
    %c58_289 = arith.constant 58 : index
    %1442 = memref.load %arg4[%c58_289] : memref<72xf32, #tpu.memory_space<smem>>
    %1443 = vector.broadcast %1442 : f32 to vector<16x16xf32>
    %1444 = arith.mulf %1441, %1443 : vector<16x16xf32>
    %1445 = arith.addf %1439, %1444 : vector<16x16xf32>
    %c2_290 = arith.constant 2 : index
    %c2_291 = arith.constant 2 : index
    %c2_292 = arith.constant 2 : index
    %1446 = vector.load %arg8[%c2_290, %c2_291, %c2_292] : memref<8x18x18xf32, #tpu.memory_space<vmem>>, vector<1x16x16xf32>
    %1447 = vector.shape_cast %1446 : vector<1x16x16xf32> to vector<16x16xf32>
    %c66_293 = arith.constant 66 : index
    %1448 = memref.load %arg4[%c66_293] : memref<72xf32, #tpu.memory_space<smem>>
    %1449 = vector.broadcast %1448 : f32 to vector<16x16xf32>
    %1450 = arith.mulf %1447, %1449 : vector<16x16xf32>
    %1451 = arith.addf %1445, %1450 : vector<16x16xf32>
    %c3_294 = arith.constant 3 : index
    %c0_295 = arith.constant 0 : index
    %c0_296 = arith.constant 0 : index
    %1452 = vector.load %arg8[%c3_294, %c0_295, %c0_296] : memref<8x18x18xf32, #tpu.memory_space<vmem>>, vector<1x16x16xf32>
    %1453 = vector.shape_cast %1452 : vector<1x16x16xf32> to vector<16x16xf32>
    %c3_297 = arith.constant 3 : index
    %1454 = memref.load %arg4[%c3_297] : memref<72xf32, #tpu.memory_space<smem>>
    %1455 = vector.broadcast %1454 : f32 to vector<16x16xf32>
    %1456 = arith.mulf %1453, %1455 : vector<16x16xf32>
    %1457 = arith.addf %1451, %1456 : vector<16x16xf32>
    %c3_298 = arith.constant 3 : index
    %c0_299 = arith.constant 0 : index
    %c1_300 = arith.constant 1 : index
    %1458 = vector.load %arg8[%c3_298, %c0_299, %c1_300] : memref<8x18x18xf32, #tpu.memory_space<vmem>>, vector<1x16x16xf32>
    %1459 = vector.shape_cast %1458 : vector<1x16x16xf32> to vector<16x16xf32>
    %c11_301 = arith.constant 11 : index
    %1460 = memref.load %arg4[%c11_301] : memref<72xf32, #tpu.memory_space<smem>>
    %1461 = vector.broadcast %1460 : f32 to vector<16x16xf32>
    %1462 = arith.mulf %1459, %1461 : vector<16x16xf32>
    %1463 = arith.addf %1457, %1462 : vector<16x16xf32>
    %c3_302 = arith.constant 3 : index
    %c0_303 = arith.constant 0 : index
    %c2_304 = arith.constant 2 : index
    %1464 = vector.load %arg8[%c3_302, %c0_303, %c2_304] : memref<8x18x18xf32, #tpu.memory_space<vmem>>, vector<1x16x16xf32>
    %1465 = vector.shape_cast %1464 : vector<1x16x16xf32> to vector<16x16xf32>
    %c19_305 = arith.constant 19 : index
    %1466 = memref.load %arg4[%c19_305] : memref<72xf32, #tpu.memory_space<smem>>
    %1467 = vector.broadcast %1466 : f32 to vector<16x16xf32>
    %1468 = arith.mulf %1465, %1467 : vector<16x16xf32>
    %1469 = arith.addf %1463, %1468 : vector<16x16xf32>
    %c3_306 = arith.constant 3 : index
    %c1_307 = arith.constant 1 : index
    %c0_308 = arith.constant 0 : index
    %1470 = vector.load %arg8[%c3_306, %c1_307, %c0_308] : memref<8x18x18xf32, #tpu.memory_space<vmem>>, vector<1x16x16xf32>
    %1471 = vector.shape_cast %1470 : vector<1x16x16xf32> to vector<16x16xf32>
    %c27_309 = arith.constant 27 : index
    %1472 = memref.load %arg4[%c27_309] : memref<72xf32, #tpu.memory_space<smem>>
    %1473 = vector.broadcast %1472 : f32 to vector<16x16xf32>
    %1474 = arith.mulf %1471, %1473 : vector<16x16xf32>
    %1475 = arith.addf %1469, %1474 : vector<16x16xf32>
    %c3_310 = arith.constant 3 : index
    %c1_311 = arith.constant 1 : index
    %c1_312 = arith.constant 1 : index
    %1476 = vector.load %arg8[%c3_310, %c1_311, %c1_312] : memref<8x18x18xf32, #tpu.memory_space<vmem>>, vector<1x16x16xf32>
    %1477 = vector.shape_cast %1476 : vector<1x16x16xf32> to vector<16x16xf32>
    %c35_313 = arith.constant 35 : index
    %1478 = memref.load %arg4[%c35_313] : memref<72xf32, #tpu.memory_space<smem>>
    %1479 = vector.broadcast %1478 : f32 to vector<16x16xf32>
    %1480 = arith.mulf %1477, %1479 : vector<16x16xf32>
    %1481 = arith.addf %1475, %1480 : vector<16x16xf32>
    %c3_314 = arith.constant 3 : index
    %c1_315 = arith.constant 1 : index
    %c2_316 = arith.constant 2 : index
    %1482 = vector.load %arg8[%c3_314, %c1_315, %c2_316] : memref<8x18x18xf32, #tpu.memory_space<vmem>>, vector<1x16x16xf32>
    %1483 = vector.shape_cast %1482 : vector<1x16x16xf32> to vector<16x16xf32>
    %c43_317 = arith.constant 43 : index
    %1484 = memref.load %arg4[%c43_317] : memref<72xf32, #tpu.memory_space<smem>>
    %1485 = vector.broadcast %1484 : f32 to vector<16x16xf32>
    %1486 = arith.mulf %1483, %1485 : vector<16x16xf32>
    %1487 = arith.addf %1481, %1486 : vector<16x16xf32>
    %c3_318 = arith.constant 3 : index
    %c2_319 = arith.constant 2 : index
    %c0_320 = arith.constant 0 : index
    %1488 = vector.load %arg8[%c3_318, %c2_319, %c0_320] : memref<8x18x18xf32, #tpu.memory_space<vmem>>, vector<1x16x16xf32>
    %1489 = vector.shape_cast %1488 : vector<1x16x16xf32> to vector<16x16xf32>
    %c51_321 = arith.constant 51 : index
    %1490 = memref.load %arg4[%c51_321] : memref<72xf32, #tpu.memory_space<smem>>
    %1491 = vector.broadcast %1490 : f32 to vector<16x16xf32>
    %1492 = arith.mulf %1489, %1491 : vector<16x16xf32>
    %1493 = arith.addf %1487, %1492 : vector<16x16xf32>
    %c3_322 = arith.constant 3 : index
    %c2_323 = arith.constant 2 : index
    %c1_324 = arith.constant 1 : index
    %1494 = vector.load %arg8[%c3_322, %c2_323, %c1_324] : memref<8x18x18xf32, #tpu.memory_space<vmem>>, vector<1x16x16xf32>
    %1495 = vector.shape_cast %1494 : vector<1x16x16xf32> to vector<16x16xf32>
    %c59_325 = arith.constant 59 : index
    %1496 = memref.load %arg4[%c59_325] : memref<72xf32, #tpu.memory_space<smem>>
    %1497 = vector.broadcast %1496 : f32 to vector<16x16xf32>
    %1498 = arith.mulf %1495, %1497 : vector<16x16xf32>
    %1499 = arith.addf %1493, %1498 : vector<16x16xf32>
    %c3_326 = arith.constant 3 : index
    %c2_327 = arith.constant 2 : index
    %c2_328 = arith.constant 2 : index
    %1500 = vector.load %arg8[%c3_326, %c2_327, %c2_328] : memref<8x18x18xf32, #tpu.memory_space<vmem>>, vector<1x16x16xf32>
    %1501 = vector.shape_cast %1500 : vector<1x16x16xf32> to vector<16x16xf32>
    %c67_329 = arith.constant 67 : index
    %1502 = memref.load %arg4[%c67_329] : memref<72xf32, #tpu.memory_space<smem>>
    %1503 = vector.broadcast %1502 : f32 to vector<16x16xf32>
    %1504 = arith.mulf %1501, %1503 : vector<16x16xf32>
    %1505 = arith.addf %1499, %1504 : vector<16x16xf32>
    %c4_330 = arith.constant 4 : index
    %c0_331 = arith.constant 0 : index
    %c0_332 = arith.constant 0 : index
    %1506 = vector.load %arg8[%c4_330, %c0_331, %c0_332] : memref<8x18x18xf32, #tpu.memory_space<vmem>>, vector<1x16x16xf32>
    %1507 = vector.shape_cast %1506 : vector<1x16x16xf32> to vector<16x16xf32>
    %c4_333 = arith.constant 4 : index
    %1508 = memref.load %arg4[%c4_333] : memref<72xf32, #tpu.memory_space<smem>>
    %1509 = vector.broadcast %1508 : f32 to vector<16x16xf32>
    %1510 = arith.mulf %1507, %1509 : vector<16x16xf32>
    %1511 = arith.addf %1505, %1510 : vector<16x16xf32>
    %c4_334 = arith.constant 4 : index
    %c0_335 = arith.constant 0 : index
    %c1_336 = arith.constant 1 : index
    %1512 = vector.load %arg8[%c4_334, %c0_335, %c1_336] : memref<8x18x18xf32, #tpu.memory_space<vmem>>, vector<1x16x16xf32>
    %1513 = vector.shape_cast %1512 : vector<1x16x16xf32> to vector<16x16xf32>
    %c12_337 = arith.constant 12 : index
    %1514 = memref.load %arg4[%c12_337] : memref<72xf32, #tpu.memory_space<smem>>
    %1515 = vector.broadcast %1514 : f32 to vector<16x16xf32>
    %1516 = arith.mulf %1513, %1515 : vector<16x16xf32>
    %1517 = arith.addf %1511, %1516 : vector<16x16xf32>
    %c4_338 = arith.constant 4 : index
    %c0_339 = arith.constant 0 : index
    %c2_340 = arith.constant 2 : index
    %1518 = vector.load %arg8[%c4_338, %c0_339, %c2_340] : memref<8x18x18xf32, #tpu.memory_space<vmem>>, vector<1x16x16xf32>
    %1519 = vector.shape_cast %1518 : vector<1x16x16xf32> to vector<16x16xf32>
    %c20_341 = arith.constant 20 : index
    %1520 = memref.load %arg4[%c20_341] : memref<72xf32, #tpu.memory_space<smem>>
    %1521 = vector.broadcast %1520 : f32 to vector<16x16xf32>
    %1522 = arith.mulf %1519, %1521 : vector<16x16xf32>
    %1523 = arith.addf %1517, %1522 : vector<16x16xf32>
    %c4_342 = arith.constant 4 : index
    %c1_343 = arith.constant 1 : index
    %c0_344 = arith.constant 0 : index
    %1524 = vector.load %arg8[%c4_342, %c1_343, %c0_344] : memref<8x18x18xf32, #tpu.memory_space<vmem>>, vector<1x16x16xf32>
    %1525 = vector.shape_cast %1524 : vector<1x16x16xf32> to vector<16x16xf32>
    %c28_345 = arith.constant 28 : index
    %1526 = memref.load %arg4[%c28_345] : memref<72xf32, #tpu.memory_space<smem>>
    %1527 = vector.broadcast %1526 : f32 to vector<16x16xf32>
    %1528 = arith.mulf %1525, %1527 : vector<16x16xf32>
    %1529 = arith.addf %1523, %1528 : vector<16x16xf32>
    %c4_346 = arith.constant 4 : index
    %c1_347 = arith.constant 1 : index
    %c1_348 = arith.constant 1 : index
    %1530 = vector.load %arg8[%c4_346, %c1_347, %c1_348] : memref<8x18x18xf32, #tpu.memory_space<vmem>>, vector<1x16x16xf32>
    %1531 = vector.shape_cast %1530 : vector<1x16x16xf32> to vector<16x16xf32>
    %c36_349 = arith.constant 36 : index
    %1532 = memref.load %arg4[%c36_349] : memref<72xf32, #tpu.memory_space<smem>>
    %1533 = vector.broadcast %1532 : f32 to vector<16x16xf32>
    %1534 = arith.mulf %1531, %1533 : vector<16x16xf32>
    %1535 = arith.addf %1529, %1534 : vector<16x16xf32>
    %c4_350 = arith.constant 4 : index
    %c1_351 = arith.constant 1 : index
    %c2_352 = arith.constant 2 : index
    %1536 = vector.load %arg8[%c4_350, %c1_351, %c2_352] : memref<8x18x18xf32, #tpu.memory_space<vmem>>, vector<1x16x16xf32>
    %1537 = vector.shape_cast %1536 : vector<1x16x16xf32> to vector<16x16xf32>
    %c44_353 = arith.constant 44 : index
    %1538 = memref.load %arg4[%c44_353] : memref<72xf32, #tpu.memory_space<smem>>
    %1539 = vector.broadcast %1538 : f32 to vector<16x16xf32>
    %1540 = arith.mulf %1537, %1539 : vector<16x16xf32>
    %1541 = arith.addf %1535, %1540 : vector<16x16xf32>
    %c4_354 = arith.constant 4 : index
    %c2_355 = arith.constant 2 : index
    %c0_356 = arith.constant 0 : index
    %1542 = vector.load %arg8[%c4_354, %c2_355, %c0_356] : memref<8x18x18xf32, #tpu.memory_space<vmem>>, vector<1x16x16xf32>
    %1543 = vector.shape_cast %1542 : vector<1x16x16xf32> to vector<16x16xf32>
    %c52_357 = arith.constant 52 : index
    %1544 = memref.load %arg4[%c52_357] : memref<72xf32, #tpu.memory_space<smem>>
    %1545 = vector.broadcast %1544 : f32 to vector<16x16xf32>
    %1546 = arith.mulf %1543, %1545 : vector<16x16xf32>
    %1547 = arith.addf %1541, %1546 : vector<16x16xf32>
    %c4_358 = arith.constant 4 : index
    %c2_359 = arith.constant 2 : index
    %c1_360 = arith.constant 1 : index
    %1548 = vector.load %arg8[%c4_358, %c2_359, %c1_360] : memref<8x18x18xf32, #tpu.memory_space<vmem>>, vector<1x16x16xf32>
    %1549 = vector.shape_cast %1548 : vector<1x16x16xf32> to vector<16x16xf32>
    %c60_361 = arith.constant 60 : index
    %1550 = memref.load %arg4[%c60_361] : memref<72xf32, #tpu.memory_space<smem>>
    %1551 = vector.broadcast %1550 : f32 to vector<16x16xf32>
    %1552 = arith.mulf %1549, %1551 : vector<16x16xf32>
    %1553 = arith.addf %1547, %1552 : vector<16x16xf32>
    %c4_362 = arith.constant 4 : index
    %c2_363 = arith.constant 2 : index
    %c2_364 = arith.constant 2 : index
    %1554 = vector.load %arg8[%c4_362, %c2_363, %c2_364] : memref<8x18x18xf32, #tpu.memory_space<vmem>>, vector<1x16x16xf32>
    %1555 = vector.shape_cast %1554 : vector<1x16x16xf32> to vector<16x16xf32>
    %c68_365 = arith.constant 68 : index
    %1556 = memref.load %arg4[%c68_365] : memref<72xf32, #tpu.memory_space<smem>>
    %1557 = vector.broadcast %1556 : f32 to vector<16x16xf32>
    %1558 = arith.mulf %1555, %1557 : vector<16x16xf32>
    %1559 = arith.addf %1553, %1558 : vector<16x16xf32>
    %c5_366 = arith.constant 5 : index
    %c0_367 = arith.constant 0 : index
    %c0_368 = arith.constant 0 : index
    %1560 = vector.load %arg8[%c5_366, %c0_367, %c0_368] : memref<8x18x18xf32, #tpu.memory_space<vmem>>, vector<1x16x16xf32>
    %1561 = vector.shape_cast %1560 : vector<1x16x16xf32> to vector<16x16xf32>
    %c5_369 = arith.constant 5 : index
    %1562 = memref.load %arg4[%c5_369] : memref<72xf32, #tpu.memory_space<smem>>
    %1563 = vector.broadcast %1562 : f32 to vector<16x16xf32>
    %1564 = arith.mulf %1561, %1563 : vector<16x16xf32>
    %1565 = arith.addf %1559, %1564 : vector<16x16xf32>
    %c5_370 = arith.constant 5 : index
    %c0_371 = arith.constant 0 : index
    %c1_372 = arith.constant 1 : index
    %1566 = vector.load %arg8[%c5_370, %c0_371, %c1_372] : memref<8x18x18xf32, #tpu.memory_space<vmem>>, vector<1x16x16xf32>
    %1567 = vector.shape_cast %1566 : vector<1x16x16xf32> to vector<16x16xf32>
    %c13_373 = arith.constant 13 : index
    %1568 = memref.load %arg4[%c13_373] : memref<72xf32, #tpu.memory_space<smem>>
    %1569 = vector.broadcast %1568 : f32 to vector<16x16xf32>
    %1570 = arith.mulf %1567, %1569 : vector<16x16xf32>
    %1571 = arith.addf %1565, %1570 : vector<16x16xf32>
    %c5_374 = arith.constant 5 : index
    %c0_375 = arith.constant 0 : index
    %c2_376 = arith.constant 2 : index
    %1572 = vector.load %arg8[%c5_374, %c0_375, %c2_376] : memref<8x18x18xf32, #tpu.memory_space<vmem>>, vector<1x16x16xf32>
    %1573 = vector.shape_cast %1572 : vector<1x16x16xf32> to vector<16x16xf32>
    %c21_377 = arith.constant 21 : index
    %1574 = memref.load %arg4[%c21_377] : memref<72xf32, #tpu.memory_space<smem>>
    %1575 = vector.broadcast %1574 : f32 to vector<16x16xf32>
    %1576 = arith.mulf %1573, %1575 : vector<16x16xf32>
    %1577 = arith.addf %1571, %1576 : vector<16x16xf32>
    %c5_378 = arith.constant 5 : index
    %c1_379 = arith.constant 1 : index
    %c0_380 = arith.constant 0 : index
    %1578 = vector.load %arg8[%c5_378, %c1_379, %c0_380] : memref<8x18x18xf32, #tpu.memory_space<vmem>>, vector<1x16x16xf32>
    %1579 = vector.shape_cast %1578 : vector<1x16x16xf32> to vector<16x16xf32>
    %c29_381 = arith.constant 29 : index
    %1580 = memref.load %arg4[%c29_381] : memref<72xf32, #tpu.memory_space<smem>>
    %1581 = vector.broadcast %1580 : f32 to vector<16x16xf32>
    %1582 = arith.mulf %1579, %1581 : vector<16x16xf32>
    %1583 = arith.addf %1577, %1582 : vector<16x16xf32>
    %c5_382 = arith.constant 5 : index
    %c1_383 = arith.constant 1 : index
    %c1_384 = arith.constant 1 : index
    %1584 = vector.load %arg8[%c5_382, %c1_383, %c1_384] : memref<8x18x18xf32, #tpu.memory_space<vmem>>, vector<1x16x16xf32>
    %1585 = vector.shape_cast %1584 : vector<1x16x16xf32> to vector<16x16xf32>
    %c37_385 = arith.constant 37 : index
    %1586 = memref.load %arg4[%c37_385] : memref<72xf32, #tpu.memory_space<smem>>
    %1587 = vector.broadcast %1586 : f32 to vector<16x16xf32>
    %1588 = arith.mulf %1585, %1587 : vector<16x16xf32>
    %1589 = arith.addf %1583, %1588 : vector<16x16xf32>
    %c5_386 = arith.constant 5 : index
    %c1_387 = arith.constant 1 : index
    %c2_388 = arith.constant 2 : index
    %1590 = vector.load %arg8[%c5_386, %c1_387, %c2_388] : memref<8x18x18xf32, #tpu.memory_space<vmem>>, vector<1x16x16xf32>
    %1591 = vector.shape_cast %1590 : vector<1x16x16xf32> to vector<16x16xf32>
    %c45_389 = arith.constant 45 : index
    %1592 = memref.load %arg4[%c45_389] : memref<72xf32, #tpu.memory_space<smem>>
    %1593 = vector.broadcast %1592 : f32 to vector<16x16xf32>
    %1594 = arith.mulf %1591, %1593 : vector<16x16xf32>
    %1595 = arith.addf %1589, %1594 : vector<16x16xf32>
    %c5_390 = arith.constant 5 : index
    %c2_391 = arith.constant 2 : index
    %c0_392 = arith.constant 0 : index
    %1596 = vector.load %arg8[%c5_390, %c2_391, %c0_392] : memref<8x18x18xf32, #tpu.memory_space<vmem>>, vector<1x16x16xf32>
    %1597 = vector.shape_cast %1596 : vector<1x16x16xf32> to vector<16x16xf32>
    %c53_393 = arith.constant 53 : index
    %1598 = memref.load %arg4[%c53_393] : memref<72xf32, #tpu.memory_space<smem>>
    %1599 = vector.broadcast %1598 : f32 to vector<16x16xf32>
    %1600 = arith.mulf %1597, %1599 : vector<16x16xf32>
    %1601 = arith.addf %1595, %1600 : vector<16x16xf32>
    %c5_394 = arith.constant 5 : index
    %c2_395 = arith.constant 2 : index
    %c1_396 = arith.constant 1 : index
    %1602 = vector.load %arg8[%c5_394, %c2_395, %c1_396] : memref<8x18x18xf32, #tpu.memory_space<vmem>>, vector<1x16x16xf32>
    %1603 = vector.shape_cast %1602 : vector<1x16x16xf32> to vector<16x16xf32>
    %c61_397 = arith.constant 61 : index
    %1604 = memref.load %arg4[%c61_397] : memref<72xf32, #tpu.memory_space<smem>>
    %1605 = vector.broadcast %1604 : f32 to vector<16x16xf32>
    %1606 = arith.mulf %1603, %1605 : vector<16x16xf32>
    %1607 = arith.addf %1601, %1606 : vector<16x16xf32>
    %c5_398 = arith.constant 5 : index
    %c2_399 = arith.constant 2 : index
    %c2_400 = arith.constant 2 : index
    %1608 = vector.load %arg8[%c5_398, %c2_399, %c2_400] : memref<8x18x18xf32, #tpu.memory_space<vmem>>, vector<1x16x16xf32>
    %1609 = vector.shape_cast %1608 : vector<1x16x16xf32> to vector<16x16xf32>
    %c69_401 = arith.constant 69 : index
    %1610 = memref.load %arg4[%c69_401] : memref<72xf32, #tpu.memory_space<smem>>
    %1611 = vector.broadcast %1610 : f32 to vector<16x16xf32>
    %1612 = arith.mulf %1609, %1611 : vector<16x16xf32>
    %1613 = arith.addf %1607, %1612 : vector<16x16xf32>
    %c6_402 = arith.constant 6 : index
    %c0_403 = arith.constant 0 : index
    %c0_404 = arith.constant 0 : index
    %1614 = vector.load %arg8[%c6_402, %c0_403, %c0_404] : memref<8x18x18xf32, #tpu.memory_space<vmem>>, vector<1x16x16xf32>
    %1615 = vector.shape_cast %1614 : vector<1x16x16xf32> to vector<16x16xf32>
    %c6_405 = arith.constant 6 : index
    %1616 = memref.load %arg4[%c6_405] : memref<72xf32, #tpu.memory_space<smem>>
    %1617 = vector.broadcast %1616 : f32 to vector<16x16xf32>
    %1618 = arith.mulf %1615, %1617 : vector<16x16xf32>
    %1619 = arith.addf %1613, %1618 : vector<16x16xf32>
    %c6_406 = arith.constant 6 : index
    %c0_407 = arith.constant 0 : index
    %c1_408 = arith.constant 1 : index
    %1620 = vector.load %arg8[%c6_406, %c0_407, %c1_408] : memref<8x18x18xf32, #tpu.memory_space<vmem>>, vector<1x16x16xf32>
    %1621 = vector.shape_cast %1620 : vector<1x16x16xf32> to vector<16x16xf32>
    %c14_409 = arith.constant 14 : index
    %1622 = memref.load %arg4[%c14_409] : memref<72xf32, #tpu.memory_space<smem>>
    %1623 = vector.broadcast %1622 : f32 to vector<16x16xf32>
    %1624 = arith.mulf %1621, %1623 : vector<16x16xf32>
    %1625 = arith.addf %1619, %1624 : vector<16x16xf32>
    %c6_410 = arith.constant 6 : index
    %c0_411 = arith.constant 0 : index
    %c2_412 = arith.constant 2 : index
    %1626 = vector.load %arg8[%c6_410, %c0_411, %c2_412] : memref<8x18x18xf32, #tpu.memory_space<vmem>>, vector<1x16x16xf32>
    %1627 = vector.shape_cast %1626 : vector<1x16x16xf32> to vector<16x16xf32>
    %c22_413 = arith.constant 22 : index
    %1628 = memref.load %arg4[%c22_413] : memref<72xf32, #tpu.memory_space<smem>>
    %1629 = vector.broadcast %1628 : f32 to vector<16x16xf32>
    %1630 = arith.mulf %1627, %1629 : vector<16x16xf32>
    %1631 = arith.addf %1625, %1630 : vector<16x16xf32>
    %c6_414 = arith.constant 6 : index
    %c1_415 = arith.constant 1 : index
    %c0_416 = arith.constant 0 : index
    %1632 = vector.load %arg8[%c6_414, %c1_415, %c0_416] : memref<8x18x18xf32, #tpu.memory_space<vmem>>, vector<1x16x16xf32>
    %1633 = vector.shape_cast %1632 : vector<1x16x16xf32> to vector<16x16xf32>
    %c30_417 = arith.constant 30 : index
    %1634 = memref.load %arg4[%c30_417] : memref<72xf32, #tpu.memory_space<smem>>
    %1635 = vector.broadcast %1634 : f32 to vector<16x16xf32>
    %1636 = arith.mulf %1633, %1635 : vector<16x16xf32>
    %1637 = arith.addf %1631, %1636 : vector<16x16xf32>
    %c6_418 = arith.constant 6 : index
    %c1_419 = arith.constant 1 : index
    %c1_420 = arith.constant 1 : index
    %1638 = vector.load %arg8[%c6_418, %c1_419, %c1_420] : memref<8x18x18xf32, #tpu.memory_space<vmem>>, vector<1x16x16xf32>
    %1639 = vector.shape_cast %1638 : vector<1x16x16xf32> to vector<16x16xf32>
    %c38_421 = arith.constant 38 : index
    %1640 = memref.load %arg4[%c38_421] : memref<72xf32, #tpu.memory_space<smem>>
    %1641 = vector.broadcast %1640 : f32 to vector<16x16xf32>
    %1642 = arith.mulf %1639, %1641 : vector<16x16xf32>
    %1643 = arith.addf %1637, %1642 : vector<16x16xf32>
    %c6_422 = arith.constant 6 : index
    %c1_423 = arith.constant 1 : index
    %c2_424 = arith.constant 2 : index
    %1644 = vector.load %arg8[%c6_422, %c1_423, %c2_424] : memref<8x18x18xf32, #tpu.memory_space<vmem>>, vector<1x16x16xf32>
    %1645 = vector.shape_cast %1644 : vector<1x16x16xf32> to vector<16x16xf32>
    %c46_425 = arith.constant 46 : index
    %1646 = memref.load %arg4[%c46_425] : memref<72xf32, #tpu.memory_space<smem>>
    %1647 = vector.broadcast %1646 : f32 to vector<16x16xf32>
    %1648 = arith.mulf %1645, %1647 : vector<16x16xf32>
    %1649 = arith.addf %1643, %1648 : vector<16x16xf32>
    %c6_426 = arith.constant 6 : index
    %c2_427 = arith.constant 2 : index
    %c0_428 = arith.constant 0 : index
    %1650 = vector.load %arg8[%c6_426, %c2_427, %c0_428] : memref<8x18x18xf32, #tpu.memory_space<vmem>>, vector<1x16x16xf32>
    %1651 = vector.shape_cast %1650 : vector<1x16x16xf32> to vector<16x16xf32>
    %c54_429 = arith.constant 54 : index
    %1652 = memref.load %arg4[%c54_429] : memref<72xf32, #tpu.memory_space<smem>>
    %1653 = vector.broadcast %1652 : f32 to vector<16x16xf32>
    %1654 = arith.mulf %1651, %1653 : vector<16x16xf32>
    %1655 = arith.addf %1649, %1654 : vector<16x16xf32>
    %c6_430 = arith.constant 6 : index
    %c2_431 = arith.constant 2 : index
    %c1_432 = arith.constant 1 : index
    %1656 = vector.load %arg8[%c6_430, %c2_431, %c1_432] : memref<8x18x18xf32, #tpu.memory_space<vmem>>, vector<1x16x16xf32>
    %1657 = vector.shape_cast %1656 : vector<1x16x16xf32> to vector<16x16xf32>
    %c62_433 = arith.constant 62 : index
    %1658 = memref.load %arg4[%c62_433] : memref<72xf32, #tpu.memory_space<smem>>
    %1659 = vector.broadcast %1658 : f32 to vector<16x16xf32>
    %1660 = arith.mulf %1657, %1659 : vector<16x16xf32>
    %1661 = arith.addf %1655, %1660 : vector<16x16xf32>
    %c6_434 = arith.constant 6 : index
    %c2_435 = arith.constant 2 : index
    %c2_436 = arith.constant 2 : index
    %1662 = vector.load %arg8[%c6_434, %c2_435, %c2_436] : memref<8x18x18xf32, #tpu.memory_space<vmem>>, vector<1x16x16xf32>
    %1663 = vector.shape_cast %1662 : vector<1x16x16xf32> to vector<16x16xf32>
    %c70_437 = arith.constant 70 : index
    %1664 = memref.load %arg4[%c70_437] : memref<72xf32, #tpu.memory_space<smem>>
    %1665 = vector.broadcast %1664 : f32 to vector<16x16xf32>
    %1666 = arith.mulf %1663, %1665 : vector<16x16xf32>
    %1667 = arith.addf %1661, %1666 : vector<16x16xf32>
    %c7_438 = arith.constant 7 : index
    %c0_439 = arith.constant 0 : index
    %c0_440 = arith.constant 0 : index
    %1668 = vector.load %arg8[%c7_438, %c0_439, %c0_440] : memref<8x18x18xf32, #tpu.memory_space<vmem>>, vector<1x16x16xf32>
    %1669 = vector.shape_cast %1668 : vector<1x16x16xf32> to vector<16x16xf32>
    %c7_441 = arith.constant 7 : index
    %1670 = memref.load %arg4[%c7_441] : memref<72xf32, #tpu.memory_space<smem>>
    %1671 = vector.broadcast %1670 : f32 to vector<16x16xf32>
    %1672 = arith.mulf %1669, %1671 : vector<16x16xf32>
    %1673 = arith.addf %1667, %1672 : vector<16x16xf32>
    %c7_442 = arith.constant 7 : index
    %c0_443 = arith.constant 0 : index
    %c1_444 = arith.constant 1 : index
    %1674 = vector.load %arg8[%c7_442, %c0_443, %c1_444] : memref<8x18x18xf32, #tpu.memory_space<vmem>>, vector<1x16x16xf32>
    %1675 = vector.shape_cast %1674 : vector<1x16x16xf32> to vector<16x16xf32>
    %c15_445 = arith.constant 15 : index
    %1676 = memref.load %arg4[%c15_445] : memref<72xf32, #tpu.memory_space<smem>>
    %1677 = vector.broadcast %1676 : f32 to vector<16x16xf32>
    %1678 = arith.mulf %1675, %1677 : vector<16x16xf32>
    %1679 = arith.addf %1673, %1678 : vector<16x16xf32>
    %c7_446 = arith.constant 7 : index
    %c0_447 = arith.constant 0 : index
    %c2_448 = arith.constant 2 : index
    %1680 = vector.load %arg8[%c7_446, %c0_447, %c2_448] : memref<8x18x18xf32, #tpu.memory_space<vmem>>, vector<1x16x16xf32>
    %1681 = vector.shape_cast %1680 : vector<1x16x16xf32> to vector<16x16xf32>
    %c23_449 = arith.constant 23 : index
    %1682 = memref.load %arg4[%c23_449] : memref<72xf32, #tpu.memory_space<smem>>
    %1683 = vector.broadcast %1682 : f32 to vector<16x16xf32>
    %1684 = arith.mulf %1681, %1683 : vector<16x16xf32>
    %1685 = arith.addf %1679, %1684 : vector<16x16xf32>
    %c7_450 = arith.constant 7 : index
    %c1_451 = arith.constant 1 : index
    %c0_452 = arith.constant 0 : index
    %1686 = vector.load %arg8[%c7_450, %c1_451, %c0_452] : memref<8x18x18xf32, #tpu.memory_space<vmem>>, vector<1x16x16xf32>
    %1687 = vector.shape_cast %1686 : vector<1x16x16xf32> to vector<16x16xf32>
    %c31_453 = arith.constant 31 : index
    %1688 = memref.load %arg4[%c31_453] : memref<72xf32, #tpu.memory_space<smem>>
    %1689 = vector.broadcast %1688 : f32 to vector<16x16xf32>
    %1690 = arith.mulf %1687, %1689 : vector<16x16xf32>
    %1691 = arith.addf %1685, %1690 : vector<16x16xf32>
    %c7_454 = arith.constant 7 : index
    %c1_455 = arith.constant 1 : index
    %c1_456 = arith.constant 1 : index
    %1692 = vector.load %arg8[%c7_454, %c1_455, %c1_456] : memref<8x18x18xf32, #tpu.memory_space<vmem>>, vector<1x16x16xf32>
    %1693 = vector.shape_cast %1692 : vector<1x16x16xf32> to vector<16x16xf32>
    %c39_457 = arith.constant 39 : index
    %1694 = memref.load %arg4[%c39_457] : memref<72xf32, #tpu.memory_space<smem>>
    %1695 = vector.broadcast %1694 : f32 to vector<16x16xf32>
    %1696 = arith.mulf %1693, %1695 : vector<16x16xf32>
    %1697 = arith.addf %1691, %1696 : vector<16x16xf32>
    %c7_458 = arith.constant 7 : index
    %c1_459 = arith.constant 1 : index
    %c2_460 = arith.constant 2 : index
    %1698 = vector.load %arg8[%c7_458, %c1_459, %c2_460] : memref<8x18x18xf32, #tpu.memory_space<vmem>>, vector<1x16x16xf32>
    %1699 = vector.shape_cast %1698 : vector<1x16x16xf32> to vector<16x16xf32>
    %c47_461 = arith.constant 47 : index
    %1700 = memref.load %arg4[%c47_461] : memref<72xf32, #tpu.memory_space<smem>>
    %1701 = vector.broadcast %1700 : f32 to vector<16x16xf32>
    %1702 = arith.mulf %1699, %1701 : vector<16x16xf32>
    %1703 = arith.addf %1697, %1702 : vector<16x16xf32>
    %c7_462 = arith.constant 7 : index
    %c2_463 = arith.constant 2 : index
    %c0_464 = arith.constant 0 : index
    %1704 = vector.load %arg8[%c7_462, %c2_463, %c0_464] : memref<8x18x18xf32, #tpu.memory_space<vmem>>, vector<1x16x16xf32>
    %1705 = vector.shape_cast %1704 : vector<1x16x16xf32> to vector<16x16xf32>
    %c55_465 = arith.constant 55 : index
    %1706 = memref.load %arg4[%c55_465] : memref<72xf32, #tpu.memory_space<smem>>
    %1707 = vector.broadcast %1706 : f32 to vector<16x16xf32>
    %1708 = arith.mulf %1705, %1707 : vector<16x16xf32>
    %1709 = arith.addf %1703, %1708 : vector<16x16xf32>
    %c7_466 = arith.constant 7 : index
    %c2_467 = arith.constant 2 : index
    %c1_468 = arith.constant 1 : index
    %1710 = vector.load %arg8[%c7_466, %c2_467, %c1_468] : memref<8x18x18xf32, #tpu.memory_space<vmem>>, vector<1x16x16xf32>
    %1711 = vector.shape_cast %1710 : vector<1x16x16xf32> to vector<16x16xf32>
    %c63_469 = arith.constant 63 : index
    %1712 = memref.load %arg4[%c63_469] : memref<72xf32, #tpu.memory_space<smem>>
    %1713 = vector.broadcast %1712 : f32 to vector<16x16xf32>
    %1714 = arith.mulf %1711, %1713 : vector<16x16xf32>
    %1715 = arith.addf %1709, %1714 : vector<16x16xf32>
    %c7_470 = arith.constant 7 : index
    %c2_471 = arith.constant 2 : index
    %c2_472 = arith.constant 2 : index
    %1716 = vector.load %arg8[%c7_470, %c2_471, %c2_472] : memref<8x18x18xf32, #tpu.memory_space<vmem>>, vector<1x16x16xf32>
    %1717 = vector.shape_cast %1716 : vector<1x16x16xf32> to vector<16x16xf32>
    %c71_473 = arith.constant 71 : index
    %1718 = memref.load %arg4[%c71_473] : memref<72xf32, #tpu.memory_space<smem>>
    %1719 = vector.broadcast %1718 : f32 to vector<16x16xf32>
    %1720 = arith.mulf %1717, %1719 : vector<16x16xf32>
    %1721 = arith.addf %1715, %1720 : vector<16x16xf32>
    %c0_474 = arith.constant 0 : index
    %1722 = memref.load %arg5[%c0_474] : memref<1xf32, #tpu.memory_space<smem>>
    %1723 = vector.broadcast %1722 : f32 to vector<16x16xf32>
    %1724 = arith.addf %1721, %1723 : vector<16x16xf32>
    %cst_475 = arith.constant dense<0xFF800000> : vector<16xf32>
    %1725 = vector.multi_reduction <maximumf>, %1724, %cst_475 [0] : vector<16x16xf32> to vector<16xf32>
    %1726 = vector.shape_cast %1725 : vector<16xf32> to vector<1x16xf32>
    %1727 = vector.broadcast %1726 : vector<1x16xf32> to vector<16x16xf32>
    %1728 = arith.subf %1724, %1727 : vector<16x16xf32>
    %1729 = math.exp %1728 : vector<16x16xf32>
    %cst_476 = arith.constant dense<0.000000e+00> : vector<16xf32>
    %1730 = vector.multi_reduction <add>, %1729, %cst_476 [0] : vector<16x16xf32> to vector<16xf32>
    %1731 = vector.shape_cast %1730 : vector<16xf32> to vector<1x16xf32>
    %1732 = vector.broadcast %1731 : vector<1x16xf32> to vector<16x16xf32>
    %1733 = arith.divf %1729, %1732 : vector<16x16xf32>
    %c0_477 = arith.constant 0 : index
    %c0_478 = arith.constant 0 : index
    %c0_479 = arith.constant 0 : index
    %1734 = vector.load %arg6[%c0_477, %c0_478, %c0_479] : memref<1x16x16xf32, #tpu.memory_space<vmem>>, vector<1x16x16xf32>
    %1735 = vector.shape_cast %1734 : vector<1x16x16xf32> to vector<16x16xf32>
    %1736 = vector.shape_cast %1733 : vector<16x16xf32> to vector<1x16x16xf32>
    tpu.vector_store %arg6[%c0_477, %c0_478, %c0_479], %1736 {strides = array<i32>} : memref<1x16x16xf32, #tpu.memory_space<vmem>>, vector<1x16x16xf32>,
    return
  }
  func.func @transform_0(%arg0: i32) -> (i32, i32, i32, i32) {
    %c0_i32 = arith.constant 0 : i32
    %c0_i32_0 = arith.constant 0 : i32
    %c0_i32_1 = arith.constant 0 : i32
    %c0_i32_2 = arith.constant 0 : i32
    return %arg0, %c0_i32, %c0_i32_0, %c0_i32_1 : i32, i32, i32, i32
  }
  func.func @transform_1(%arg0: i32) -> i32 {
    %c0_i32 = arith.constant 0 : i32
    %c0_i32_0 = arith.constant 0 : i32
    return %c0_i32 : i32
  }
  func.func @transform_2(%arg0: i32) -> i32 {
    %c0_i32 = arith.constant 0 : i32
    %c0_i32_0 = arith.constant 0 : i32
    return %c0_i32 : i32
  }
  func.func @transform_3(%arg0: i32) -> i32 {
    %c0_i32 = arith.constant 0 : i32
    %c0_i32_0 = arith.constant 0 : i32
    return %c0_i32 : i32
  }
  func.func @transform_4(%arg0: i32) -> i32 {
    %c0_i32 = arith.constant 0 : i32
    %c0_i32_0 = arith.constant 0 : i32
    return %c0_i32 : i32
  }
  func.func @transform_5(%arg0: i32) -> (i32, i32, i32) {
    %c0_i32 = arith.constant 0 : i32
    %c0_i32_0 = arith.constant 0 : i32
    %c0_i32_1 = arith.constant 0 : i32
    return %arg0, %c0_i32, %c0_i32_0 : i32, i32, i32
  }
}

</mosaic_0001>

<llo_original>
// kernel: tpu_custom_call.1
$region0: #{tpu_custom_call.1}
  #allocation0 [shape = 'u32[]', space=smem, size = 0x4, offset = 0x4, fixed_abs, tag = 'smem constant byte address 0x4 - core index']
  #allocation1 [shape = 'u32[72,128]{1,0:T(1,128)}', space=vmem, size = 0x9000, scoped, tag = 'internal scratch']
  #allocation2 [shape = 'f32[4,18,18]{2,1,0:T(8,128)}', space=vmem, size = 0xc000, scoped, tag = 'scratch operand']
  #allocation3 [shape = 'f32[8,18,18]{2,1,0:T(8,128)}', space=vmem, size = 0x18000, scoped, tag = 'scratch operand']
  #allocation4 [shape = 'f32[1]{0:T(128)S(6)}', space=smem, size = 0x200, scoped, tag = 'scoped memory for tpu_custom_call.1']
  %s0 = inlined_call_operand.hbm [shape: f32[2,4,16,16], index: 0, kind: input, shape index: {}]
  %s1 = inlined_call_operand.hbm [shape: f32[288], index: 1, kind: input, shape index: {}]
  %s2 = inlined_call_operand.vmem [shape: f32[8], index: 2, kind: input, shape index: {}]
  %s3 = inlined_call_operand.vmem [shape: f32[72], index: 3, kind: input, shape index: {}]
  %s4 = inlined_call_operand.<no memory space> [shape: f32[1], index: 4, kind: input, shape index: {}]
  %s5 = inlined_call_operand.hbm [shape: f32[2,16,16], index: 5, kind: output, shape index: {}]
  %s6 = sld [smem:[#allocation0]]
  $region69: #{tpu_custom_call.1} parent=0
    _
  %s8 = ssub.s32 1, %s6
  %s9 = scalar_select 0, %s8, %s6
  %10 = sst [smem:[#allocation4]] %s4
  $region1: #{tpu_custom_call.1} parent=0
    #allocation5 [shape = 'u8[65536]{0}', space=vmem, size = 0x10000, scoped, tag = 'input window, operand 0']
    #allocation6 [shape = 's32[2]{0}', space=sflag, size = 0x8, scoped, tag = 'scoped memory for tpu_custom_call.1']
    #allocation7 [shape = 's32[2]{0}', space=sflag, size = 0x8, scoped, tag = 'scoped memory for tpu_custom_call.1']
    #allocation8 [shape = 's32[2]{0}', space=sflag, size = 0x8, scoped, tag = 'scoped memory for tpu_custom_call.1']
    #allocation9 [shape = 's32[2]{0}', space=sflag, size = 0x8, scoped, tag = 'scoped memory for tpu_custom_call.1']
    #allocation10 [shape = 'u8[1536]{0}', space=smem, size = 0x600, scoped, tag = 'input window, operand 1, single buffered']
    #allocation11 [shape = 'u8[512]{0}', space=smem, size = 0x200, scoped, tag = 'input window, operand 2, single buffered']
    #allocation12 [shape = 'u8[512]{0}', space=smem, size = 0x200, scoped, tag = 'input window, operand 3, single buffered']
    #allocation13 [shape = 's32[1]{0}', space=sflag, size = 0x4, scoped, tag = 'scoped memory for tpu_custom_call.1']
    #allocation14 [shape = 'u8[16384]{0}', space=vmem, size = 0x4000, scoped, tag = 'output window, operand 0']
    %11 = vsyncpa [#allocation6], 0
    %s12 = scalar_lea.sflag [#allocation6], 1
    %13 = vsyncpa %s12, 0
    %14 = vsyncpa [#allocation8], 0
    %15 = vsyncpa [#allocation9], 0
    %16 = vsyncpa [#allocation13], 0
    %17 = vsyncpa [#allocation7], 0
    %s18 = scalar_lea.sflag [#allocation7], 1
    %19 = vsyncpa %s18, 0
    loop: start=0, step=1, limit=4
    $region2: #{tpu_custom_call.1} parent=1 // loop_pre_header
      _
    $region3: #{tpu_custom_call.1} parent=1 // loop_header
      %s21 = sphi 0, %s25
      %p22 = scmp.ge.s32.totalorder %s21, 4
      %s31 = sphi 0, %s33
      %s34 = sphi 0, %s31
      %s35 = sphi 0, %s34
      %s51 = sphi 0, %s35
      %s55 = sphi 0, %s55
      %s57 = sphi 0, %s55
      %s58 = sphi 0, %s57
      %s72 = sphi 0, %s58
      %s76 = sphi 0, %s76
      %s78 = sphi 0, %s76
      %s79 = sphi 0, %s78
      %s93 = sphi 0, %s79
      %s97 = sphi 0, %s97
      %s99 = sphi 0, %s97
      %s100 = sphi 0, %s99
      %s114 = sphi 0, %s100
      %s118 = sphi 0, %s118
      %s120 = sphi 0, %s118
      %s121 = sphi 0, %s120
      %s135 = sphi 0, %s121
      %s141 = sphi 0, %s143
      %s144 = sphi 0, %s141
      %s145 = sphi 0, %s144
      %s161 = sphi 0, %s145
    $region4: #{tpu_custom_call.1} parent=1 // loop_header_branch
      %24 = sbr.rel (%p22) target = $region8
    $region5: #{tpu_custom_call.1} parent=1 // loop_body
      %s26 = ssub.s32 %s21, 1
      %s27 = ssub.s32 %s21, 2
      %s28 = sadd.s32 %s21, 1
      %s29 = ssub.s32 %s21, %s28
      %p30 = scmp.eq.s32.totalorder %s29, 0
      %s32 = sadd.s32 %s31, 1
      %s33 = scalar_select %p30, %s31, %s32
      %p36 = pneg %p30
      %p37 = scmp.eq.s32.totalorder %s21, 1
      %p38 = por %p36, %p37
      %p39 = scmp.ne.s32.totalorder %s31, %s34
      %p40 = scmp.eq.s32.totalorder %s21, 0
      %p41 = por %p39, %p40
      %p42 = scmp.ne.s32.totalorder %s31, %s34
      %p43 = scmp.eq.s32.totalorder %s26, 1
      %p44 = por %p42, %p43
      %p45 = scmp.ne.s32.totalorder %s34, %s35
      %p46 = scmp.eq.s32.totalorder %s26, 0
      %p47 = por %p45, %p46
      %p48 = scmp.ne.s32.totalorder %s34, %s35
      %p49 = scmp.eq.s32.totalorder %s27, 1
      %p50 = por %p48, %p49
      %p52 = scmp.ne.s32.totalorder %s35, %s51
      %p53 = scmp.eq.s32.totalorder %s27, 0
      %p54 = por %p52, %p53
      %s56 = sadd.s32 %s55, 1
      %p59 = scmp.eq.s32.totalorder %s21, 1
      %p60 = scmp.ne.s32.totalorder %s55, %s57
      %p61 = scmp.eq.s32.totalorder %s21, 0
      %p62 = por %p60, %p61
      %p63 = scmp.ne.s32.totalorder %s55, %s57
      %p64 = scmp.eq.s32.totalorder %s26, 1
      %p65 = por %p63, %p64
      %p66 = scmp.ne.s32.totalorder %s57, %s58
      %p67 = scmp.eq.s32.totalorder %s26, 0
      %p68 = por %p66, %p67
      %p69 = scmp.ne.s32.totalorder %s57, %s58
      %p70 = scmp.eq.s32.totalorder %s27, 1
      %p71 = por %p69, %p70
      %p73 = scmp.ne.s32.totalorder %s58, %s72
      %p74 = scmp.eq.s32.totalorder %s27, 0
      %p75 = por %p73, %p74
      %s77 = sadd.s32 %s76, 1
      %p80 = scmp.eq.s32.totalorder %s21, 1
      %p81 = scmp.ne.s32.totalorder %s76, %s78
      %p82 = scmp.eq.s32.totalorder %s21, 0
      %p83 = por %p81, %p82
      %p84 = scmp.ne.s32.totalorder %s76, %s78
      %p85 = scmp.eq.s32.totalorder %s26, 1
      %p86 = por %p84, %p85
      %p87 = scmp.ne.s32.totalorder %s78, %s79
      %p88 = scmp.eq.s32.totalorder %s26, 0
      %p89 = por %p87, %p88
      %p90 = scmp.ne.s32.totalorder %s78, %s79
      %p91 = scmp.eq.s32.totalorder %s27, 1
      %p92 = por %p90, %p91
      %p94 = scmp.ne.s32.totalorder %s79, %s93
      %p95 = scmp.eq.s32.totalorder %s27, 0
      %p96 = por %p94, %p95
      %s98 = sadd.s32 %s97, 1
      %p101 = scmp.eq.s32.totalorder %s21, 1
      %p102 = scmp.ne.s32.totalorder %s97, %s99
      %p103 = scmp.eq.s32.totalorder %s21, 0
      %p104 = por %p102, %p103
      %p105 = scmp.ne.s32.totalorder %s97, %s99
      %p106 = scmp.eq.s32.totalorder %s26, 1
      %p107 = por %p105, %p106
      %p108 = scmp.ne.s32.totalorder %s99, %s100
      %p109 = scmp.eq.s32.totalorder %s26, 0
      %p110 = por %p108, %p109
      %p111 = scmp.ne.s32.totalorder %s99, %s100
      %p112 = scmp.eq.s32.totalorder %s27, 1
      %p113 = por %p111, %p112
      %p115 = scmp.ne.s32.totalorder %s100, %s114
      %p116 = scmp.eq.s32.totalorder %s27, 0
      %p117 = por %p115, %p116
      %s119 = sadd.s32 %s118, 1
      %p122 = scmp.eq.s32.totalorder %s21, 1
      %p123 = scmp.ne.s32.totalorder %s118, %s120
      %p124 = scmp.eq.s32.totalorder %s21, 0
      %p125 = por %p123, %p124
      %p126 = scmp.ne.s32.totalorder %s118, %s120
      %p127 = scmp.eq.s32.totalorder %s26, 1
      %p128 = por %p126, %p127
      %p129 = scmp.ne.s32.totalorder %s120, %s121
      %p130 = scmp.eq.s32.totalorder %s26, 0
      %p131 = por %p129, %p130
      %p132 = scmp.ne.s32.totalorder %s120, %s121
      %p133 = scmp.eq.s32.totalorder %s27, 1
      %p134 = por %p132, %p133
      %p136 = scmp.ne.s32.totalorder %s121, %s135
      %p137 = scmp.eq.s32.totalorder %s27, 0
      %p138 = por %p136, %p137
      %s139 = ssub.s32 %s21, %s28
      %p140 = scmp.eq.s32.totalorder %s139, 0
      %s142 = sadd.s32 %s141, 1
      %s143 = scalar_select %p140, %s141, %s142
      %p146 = pneg %p140
      %p147 = scmp.eq.s32.totalorder %s21, 1
      %p148 = por %p146, %p147
      %p149 = scmp.ne.s32.totalorder %s141, %s144
      %p150 = scmp.eq.s32.totalorder %s21, 0
      %p151 = por %p149, %p150
      %p152 = scmp.ne.s32.totalorder %s141, %s144
      %p153 = scmp.eq.s32.totalorder %s26, 1
      %p154 = por %p152, %p153
      %p155 = scmp.ne.s32.totalorder %s144, %s145
      %p156 = scmp.eq.s32.totalorder %s26, 0
      %p157 = por %p155, %p156
      %p158 = scmp.ne.s32.totalorder %s144, %s145
      %p159 = scmp.eq.s32.totalorder %s27, 1
      %p160 = por %p158, %p159
      %p162 = scmp.ne.s32.totalorder %s145, %s161
      %p163 = scmp.eq.s32.totalorder %s27, 0
      %p164 = por %p162, %p163
      %p165 = scmp.le.s32.totalorder 1, %s21
      %p166 = scmp.lt.s32.totalorder %s21, 3
      %p167 = pnand %p165, %p166
      %p168 = pneg %p167
      // Predicated region
      $region9: #{tpu_custom_call.1} parent=5 // pred_check
        _
      $region10: #{tpu_custom_call.1} parent=5 // pred_check_branch
        %170 = sbr.rel (%p167) target = $region12
      $region11: #{tpu_custom_call.1} parent=5 // pred_region
        %s171 = ssub.s32 %s21, 1
        // Predicated region
        $region13: #{tpu_custom_call.1} parent=11 // pred_check
          %p172 = pneg %p68
        $region14: #{tpu_custom_call.1} parent=11 // pred_check_branch
          %174 = sbr.rel (%p172) target = $region16
        $region15: #{tpu_custom_call.1} parent=11 // pred_region
          %176 = vsyncadd [#allocation8], 0
          %s178 = sshll.u32 %s1, 4
          %s179 = int_to_ptr.hbm [resolvable:$true] %s178
          %181 = dma.hbm_to_smem %s179, 48, [#allocation10], [#allocation8]
        $region16: #{tpu_custom_call.1} parent=11 // pred_fallthru
          _
        // Predicated region
        $region17: #{tpu_custom_call.1} parent=11 // pred_check
          %p182 = pneg %p89
        $region18: #{tpu_custom_call.1} parent=11 // pred_check_branch
          %184 = sbr.rel (%p182) target = $region20
        $region19: #{tpu_custom_call.1} parent=11 // pred_region
          %186 = vsyncadd [#allocation9], 0
          %s188 = sshll.u32 %s2, 4
          %s189 = int_to_ptr.vmem [resolvable:$true] %s188
          %191 = dma.vmem_to_smem %s189, 16, [#allocation11], [#allocation9]
        $region20: #{tpu_custom_call.1} parent=11 // pred_fallthru
          _
        // Predicated region
        $region21: #{tpu_custom_call.1} parent=11 // pred_check
          %p192 = pneg %p110
        $region22: #{tpu_custom_call.1} parent=11 // pred_check_branch
          %194 = sbr.rel (%p192) target = $region24
        $region23: #{tpu_custom_call.1} parent=11 // pred_region
          %196 = vsyncadd [#allocation13], 0
          %s198 = sshll.u32 %s3, 4
          %s199 = int_to_ptr.vmem [resolvable:$true] %s198
          %201 = dma.vmem_to_smem %s199, 16, [#allocation12], [#allocation13]
        $region24: #{tpu_custom_call.1} parent=11 // pred_fallthru
          _
        // Predicated region
        $region25: #{tpu_custom_call.1} parent=11 // pred_check
          %p202 = pneg %p131
        $region26: #{tpu_custom_call.1} parent=11 // pred_check_branch
          %204 = sbr.rel (%p202) target = $region28
        $region27: #{tpu_custom_call.1} parent=11 // pred_region
          _
        $region28: #{tpu_custom_call.1} parent=11 // pred_fallthru
          _
      $region12: #{tpu_custom_call.1} parent=5 // pred_fallthru
        _
      %p205 = scmp.lt.s32.totalorder %s21, 2
      // Predicated region
      $region29: #{tpu_custom_call.1} parent=5 // pred_check
        %p206 = pneg %p205
      $region30: #{tpu_custom_call.1} parent=5 // pred_check_branch
        %208 = sbr.rel (%p206) target = $region32
      $region31: #{tpu_custom_call.1} parent=5 // pred_region
        // Predicated region
        $region33: #{tpu_custom_call.1} parent=31 // pred_check
          %p209 = pneg %p41
        $region34: #{tpu_custom_call.1} parent=31 // pred_check_branch
          %211 = sbr.rel (%p209) target = $region36
        $region35: #{tpu_custom_call.1} parent=31 // pred_region
          %s212 = sand.u32 %s31, 1
          %s213 = scalar_lea.sflag [#allocation6], %s212
          %s214 = sand.u32 %s31, 1
          %s215 = smul.addr %s214, 64
          %s216 = scalar_lea.vmem [#allocation5], %s215
          %218 = vsyncadd %s213, 0
          %s219 = smul.addr %s21, 8
          %s220 = smul.addr %s219, 8
          %s221 = scalar_lea.hbm %s0, %s220
          %s222 = sshll.u32 %s221, 4
          %s223 = int_to_ptr.hbm [resolvable:$true] %s222
          %s224 = sshll.u32 %s216, 4
          %s225 = int_to_ptr.vmem [resolvable:$true] %s224
          %230 = dma.hbm_to_vmem [thread:$0]  %s223, 1024, %s225, %s213, 128, 128, 8
        $region36: #{tpu_custom_call.1} parent=31 // pred_fallthru
          _
      $region32: #{tpu_custom_call.1} parent=5 // pred_fallthru
        _
      %p231 = scmp.le.s32.totalorder 1, %s21
      %p232 = scmp.lt.s32.totalorder %s21, 3
      %p233 = pnand %p231, %p232
      %p234 = pneg %p233
      // Predicated region
      $region37: #{tpu_custom_call.1} parent=5 // pred_check
        _
      $region38: #{tpu_custom_call.1} parent=5 // pred_check_branch
        %236 = sbr.rel (%p233) target = $region40
      $region39: #{tpu_custom_call.1} parent=5 // pred_region
        %s237 = ssub.s32 %s21, 1
        %s238 = sand.u32 %s34, 1
        %s239 = scalar_lea.sflag [#allocation6], %s238
        %s240 = sand.u32 %s34, 1
        %s241 = smul.addr %s240, 64
        %s242 = scalar_lea.vmem [#allocation5], %s241
        // Predicated region
        $region41: #{tpu_custom_call.1} parent=39 // pred_check
          %p243 = pneg %p47
        $region42: #{tpu_custom_call.1} parent=39 // pred_check_branch
          %245 = sbr.rel (%p243) target = $region44
        $region43: #{tpu_custom_call.1} parent=39 // pred_region
          %247 = dma.done %s239, 1024
        $region44: #{tpu_custom_call.1} parent=39 // pred_fallthru
          _
        // Predicated region
        $region45: #{tpu_custom_call.1} parent=39 // pred_check
          %p248 = pneg %p68
        $region46: #{tpu_custom_call.1} parent=39 // pred_check_branch
          %250 = sbr.rel (%p248) target = $region48
        $region47: #{tpu_custom_call.1} parent=39 // pred_region
          %252 = dma.done [#allocation8], 48
        $region48: #{tpu_custom_call.1} parent=39 // pred_fallthru
          _
        // Predicated region
        $region49: #{tpu_custom_call.1} parent=39 // pred_check
          %p253 = pneg %p89
        $region50: #{tpu_custom_call.1} parent=39 // pred_check_branch
          %255 = sbr.rel (%p253) target = $region52
        $region51: #{tpu_custom_call.1} parent=39 // pred_region
          %257 = dma.done [#allocation9], 16
        $region52: #{tpu_custom_call.1} parent=39 // pred_fallthru
          _
        // Predicated region
        $region53: #{tpu_custom_call.1} parent=39 // pred_check
          %p258 = pneg %p110
        $region54: #{tpu_custom_call.1} parent=39 // pred_check_branch
          %260 = sbr.rel (%p258) target = $region56
        $region55: #{tpu_custom_call.1} parent=39 // pred_region
          %262 = dma.done [#allocation13], 16
        $region56: #{tpu_custom_call.1} parent=39 // pred_fallthru
          _
        %263 = sfence
        %s264 = sand.u32 %s34, 1
        %s265 = scalar_lea.sflag [#allocation6], %s264
        %s266 = sand.u32 %s34, 1
        %s267 = smul.addr %s266, 64
        %s268 = scalar_lea.vmem [#allocation5], %s267
        %p269 = pneg %p47
        %p270 = pneg %p44
        %p271 = pneg %p68
        %p272 = pneg %p65
        %p273 = pneg %p89
        %p274 = pneg %p86
        %p275 = pneg %p110
        %p276 = pneg %p107
        %p277 = pneg %p131
        %p278 = pneg %p128
        %p279 = pneg %p157
        %p280 = pneg %p154
        %s281 = sand.u32 %s144, 1
        %s282 = scalar_lea.sflag [#allocation7], %s281
        %s283 = sand.u32 %s144, 1
        %s284 = smul.addr %s283, 16
        %s285 = scalar_lea.vmem [#allocation14], %s284
        %vm286 = vcmask 139264
        %287 = vst.msk [vmem:[#allocation2] sm:$0x1] %vm286, 0.0
        %288 = vst.msk [vmem:[#allocation2 + $0x18] sm:$0x1] %vm286, 0.0
        %289 = vst.msk [vmem:[#allocation2 + $0x30] sm:$0x1] %vm286, 0.0
        %290 = vst.msk [vmem:[#allocation2 + $0x48] sm:$0x1] %vm286, 0.0
        %291 = vst.msk [vmem:[#allocation2 + $0x11] sm:$0x1] %vm286, 0.0
        %292 = vst.msk [vmem:[#allocation2 + $0x29] sm:$0x1] %vm286, 0.0
        %293 = vst.msk [vmem:[#allocation2 + $0x41] sm:$0x1] %vm286, 0.0
        %294 = vst.msk [vmem:[#allocation2 + $0x59] sm:$0x1] %vm286, 0.0
        %vm295 = vcmask 7168
        %296 = vst.msk [vmem:[#allocation2] sm:$0xff] %vm295, 0.0
        %297 = vst.msk [vmem:[#allocation2 + $0x8] sm:$0xff] %vm295, 0.0
        %vm298 = vcmask 1024
        %299 = vst.msk [vmem:[#allocation2 + $0x10] sm:$0x3] %vm298, 0.0
        %300 = vst.msk [vmem:[#allocation2 + $0x18] sm:$0xff] %vm295, 0.0
        %301 = vst.msk [vmem:[#allocation2 + $0x20] sm:$0xff] %vm295, 0.0
        %302 = vst.msk [vmem:[#allocation2 + $0x28] sm:$0x3] %vm298, 0.0
        %303 = vst.msk [vmem:[#allocation2 + $0x30] sm:$0xff] %vm295, 0.0
        %304 = vst.msk [vmem:[#allocation2 + $0x38] sm:$0xff] %vm295, 0.0
        %305 = vst.msk [vmem:[#allocation2 + $0x40] sm:$0x3] %vm298, 0.0
        %306 = vst.msk [vmem:[#allocation2 + $0x48] sm:$0xff] %vm295, 0.0
        %307 = vst.msk [vmem:[#allocation2 + $0x50] sm:$0xff] %vm295, 0.0
        %308 = vst.msk [vmem:[#allocation2 + $0x58] sm:$0x3] %vm298, 0.0
        %vm309 = vcmask 146568
        %310 = vst.msk [vmem:[#allocation2] sm:$0xff] %vm309, 0.0
        %311 = vst.msk [vmem:[#allocation2 + $0x8] sm:$0xff] %vm309, 0.0
        %vm312 = vcmask 140424
        %313 = vst.msk [vmem:[#allocation2 + $0x10] sm:$0x3] %vm312, 0.0
        %314 = vst.msk [vmem:[#allocation2 + $0x18] sm:$0xff] %vm309, 0.0
        %315 = vst.msk [vmem:[#allocation2 + $0x20] sm:$0xff] %vm309, 0.0
        %316 = vst.msk [vmem:[#allocation2 + $0x28] sm:$0x3] %vm312, 0.0
        %317 = vst.msk [vmem:[#allocation2 + $0x30] sm:$0xff] %vm309, 0.0
        %318 = vst.msk [vmem:[#allocation2 + $0x38] sm:$0xff] %vm309, 0.0
        %319 = vst.msk [vmem:[#allocation2 + $0x40] sm:$0x3] %vm312, 0.0
        %320 = vst.msk [vmem:[#allocation2 + $0x48] sm:$0xff] %vm309, 0.0
        %321 = vst.msk [vmem:[#allocation2 + $0x50] sm:$0xff] %vm309, 0.0
        %322 = vst.msk [vmem:[#allocation2 + $0x58] sm:$0x3] %vm312, 0.0
        %323 = vst.msk [vmem:[#allocation3] sm:$0x1] %vm286, 0.0
        %324 = vst.msk [vmem:[#allocation3 + $0x18] sm:$0x1] %vm286, 0.0
        %325 = vst.msk [vmem:[#allocation3 + $0x30] sm:$0x1] %vm286, 0.0
        %326 = vst.msk [vmem:[#allocation3 + $0x48] sm:$0x1] %vm286, 0.0
        %327 = vst.msk [vmem:[#allocation3 + $0x60] sm:$0x1] %vm286, 0.0
        %328 = vst.msk [vmem:[#allocation3 + $0x78] sm:$0x1] %vm286, 0.0
        %329 = vst.msk [vmem:[#allocation3 + $0x90] sm:$0x1] %vm286, 0.0
        %330 = vst.msk [vmem:[#allocation3 + $0xa8] sm:$0x1] %vm286, 0.0
        %331 = vst.msk [vmem:[#allocation3 + $0x11] sm:$0x1] %vm286, 0.0
        %332 = vst.msk [vmem:[#allocation3 + $0x29] sm:$0x1] %vm286, 0.0
        %333 = vst.msk [vmem:[#allocation3 + $0x41] sm:$0x1] %vm286, 0.0
        %334 = vst.msk [vmem:[#allocation3 + $0x59] sm:$0x1] %vm286, 0.0
        %335 = vst.msk [vmem:[#allocation3 + $0x71] sm:$0x1] %vm286, 0.0
        %336 = vst.msk [vmem:[#allocation3 + $0x89] sm:$0x1] %vm286, 0.0
        %337 = vst.msk [vmem:[#allocation3 + $0xa1] sm:$0x1] %vm286, 0.0
        %338 = vst.msk [vmem:[#allocation3 + $0xb9] sm:$0x1] %vm286, 0.0
        %339 = vst.msk [vmem:[#allocation3] sm:$0xff] %vm295, 0.0
        %340 = vst.msk [vmem:[#allocation3 + $0x8] sm:$0xff] %vm295, 0.0
        %341 = vst.msk [vmem:[#allocation3 + $0x10] sm:$0x3] %vm298, 0.0
        %342 = vst.msk [vmem:[#allocation3 + $0x18] sm:$0xff] %vm295, 0.0
        %343 = vst.msk [vmem:[#allocation3 + $0x20] sm:$0xff] %vm295, 0.0
        %344 = vst.msk [vmem:[#allocation3 + $0x28] sm:$0x3] %vm298, 0.0
        %345 = vst.msk [vmem:[#allocation3 + $0x30] sm:$0xff] %vm295, 0.0
        %346 = vst.msk [vmem:[#allocation3 + $0x38] sm:$0xff] %vm295, 0.0
        %347 = vst.msk [vmem:[#allocation3 + $0x40] sm:$0x3] %vm298, 0.0
        %348 = vst.msk [vmem:[#allocation3 + $0x48] sm:$0xff] %vm295, 0.0
        %349 = vst.msk [vmem:[#allocation3 + $0x50] sm:$0xff] %vm295, 0.0
        %350 = vst.msk [vmem:[#allocation3 + $0x58] sm:$0x3] %vm298, 0.0
        %351 = vst.msk [vmem:[#allocation3 + $0x60] sm:$0xff] %vm295, 0.0
        %352 = vst.msk [vmem:[#allocation3 + $0x68] sm:$0xff] %vm295, 0.0
        %353 = vst.msk [vmem:[#allocation3 + $0x70] sm:$0x3] %vm298, 0.0
        %354 = vst.msk [vmem:[#allocation3 + $0x78] sm:$0xff] %vm295, 0.0
        %355 = vst.msk [vmem:[#allocation3 + $0x80] sm:$0xff] %vm295, 0.0
        %356 = vst.msk [vmem:[#allocation3 + $0x88] sm:$0x3] %vm298, 0.0
        %357 = vst.msk [vmem:[#allocation3 + $0x90] sm:$0xff] %vm295, 0.0
        %358 = vst.msk [vmem:[#allocation3 + $0x98] sm:$0xff] %vm295, 0.0
        %359 = vst.msk [vmem:[#allocation3 + $0xa0] sm:$0x3] %vm298, 0.0
        %360 = vst.msk [vmem:[#allocation3 + $0xa8] sm:$0xff] %vm295, 0.0
        %361 = vst.msk [vmem:[#allocation3 + $0xb0] sm:$0xff] %vm295, 0.0
        %362 = vst.msk [vmem:[#allocation3 + $0xb8] sm:$0x3] %vm298, 0.0
        %363 = vst.msk [vmem:[#allocation3] sm:$0xff] %vm309, 0.0
        %364 = vst.msk [vmem:[#allocation3 + $0x8] sm:$0xff] %vm309, 0.0
        %365 = vst.msk [vmem:[#allocation3 + $0x10] sm:$0x3] %vm312, 0.0
        %366 = vst.msk [vmem:[#allocation3 + $0x18] sm:$0xff] %vm309, 0.0
        %367 = vst.msk [vmem:[#allocation3 + $0x20] sm:$0xff] %vm309, 0.0
        %368 = vst.msk [vmem:[#allocation3 + $0x28] sm:$0x3] %vm312, 0.0
        %369 = vst.msk [vmem:[#allocation3 + $0x30] sm:$0xff] %vm309, 0.0
        %370 = vst.msk [vmem:[#allocation3 + $0x38] sm:$0xff] %vm309, 0.0
        %371 = vst.msk [vmem:[#allocation3 + $0x40] sm:$0x3] %vm312, 0.0
        %372 = vst.msk [vmem:[#allocation3 + $0x48] sm:$0xff] %vm309, 0.0
        %373 = vst.msk [vmem:[#allocation3 + $0x50] sm:$0xff] %vm309, 0.0
        %374 = vst.msk [vmem:[#allocation3 + $0x58] sm:$0x3] %vm312, 0.0
        %375 = vst.msk [vmem:[#allocation3 + $0x60] sm:$0xff] %vm309, 0.0
        %376 = vst.msk [vmem:[#allocation3 + $0x68] sm:$0xff] %vm309, 0.0
        %377 = vst.msk [vmem:[#allocation3 + $0x70] sm:$0x3] %vm312, 0.0
        %378 = vst.msk [vmem:[#allocation3 + $0x78] sm:$0xff] %vm309, 0.0
        %379 = vst.msk [vmem:[#allocation3 + $0x80] sm:$0xff] %vm309, 0.0
        %380 = vst.msk [vmem:[#allocation3 + $0x88] sm:$0x3] %vm312, 0.0
        %381 = vst.msk [vmem:[#allocation3 + $0x90] sm:$0xff] %vm309, 0.0
        %382 = vst.msk [vmem:[#allocation3 + $0x98] sm:$0xff] %vm309, 0.0
        %383 = vst.msk [vmem:[#allocation3 + $0xa0] sm:$0x3] %vm312, 0.0
        %384 = vst.msk [vmem:[#allocation3 + $0xa8] sm:$0xff] %vm309, 0.0
        %385 = vst.msk [vmem:[#allocation3 + $0xb0] sm:$0xff] %vm309, 0.0
        %386 = vst.msk [vmem:[#allocation3 + $0xb8] sm:$0x3] %vm312, 0.0
        %v387 = vld [vmem:[%s242] sm:$0xff]
        %v388 = vld [vmem:[%s242 + $0x8] sm:$0xff]
        %v389 = vld [vmem:[%s242 + $0x10] sm:$0xff]
        %v390 = vld [vmem:[%s242 + $0x18] sm:$0xff]
        %v391 = vld [vmem:[%s242 + $0x20] sm:$0xff]
        %v392 = vld [vmem:[%s242 + $0x28] sm:$0xff]
        %v393 = vld [vmem:[%s242 + $0x30] sm:$0xff]
        %v394 = vld [vmem:[%s242 + $0x38] sm:$0xff]
        %403 = vrot.lane.b32.xlu0 %v387, 1
        %v404 = vpop.permute.xlu0 %403
        %405 = vrot.lane.b32.xlu0 %v388, 1
        %v406 = vpop.permute.xlu0 %405
        %407 = vrot.lane.b32.xlu0 %v389, 1
        %v408 = vpop.permute.xlu0 %407
        %409 = vrot.lane.b32.xlu0 %v390, 1
        %v410 = vpop.permute.xlu0 %409
        %411 = vrot.lane.b32.xlu0 %v391, 1
        %v412 = vpop.permute.xlu0 %411
        %413 = vrot.lane.b32.xlu0 %v392, 1
        %v414 = vpop.permute.xlu0 %413
        %415 = vrot.lane.b32.xlu0 %v393, 1
        %v416 = vpop.permute.xlu0 %415
        %417 = vrot.lane.b32.xlu0 %v394, 1
        %v418 = vpop.permute.xlu0 %417
        %vm427 = vcmask 138248
        %428 = vst.msk [vmem:[#allocation2 + $0x1] sm:$0xff] %vm427, %v404
        %429 = vst.msk [vmem:[#allocation2 + $0x9] sm:$0xff] %vm427, %v406
        %430 = vst.msk [vmem:[#allocation2 + $0x19] sm:$0xff] %vm427, %v408
        %431 = vst.msk [vmem:[#allocation2 + $0x21] sm:$0xff] %vm427, %v410
        %432 = vst.msk [vmem:[#allocation2 + $0x31] sm:$0xff] %vm427, %v412
        %433 = vst.msk [vmem:[#allocation2 + $0x39] sm:$0xff] %vm427, %v414
        %434 = vst.msk [vmem:[#allocation2 + $0x49] sm:$0xff] %vm427, %v416
        %435 = vst.msk [vmem:[#allocation2 + $0x51] sm:$0xff] %vm427, %v418
        %v436 = vld [vmem:[#allocation2] sm:$0xff]
        %v437 = vld [vmem:[#allocation2 + $0x8] sm:$0xff]
        %s438 = sld [smem:[#allocation10]]
        %v439 = vstv %s438
        %v440 = vmul.f32 %v436, %v439
        %v441 = vmul.f32 %v437, %v439
        %s442 = sld [smem:[#allocation10 + $0x1]]
        %v443 = vstv %s442
        %v444 = vmul.f32 %v436, %v443
        %v445 = vmul.f32 %v437, %v443
        %s446 = sld [smem:[#allocation10 + $0x2]]
        %v447 = vstv %s446
        %v448 = vmul.f32 %v436, %v447
        %v449 = vmul.f32 %v437, %v447
        %s450 = sld [smem:[#allocation10 + $0x3]]
        %v451 = vstv %s450
        %v452 = vmul.f32 %v436, %v451
        %v453 = vmul.f32 %v437, %v451
        %s454 = sld [smem:[#allocation10 + $0x4]]
        %v455 = vstv %s454
        %v456 = vmul.f32 %v436, %v455
        %v457 = vmul.f32 %v437, %v455
        %s458 = sld [smem:[#allocation10 + $0x5]]
        %v459 = vstv %s458
        %v460 = vmul.f32 %v436, %v459
        %v461 = vmul.f32 %v437, %v459
        %s462 = sld [smem:[#allocation10 + $0x6]]
        %v463 = vstv %s462
        %v464 = vmul.f32 %v436, %v463
        %v465 = vmul.f32 %v437, %v463
        %s466 = sld [smem:[#allocation10 + $0x7]]
        %v467 = vstv %s466
        %v468 = vmul.f32 %v436, %v467
        %v469 = vmul.f32 %v437, %v467
        %s470 = sld [smem:[#allocation10 + $0x20]]
        %v471 = vstv %s470
        %v472 = vmul.f32 %v436, %v471
        %v473 = vmul.f32 %v437, %v471
        %476 = vrot.lane.b32.xlu0 %v472, 127
        %v477 = vpop.permute.xlu0 %476
        %478 = vrot.lane.b32.xlu0 %v473, 127
        %v479 = vpop.permute.xlu0 %478
        %v482 = vadd.f32 %v440, %v477
        %v483 = vadd.f32 %v441, %v479
        %s484 = sld [smem:[#allocation10 + $0x21]]
        %v485 = vstv %s484
        %v486 = vmul.f32 %v436, %v485
        %v487 = vmul.f32 %v437, %v485
        %490 = vrot.lane.b32.xlu0 %v486, 127
        %v491 = vpop.permute.xlu0 %490
        %492 = vrot.lane.b32.xlu0 %v487, 127
        %v493 = vpop.permute.xlu0 %492
        %v496 = vadd.f32 %v444, %v491
        %v497 = vadd.f32 %v445, %v493
        %s498 = sld [smem:[#allocation10 + $0x22]]
        %v499 = vstv %s498
        %v500 = vmul.f32 %v436, %v499
        %v501 = vmul.f32 %v437, %v499
        %504 = vrot.lane.b32.xlu0 %v500, 127
        %v505 = vpop.permute.xlu0 %504
        %506 = vrot.lane.b32.xlu0 %v501, 127
        %v507 = vpop.permute.xlu0 %506
        %v510 = vadd.f32 %v448, %v505
        %v511 = vadd.f32 %v449, %v507
        %s512 = sld [smem:[#allocation10 + $0x23]]
        %v513 = vstv %s512
        %v514 = vmul.f32 %v436, %v513
        %v515 = vmul.f32 %v437, %v513
        %518 = vrot.lane.b32.xlu0 %v514, 127
        %v519 = vpop.permute.xlu0 %518
        %520 = vrot.lane.b32.xlu0 %v515, 127
        %v521 = vpop.permute.xlu0 %520
        %v524 = vadd.f32 %v452, %v519
        %v525 = vadd.f32 %v453, %v521
        %s526 = sld [smem:[#allocation10 + $0x24]]
        %v527 = vstv %s526
        %v528 = vmul.f32 %v436, %v527
        %v529 = vmul.f32 %v437, %v527
        %532 = vrot.lane.b32.xlu0 %v528, 127
        %v533 = vpop.permute.xlu0 %532
        %534 = vrot.lane.b32.xlu0 %v529, 127
        %v535 = vpop.permute.xlu0 %534
        %v538 = vadd.f32 %v456, %v533
        %v539 = vadd.f32 %v457, %v535
        %s540 = sld [smem:[#allocation10 + $0x25]]
        %v541 = vstv %s540
        %v542 = vmul.f32 %v436, %v541
        %v543 = vmul.f32 %v437, %v541
        %546 = vrot.lane.b32.xlu0 %v542, 127
        %v547 = vpop.permute.xlu0 %546
        %548 = vrot.lane.b32.xlu0 %v543, 127
        %v549 = vpop.permute.xlu0 %548
        %v552 = vadd.f32 %v460, %v547
        %v553 = vadd.f32 %v461, %v549
        %s554 = sld [smem:[#allocation10 + $0x26]]
        %v555 = vstv %s554
        %v556 = vmul.f32 %v436, %v555
        %v557 = vmul.f32 %v437, %v555
        %560 = vrot.lane.b32.xlu0 %v556, 127
        %v561 = vpop.permute.xlu0 %560
        %562 = vrot.lane.b32.xlu0 %v557, 127
        %v563 = vpop.permute.xlu0 %562
        %v566 = vadd.f32 %v464, %v561
        %v567 = vadd.f32 %v465, %v563
        %s568 = sld [smem:[#allocation10 + $0x27]]
        %v569 = vstv %s568
        %v570 = vmul.f32 %v436, %v569
        %v571 = vmul.f32 %v437, %v569
        %574 = vrot.lane.b32.xlu0 %v570, 127
        %v575 = vpop.permute.xlu0 %574
        %576 = vrot.lane.b32.xlu0 %v571, 127
        %v577 = vpop.permute.xlu0 %576
        %v580 = vadd.f32 %v468, %v575
        %v581 = vadd.f32 %v469, %v577
        %s582 = sld [smem:[#allocation10 + $0x40]]
        %v583 = vstv %s582
        %v584 = vmul.f32 %v436, %v583
        %v585 = vmul.f32 %v437, %v583
        %588 = vrot.lane.b32.xlu0 %v584, 126
        %v589 = vpop.permute.xlu0 %588
        %590 = vrot.lane.b32.xlu0 %v585, 126
        %v591 = vpop.permute.xlu0 %590
        %v594 = vadd.f32 %v482, %v589
        %v595 = vadd.f32 %v483, %v591
        %s596 = sld [smem:[#allocation10 + $0x41]]
        %v597 = vstv %s596
        %v598 = vmul.f32 %v436, %v597
        %v599 = vmul.f32 %v437, %v597
        %602 = vrot.lane.b32.xlu0 %v598, 126
        %v603 = vpop.permute.xlu0 %602
        %604 = vrot.lane.b32.xlu0 %v599, 126
        %v605 = vpop.permute.xlu0 %604
        %v608 = vadd.f32 %v496, %v603
        %v609 = vadd.f32 %v497, %v605
        %s610 = sld [smem:[#allocation10 + $0x42]]
        %v611 = vstv %s610
        %v612 = vmul.f32 %v436, %v611
        %v613 = vmul.f32 %v437, %v611
        %616 = vrot.lane.b32.xlu0 %v612, 126
        %v617 = vpop.permute.xlu0 %616
        %618 = vrot.lane.b32.xlu0 %v613, 126
        %v619 = vpop.permute.xlu0 %618
        %v622 = vadd.f32 %v510, %v617
        %v623 = vadd.f32 %v511, %v619
        %s624 = sld [smem:[#allocation10 + $0x43]]
        %v625 = vstv %s624
        %v626 = vmul.f32 %v436, %v625
        %v627 = vmul.f32 %v437, %v625
        %630 = vrot.lane.b32.xlu0 %v626, 126
        %v631 = vpop.permute.xlu0 %630
        %632 = vrot.lane.b32.xlu0 %v627, 126
        %v633 = vpop.permute.xlu0 %632
        %v636 = vadd.f32 %v524, %v631
        %v637 = vadd.f32 %v525, %v633
        %s638 = sld [smem:[#allocation10 + $0x44]]
        %v639 = vstv %s638
        %v640 = vmul.f32 %v436, %v639
        %v641 = vmul.f32 %v437, %v639
        %644 = vrot.lane.b32.xlu0 %v640, 126
        %v645 = vpop.permute.xlu0 %644
        %646 = vrot.lane.b32.xlu0 %v641, 126
        %v647 = vpop.permute.xlu0 %646
        %v650 = vadd.f32 %v538, %v645
        %v651 = vadd.f32 %v539, %v647
        %s652 = sld [smem:[#allocation10 + $0x45]]
        %v653 = vstv %s652
        %v654 = vmul.f32 %v436, %v653
        %v655 = vmul.f32 %v437, %v653
        %658 = vrot.lane.b32.xlu0 %v654, 126
        %v659 = vpop.permute.xlu0 %658
        %660 = vrot.lane.b32.xlu0 %v655, 126
        %v661 = vpop.permute.xlu0 %660
        %v664 = vadd.f32 %v552, %v659
        %v665 = vadd.f32 %v553, %v661
        %s666 = sld [smem:[#allocation10 + $0x46]]
        %v667 = vstv %s666
        %v668 = vmul.f32 %v436, %v667
        %v669 = vmul.f32 %v437, %v667
        %672 = vrot.lane.b32.xlu0 %v668, 126
        %v673 = vpop.permute.xlu0 %672
        %674 = vrot.lane.b32.xlu0 %v669, 126
        %v675 = vpop.permute.xlu0 %674
        %v678 = vadd.f32 %v566, %v673
        %v679 = vadd.f32 %v567, %v675
        %s680 = sld [smem:[#allocation10 + $0x47]]
        %v681 = vstv %s680
        %v682 = vmul.f32 %v436, %v681
        %v683 = vmul.f32 %v437, %v681
        %686 = vrot.lane.b32.xlu0 %v682, 126
        %v687 = vpop.permute.xlu0 %686
        %688 = vrot.lane.b32.xlu0 %v683, 126
        %v689 = vpop.permute.xlu0 %688
        %v692 = vadd.f32 %v580, %v687
        %v693 = vadd.f32 %v581, %v689
        %v694 = vld [vmem:[#allocation2 + $0x1] sm:$0xff]
        %v695 = vld [vmem:[#allocation2 + $0x9] sm:$0xff]
        %s696 = sld [smem:[#allocation10 + $0x60]]
        %v697 = vstv %s696
        %v698 = vmul.f32 %v694, %v697
        %v699 = vmul.f32 %v695, %v697
        %v700 = vadd.f32 %v594, %v698
        %v701 = vadd.f32 %v595, %v699
        %s702 = sld [smem:[#allocation10 + $0x61]]
        %v703 = vstv %s702
        %v704 = vmul.f32 %v694, %v703
        %v705 = vmul.f32 %v695, %v703
        %v706 = vadd.f32 %v608, %v704
        %v707 = vadd.f32 %v609, %v705
        %s708 = sld [smem:[#allocation10 + $0x62]]
        %v709 = vstv %s708
        %v710 = vmul.f32 %v694, %v709
        %v711 = vmul.f32 %v695, %v709
        %v712 = vadd.f32 %v622, %v710
        %v713 = vadd.f32 %v623, %v711
        %s714 = sld [smem:[#allocation10 + $0x63]]
        %v715 = vstv %s714
        %v716 = vmul.f32 %v694, %v715
        %v717 = vmul.f32 %v695, %v715
        %v718 = vadd.f32 %v636, %v716
        %v719 = vadd.f32 %v637, %v717
        %s720 = sld [smem:[#allocation10 + $0x64]]
        %v721 = vstv %s720
        %v722 = vmul.f32 %v694, %v721
        %v723 = vmul.f32 %v695, %v721
        %v724 = vadd.f32 %v650, %v722
        %v725 = vadd.f32 %v651, %v723
        %s726 = sld [smem:[#allocation10 + $0x65]]
        %v727 = vstv %s726
        %v728 = vmul.f32 %v694, %v727
        %v729 = vmul.f32 %v695, %v727
        %v730 = vadd.f32 %v664, %v728
        %v731 = vadd.f32 %v665, %v729
        %s732 = sld [smem:[#allocation10 + $0x66]]
        %v733 = vstv %s732
        %v734 = vmul.f32 %v694, %v733
        %v735 = vmul.f32 %v695, %v733
        %v736 = vadd.f32 %v678, %v734
        %v737 = vadd.f32 %v679, %v735
        %s738 = sld [smem:[#allocation10 + $0x67]]
        %v739 = vstv %s738
        %v740 = vmul.f32 %v694, %v739
        %v741 = vmul.f32 %v695, %v739
        %v742 = vadd.f32 %v692, %v740
        %v743 = vadd.f32 %v693, %v741
        %s744 = sld [smem:[#allocation10 + $0x80]]
        %v745 = vstv %s744
        %v746 = vmul.f32 %v694, %v745
        %v747 = vmul.f32 %v695, %v745
        %750 = vrot.lane.b32.xlu0 %v746, 127
        %v751 = vpop.permute.xlu0 %750
        %752 = vrot.lane.b32.xlu0 %v747, 127
        %v753 = vpop.permute.xlu0 %752
        %v756 = vadd.f32 %v700, %v751
        %v757 = vadd.f32 %v701, %v753
        %s758 = sld [smem:[#allocation10 + $0x81]]
        %v759 = vstv %s758
        %v760 = vmul.f32 %v694, %v759
        %v761 = vmul.f32 %v695, %v759
        %764 = vrot.lane.b32.xlu0 %v760, 127
        %v765 = vpop.permute.xlu0 %764
        %766 = vrot.lane.b32.xlu0 %v761, 127
        %v767 = vpop.permute.xlu0 %766
        %v770 = vadd.f32 %v706, %v765
        %v771 = vadd.f32 %v707, %v767
        %s772 = sld [smem:[#allocation10 + $0x82]]
        %v773 = vstv %s772
        %v774 = vmul.f32 %v694, %v773
        %v775 = vmul.f32 %v695, %v773
        %778 = vrot.lane.b32.xlu0 %v774, 127
        %v779 = vpop.permute.xlu0 %778
        %780 = vrot.lane.b32.xlu0 %v775, 127
        %v781 = vpop.permute.xlu0 %780
        %v784 = vadd.f32 %v712, %v779
        %v785 = vadd.f32 %v713, %v781
        %s786 = sld [smem:[#allocation10 + $0x83]]
        %v787 = vstv %s786
        %v788 = vmul.f32 %v694, %v787
        %v789 = vmul.f32 %v695, %v787
        %792 = vrot.lane.b32.xlu0 %v788, 127
        %v793 = vpop.permute.xlu0 %792
        %794 = vrot.lane.b32.xlu0 %v789, 127
        %v795 = vpop.permute.xlu0 %794
        %v798 = vadd.f32 %v718, %v793
        %v799 = vadd.f32 %v719, %v795
        %s800 = sld [smem:[#allocation10 + $0x84]]
        %v801 = vstv %s800
        %v802 = vmul.f32 %v694, %v801
        %v803 = vmul.f32 %v695, %v801
        %806 = vrot.lane.b32.xlu0 %v802, 127
        %v807 = vpop.permute.xlu0 %806
        %808 = vrot.lane.b32.xlu0 %v803, 127
        %v809 = vpop.permute.xlu0 %808
        %v812 = vadd.f32 %v724, %v807
        %v813 = vadd.f32 %v725, %v809
        %s814 = sld [smem:[#allocation10 + $0x85]]
        %v815 = vstv %s814
        %v816 = vmul.f32 %v694, %v815
        %v817 = vmul.f32 %v695, %v815
        %820 = vrot.lane.b32.xlu0 %v816, 127
        %v821 = vpop.permute.xlu0 %820
        %822 = vrot.lane.b32.xlu0 %v817, 127
        %v823 = vpop.permute.xlu0 %822
        %v826 = vadd.f32 %v730, %v821
        %v827 = vadd.f32 %v731, %v823
        %s828 = sld [smem:[#allocation10 + $0x86]]
        %v829 = vstv %s828
        %v830 = vmul.f32 %v694, %v829
        %v831 = vmul.f32 %v695, %v829
        %834 = vrot.lane.b32.xlu0 %v830, 127
        %v835 = vpop.permute.xlu0 %834
        %836 = vrot.lane.b32.xlu0 %v831, 127
        %v837 = vpop.permute.xlu0 %836
        %v840 = vadd.f32 %v736, %v835
        %v841 = vadd.f32 %v737, %v837
        %s842 = sld [smem:[#allocation10 + $0x87]]
        %v843 = vstv %s842
        %v844 = vmul.f32 %v694, %v843
        %v845 = vmul.f32 %v695, %v843
        %848 = vrot.lane.b32.xlu0 %v844, 127
        %v849 = vpop.permute.xlu0 %848
        %850 = vrot.lane.b32.xlu0 %v845, 127
        %v851 = vpop.permute.xlu0 %850
        %v854 = vadd.f32 %v742, %v849
        %v855 = vadd.f32 %v743, %v851
        %s856 = sld [smem:[#allocation10 + $0xa0]]
        %v857 = vstv %s856
        %v858 = vmul.f32 %v694, %v857
        %v859 = vmul.f32 %v695, %v857
        %862 = vrot.lane.b32.xlu0 %v858, 126
        %v863 = vpop.permute.xlu0 %862
        %864 = vrot.lane.b32.xlu0 %v859, 126
        %v865 = vpop.permute.xlu0 %864
        %v868 = vadd.f32 %v756, %v863
        %v869 = vadd.f32 %v757, %v865
        %s870 = sld [smem:[#allocation10 + $0xa1]]
        %v871 = vstv %s870
        %v872 = vmul.f32 %v694, %v871
        %v873 = vmul.f32 %v695, %v871
        %876 = vrot.lane.b32.xlu0 %v872, 126
        %v877 = vpop.permute.xlu0 %876
        %878 = vrot.lane.b32.xlu0 %v873, 126
        %v879 = vpop.permute.xlu0 %878
        %v882 = vadd.f32 %v770, %v877
        %v883 = vadd.f32 %v771, %v879
        %s884 = sld [smem:[#allocation10 + $0xa2]]
        %v885 = vstv %s884
        %v886 = vmul.f32 %v694, %v885
        %v887 = vmul.f32 %v695, %v885
        %890 = vrot.lane.b32.xlu0 %v886, 126
        %v891 = vpop.permute.xlu0 %890
        %892 = vrot.lane.b32.xlu0 %v887, 126
        %v893 = vpop.permute.xlu0 %892
        %v896 = vadd.f32 %v784, %v891
        %v897 = vadd.f32 %v785, %v893
        %s898 = sld [smem:[#allocation10 + $0xa3]]
        %v899 = vstv %s898
        %v900 = vmul.f32 %v694, %v899
        %v901 = vmul.f32 %v695, %v899
        %904 = vrot.lane.b32.xlu0 %v900, 126
        %v905 = vpop.permute.xlu0 %904
        %906 = vrot.lane.b32.xlu0 %v901, 126
        %v907 = vpop.permute.xlu0 %906
        %v910 = vadd.f32 %v798, %v905
        %v911 = vadd.f32 %v799, %v907
        %s912 = sld [smem:[#allocation10 + $0xa4]]
        %v913 = vstv %s912
        %v914 = vmul.f32 %v694, %v913
        %v915 = vmul.f32 %v695, %v913
        %918 = vrot.lane.b32.xlu0 %v914, 126
        %v919 = vpop.permute.xlu0 %918
        %920 = vrot.lane.b32.xlu0 %v915, 126
        %v921 = vpop.permute.xlu0 %920
        %v924 = vadd.f32 %v812, %v919
        %v925 = vadd.f32 %v813, %v921
        %s926 = sld [smem:[#allocation10 + $0xa5]]
        %v927 = vstv %s926
        %v928 = vmul.f32 %v694, %v927
        %v929 = vmul.f32 %v695, %v927
        %932 = vrot.lane.b32.xlu0 %v928, 126
        %v933 = vpop.permute.xlu0 %932
        %934 = vrot.lane.b32.xlu0 %v929, 126
        %v935 = vpop.permute.xlu0 %934
        %v938 = vadd.f32 %v826, %v933
        %v939 = vadd.f32 %v827, %v935
        %s940 = sld [smem:[#allocation10 + $0xa6]]
        %v941 = vstv %s940
        %v942 = vmul.f32 %v694, %v941
        %v943 = vmul.f32 %v695, %v941
        %946 = vrot.lane.b32.xlu0 %v942, 126
        %v947 = vpop.permute.xlu0 %946
        %948 = vrot.lane.b32.xlu0 %v943, 126
        %v949 = vpop.permute.xlu0 %948
        %v952 = vadd.f32 %v840, %v947
        %v953 = vadd.f32 %v841, %v949
        %s954 = sld [smem:[#allocation10 + $0xa7]]
        %v955 = vstv %s954
        %v956 = vmul.f32 %v694, %v955
        %v957 = vmul.f32 %v695, %v955
        %960 = vrot.lane.b32.xlu0 %v956, 126
        %v961 = vpop.permute.xlu0 %960
        %962 = vrot.lane.b32.xlu0 %v957, 126
        %v963 = vpop.permute.xlu0 %962
        %v966 = vadd.f32 %v854, %v961
        %v967 = vadd.f32 %v855, %v963
        %v968 = vld [vmem:[#allocation2 + $0x2] sm:$0xff]
        %v969 = vld [vmem:[#allocation2 + $0xa] sm:$0xff]
        %s970 = sld [smem:[#allocation10 + $0xc0]]
        %v971 = vstv %s970
        %v972 = vmul.f32 %v968, %v971
        %v973 = vmul.f32 %v969, %v971
        %v974 = vadd.f32 %v868, %v972
        %v975 = vadd.f32 %v869, %v973
        %s976 = sld [smem:[#allocation10 + $0xc1]]
        %v977 = vstv %s976
        %v978 = vmul.f32 %v968, %v977
        %v979 = vmul.f32 %v969, %v977
        %v980 = vadd.f32 %v882, %v978
        %v981 = vadd.f32 %v883, %v979
        %s982 = sld [smem:[#allocation10 + $0xc2]]
        %v983 = vstv %s982
        %v984 = vmul.f32 %v968, %v983
        %v985 = vmul.f32 %v969, %v983
        %v986 = vadd.f32 %v896, %v984
        %v987 = vadd.f32 %v897, %v985
        %s988 = sld [smem:[#allocation10 + $0xc3]]
        %v989 = vstv %s988
        %v990 = vmul.f32 %v968, %v989
        %v991 = vmul.f32 %v969, %v989
        %v992 = vadd.f32 %v910, %v990
        %v993 = vadd.f32 %v911, %v991
        %s994 = sld [smem:[#allocation10 + $0xc4]]
        %v995 = vstv %s994
        %v996 = vmul.f32 %v968, %v995
        %v997 = vmul.f32 %v969, %v995
        %v998 = vadd.f32 %v924, %v996
        %v999 = vadd.f32 %v925, %v997
        %s1000 = sld [smem:[#allocation10 + $0xc5]]
        %v1001 = vstv %s1000
        %v1002 = vmul.f32 %v968, %v1001
        %v1003 = vmul.f32 %v969, %v1001
        %v1004 = vadd.f32 %v938, %v1002
        %v1005 = vadd.f32 %v939, %v1003
        %s1006 = sld [smem:[#allocation10 + $0xc6]]
        %v1007 = vstv %s1006
        %v1008 = vmul.f32 %v968, %v1007
        %v1009 = vmul.f32 %v969, %v1007
        %v1010 = vadd.f32 %v952, %v1008
        %v1011 = vadd.f32 %v953, %v1009
        %s1012 = sld [smem:[#allocation10 + $0xc7]]
        %v1013 = vstv %s1012
        %v1014 = vmul.f32 %v968, %v1013
        %v1015 = vmul.f32 %v969, %v1013
        %v1016 = vadd.f32 %v966, %v1014
        %v1017 = vadd.f32 %v967, %v1015
        %s1018 = sld [smem:[#allocation10 + $0xe0]]
        %v1019 = vstv %s1018
        %v1020 = vmul.f32 %v968, %v1019
        %v1021 = vmul.f32 %v969, %v1019
        %1024 = vrot.lane.b32.xlu0 %v1020, 127
        %v1025 = vpop.permute.xlu0 %1024
        %1026 = vrot.lane.b32.xlu0 %v1021, 127
        %v1027 = vpop.permute.xlu0 %1026
        %v1030 = vadd.f32 %v974, %v1025
        %v1031 = vadd.f32 %v975, %v1027
        %s1032 = sld [smem:[#allocation10 + $0xe1]]
        %v1033 = vstv %s1032
        %v1034 = vmul.f32 %v968, %v1033
        %v1035 = vmul.f32 %v969, %v1033
        %1038 = vrot.lane.b32.xlu0 %v1034, 127
        %v1039 = vpop.permute.xlu0 %1038
        %1040 = vrot.lane.b32.xlu0 %v1035, 127
        %v1041 = vpop.permute.xlu0 %1040
        %v1044 = vadd.f32 %v980, %v1039
        %v1045 = vadd.f32 %v981, %v1041
        %s1046 = sld [smem:[#allocation10 + $0xe2]]
        %v1047 = vstv %s1046
        %v1048 = vmul.f32 %v968, %v1047
        %v1049 = vmul.f32 %v969, %v1047
        %1052 = vrot.lane.b32.xlu0 %v1048, 127
        %v1053 = vpop.permute.xlu0 %1052
        %1054 = vrot.lane.b32.xlu0 %v1049, 127
        %v1055 = vpop.permute.xlu0 %1054
        %v1058 = vadd.f32 %v986, %v1053
        %v1059 = vadd.f32 %v987, %v1055
        %s1060 = sld [smem:[#allocation10 + $0xe3]]
        %v1061 = vstv %s1060
        %v1062 = vmul.f32 %v968, %v1061
        %v1063 = vmul.f32 %v969, %v1061
        %1066 = vrot.lane.b32.xlu0 %v1062, 127
        %v1067 = vpop.permute.xlu0 %1066
        %1068 = vrot.lane.b32.xlu0 %v1063, 127
        %v1069 = vpop.permute.xlu0 %1068
        %v1072 = vadd.f32 %v992, %v1067
        %v1073 = vadd.f32 %v993, %v1069
        %s1074 = sld [smem:[#allocation10 + $0xe4]]
        %v1075 = vstv %s1074
        %v1076 = vmul.f32 %v968, %v1075
        %v1077 = vmul.f32 %v969, %v1075
        %1080 = vrot.lane.b32.xlu0 %v1076, 127
        %v1081 = vpop.permute.xlu0 %1080
        %1082 = vrot.lane.b32.xlu0 %v1077, 127
        %v1083 = vpop.permute.xlu0 %1082
        %v1086 = vadd.f32 %v998, %v1081
        %v1087 = vadd.f32 %v999, %v1083
        %s1088 = sld [smem:[#allocation10 + $0xe5]]
        %v1089 = vstv %s1088
        %v1090 = vmul.f32 %v968, %v1089
        %v1091 = vmul.f32 %v969, %v1089
        %1094 = vrot.lane.b32.xlu0 %v1090, 127
        %v1095 = vpop.permute.xlu0 %1094
        %1096 = vrot.lane.b32.xlu0 %v1091, 127
        %v1097 = vpop.permute.xlu0 %1096
        %v1100 = vadd.f32 %v1004, %v1095
        %v1101 = vadd.f32 %v1005, %v1097
        %s1102 = sld [smem:[#allocation10 + $0xe6]]
        %v1103 = vstv %s1102
        %v1104 = vmul.f32 %v968, %v1103
        %v1105 = vmul.f32 %v969, %v1103
        %1108 = vrot.lane.b32.xlu0 %v1104, 127
        %v1109 = vpop.permute.xlu0 %1108
        %1110 = vrot.lane.b32.xlu0 %v1105, 127
        %v1111 = vpop.permute.xlu0 %1110
        %v1114 = vadd.f32 %v1010, %v1109
        %v1115 = vadd.f32 %v1011, %v1111
        %s1116 = sld [smem:[#allocation10 + $0xe7]]
        %v1117 = vstv %s1116
        %v1118 = vmul.f32 %v968, %v1117
        %v1119 = vmul.f32 %v969, %v1117
        %1122 = vrot.lane.b32.xlu0 %v1118, 127
        %v1123 = vpop.permute.xlu0 %1122
        %1124 = vrot.lane.b32.xlu0 %v1119, 127
        %v1125 = vpop.permute.xlu0 %1124
        %v1128 = vadd.f32 %v1016, %v1123
        %v1129 = vadd.f32 %v1017, %v1125
        %s1130 = sld [smem:[#allocation10 + $0x100]]
        %v1131 = vstv %s1130
        %v1132 = vmul.f32 %v968, %v1131
        %v1133 = vmul.f32 %v969, %v1131
        %1136 = vrot.lane.b32.xlu0 %v1132, 126
        %v1137 = vpop.permute.xlu0 %1136
        %1138 = vrot.lane.b32.xlu0 %v1133, 126
        %v1139 = vpop.permute.xlu0 %1138
        %v1142 = vadd.f32 %v1030, %v1137
        %v1143 = vadd.f32 %v1031, %v1139
        %s1144 = sld [smem:[#allocation10 + $0x101]]
        %v1145 = vstv %s1144
        %v1146 = vmul.f32 %v968, %v1145
        %v1147 = vmul.f32 %v969, %v1145
        %1150 = vrot.lane.b32.xlu0 %v1146, 126
        %v1151 = vpop.permute.xlu0 %1150
        %1152 = vrot.lane.b32.xlu0 %v1147, 126
        %v1153 = vpop.permute.xlu0 %1152
        %v1156 = vadd.f32 %v1044, %v1151
        %v1157 = vadd.f32 %v1045, %v1153
        %s1158 = sld [smem:[#allocation10 + $0x102]]
        %v1159 = vstv %s1158
        %v1160 = vmul.f32 %v968, %v1159
        %v1161 = vmul.f32 %v969, %v1159
        %1164 = vrot.lane.b32.xlu0 %v1160, 126
        %v1165 = vpop.permute.xlu0 %1164
        %1166 = vrot.lane.b32.xlu0 %v1161, 126
        %v1167 = vpop.permute.xlu0 %1166
        %v1170 = vadd.f32 %v1058, %v1165
        %v1171 = vadd.f32 %v1059, %v1167
        %s1172 = sld [smem:[#allocation10 + $0x103]]
        %v1173 = vstv %s1172
        %v1174 = vmul.f32 %v968, %v1173
        %v1175 = vmul.f32 %v969, %v1173
        %1178 = vrot.lane.b32.xlu0 %v1174, 126
        %v1179 = vpop.permute.xlu0 %1178
        %1180 = vrot.lane.b32.xlu0 %v1175, 126
        %v1181 = vpop.permute.xlu0 %1180
        %v1184 = vadd.f32 %v1072, %v1179
        %v1185 = vadd.f32 %v1073, %v1181
        %s1186 = sld [smem:[#allocation10 + $0x104]]
        %v1187 = vstv %s1186
        %v1188 = vmul.f32 %v968, %v1187
        %v1189 = vmul.f32 %v969, %v1187
        %1192 = vrot.lane.b32.xlu0 %v1188, 126
        %v1193 = vpop.permute.xlu0 %1192
        %1194 = vrot.lane.b32.xlu0 %v1189, 126
        %v1195 = vpop.permute.xlu0 %1194
        %v1198 = vadd.f32 %v1086, %v1193
        %v1199 = vadd.f32 %v1087, %v1195
        %s1200 = sld [smem:[#allocation10 + $0x105]]
        %v1201 = vstv %s1200
        %v1202 = vmul.f32 %v968, %v1201
        %v1203 = vmul.f32 %v969, %v1201
        %1206 = vrot.lane.b32.xlu0 %v1202, 126
        %v1207 = vpop.permute.xlu0 %1206
        %1208 = vrot.lane.b32.xlu0 %v1203, 126
        %v1209 = vpop.permute.xlu0 %1208
        %v1212 = vadd.f32 %v1100, %v1207
        %v1213 = vadd.f32 %v1101, %v1209
        %s1214 = sld [smem:[#allocation10 + $0x106]]
        %v1215 = vstv %s1214
        %v1216 = vmul.f32 %v968, %v1215
        %v1217 = vmul.f32 %v969, %v1215
        %1220 = vrot.lane.b32.xlu0 %v1216, 126
        %v1221 = vpop.permute.xlu0 %1220
        %1222 = vrot.lane.b32.xlu0 %v1217, 126
        %v1223 = vpop.permute.xlu0 %1222
        %v1226 = vadd.f32 %v1114, %v1221
        %v1227 = vadd.f32 %v1115, %v1223
        %s1228 = sld [smem:[#allocation10 + $0x107]]
        %v1229 = vstv %s1228
        %v1230 = vmul.f32 %v968, %v1229
        %v1231 = vmul.f32 %v969, %v1229
        %1234 = vrot.lane.b32.xlu0 %v1230, 126
        %v1235 = vpop.permute.xlu0 %1234
        %1236 = vrot.lane.b32.xlu0 %v1231, 126
        %v1237 = vpop.permute.xlu0 %1236
        %v1240 = vadd.f32 %v1128, %v1235
        %v1241 = vadd.f32 %v1129, %v1237
        %s1242 = scalar_lea.vmem [#allocation2], 24
        %v1243 = vld [vmem:[%s1242] sm:$0xff]
        %v1244 = vld [vmem:[%s1242 + $0x8] sm:$0xff]
        %s1245 = sld [smem:[#allocation10 + $0x8]]
        %v1246 = vstv %s1245
        %v1247 = vmul.f32 %v1243, %v1246
        %v1248 = vmul.f32 %v1244, %v1246
        %v1249 = vadd.f32 %v1142, %v1247
        %v1250 = vadd.f32 %v1143, %v1248
        %s1251 = sld [smem:[#allocation10 + $0x9]]
        %v1252 = vstv %s1251
        %v1253 = vmul.f32 %v1243, %v1252
        %v1254 = vmul.f32 %v1244, %v1252
        %v1255 = vadd.f32 %v1156, %v1253
        %v1256 = vadd.f32 %v1157, %v1254
        %s1257 = sld [smem:[#allocation10 + $0xa]]
        %v1258 = vstv %s1257
        %v1259 = vmul.f32 %v1243, %v1258
        %v1260 = vmul.f32 %v1244, %v1258
        %v1261 = vadd.f32 %v1170, %v1259
        %v1262 = vadd.f32 %v1171, %v1260
        %s1263 = sld [smem:[#allocation10 + $0xb]]
        %v1264 = vstv %s1263
        %v1265 = vmul.f32 %v1243, %v1264
        %v1266 = vmul.f32 %v1244, %v1264
        %v1267 = vadd.f32 %v1184, %v1265
        %v1268 = vadd.f32 %v1185, %v1266
        %s1269 = sld [smem:[#allocation10 + $0xc]]
        %v1270 = vstv %s1269
        %v1271 = vmul.f32 %v1243, %v1270
        %v1272 = vmul.f32 %v1244, %v1270
        %v1273 = vadd.f32 %v1198, %v1271
        %v1274 = vadd.f32 %v1199, %v1272
        %s1275 = sld [smem:[#allocation10 + $0xd]]
        %v1276 = vstv %s1275
        %v1277 = vmul.f32 %v1243, %v1276
        %v1278 = vmul.f32 %v1244, %v1276
        %v1279 = vadd.f32 %v1212, %v1277
        %v1280 = vadd.f32 %v1213, %v1278
        %s1281 = sld [smem:[#allocation10 + $0xe]]
        %v1282 = vstv %s1281
        %v1283 = vmul.f32 %v1243, %v1282
        %v1284 = vmul.f32 %v1244, %v1282
        %v1285 = vadd.f32 %v1226, %v1283
        %v1286 = vadd.f32 %v1227, %v1284
        %s1287 = sld [smem:[#allocation10 + $0xf]]
        %v1288 = vstv %s1287
        %v1289 = vmul.f32 %v1243, %v1288
        %v1290 = vmul.f32 %v1244, %v1288
        %v1291 = vadd.f32 %v1240, %v1289
        %v1292 = vadd.f32 %v1241, %v1290
        %s1293 = sld [smem:[#allocation10 + $0x28]]
        %v1294 = vstv %s1293
        %v1295 = vmul.f32 %v1243, %v1294
        %v1296 = vmul.f32 %v1244, %v1294
        %1299 = vrot.lane.b32.xlu0 %v1295, 127
        %v1300 = vpop.permute.xlu0 %1299
        %1301 = vrot.lane.b32.xlu0 %v1296, 127
        %v1302 = vpop.permute.xlu0 %1301
        %v1305 = vadd.f32 %v1249, %v1300
        %v1306 = vadd.f32 %v1250, %v1302
        %s1307 = sld [smem:[#allocation10 + $0x29]]
        %v1308 = vstv %s1307
        %v1309 = vmul.f32 %v1243, %v1308
        %v1310 = vmul.f32 %v1244, %v1308
        %1313 = vrot.lane.b32.xlu0 %v1309, 127
        %v1314 = vpop.permute.xlu0 %1313
        %1315 = vrot.lane.b32.xlu0 %v1310, 127
        %v1316 = vpop.permute.xlu0 %1315
        %v1319 = vadd.f32 %v1255, %v1314
        %v1320 = vadd.f32 %v1256, %v1316
        %s1321 = sld [smem:[#allocation10 + $0x2a]]
        %v1322 = vstv %s1321
        %v1323 = vmul.f32 %v1243, %v1322
        %v1324 = vmul.f32 %v1244, %v1322
        %1327 = vrot.lane.b32.xlu0 %v1323, 127
        %v1328 = vpop.permute.xlu0 %1327
        %1329 = vrot.lane.b32.xlu0 %v1324, 127
        %v1330 = vpop.permute.xlu0 %1329
        %v1333 = vadd.f32 %v1261, %v1328
        %v1334 = vadd.f32 %v1262, %v1330
        %s1335 = sld [smem:[#allocation10 + $0x2b]]
        %v1336 = vstv %s1335
        %v1337 = vmul.f32 %v1243, %v1336
        %v1338 = vmul.f32 %v1244, %v1336
        %1341 = vrot.lane.b32.xlu0 %v1337, 127
        %v1342 = vpop.permute.xlu0 %1341
        %1343 = vrot.lane.b32.xlu0 %v1338, 127
        %v1344 = vpop.permute.xlu0 %1343
        %v1347 = vadd.f32 %v1267, %v1342
        %v1348 = vadd.f32 %v1268, %v1344
        %s1349 = sld [smem:[#allocation10 + $0x2c]]
        %v1350 = vstv %s1349
        %v1351 = vmul.f32 %v1243, %v1350
        %v1352 = vmul.f32 %v1244, %v1350
        %1355 = vrot.lane.b32.xlu0 %v1351, 127
        %v1356 = vpop.permute.xlu0 %1355
        %1357 = vrot.lane.b32.xlu0 %v1352, 127
        %v1358 = vpop.permute.xlu0 %1357
        %v1361 = vadd.f32 %v1273, %v1356
        %v1362 = vadd.f32 %v1274, %v1358
        %s1363 = sld [smem:[#allocation10 + $0x2d]]
        %v1364 = vstv %s1363
        %v1365 = vmul.f32 %v1243, %v1364
        %v1366 = vmul.f32 %v1244, %v1364
        %1369 = vrot.lane.b32.xlu0 %v1365, 127
        %v1370 = vpop.permute.xlu0 %1369
        %1371 = vrot.lane.b32.xlu0 %v1366, 127
        %v1372 = vpop.permute.xlu0 %1371
        %v1375 = vadd.f32 %v1279, %v1370
        %v1376 = vadd.f32 %v1280, %v1372
        %s1377 = sld [smem:[#allocation10 + $0x2e]]
        %v1378 = vstv %s1377
        %v1379 = vmul.f32 %v1243, %v1378
        %v1380 = vmul.f32 %v1244, %v1378
        %1383 = vrot.lane.b32.xlu0 %v1379, 127
        %v1384 = vpop.permute.xlu0 %1383
        %1385 = vrot.lane.b32.xlu0 %v1380, 127
        %v1386 = vpop.permute.xlu0 %1385
        %v1389 = vadd.f32 %v1285, %v1384
        %v1390 = vadd.f32 %v1286, %v1386
        %s1391 = sld [smem:[#allocation10 + $0x2f]]
        %v1392 = vstv %s1391
        %v1393 = vmul.f32 %v1243, %v1392
        %v1394 = vmul.f32 %v1244, %v1392
        %1397 = vrot.lane.b32.xlu0 %v1393, 127
        %v1398 = vpop.permute.xlu0 %1397
        %1399 = vrot.lane.b32.xlu0 %v1394, 127
        %v1400 = vpop.permute.xlu0 %1399
        %v1403 = vadd.f32 %v1291, %v1398
        %v1404 = vadd.f32 %v1292, %v1400
        %s1405 = sld [smem:[#allocation10 + $0x48]]
        %v1406 = vstv %s1405
        %v1407 = vmul.f32 %v1243, %v1406
        %v1408 = vmul.f32 %v1244, %v1406
        %1411 = vrot.lane.b32.xlu0 %v1407, 126
        %v1412 = vpop.permute.xlu0 %1411
        %1413 = vrot.lane.b32.xlu0 %v1408, 126
        %v1414 = vpop.permute.xlu0 %1413
        %v1417 = vadd.f32 %v1305, %v1412
        %v1418 = vadd.f32 %v1306, %v1414
        %s1419 = sld [smem:[#allocation10 + $0x49]]
        %v1420 = vstv %s1419
        %v1421 = vmul.f32 %v1243, %v1420
        %v1422 = vmul.f32 %v1244, %v1420
        %1425 = vrot.lane.b32.xlu0 %v1421, 126
        %v1426 = vpop.permute.xlu0 %1425
        %1427 = vrot.lane.b32.xlu0 %v1422, 126
        %v1428 = vpop.permute.xlu0 %1427
        %v1431 = vadd.f32 %v1319, %v1426
        %v1432 = vadd.f32 %v1320, %v1428
        %s1433 = sld [smem:[#allocation10 + $0x4a]]
        %v1434 = vstv %s1433
        %v1435 = vmul.f32 %v1243, %v1434
        %v1436 = vmul.f32 %v1244, %v1434
        %1439 = vrot.lane.b32.xlu0 %v1435, 126
        %v1440 = vpop.permute.xlu0 %1439
        %1441 = vrot.lane.b32.xlu0 %v1436, 126
        %v1442 = vpop.permute.xlu0 %1441
        %v1445 = vadd.f32 %v1333, %v1440
        %v1446 = vadd.f32 %v1334, %v1442
        %s1447 = sld [smem:[#allocation10 + $0x4b]]
        %v1448 = vstv %s1447
        %v1449 = vmul.f32 %v1243, %v1448
        %v1450 = vmul.f32 %v1244, %v1448
        %1453 = vrot.lane.b32.xlu0 %v1449, 126
        %v1454 = vpop.permute.xlu0 %1453
        %1455 = vrot.lane.b32.xlu0 %v1450, 126
        %v1456 = vpop.permute.xlu0 %1455
        %v1459 = vadd.f32 %v1347, %v1454
        %v1460 = vadd.f32 %v1348, %v1456
        %s1461 = sld [smem:[#allocation10 + $0x4c]]
        %v1462 = vstv %s1461
        %v1463 = vmul.f32 %v1243, %v1462
        %v1464 = vmul.f32 %v1244, %v1462
        %1467 = vrot.lane.b32.xlu0 %v1463, 126
        %v1468 = vpop.permute.xlu0 %1467
        %1469 = vrot.lane.b32.xlu0 %v1464, 126
        %v1470 = vpop.permute.xlu0 %1469
        %v1473 = vadd.f32 %v1361, %v1468
        %v1474 = vadd.f32 %v1362, %v1470
        %s1475 = sld [smem:[#allocation10 + $0x4d]]
        %v1476 = vstv %s1475
        %v1477 = vmul.f32 %v1243, %v1476
        %v1478 = vmul.f32 %v1244, %v1476
        %1481 = vrot.lane.b32.xlu0 %v1477, 126
        %v1482 = vpop.permute.xlu0 %1481
        %1483 = vrot.lane.b32.xlu0 %v1478, 126
        %v1484 = vpop.permute.xlu0 %1483
        %v1487 = vadd.f32 %v1375, %v1482
        %v1488 = vadd.f32 %v1376, %v1484
        %s1489 = sld [smem:[#allocation10 + $0x4e]]
        %v1490 = vstv %s1489
        %v1491 = vmul.f32 %v1243, %v1490
        %v1492 = vmul.f32 %v1244, %v1490
        %1495 = vrot.lane.b32.xlu0 %v1491, 126
        %v1496 = vpop.permute.xlu0 %1495
        %1497 = vrot.lane.b32.xlu0 %v1492, 126
        %v1498 = vpop.permute.xlu0 %1497
        %v1501 = vadd.f32 %v1389, %v1496
        %v1502 = vadd.f32 %v1390, %v1498
        %s1503 = sld [smem:[#allocation10 + $0x4f]]
        %v1504 = vstv %s1503
        %v1505 = vmul.f32 %v1243, %v1504
        %v1506 = vmul.f32 %v1244, %v1504
        %1509 = vrot.lane.b32.xlu0 %v1505, 126
        %v1510 = vpop.permute.xlu0 %1509
        %1511 = vrot.lane.b32.xlu0 %v1506, 126
        %v1512 = vpop.permute.xlu0 %1511
        %v1515 = vadd.f32 %v1403, %v1510
        %v1516 = vadd.f32 %v1404, %v1512
        %v1517 = vld [vmem:[%s1242 + $0x1] sm:$0xff]
        %v1518 = vld [vmem:[%s1242 + $0x9] sm:$0xff]
        %s1519 = sld [smem:[#allocation10 + $0x68]]
        %v1520 = vstv %s1519
        %v1521 = vmul.f32 %v1517, %v1520
        %v1522 = vmul.f32 %v1518, %v1520
        %v1523 = vadd.f32 %v1417, %v1521
        %v1524 = vadd.f32 %v1418, %v1522
        %s1525 = sld [smem:[#allocation10 + $0x69]]
        %v1526 = vstv %s1525
        %v1527 = vmul.f32 %v1517, %v1526
        %v1528 = vmul.f32 %v1518, %v1526
        %v1529 = vadd.f32 %v1431, %v1527
        %v1530 = vadd.f32 %v1432, %v1528
        %s1531 = sld [smem:[#allocation10 + $0x6a]]
        %v1532 = vstv %s1531
        %v1533 = vmul.f32 %v1517, %v1532
        %v1534 = vmul.f32 %v1518, %v1532
        %v1535 = vadd.f32 %v1445, %v1533
        %v1536 = vadd.f32 %v1446, %v1534
        %s1537 = sld [smem:[#allocation10 + $0x6b]]
        %v1538 = vstv %s1537
        %v1539 = vmul.f32 %v1517, %v1538
        %v1540 = vmul.f32 %v1518, %v1538
        %v1541 = vadd.f32 %v1459, %v1539
        %v1542 = vadd.f32 %v1460, %v1540
        %s1543 = sld [smem:[#allocation10 + $0x6c]]
        %v1544 = vstv %s1543
        %v1545 = vmul.f32 %v1517, %v1544
        %v1546 = vmul.f32 %v1518, %v1544
        %v1547 = vadd.f32 %v1473, %v1545
        %v1548 = vadd.f32 %v1474, %v1546
        %s1549 = sld [smem:[#allocation10 + $0x6d]]
        %v1550 = vstv %s1549
        %v1551 = vmul.f32 %v1517, %v1550
        %v1552 = vmul.f32 %v1518, %v1550
        %v1553 = vadd.f32 %v1487, %v1551
        %v1554 = vadd.f32 %v1488, %v1552
        %s1555 = sld [smem:[#allocation10 + $0x6e]]
        %v1556 = vstv %s1555
        %v1557 = vmul.f32 %v1517, %v1556
        %v1558 = vmul.f32 %v1518, %v1556
        %v1559 = vadd.f32 %v1501, %v1557
        %v1560 = vadd.f32 %v1502, %v1558
        %s1561 = sld [smem:[#allocation10 + $0x6f]]
        %v1562 = vstv %s1561
        %v1563 = vmul.f32 %v1517, %v1562
        %v1564 = vmul.f32 %v1518, %v1562
        %v1565 = vadd.f32 %v1515, %v1563
        %v1566 = vadd.f32 %v1516, %v1564
        %s1567 = sld [smem:[#allocation10 + $0x88]]
        %v1568 = vstv %s1567
        %v1569 = vmul.f32 %v1517, %v1568
        %v1570 = vmul.f32 %v1518, %v1568
        %1573 = vrot.lane.b32.xlu0 %v1569, 127
        %v1574 = vpop.permute.xlu0 %1573
        %1575 = vrot.lane.b32.xlu0 %v1570, 127
        %v1576 = vpop.permute.xlu0 %1575
        %v1579 = vadd.f32 %v1523, %v1574
        %v1580 = vadd.f32 %v1524, %v1576
        %s1581 = sld [smem:[#allocation10 + $0x89]]
        %v1582 = vstv %s1581
        %v1583 = vmul.f32 %v1517, %v1582
        %v1584 = vmul.f32 %v1518, %v1582
        %1587 = vrot.lane.b32.xlu0 %v1583, 127
        %v1588 = vpop.permute.xlu0 %1587
        %1589 = vrot.lane.b32.xlu0 %v1584, 127
        %v1590 = vpop.permute.xlu0 %1589
        %v1593 = vadd.f32 %v1529, %v1588
        %v1594 = vadd.f32 %v1530, %v1590
        %s1595 = sld [smem:[#allocation10 + $0x8a]]
        %v1596 = vstv %s1595
        %v1597 = vmul.f32 %v1517, %v1596
        %v1598 = vmul.f32 %v1518, %v1596
        %1601 = vrot.lane.b32.xlu0 %v1597, 127
        %v1602 = vpop.permute.xlu0 %1601
        %1603 = vrot.lane.b32.xlu0 %v1598, 127
        %v1604 = vpop.permute.xlu0 %1603
        %v1607 = vadd.f32 %v1535, %v1602
        %v1608 = vadd.f32 %v1536, %v1604
        %s1609 = sld [smem:[#allocation10 + $0x8b]]
        %v1610 = vstv %s1609
        %v1611 = vmul.f32 %v1517, %v1610
        %v1612 = vmul.f32 %v1518, %v1610
        %1615 = vrot.lane.b32.xlu0 %v1611, 127
        %v1616 = vpop.permute.xlu0 %1615
        %1617 = vrot.lane.b32.xlu0 %v1612, 127
        %v1618 = vpop.permute.xlu0 %1617
        %v1621 = vadd.f32 %v1541, %v1616
        %v1622 = vadd.f32 %v1542, %v1618
        %s1623 = sld [smem:[#allocation10 + $0x8c]]
        %v1624 = vstv %s1623
        %v1625 = vmul.f32 %v1517, %v1624
        %v1626 = vmul.f32 %v1518, %v1624
        %1629 = vrot.lane.b32.xlu0 %v1625, 127
        %v1630 = vpop.permute.xlu0 %1629
        %1631 = vrot.lane.b32.xlu0 %v1626, 127
        %v1632 = vpop.permute.xlu0 %1631
        %v1635 = vadd.f32 %v1547, %v1630
        %v1636 = vadd.f32 %v1548, %v1632
        %s1637 = sld [smem:[#allocation10 + $0x8d]]
        %v1638 = vstv %s1637
        %v1639 = vmul.f32 %v1517, %v1638
        %v1640 = vmul.f32 %v1518, %v1638
        %1643 = vrot.lane.b32.xlu0 %v1639, 127
        %v1644 = vpop.permute.xlu0 %1643
        %1645 = vrot.lane.b32.xlu0 %v1640, 127
        %v1646 = vpop.permute.xlu0 %1645
        %v1649 = vadd.f32 %v1553, %v1644
        %v1650 = vadd.f32 %v1554, %v1646
        %s1651 = sld [smem:[#allocation10 + $0x8e]]
        %v1652 = vstv %s1651
        %v1653 = vmul.f32 %v1517, %v1652
        %v1654 = vmul.f32 %v1518, %v1652
        %1657 = vrot.lane.b32.xlu0 %v1653, 127
        %v1658 = vpop.permute.xlu0 %1657
        %1659 = vrot.lane.b32.xlu0 %v1654, 127
        %v1660 = vpop.permute.xlu0 %1659
        %v1663 = vadd.f32 %v1559, %v1658
        %v1664 = vadd.f32 %v1560, %v1660
        %s1665 = sld [smem:[#allocation10 + $0x8f]]
        %v1666 = vstv %s1665
        %v1667 = vmul.f32 %v1517, %v1666
        %v1668 = vmul.f32 %v1518, %v1666
        %1671 = vrot.lane.b32.xlu0 %v1667, 127
        %v1672 = vpop.permute.xlu0 %1671
        %1673 = vrot.lane.b32.xlu0 %v1668, 127
        %v1674 = vpop.permute.xlu0 %1673
        %v1677 = vadd.f32 %v1565, %v1672
        %v1678 = vadd.f32 %v1566, %v1674
        %s1679 = sld [smem:[#allocation10 + $0xa8]]
        %v1680 = vstv %s1679
        %v1681 = vmul.f32 %v1517, %v1680
        %v1682 = vmul.f32 %v1518, %v1680
        %1685 = vrot.lane.b32.xlu0 %v1681, 126
        %v1686 = vpop.permute.xlu0 %1685
        %1687 = vrot.lane.b32.xlu0 %v1682, 126
        %v1688 = vpop.permute.xlu0 %1687
        %v1691 = vadd.f32 %v1579, %v1686
        %v1692 = vadd.f32 %v1580, %v1688
        %s1693 = sld [smem:[#allocation10 + $0xa9]]
        %v1694 = vstv %s1693
        %v1695 = vmul.f32 %v1517, %v1694
        %v1696 = vmul.f32 %v1518, %v1694
        %1699 = vrot.lane.b32.xlu0 %v1695, 126
        %v1700 = vpop.permute.xlu0 %1699
        %1701 = vrot.lane.b32.xlu0 %v1696, 126
        %v1702 = vpop.permute.xlu0 %1701
        %v1705 = vadd.f32 %v1593, %v1700
        %v1706 = vadd.f32 %v1594, %v1702
        %s1707 = sld [smem:[#allocation10 + $0xaa]]
        %v1708 = vstv %s1707
        %v1709 = vmul.f32 %v1517, %v1708
        %v1710 = vmul.f32 %v1518, %v1708
        %1713 = vrot.lane.b32.xlu0 %v1709, 126
        %v1714 = vpop.permute.xlu0 %1713
        %1715 = vrot.lane.b32.xlu0 %v1710, 126
        %v1716 = vpop.permute.xlu0 %1715
        %v1719 = vadd.f32 %v1607, %v1714
        %v1720 = vadd.f32 %v1608, %v1716
        %s1721 = sld [smem:[#allocation10 + $0xab]]
        %v1722 = vstv %s1721
        %v1723 = vmul.f32 %v1517, %v1722
        %v1724 = vmul.f32 %v1518, %v1722
        %1727 = vrot.lane.b32.xlu0 %v1723, 126
        %v1728 = vpop.permute.xlu0 %1727
        %1729 = vrot.lane.b32.xlu0 %v1724, 126
        %v1730 = vpop.permute.xlu0 %1729
        %v1733 = vadd.f32 %v1621, %v1728
        %v1734 = vadd.f32 %v1622, %v1730
        %s1735 = sld [smem:[#allocation10 + $0xac]]
        %v1736 = vstv %s1735
        %v1737 = vmul.f32 %v1517, %v1736
        %v1738 = vmul.f32 %v1518, %v1736
        %1741 = vrot.lane.b32.xlu0 %v1737, 126
        %v1742 = vpop.permute.xlu0 %1741
        %1743 = vrot.lane.b32.xlu0 %v1738, 126
        %v1744 = vpop.permute.xlu0 %1743
        %v1747 = vadd.f32 %v1635, %v1742
        %v1748 = vadd.f32 %v1636, %v1744
        %s1749 = sld [smem:[#allocation10 + $0xad]]
        %v1750 = vstv %s1749
        %v1751 = vmul.f32 %v1517, %v1750
        %v1752 = vmul.f32 %v1518, %v1750
        %1755 = vrot.lane.b32.xlu0 %v1751, 126
        %v1756 = vpop.permute.xlu0 %1755
        %1757 = vrot.lane.b32.xlu0 %v1752, 126
        %v1758 = vpop.permute.xlu0 %1757
        %v1761 = vadd.f32 %v1649, %v1756
        %v1762 = vadd.f32 %v1650, %v1758
        %s1763 = sld [smem:[#allocation10 + $0xae]]
        %v1764 = vstv %s1763
        %v1765 = vmul.f32 %v1517, %v1764
        %v1766 = vmul.f32 %v1518, %v1764
        %1769 = vrot.lane.b32.xlu0 %v1765, 126
        %v1770 = vpop.permute.xlu0 %1769
        %1771 = vrot.lane.b32.xlu0 %v1766, 126
        %v1772 = vpop.permute.xlu0 %1771
        %v1775 = vadd.f32 %v1663, %v1770
        %v1776 = vadd.f32 %v1664, %v1772
        %s1777 = sld [smem:[#allocation10 + $0xaf]]
        %v1778 = vstv %s1777
        %v1779 = vmul.f32 %v1517, %v1778
        %v1780 = vmul.f32 %v1518, %v1778
        %1783 = vrot.lane.b32.xlu0 %v1779, 126
        %v1784 = vpop.permute.xlu0 %1783
        %1785 = vrot.lane.b32.xlu0 %v1780, 126
        %v1786 = vpop.permute.xlu0 %1785
        %v1789 = vadd.f32 %v1677, %v1784
        %v1790 = vadd.f32 %v1678, %v1786
        %v1791 = vld [vmem:[%s1242 + $0x2] sm:$0xff]
        %v1792 = vld [vmem:[%s1242 + $0xa] sm:$0xff]
        %s1793 = sld [smem:[#allocation10 + $0xc8]]
        %v1794 = vstv %s1793
        %v1795 = vmul.f32 %v1791, %v1794
        %v1796 = vmul.f32 %v1792, %v1794
        %v1797 = vadd.f32 %v1691, %v1795
        %v1798 = vadd.f32 %v1692, %v1796
        %s1799 = sld [smem:[#allocation10 + $0xc9]]
        %v1800 = vstv %s1799
        %v1801 = vmul.f32 %v1791, %v1800
        %v1802 = vmul.f32 %v1792, %v1800
        %v1803 = vadd.f32 %v1705, %v1801
        %v1804 = vadd.f32 %v1706, %v1802
        %s1805 = sld [smem:[#allocation10 + $0xca]]
        %v1806 = vstv %s1805
        %v1807 = vmul.f32 %v1791, %v1806
        %v1808 = vmul.f32 %v1792, %v1806
        %v1809 = vadd.f32 %v1719, %v1807
        %v1810 = vadd.f32 %v1720, %v1808
        %s1811 = sld [smem:[#allocation10 + $0xcb]]
        %v1812 = vstv %s1811
        %v1813 = vmul.f32 %v1791, %v1812
        %v1814 = vmul.f32 %v1792, %v1812
        %v1815 = vadd.f32 %v1733, %v1813
        %v1816 = vadd.f32 %v1734, %v1814
        %s1817 = sld [smem:[#allocation10 + $0xcc]]
        %v1818 = vstv %s1817
        %v1819 = vmul.f32 %v1791, %v1818
        %v1820 = vmul.f32 %v1792, %v1818
        %v1821 = vadd.f32 %v1747, %v1819
        %v1822 = vadd.f32 %v1748, %v1820
        %s1823 = sld [smem:[#allocation10 + $0xcd]]
        %v1824 = vstv %s1823
        %v1825 = vmul.f32 %v1791, %v1824
        %v1826 = vmul.f32 %v1792, %v1824
        %v1827 = vadd.f32 %v1761, %v1825
        %v1828 = vadd.f32 %v1762, %v1826
        %s1829 = sld [smem:[#allocation10 + $0xce]]
        %v1830 = vstv %s1829
        %v1831 = vmul.f32 %v1791, %v1830
        %v1832 = vmul.f32 %v1792, %v1830
        %v1833 = vadd.f32 %v1775, %v1831
        %v1834 = vadd.f32 %v1776, %v1832
        %s1835 = sld [smem:[#allocation10 + $0xcf]]
        %v1836 = vstv %s1835
        %v1837 = vmul.f32 %v1791, %v1836
        %v1838 = vmul.f32 %v1792, %v1836
        %v1839 = vadd.f32 %v1789, %v1837
        %v1840 = vadd.f32 %v1790, %v1838
        %s1841 = sld [smem:[#allocation10 + $0xe8]]
        %v1842 = vstv %s1841
        %v1843 = vmul.f32 %v1791, %v1842
        %v1844 = vmul.f32 %v1792, %v1842
        %1847 = vrot.lane.b32.xlu0 %v1843, 127
        %v1848 = vpop.permute.xlu0 %1847
        %1849 = vrot.lane.b32.xlu0 %v1844, 127
        %v1850 = vpop.permute.xlu0 %1849
        %v1853 = vadd.f32 %v1797, %v1848
        %v1854 = vadd.f32 %v1798, %v1850
        %s1855 = sld [smem:[#allocation10 + $0xe9]]
        %v1856 = vstv %s1855
        %v1857 = vmul.f32 %v1791, %v1856
        %v1858 = vmul.f32 %v1792, %v1856
        %1861 = vrot.lane.b32.xlu0 %v1857, 127
        %v1862 = vpop.permute.xlu0 %1861
        %1863 = vrot.lane.b32.xlu0 %v1858, 127
        %v1864 = vpop.permute.xlu0 %1863
        %v1867 = vadd.f32 %v1803, %v1862
        %v1868 = vadd.f32 %v1804, %v1864
        %s1869 = sld [smem:[#allocation10 + $0xea]]
        %v1870 = vstv %s1869
        %v1871 = vmul.f32 %v1791, %v1870
        %v1872 = vmul.f32 %v1792, %v1870
        %1875 = vrot.lane.b32.xlu0 %v1871, 127
        %v1876 = vpop.permute.xlu0 %1875
        %1877 = vrot.lane.b32.xlu0 %v1872, 127
        %v1878 = vpop.permute.xlu0 %1877
        %v1881 = vadd.f32 %v1809, %v1876
        %v1882 = vadd.f32 %v1810, %v1878
        %s1883 = sld [smem:[#allocation10 + $0xeb]]
        %v1884 = vstv %s1883
        %v1885 = vmul.f32 %v1791, %v1884
        %v1886 = vmul.f32 %v1792, %v1884
        %1889 = vrot.lane.b32.xlu0 %v1885, 127
        %v1890 = vpop.permute.xlu0 %1889
        %1891 = vrot.lane.b32.xlu0 %v1886, 127
        %v1892 = vpop.permute.xlu0 %1891
        %v1895 = vadd.f32 %v1815, %v1890
        %v1896 = vadd.f32 %v1816, %v1892
        %s1897 = sld [smem:[#allocation10 + $0xec]]
        %v1898 = vstv %s1897
        %v1899 = vmul.f32 %v1791, %v1898
        %v1900 = vmul.f32 %v1792, %v1898
        %1903 = vrot.lane.b32.xlu0 %v1899, 127
        %v1904 = vpop.permute.xlu0 %1903
        %1905 = vrot.lane.b32.xlu0 %v1900, 127
        %v1906 = vpop.permute.xlu0 %1905
        %v1909 = vadd.f32 %v1821, %v1904
        %v1910 = vadd.f32 %v1822, %v1906
        %s1911 = sld [smem:[#allocation10 + $0xed]]
        %v1912 = vstv %s1911
        %v1913 = vmul.f32 %v1791, %v1912
        %v1914 = vmul.f32 %v1792, %v1912
        %1917 = vrot.lane.b32.xlu0 %v1913, 127
        %v1918 = vpop.permute.xlu0 %1917
        %1919 = vrot.lane.b32.xlu0 %v1914, 127
        %v1920 = vpop.permute.xlu0 %1919
        %v1923 = vadd.f32 %v1827, %v1918
        %v1924 = vadd.f32 %v1828, %v1920
        %s1925 = sld [smem:[#allocation10 + $0xee]]
        %v1926 = vstv %s1925
        %v1927 = vmul.f32 %v1791, %v1926
        %v1928 = vmul.f32 %v1792, %v1926
        %1931 = vrot.lane.b32.xlu0 %v1927, 127
        %v1932 = vpop.permute.xlu0 %1931
        %1933 = vrot.lane.b32.xlu0 %v1928, 127
        %v1934 = vpop.permute.xlu0 %1933
        %v1937 = vadd.f32 %v1833, %v1932
        %v1938 = vadd.f32 %v1834, %v1934
        %s1939 = sld [smem:[#allocation10 + $0xef]]
        %v1940 = vstv %s1939
        %v1941 = vmul.f32 %v1791, %v1940
        %v1942 = vmul.f32 %v1792, %v1940
        %1945 = vrot.lane.b32.xlu0 %v1941, 127
        %v1946 = vpop.permute.xlu0 %1945
        %1947 = vrot.lane.b32.xlu0 %v1942, 127
        %v1948 = vpop.permute.xlu0 %1947
        %v1951 = vadd.f32 %v1839, %v1946
        %v1952 = vadd.f32 %v1840, %v1948
        %s1953 = sld [smem:[#allocation10 + $0x108]]
        %v1954 = vstv %s1953
        %v1955 = vmul.f32 %v1791, %v1954
        %v1956 = vmul.f32 %v1792, %v1954
        %1959 = vrot.lane.b32.xlu0 %v1955, 126
        %v1960 = vpop.permute.xlu0 %1959
        %1961 = vrot.lane.b32.xlu0 %v1956, 126
        %v1962 = vpop.permute.xlu0 %1961
        %v1965 = vadd.f32 %v1853, %v1960
        %v1966 = vadd.f32 %v1854, %v1962
        %s1967 = sld [smem:[#allocation10 + $0x109]]
        %v1968 = vstv %s1967
        %v1969 = vmul.f32 %v1791, %v1968
        %v1970 = vmul.f32 %v1792, %v1968
        %1973 = vrot.lane.b32.xlu0 %v1969, 126
        %v1974 = vpop.permute.xlu0 %1973
        %1975 = vrot.lane.b32.xlu0 %v1970, 126
        %v1976 = vpop.permute.xlu0 %1975
        %v1979 = vadd.f32 %v1867, %v1974
        %v1980 = vadd.f32 %v1868, %v1976
        %s1981 = sld [smem:[#allocation10 + $0x10a]]
        %v1982 = vstv %s1981
        %v1983 = vmul.f32 %v1791, %v1982
        %v1984 = vmul.f32 %v1792, %v1982
        %1987 = vrot.lane.b32.xlu0 %v1983, 126
        %v1988 = vpop.permute.xlu0 %1987
        %1989 = vrot.lane.b32.xlu0 %v1984, 126
        %v1990 = vpop.permute.xlu0 %1989
        %v1993 = vadd.f32 %v1881, %v1988
        %v1994 = vadd.f32 %v1882, %v1990
        %s1995 = sld [smem:[#allocation10 + $0x10b]]
        %v1996 = vstv %s1995
        %v1997 = vmul.f32 %v1791, %v1996
        %v1998 = vmul.f32 %v1792, %v1996
        %2001 = vrot.lane.b32.xlu0 %v1997, 126
        %v2002 = vpop.permute.xlu0 %2001
        %2003 = vrot.lane.b32.xlu0 %v1998, 126
        %v2004 = vpop.permute.xlu0 %2003
        %v2007 = vadd.f32 %v1895, %v2002
        %v2008 = vadd.f32 %v1896, %v2004
        %s2009 = sld [smem:[#allocation10 + $0x10c]]
        %v2010 = vstv %s2009
        %v2011 = vmul.f32 %v1791, %v2010
        %v2012 = vmul.f32 %v1792, %v2010
        %2015 = vrot.lane.b32.xlu0 %v2011, 126
        %v2016 = vpop.permute.xlu0 %2015
        %2017 = vrot.lane.b32.xlu0 %v2012, 126
        %v2018 = vpop.permute.xlu0 %2017
        %v2021 = vadd.f32 %v1909, %v2016
        %v2022 = vadd.f32 %v1910, %v2018
        %s2023 = sld [smem:[#allocation10 + $0x10d]]
        %v2024 = vstv %s2023
        %v2025 = vmul.f32 %v1791, %v2024
        %v2026 = vmul.f32 %v1792, %v2024
        %2029 = vrot.lane.b32.xlu0 %v2025, 126
        %v2030 = vpop.permute.xlu0 %2029
        %2031 = vrot.lane.b32.xlu0 %v2026, 126
        %v2032 = vpop.permute.xlu0 %2031
        %v2035 = vadd.f32 %v1923, %v2030
        %v2036 = vadd.f32 %v1924, %v2032
        %s2037 = sld [smem:[#allocation10 + $0x10e]]
        %v2038 = vstv %s2037
        %v2039 = vmul.f32 %v1791, %v2038
        %v2040 = vmul.f32 %v1792, %v2038
        %2043 = vrot.lane.b32.xlu0 %v2039, 126
        %v2044 = vpop.permute.xlu0 %2043
        %2045 = vrot.lane.b32.xlu0 %v2040, 126
        %v2046 = vpop.permute.xlu0 %2045
        %v2049 = vadd.f32 %v1937, %v2044
        %v2050 = vadd.f32 %v1938, %v2046
        %s2051 = sld [smem:[#allocation10 + $0x10f]]
        %v2052 = vstv %s2051
        %v2053 = vmul.f32 %v1791, %v2052
        %v2054 = vmul.f32 %v1792, %v2052
        %2057 = vrot.lane.b32.xlu0 %v2053, 126
        %v2058 = vpop.permute.xlu0 %2057
        %2059 = vrot.lane.b32.xlu0 %v2054, 126
        %v2060 = vpop.permute.xlu0 %2059
        %v2063 = vadd.f32 %v1951, %v2058
        %v2064 = vadd.f32 %v1952, %v2060
        %s2065 = scalar_lea.vmem [#allocation2], 48
        %v2066 = vld [vmem:[%s2065] sm:$0xff]
        %v2067 = vld [vmem:[%s2065 + $0x8] sm:$0xff]
        %s2068 = sld [smem:[#allocation10 + $0x10]]
        %v2069 = vstv %s2068
        %v2070 = vmul.f32 %v2066, %v2069
        %v2071 = vmul.f32 %v2067, %v2069
        %v2072 = vadd.f32 %v1965, %v2070
        %v2073 = vadd.f32 %v1966, %v2071
        %s2074 = sld [smem:[#allocation10 + $0x11]]
        %v2075 = vstv %s2074
        %v2076 = vmul.f32 %v2066, %v2075
        %v2077 = vmul.f32 %v2067, %v2075
        %v2078 = vadd.f32 %v1979, %v2076
        %v2079 = vadd.f32 %v1980, %v2077
        %s2080 = sld [smem:[#allocation10 + $0x12]]
        %v2081 = vstv %s2080
        %v2082 = vmul.f32 %v2066, %v2081
        %v2083 = vmul.f32 %v2067, %v2081
        %v2084 = vadd.f32 %v1993, %v2082
        %v2085 = vadd.f32 %v1994, %v2083
        %s2086 = sld [smem:[#allocation10 + $0x13]]
        %v2087 = vstv %s2086
        %v2088 = vmul.f32 %v2066, %v2087
        %v2089 = vmul.f32 %v2067, %v2087
        %v2090 = vadd.f32 %v2007, %v2088
        %v2091 = vadd.f32 %v2008, %v2089
        %s2092 = sld [smem:[#allocation10 + $0x14]]
        %v2093 = vstv %s2092
        %v2094 = vmul.f32 %v2066, %v2093
        %v2095 = vmul.f32 %v2067, %v2093
        %v2096 = vadd.f32 %v2021, %v2094
        %v2097 = vadd.f32 %v2022, %v2095
        %s2098 = sld [smem:[#allocation10 + $0x15]]
        %v2099 = vstv %s2098
        %v2100 = vmul.f32 %v2066, %v2099
        %v2101 = vmul.f32 %v2067, %v2099
        %v2102 = vadd.f32 %v2035, %v2100
        %v2103 = vadd.f32 %v2036, %v2101
        %s2104 = sld [smem:[#allocation10 + $0x16]]
        %v2105 = vstv %s2104
        %v2106 = vmul.f32 %v2066, %v2105
        %v2107 = vmul.f32 %v2067, %v2105
        %v2108 = vadd.f32 %v2049, %v2106
        %v2109 = vadd.f32 %v2050, %v2107
        %s2110 = sld [smem:[#allocation10 + $0x17]]
        %v2111 = vstv %s2110
        %v2112 = vmul.f32 %v2066, %v2111
        %v2113 = vmul.f32 %v2067, %v2111
        %v2114 = vadd.f32 %v2063, %v2112
        %v2115 = vadd.f32 %v2064, %v2113
        %s2116 = sld [smem:[#allocation10 + $0x30]]
        %v2117 = vstv %s2116
        %v2118 = vmul.f32 %v2066, %v2117
        %v2119 = vmul.f32 %v2067, %v2117
        %2122 = vrot.lane.b32.xlu0 %v2118, 127
        %v2123 = vpop.permute.xlu0 %2122
        %2124 = vrot.lane.b32.xlu0 %v2119, 127
        %v2125 = vpop.permute.xlu0 %2124
        %v2128 = vadd.f32 %v2072, %v2123
        %v2129 = vadd.f32 %v2073, %v2125
        %s2130 = sld [smem:[#allocation10 + $0x31]]
        %v2131 = vstv %s2130
        %v2132 = vmul.f32 %v2066, %v2131
        %v2133 = vmul.f32 %v2067, %v2131
        %2136 = vrot.lane.b32.xlu0 %v2132, 127
        %v2137 = vpop.permute.xlu0 %2136
        %2138 = vrot.lane.b32.xlu0 %v2133, 127
        %v2139 = vpop.permute.xlu0 %2138
        %v2142 = vadd.f32 %v2078, %v2137
        %v2143 = vadd.f32 %v2079, %v2139
        %s2144 = sld [smem:[#allocation10 + $0x32]]
        %v2145 = vstv %s2144
        %v2146 = vmul.f32 %v2066, %v2145
        %v2147 = vmul.f32 %v2067, %v2145
        %2150 = vrot.lane.b32.xlu0 %v2146, 127
        %v2151 = vpop.permute.xlu0 %2150
        %2152 = vrot.lane.b32.xlu0 %v2147, 127
        %v2153 = vpop.permute.xlu0 %2152
        %v2156 = vadd.f32 %v2084, %v2151
        %v2157 = vadd.f32 %v2085, %v2153
        %s2158 = sld [smem:[#allocation10 + $0x33]]
        %v2159 = vstv %s2158
        %v2160 = vmul.f32 %v2066, %v2159
        %v2161 = vmul.f32 %v2067, %v2159
        %2164 = vrot.lane.b32.xlu0 %v2160, 127
        %v2165 = vpop.permute.xlu0 %2164
        %2166 = vrot.lane.b32.xlu0 %v2161, 127
        %v2167 = vpop.permute.xlu0 %2166
        %v2170 = vadd.f32 %v2090, %v2165
        %v2171 = vadd.f32 %v2091, %v2167
        %s2172 = sld [smem:[#allocation10 + $0x34]]
        %v2173 = vstv %s2172
        %v2174 = vmul.f32 %v2066, %v2173
        %v2175 = vmul.f32 %v2067, %v2173
        %2178 = vrot.lane.b32.xlu0 %v2174, 127
        %v2179 = vpop.permute.xlu0 %2178
        %2180 = vrot.lane.b32.xlu0 %v2175, 127
        %v2181 = vpop.permute.xlu0 %2180
        %v2184 = vadd.f32 %v2096, %v2179
        %v2185 = vadd.f32 %v2097, %v2181
        %s2186 = sld [smem:[#allocation10 + $0x35]]
        %v2187 = vstv %s2186
        %v2188 = vmul.f32 %v2066, %v2187
        %v2189 = vmul.f32 %v2067, %v2187
        %2192 = vrot.lane.b32.xlu0 %v2188, 127
        %v2193 = vpop.permute.xlu0 %2192
        %2194 = vrot.lane.b32.xlu0 %v2189, 127
        %v2195 = vpop.permute.xlu0 %2194
        %v2198 = vadd.f32 %v2102, %v2193
        %v2199 = vadd.f32 %v2103, %v2195
        %s2200 = sld [smem:[#allocation10 + $0x36]]
        %v2201 = vstv %s2200
        %v2202 = vmul.f32 %v2066, %v2201
        %v2203 = vmul.f32 %v2067, %v2201
        %2206 = vrot.lane.b32.xlu0 %v2202, 127
        %v2207 = vpop.permute.xlu0 %2206
        %2208 = vrot.lane.b32.xlu0 %v2203, 127
        %v2209 = vpop.permute.xlu0 %2208
        %v2212 = vadd.f32 %v2108, %v2207
        %v2213 = vadd.f32 %v2109, %v2209
        %s2214 = sld [smem:[#allocation10 + $0x37]]
        %v2215 = vstv %s2214
        %v2216 = vmul.f32 %v2066, %v2215
        %v2217 = vmul.f32 %v2067, %v2215
        %2220 = vrot.lane.b32.xlu0 %v2216, 127
        %v2221 = vpop.permute.xlu0 %2220
        %2222 = vrot.lane.b32.xlu0 %v2217, 127
        %v2223 = vpop.permute.xlu0 %2222
        %v2226 = vadd.f32 %v2114, %v2221
        %v2227 = vadd.f32 %v2115, %v2223
        %s2228 = sld [smem:[#allocation10 + $0x50]]
        %v2229 = vstv %s2228
        %v2230 = vmul.f32 %v2066, %v2229
        %v2231 = vmul.f32 %v2067, %v2229
        %2234 = vrot.lane.b32.xlu0 %v2230, 126
        %v2235 = vpop.permute.xlu0 %2234
        %2236 = vrot.lane.b32.xlu0 %v2231, 126
        %v2237 = vpop.permute.xlu0 %2236
        %v2240 = vadd.f32 %v2128, %v2235
        %v2241 = vadd.f32 %v2129, %v2237
        %s2242 = sld [smem:[#allocation10 + $0x51]]
        %v2243 = vstv %s2242
        %v2244 = vmul.f32 %v2066, %v2243
        %v2245 = vmul.f32 %v2067, %v2243
        %2248 = vrot.lane.b32.xlu0 %v2244, 126
        %v2249 = vpop.permute.xlu0 %2248
        %2250 = vrot.lane.b32.xlu0 %v2245, 126
        %v2251 = vpop.permute.xlu0 %2250
        %v2254 = vadd.f32 %v2142, %v2249
        %v2255 = vadd.f32 %v2143, %v2251
        %s2256 = sld [smem:[#allocation10 + $0x52]]
        %v2257 = vstv %s2256
        %v2258 = vmul.f32 %v2066, %v2257
        %v2259 = vmul.f32 %v2067, %v2257
        %2262 = vrot.lane.b32.xlu0 %v2258, 126
        %v2263 = vpop.permute.xlu0 %2262
        %2264 = vrot.lane.b32.xlu0 %v2259, 126
        %v2265 = vpop.permute.xlu0 %2264
        %v2268 = vadd.f32 %v2156, %v2263
        %v2269 = vadd.f32 %v2157, %v2265
        %s2270 = sld [smem:[#allocation10 + $0x53]]
        %v2271 = vstv %s2270
        %v2272 = vmul.f32 %v2066, %v2271
        %v2273 = vmul.f32 %v2067, %v2271
        %2276 = vrot.lane.b32.xlu0 %v2272, 126
        %v2277 = vpop.permute.xlu0 %2276
        %2278 = vrot.lane.b32.xlu0 %v2273, 126
        %v2279 = vpop.permute.xlu0 %2278
        %v2282 = vadd.f32 %v2170, %v2277
        %v2283 = vadd.f32 %v2171, %v2279
        %s2284 = sld [smem:[#allocation10 + $0x54]]
        %v2285 = vstv %s2284
        %v2286 = vmul.f32 %v2066, %v2285
        %v2287 = vmul.f32 %v2067, %v2285
        %2290 = vrot.lane.b32.xlu0 %v2286, 126
        %v2291 = vpop.permute.xlu0 %2290
        %2292 = vrot.lane.b32.xlu0 %v2287, 126
        %v2293 = vpop.permute.xlu0 %2292
        %v2296 = vadd.f32 %v2184, %v2291
        %v2297 = vadd.f32 %v2185, %v2293
        %s2298 = sld [smem:[#allocation10 + $0x55]]
        %v2299 = vstv %s2298
        %v2300 = vmul.f32 %v2066, %v2299
        %v2301 = vmul.f32 %v2067, %v2299
        %2304 = vrot.lane.b32.xlu0 %v2300, 126
        %v2305 = vpop.permute.xlu0 %2304
        %2306 = vrot.lane.b32.xlu0 %v2301, 126
        %v2307 = vpop.permute.xlu0 %2306
        %v2310 = vadd.f32 %v2198, %v2305
        %v2311 = vadd.f32 %v2199, %v2307
        %s2312 = sld [smem:[#allocation10 + $0x56]]
        %v2313 = vstv %s2312
        %v2314 = vmul.f32 %v2066, %v2313
        %v2315 = vmul.f32 %v2067, %v2313
        %2318 = vrot.lane.b32.xlu0 %v2314, 126
        %v2319 = vpop.permute.xlu0 %2318
        %2320 = vrot.lane.b32.xlu0 %v2315, 126
        %v2321 = vpop.permute.xlu0 %2320
        %v2324 = vadd.f32 %v2212, %v2319
        %v2325 = vadd.f32 %v2213, %v2321
        %s2326 = sld [smem:[#allocation10 + $0x57]]
        %v2327 = vstv %s2326
        %v2328 = vmul.f32 %v2066, %v2327
        %v2329 = vmul.f32 %v2067, %v2327
        %2332 = vrot.lane.b32.xlu0 %v2328, 126
        %v2333 = vpop.permute.xlu0 %2332
        %2334 = vrot.lane.b32.xlu0 %v2329, 126
        %v2335 = vpop.permute.xlu0 %2334
        %v2338 = vadd.f32 %v2226, %v2333
        %v2339 = vadd.f32 %v2227, %v2335
        %v2340 = vld [vmem:[%s2065 + $0x1] sm:$0xff]
        %v2341 = vld [vmem:[%s2065 + $0x9] sm:$0xff]
        %s2342 = sld [smem:[#allocation10 + $0x70]]
        %v2343 = vstv %s2342
        %v2344 = vmul.f32 %v2340, %v2343
        %v2345 = vmul.f32 %v2341, %v2343
        %v2346 = vadd.f32 %v2240, %v2344
        %v2347 = vadd.f32 %v2241, %v2345
        %s2348 = sld [smem:[#allocation10 + $0x71]]
        %v2349 = vstv %s2348
        %v2350 = vmul.f32 %v2340, %v2349
        %v2351 = vmul.f32 %v2341, %v2349
        %v2352 = vadd.f32 %v2254, %v2350
        %v2353 = vadd.f32 %v2255, %v2351
        %s2354 = sld [smem:[#allocation10 + $0x72]]
        %v2355 = vstv %s2354
        %v2356 = vmul.f32 %v2340, %v2355
        %v2357 = vmul.f32 %v2341, %v2355
        %v2358 = vadd.f32 %v2268, %v2356
        %v2359 = vadd.f32 %v2269, %v2357
        %s2360 = sld [smem:[#allocation10 + $0x73]]
        %v2361 = vstv %s2360
        %v2362 = vmul.f32 %v2340, %v2361
        %v2363 = vmul.f32 %v2341, %v2361
        %v2364 = vadd.f32 %v2282, %v2362
        %v2365 = vadd.f32 %v2283, %v2363
        %s2366 = sld [smem:[#allocation10 + $0x74]]
        %v2367 = vstv %s2366
        %v2368 = vmul.f32 %v2340, %v2367
        %v2369 = vmul.f32 %v2341, %v2367
        %v2370 = vadd.f32 %v2296, %v2368
        %v2371 = vadd.f32 %v2297, %v2369
        %s2372 = sld [smem:[#allocation10 + $0x75]]
        %v2373 = vstv %s2372
        %v2374 = vmul.f32 %v2340, %v2373
        %v2375 = vmul.f32 %v2341, %v2373
        %v2376 = vadd.f32 %v2310, %v2374
        %v2377 = vadd.f32 %v2311, %v2375
        %s2378 = sld [smem:[#allocation10 + $0x76]]
        %v2379 = vstv %s2378
        %v2380 = vmul.f32 %v2340, %v2379
        %v2381 = vmul.f32 %v2341, %v2379
        %v2382 = vadd.f32 %v2324, %v2380
        %v2383 = vadd.f32 %v2325, %v2381
        %s2384 = sld [smem:[#allocation10 + $0x77]]
        %v2385 = vstv %s2384
        %v2386 = vmul.f32 %v2340, %v2385
        %v2387 = vmul.f32 %v2341, %v2385
        %v2388 = vadd.f32 %v2338, %v2386
        %v2389 = vadd.f32 %v2339, %v2387
        %s2390 = sld [smem:[#allocation10 + $0x90]]
        %v2391 = vstv %s2390
        %v2392 = vmul.f32 %v2340, %v2391
        %v2393 = vmul.f32 %v2341, %v2391
        %2396 = vrot.lane.b32.xlu0 %v2392, 127
        %v2397 = vpop.permute.xlu0 %2396
        %2398 = vrot.lane.b32.xlu0 %v2393, 127
        %v2399 = vpop.permute.xlu0 %2398
        %v2402 = vadd.f32 %v2346, %v2397
        %v2403 = vadd.f32 %v2347, %v2399
        %s2404 = sld [smem:[#allocation10 + $0x91]]
        %v2405 = vstv %s2404
        %v2406 = vmul.f32 %v2340, %v2405
        %v2407 = vmul.f32 %v2341, %v2405
        %2410 = vrot.lane.b32.xlu0 %v2406, 127
        %v2411 = vpop.permute.xlu0 %2410
        %2412 = vrot.lane.b32.xlu0 %v2407, 127
        %v2413 = vpop.permute.xlu0 %2412
        %v2416 = vadd.f32 %v2352, %v2411
        %v2417 = vadd.f32 %v2353, %v2413
        %s2418 = sld [smem:[#allocation10 + $0x92]]
        %v2419 = vstv %s2418
        %v2420 = vmul.f32 %v2340, %v2419
        %v2421 = vmul.f32 %v2341, %v2419
        %2424 = vrot.lane.b32.xlu0 %v2420, 127
        %v2425 = vpop.permute.xlu0 %2424
        %2426 = vrot.lane.b32.xlu0 %v2421, 127
        %v2427 = vpop.permute.xlu0 %2426
        %v2430 = vadd.f32 %v2358, %v2425
        %v2431 = vadd.f32 %v2359, %v2427
        %s2432 = sld [smem:[#allocation10 + $0x93]]
        %v2433 = vstv %s2432
        %v2434 = vmul.f32 %v2340, %v2433
        %v2435 = vmul.f32 %v2341, %v2433
        %2438 = vrot.lane.b32.xlu0 %v2434, 127
        %v2439 = vpop.permute.xlu0 %2438
        %2440 = vrot.lane.b32.xlu0 %v2435, 127
        %v2441 = vpop.permute.xlu0 %2440
        %v2444 = vadd.f32 %v2364, %v2439
        %v2445 = vadd.f32 %v2365, %v2441
        %s2446 = sld [smem:[#allocation10 + $0x94]]
        %v2447 = vstv %s2446
        %v2448 = vmul.f32 %v2340, %v2447
        %v2449 = vmul.f32 %v2341, %v2447
        %2452 = vrot.lane.b32.xlu0 %v2448, 127
        %v2453 = vpop.permute.xlu0 %2452
        %2454 = vrot.lane.b32.xlu0 %v2449, 127
        %v2455 = vpop.permute.xlu0 %2454
        %v2458 = vadd.f32 %v2370, %v2453
        %v2459 = vadd.f32 %v2371, %v2455
        %s2460 = sld [smem:[#allocation10 + $0x95]]
        %v2461 = vstv %s2460
        %v2462 = vmul.f32 %v2340, %v2461
        %v2463 = vmul.f32 %v2341, %v2461
        %2466 = vrot.lane.b32.xlu0 %v2462, 127
        %v2467 = vpop.permute.xlu0 %2466
        %2468 = vrot.lane.b32.xlu0 %v2463, 127
        %v2469 = vpop.permute.xlu0 %2468
        %v2472 = vadd.f32 %v2376, %v2467
        %v2473 = vadd.f32 %v2377, %v2469
        %s2474 = sld [smem:[#allocation10 + $0x96]]
        %v2475 = vstv %s2474
        %v2476 = vmul.f32 %v2340, %v2475
        %v2477 = vmul.f32 %v2341, %v2475
        %2480 = vrot.lane.b32.xlu0 %v2476, 127
        %v2481 = vpop.permute.xlu0 %2480
        %2482 = vrot.lane.b32.xlu0 %v2477, 127
        %v2483 = vpop.permute.xlu0 %2482
        %v2486 = vadd.f32 %v2382, %v2481
        %v2487 = vadd.f32 %v2383, %v2483
        %s2488 = sld [smem:[#allocation10 + $0x97]]
        %v2489 = vstv %s2488
        %v2490 = vmul.f32 %v2340, %v2489
        %v2491 = vmul.f32 %v2341, %v2489
        %2494 = vrot.lane.b32.xlu0 %v2490, 127
        %v2495 = vpop.permute.xlu0 %2494
        %2496 = vrot.lane.b32.xlu0 %v2491, 127
        %v2497 = vpop.permute.xlu0 %2496
        %v2500 = vadd.f32 %v2388, %v2495
        %v2501 = vadd.f32 %v2389, %v2497
        %s2502 = sld [smem:[#allocation10 + $0xb0]]
        %v2503 = vstv %s2502
        %v2504 = vmul.f32 %v2340, %v2503
        %v2505 = vmul.f32 %v2341, %v2503
        %2508 = vrot.lane.b32.xlu0 %v2504, 126
        %v2509 = vpop.permute.xlu0 %2508
        %2510 = vrot.lane.b32.xlu0 %v2505, 126
        %v2511 = vpop.permute.xlu0 %2510
        %v2514 = vadd.f32 %v2402, %v2509
        %v2515 = vadd.f32 %v2403, %v2511
        %s2516 = sld [smem:[#allocation10 + $0xb1]]
        %v2517 = vstv %s2516
        %v2518 = vmul.f32 %v2340, %v2517
        %v2519 = vmul.f32 %v2341, %v2517
        %2522 = vrot.lane.b32.xlu0 %v2518, 126
        %v2523 = vpop.permute.xlu0 %2522
        %2524 = vrot.lane.b32.xlu0 %v2519, 126
        %v2525 = vpop.permute.xlu0 %2524
        %v2528 = vadd.f32 %v2416, %v2523
        %v2529 = vadd.f32 %v2417, %v2525
        %s2530 = sld [smem:[#allocation10 + $0xb2]]
        %v2531 = vstv %s2530
        %v2532 = vmul.f32 %v2340, %v2531
        %v2533 = vmul.f32 %v2341, %v2531
        %2536 = vrot.lane.b32.xlu0 %v2532, 126
        %v2537 = vpop.permute.xlu0 %2536
        %2538 = vrot.lane.b32.xlu0 %v2533, 126
        %v2539 = vpop.permute.xlu0 %2538
        %v2542 = vadd.f32 %v2430, %v2537
        %v2543 = vadd.f32 %v2431, %v2539
        %s2544 = sld [smem:[#allocation10 + $0xb3]]
        %v2545 = vstv %s2544
        %v2546 = vmul.f32 %v2340, %v2545
        %v2547 = vmul.f32 %v2341, %v2545
        %2550 = vrot.lane.b32.xlu0 %v2546, 126
        %v2551 = vpop.permute.xlu0 %2550
        %2552 = vrot.lane.b32.xlu0 %v2547, 126
        %v2553 = vpop.permute.xlu0 %2552
        %v2556 = vadd.f32 %v2444, %v2551
        %v2557 = vadd.f32 %v2445, %v2553
        %s2558 = sld [smem:[#allocation10 + $0xb4]]
        %v2559 = vstv %s2558
        %v2560 = vmul.f32 %v2340, %v2559
        %v2561 = vmul.f32 %v2341, %v2559
        %2564 = vrot.lane.b32.xlu0 %v2560, 126
        %v2565 = vpop.permute.xlu0 %2564
        %2566 = vrot.lane.b32.xlu0 %v2561, 126
        %v2567 = vpop.permute.xlu0 %2566
        %v2570 = vadd.f32 %v2458, %v2565
        %v2571 = vadd.f32 %v2459, %v2567
        %s2572 = sld [smem:[#allocation10 + $0xb5]]
        %v2573 = vstv %s2572
        %v2574 = vmul.f32 %v2340, %v2573
        %v2575 = vmul.f32 %v2341, %v2573
        %2578 = vrot.lane.b32.xlu0 %v2574, 126
        %v2579 = vpop.permute.xlu0 %2578
        %2580 = vrot.lane.b32.xlu0 %v2575, 126
        %v2581 = vpop.permute.xlu0 %2580
        %v2584 = vadd.f32 %v2472, %v2579
        %v2585 = vadd.f32 %v2473, %v2581
        %s2586 = sld [smem:[#allocation10 + $0xb6]]
        %v2587 = vstv %s2586
        %v2588 = vmul.f32 %v2340, %v2587
        %v2589 = vmul.f32 %v2341, %v2587
        %2592 = vrot.lane.b32.xlu0 %v2588, 126
        %v2593 = vpop.permute.xlu0 %2592
        %2594 = vrot.lane.b32.xlu0 %v2589, 126
        %v2595 = vpop.permute.xlu0 %2594
        %v2598 = vadd.f32 %v2486, %v2593
        %v2599 = vadd.f32 %v2487, %v2595
        %s2600 = sld [smem:[#allocation10 + $0xb7]]
        %v2601 = vstv %s2600
        %v2602 = vmul.f32 %v2340, %v2601
        %v2603 = vmul.f32 %v2341, %v2601
        %2606 = vrot.lane.b32.xlu0 %v2602, 126
        %v2607 = vpop.permute.xlu0 %2606
        %2608 = vrot.lane.b32.xlu0 %v2603, 126
        %v2609 = vpop.permute.xlu0 %2608
        %v2612 = vadd.f32 %v2500, %v2607
        %v2613 = vadd.f32 %v2501, %v2609
        %v2614 = vld [vmem:[%s2065 + $0x2] sm:$0xff]
        %v2615 = vld [vmem:[%s2065 + $0xa] sm:$0xff]
        %s2616 = sld [smem:[#allocation10 + $0xd0]]
        %v2617 = vstv %s2616
        %v2618 = vmul.f32 %v2614, %v2617
        %v2619 = vmul.f32 %v2615, %v2617
        %v2620 = vadd.f32 %v2514, %v2618
        %v2621 = vadd.f32 %v2515, %v2619
        %s2622 = sld [smem:[#allocation10 + $0xd1]]
        %v2623 = vstv %s2622
        %v2624 = vmul.f32 %v2614, %v2623
        %v2625 = vmul.f32 %v2615, %v2623
        %v2626 = vadd.f32 %v2528, %v2624
        %v2627 = vadd.f32 %v2529, %v2625
        %s2628 = sld [smem:[#allocation10 + $0xd2]]
        %v2629 = vstv %s2628
        %v2630 = vmul.f32 %v2614, %v2629
        %v2631 = vmul.f32 %v2615, %v2629
        %v2632 = vadd.f32 %v2542, %v2630
        %v2633 = vadd.f32 %v2543, %v2631
        %s2634 = sld [smem:[#allocation10 + $0xd3]]
        %v2635 = vstv %s2634
        %v2636 = vmul.f32 %v2614, %v2635
        %v2637 = vmul.f32 %v2615, %v2635
        %v2638 = vadd.f32 %v2556, %v2636
        %v2639 = vadd.f32 %v2557, %v2637
        %s2640 = sld [smem:[#allocation10 + $0xd4]]
        %v2641 = vstv %s2640
        %v2642 = vmul.f32 %v2614, %v2641
        %v2643 = vmul.f32 %v2615, %v2641
        %v2644 = vadd.f32 %v2570, %v2642
        %v2645 = vadd.f32 %v2571, %v2643
        %s2646 = sld [smem:[#allocation10 + $0xd5]]
        %v2647 = vstv %s2646
        %v2648 = vmul.f32 %v2614, %v2647
        %v2649 = vmul.f32 %v2615, %v2647
        %v2650 = vadd.f32 %v2584, %v2648
        %v2651 = vadd.f32 %v2585, %v2649
        %s2652 = sld [smem:[#allocation10 + $0xd6]]
        %v2653 = vstv %s2652
        %v2654 = vmul.f32 %v2614, %v2653
        %v2655 = vmul.f32 %v2615, %v2653
        %v2656 = vadd.f32 %v2598, %v2654
        %v2657 = vadd.f32 %v2599, %v2655
        %s2658 = sld [smem:[#allocation10 + $0xd7]]
        %v2659 = vstv %s2658
        %v2660 = vmul.f32 %v2614, %v2659
        %v2661 = vmul.f32 %v2615, %v2659
        %v2662 = vadd.f32 %v2612, %v2660
        %v2663 = vadd.f32 %v2613, %v2661
        %s2664 = sld [smem:[#allocation10 + $0xf0]]
        %v2665 = vstv %s2664
        %v2666 = vmul.f32 %v2614, %v2665
        %v2667 = vmul.f32 %v2615, %v2665
        %2670 = vrot.lane.b32.xlu0 %v2666, 127
        %v2671 = vpop.permute.xlu0 %2670
        %2672 = vrot.lane.b32.xlu0 %v2667, 127
        %v2673 = vpop.permute.xlu0 %2672
        %v2676 = vadd.f32 %v2620, %v2671
        %v2677 = vadd.f32 %v2621, %v2673
        %s2678 = sld [smem:[#allocation10 + $0xf1]]
        %v2679 = vstv %s2678
        %v2680 = vmul.f32 %v2614, %v2679
        %v2681 = vmul.f32 %v2615, %v2679
        %2684 = vrot.lane.b32.xlu0 %v2680, 127
        %v2685 = vpop.permute.xlu0 %2684
        %2686 = vrot.lane.b32.xlu0 %v2681, 127
        %v2687 = vpop.permute.xlu0 %2686
        %v2690 = vadd.f32 %v2626, %v2685
        %v2691 = vadd.f32 %v2627, %v2687
        %s2692 = sld [smem:[#allocation10 + $0xf2]]
        %v2693 = vstv %s2692
        %v2694 = vmul.f32 %v2614, %v2693
        %v2695 = vmul.f32 %v2615, %v2693
        %2698 = vrot.lane.b32.xlu0 %v2694, 127
        %v2699 = vpop.permute.xlu0 %2698
        %2700 = vrot.lane.b32.xlu0 %v2695, 127
        %v2701 = vpop.permute.xlu0 %2700
        %v2704 = vadd.f32 %v2632, %v2699
        %v2705 = vadd.f32 %v2633, %v2701
        %s2706 = sld [smem:[#allocation10 + $0xf3]]
        %v2707 = vstv %s2706
        %v2708 = vmul.f32 %v2614, %v2707
        %v2709 = vmul.f32 %v2615, %v2707
        %2712 = vrot.lane.b32.xlu0 %v2708, 127
        %v2713 = vpop.permute.xlu0 %2712
        %2714 = vrot.lane.b32.xlu0 %v2709, 127
        %v2715 = vpop.permute.xlu0 %2714
        %v2718 = vadd.f32 %v2638, %v2713
        %v2719 = vadd.f32 %v2639, %v2715
        %s2720 = sld [smem:[#allocation10 + $0xf4]]
        %v2721 = vstv %s2720
        %v2722 = vmul.f32 %v2614, %v2721
        %v2723 = vmul.f32 %v2615, %v2721
        %2726 = vrot.lane.b32.xlu0 %v2722, 127
        %v2727 = vpop.permute.xlu0 %2726
        %2728 = vrot.lane.b32.xlu0 %v2723, 127
        %v2729 = vpop.permute.xlu0 %2728
        %v2732 = vadd.f32 %v2644, %v2727
        %v2733 = vadd.f32 %v2645, %v2729
        %s2734 = sld [smem:[#allocation10 + $0xf5]]
        %v2735 = vstv %s2734
        %v2736 = vmul.f32 %v2614, %v2735
        %v2737 = vmul.f32 %v2615, %v2735
        %2740 = vrot.lane.b32.xlu0 %v2736, 127
        %v2741 = vpop.permute.xlu0 %2740
        %2742 = vrot.lane.b32.xlu0 %v2737, 127
        %v2743 = vpop.permute.xlu0 %2742
        %v2746 = vadd.f32 %v2650, %v2741
        %v2747 = vadd.f32 %v2651, %v2743
        %s2748 = sld [smem:[#allocation10 + $0xf6]]
        %v2749 = vstv %s2748
        %v2750 = vmul.f32 %v2614, %v2749
        %v2751 = vmul.f32 %v2615, %v2749
        %2754 = vrot.lane.b32.xlu0 %v2750, 127
        %v2755 = vpop.permute.xlu0 %2754
        %2756 = vrot.lane.b32.xlu0 %v2751, 127
        %v2757 = vpop.permute.xlu0 %2756
        %v2760 = vadd.f32 %v2656, %v2755
        %v2761 = vadd.f32 %v2657, %v2757
        %s2762 = sld [smem:[#allocation10 + $0xf7]]
        %v2763 = vstv %s2762
        %v2764 = vmul.f32 %v2614, %v2763
        %v2765 = vmul.f32 %v2615, %v2763
        %2768 = vrot.lane.b32.xlu0 %v2764, 127
        %v2769 = vpop.permute.xlu0 %2768
        %2770 = vrot.lane.b32.xlu0 %v2765, 127
        %v2771 = vpop.permute.xlu0 %2770
        %v2774 = vadd.f32 %v2662, %v2769
        %v2775 = vadd.f32 %v2663, %v2771
        %s2776 = sld [smem:[#allocation10 + $0x110]]
        %v2777 = vstv %s2776
        %v2778 = vmul.f32 %v2614, %v2777
        %v2779 = vmul.f32 %v2615, %v2777
        %2782 = vrot.lane.b32.xlu0 %v2778, 126
        %v2783 = vpop.permute.xlu0 %2782
        %2784 = vrot.lane.b32.xlu0 %v2779, 126
        %v2785 = vpop.permute.xlu0 %2784
        %v2788 = vadd.f32 %v2676, %v2783
        %v2789 = vadd.f32 %v2677, %v2785
        %s2790 = sld [smem:[#allocation10 + $0x111]]
        %v2791 = vstv %s2790
        %v2792 = vmul.f32 %v2614, %v2791
        %v2793 = vmul.f32 %v2615, %v2791
        %2796 = vrot.lane.b32.xlu0 %v2792, 126
        %v2797 = vpop.permute.xlu0 %2796
        %2798 = vrot.lane.b32.xlu0 %v2793, 126
        %v2799 = vpop.permute.xlu0 %2798
        %v2802 = vadd.f32 %v2690, %v2797
        %v2803 = vadd.f32 %v2691, %v2799
        %s2804 = sld [smem:[#allocation10 + $0x112]]
        %v2805 = vstv %s2804
        %v2806 = vmul.f32 %v2614, %v2805
        %v2807 = vmul.f32 %v2615, %v2805
        %2810 = vrot.lane.b32.xlu0 %v2806, 126
        %v2811 = vpop.permute.xlu0 %2810
        %2812 = vrot.lane.b32.xlu0 %v2807, 126
        %v2813 = vpop.permute.xlu0 %2812
        %v2816 = vadd.f32 %v2704, %v2811
        %v2817 = vadd.f32 %v2705, %v2813
        %s2818 = sld [smem:[#allocation10 + $0x113]]
        %v2819 = vstv %s2818
        %v2820 = vmul.f32 %v2614, %v2819
        %v2821 = vmul.f32 %v2615, %v2819
        %2824 = vrot.lane.b32.xlu0 %v2820, 126
        %v2825 = vpop.permute.xlu0 %2824
        %2826 = vrot.lane.b32.xlu0 %v2821, 126
        %v2827 = vpop.permute.xlu0 %2826
        %v2830 = vadd.f32 %v2718, %v2825
        %v2831 = vadd.f32 %v2719, %v2827
        %s2832 = sld [smem:[#allocation10 + $0x114]]
        %v2833 = vstv %s2832
        %v2834 = vmul.f32 %v2614, %v2833
        %v2835 = vmul.f32 %v2615, %v2833
        %2838 = vrot.lane.b32.xlu0 %v2834, 126
        %v2839 = vpop.permute.xlu0 %2838
        %2840 = vrot.lane.b32.xlu0 %v2835, 126
        %v2841 = vpop.permute.xlu0 %2840
        %v2844 = vadd.f32 %v2732, %v2839
        %v2845 = vadd.f32 %v2733, %v2841
        %s2846 = sld [smem:[#allocation10 + $0x115]]
        %v2847 = vstv %s2846
        %v2848 = vmul.f32 %v2614, %v2847
        %v2849 = vmul.f32 %v2615, %v2847
        %2852 = vrot.lane.b32.xlu0 %v2848, 126
        %v2853 = vpop.permute.xlu0 %2852
        %2854 = vrot.lane.b32.xlu0 %v2849, 126
        %v2855 = vpop.permute.xlu0 %2854
        %v2858 = vadd.f32 %v2746, %v2853
        %v2859 = vadd.f32 %v2747, %v2855
        %s2860 = sld [smem:[#allocation10 + $0x116]]
        %v2861 = vstv %s2860
        %v2862 = vmul.f32 %v2614, %v2861
        %v2863 = vmul.f32 %v2615, %v2861
        %2866 = vrot.lane.b32.xlu0 %v2862, 126
        %v2867 = vpop.permute.xlu0 %2866
        %2868 = vrot.lane.b32.xlu0 %v2863, 126
        %v2869 = vpop.permute.xlu0 %2868
        %v2872 = vadd.f32 %v2760, %v2867
        %v2873 = vadd.f32 %v2761, %v2869
        %s2874 = sld [smem:[#allocation10 + $0x117]]
        %v2875 = vstv %s2874
        %v2876 = vmul.f32 %v2614, %v2875
        %v2877 = vmul.f32 %v2615, %v2875
        %2880 = vrot.lane.b32.xlu0 %v2876, 126
        %v2881 = vpop.permute.xlu0 %2880
        %2882 = vrot.lane.b32.xlu0 %v2877, 126
        %v2883 = vpop.permute.xlu0 %2882
        %v2886 = vadd.f32 %v2774, %v2881
        %v2887 = vadd.f32 %v2775, %v2883
        %s2888 = scalar_lea.vmem [#allocation2], 72
        %v2889 = vld [vmem:[%s2888] sm:$0xff]
        %v2890 = vld [vmem:[%s2888 + $0x8] sm:$0xff]
        %s2891 = sld [smem:[#allocation10 + $0x18]]
        %v2892 = vstv %s2891
        %v2893 = vmul.f32 %v2889, %v2892
        %v2894 = vmul.f32 %v2890, %v2892
        %v2895 = vadd.f32 %v2788, %v2893
        %v2896 = vadd.f32 %v2789, %v2894
        %s2897 = sld [smem:[#allocation10 + $0x19]]
        %v2898 = vstv %s2897
        %v2899 = vmul.f32 %v2889, %v2898
        %v2900 = vmul.f32 %v2890, %v2898
        %v2901 = vadd.f32 %v2802, %v2899
        %v2902 = vadd.f32 %v2803, %v2900
        %s2903 = sld [smem:[#allocation10 + $0x1a]]
        %v2904 = vstv %s2903
        %v2905 = vmul.f32 %v2889, %v2904
        %v2906 = vmul.f32 %v2890, %v2904
        %v2907 = vadd.f32 %v2816, %v2905
        %v2908 = vadd.f32 %v2817, %v2906
        %s2909 = sld [smem:[#allocation10 + $0x1b]]
        %v2910 = vstv %s2909
        %v2911 = vmul.f32 %v2889, %v2910
        %v2912 = vmul.f32 %v2890, %v2910
        %v2913 = vadd.f32 %v2830, %v2911
        %v2914 = vadd.f32 %v2831, %v2912
        %s2915 = sld [smem:[#allocation10 + $0x1c]]
        %v2916 = vstv %s2915
        %v2917 = vmul.f32 %v2889, %v2916
        %v2918 = vmul.f32 %v2890, %v2916
        %v2919 = vadd.f32 %v2844, %v2917
        %v2920 = vadd.f32 %v2845, %v2918
        %s2921 = sld [smem:[#allocation10 + $0x1d]]
        %v2922 = vstv %s2921
        %v2923 = vmul.f32 %v2889, %v2922
        %v2924 = vmul.f32 %v2890, %v2922
        %v2925 = vadd.f32 %v2858, %v2923
        %v2926 = vadd.f32 %v2859, %v2924
        %s2927 = sld [smem:[#allocation10 + $0x1e]]
        %v2928 = vstv %s2927
        %v2929 = vmul.f32 %v2889, %v2928
        %v2930 = vmul.f32 %v2890, %v2928
        %v2931 = vadd.f32 %v2872, %v2929
        %v2932 = vadd.f32 %v2873, %v2930
        %s2933 = sld [smem:[#allocation10 + $0x1f]]
        %v2934 = vstv %s2933
        %v2935 = vmul.f32 %v2889, %v2934
        %v2936 = vmul.f32 %v2890, %v2934
        %v2937 = vadd.f32 %v2886, %v2935
        %v2938 = vadd.f32 %v2887, %v2936
        %s2939 = sld [smem:[#allocation10 + $0x38]]
        %v2940 = vstv %s2939
        %v2941 = vmul.f32 %v2889, %v2940
        %v2942 = vmul.f32 %v2890, %v2940
        %2945 = vrot.lane.b32.xlu0 %v2941, 127
        %v2946 = vpop.permute.xlu0 %2945
        %2947 = vrot.lane.b32.xlu0 %v2942, 127
        %v2948 = vpop.permute.xlu0 %2947
        %v2951 = vadd.f32 %v2895, %v2946
        %v2952 = vadd.f32 %v2896, %v2948
        %s2953 = sld [smem:[#allocation10 + $0x39]]
        %v2954 = vstv %s2953
        %v2955 = vmul.f32 %v2889, %v2954
        %v2956 = vmul.f32 %v2890, %v2954
        %2959 = vrot.lane.b32.xlu0 %v2955, 127
        %v2960 = vpop.permute.xlu0 %2959
        %2961 = vrot.lane.b32.xlu0 %v2956, 127
        %v2962 = vpop.permute.xlu0 %2961
        %v2965 = vadd.f32 %v2901, %v2960
        %v2966 = vadd.f32 %v2902, %v2962
        %s2967 = sld [smem:[#allocation10 + $0x3a]]
        %v2968 = vstv %s2967
        %v2969 = vmul.f32 %v2889, %v2968
        %v2970 = vmul.f32 %v2890, %v2968
        %2973 = vrot.lane.b32.xlu0 %v2969, 127
        %v2974 = vpop.permute.xlu0 %2973
        %2975 = vrot.lane.b32.xlu0 %v2970, 127
        %v2976 = vpop.permute.xlu0 %2975
        %v2979 = vadd.f32 %v2907, %v2974
        %v2980 = vadd.f32 %v2908, %v2976
        %s2981 = sld [smem:[#allocation10 + $0x3b]]
        %v2982 = vstv %s2981
        %v2983 = vmul.f32 %v2889, %v2982
        %v2984 = vmul.f32 %v2890, %v2982
        %2987 = vrot.lane.b32.xlu0 %v2983, 127
        %v2988 = vpop.permute.xlu0 %2987
        %2989 = vrot.lane.b32.xlu0 %v2984, 127
        %v2990 = vpop.permute.xlu0 %2989
        %v2993 = vadd.f32 %v2913, %v2988
        %v2994 = vadd.f32 %v2914, %v2990
        %s2995 = sld [smem:[#allocation10 + $0x3c]]
        %v2996 = vstv %s2995
        %v2997 = vmul.f32 %v2889, %v2996
        %v2998 = vmul.f32 %v2890, %v2996
        %3001 = vrot.lane.b32.xlu0 %v2997, 127
        %v3002 = vpop.permute.xlu0 %3001
        %3003 = vrot.lane.b32.xlu0 %v2998, 127
        %v3004 = vpop.permute.xlu0 %3003
        %v3007 = vadd.f32 %v2919, %v3002
        %v3008 = vadd.f32 %v2920, %v3004
        %s3009 = sld [smem:[#allocation10 + $0x3d]]
        %v3010 = vstv %s3009
        %v3011 = vmul.f32 %v2889, %v3010
        %v3012 = vmul.f32 %v2890, %v3010
        %3015 = vrot.lane.b32.xlu0 %v3011, 127
        %v3016 = vpop.permute.xlu0 %3015
        %3017 = vrot.lane.b32.xlu0 %v3012, 127
        %v3018 = vpop.permute.xlu0 %3017
        %v3021 = vadd.f32 %v2925, %v3016
        %v3022 = vadd.f32 %v2926, %v3018
        %s3023 = sld [smem:[#allocation10 + $0x3e]]
        %v3024 = vstv %s3023
        %v3025 = vmul.f32 %v2889, %v3024
        %v3026 = vmul.f32 %v2890, %v3024
        %3029 = vrot.lane.b32.xlu0 %v3025, 127
        %v3030 = vpop.permute.xlu0 %3029
        %3031 = vrot.lane.b32.xlu0 %v3026, 127
        %v3032 = vpop.permute.xlu0 %3031
        %v3035 = vadd.f32 %v2931, %v3030
        %v3036 = vadd.f32 %v2932, %v3032
        %s3037 = sld [smem:[#allocation10 + $0x3f]]
        %v3038 = vstv %s3037
        %v3039 = vmul.f32 %v2889, %v3038
        %v3040 = vmul.f32 %v2890, %v3038
        %3043 = vrot.lane.b32.xlu0 %v3039, 127
        %v3044 = vpop.permute.xlu0 %3043
        %3045 = vrot.lane.b32.xlu0 %v3040, 127
        %v3046 = vpop.permute.xlu0 %3045
        %v3049 = vadd.f32 %v2937, %v3044
        %v3050 = vadd.f32 %v2938, %v3046
        %s3051 = sld [smem:[#allocation10 + $0x58]]
        %v3052 = vstv %s3051
        %v3053 = vmul.f32 %v2889, %v3052
        %v3054 = vmul.f32 %v2890, %v3052
        %3057 = vrot.lane.b32.xlu0 %v3053, 126
        %v3058 = vpop.permute.xlu0 %3057
        %3059 = vrot.lane.b32.xlu0 %v3054, 126
        %v3060 = vpop.permute.xlu0 %3059
        %v3063 = vadd.f32 %v2951, %v3058
        %v3064 = vadd.f32 %v2952, %v3060
        %s3065 = sld [smem:[#allocation10 + $0x59]]
        %v3066 = vstv %s3065
        %v3067 = vmul.f32 %v2889, %v3066
        %v3068 = vmul.f32 %v2890, %v3066
        %3071 = vrot.lane.b32.xlu0 %v3067, 126
        %v3072 = vpop.permute.xlu0 %3071
        %3073 = vrot.lane.b32.xlu0 %v3068, 126
        %v3074 = vpop.permute.xlu0 %3073
        %v3077 = vadd.f32 %v2965, %v3072
        %v3078 = vadd.f32 %v2966, %v3074
        %s3079 = sld [smem:[#allocation10 + $0x5a]]
        %v3080 = vstv %s3079
        %v3081 = vmul.f32 %v2889, %v3080
        %v3082 = vmul.f32 %v2890, %v3080
        %3085 = vrot.lane.b32.xlu0 %v3081, 126
        %v3086 = vpop.permute.xlu0 %3085
        %3087 = vrot.lane.b32.xlu0 %v3082, 126
        %v3088 = vpop.permute.xlu0 %3087
        %v3091 = vadd.f32 %v2979, %v3086
        %v3092 = vadd.f32 %v2980, %v3088
        %s3093 = sld [smem:[#allocation10 + $0x5b]]
        %v3094 = vstv %s3093
        %v3095 = vmul.f32 %v2889, %v3094
        %v3096 = vmul.f32 %v2890, %v3094
        %3099 = vrot.lane.b32.xlu0 %v3095, 126
        %v3100 = vpop.permute.xlu0 %3099
        %3101 = vrot.lane.b32.xlu0 %v3096, 126
        %v3102 = vpop.permute.xlu0 %3101
        %v3105 = vadd.f32 %v2993, %v3100
        %v3106 = vadd.f32 %v2994, %v3102
        %s3107 = sld [smem:[#allocation10 + $0x5c]]
        %v3108 = vstv %s3107
        %v3109 = vmul.f32 %v2889, %v3108
        %v3110 = vmul.f32 %v2890, %v3108
        %3113 = vrot.lane.b32.xlu0 %v3109, 126
        %v3114 = vpop.permute.xlu0 %3113
        %3115 = vrot.lane.b32.xlu0 %v3110, 126
        %v3116 = vpop.permute.xlu0 %3115
        %v3119 = vadd.f32 %v3007, %v3114
        %v3120 = vadd.f32 %v3008, %v3116
        %s3121 = sld [smem:[#allocation10 + $0x5d]]
        %v3122 = vstv %s3121
        %v3123 = vmul.f32 %v2889, %v3122
        %v3124 = vmul.f32 %v2890, %v3122
        %3127 = vrot.lane.b32.xlu0 %v3123, 126
        %v3128 = vpop.permute.xlu0 %3127
        %3129 = vrot.lane.b32.xlu0 %v3124, 126
        %v3130 = vpop.permute.xlu0 %3129
        %v3133 = vadd.f32 %v3021, %v3128
        %v3134 = vadd.f32 %v3022, %v3130
        %s3135 = sld [smem:[#allocation10 + $0x5e]]
        %v3136 = vstv %s3135
        %v3137 = vmul.f32 %v2889, %v3136
        %v3138 = vmul.f32 %v2890, %v3136
        %3141 = vrot.lane.b32.xlu0 %v3137, 126
        %v3142 = vpop.permute.xlu0 %3141
        %3143 = vrot.lane.b32.xlu0 %v3138, 126
        %v3144 = vpop.permute.xlu0 %3143
        %v3147 = vadd.f32 %v3035, %v3142
        %v3148 = vadd.f32 %v3036, %v3144
        %s3149 = sld [smem:[#allocation10 + $0x5f]]
        %v3150 = vstv %s3149
        %v3151 = vmul.f32 %v2889, %v3150
        %v3152 = vmul.f32 %v2890, %v3150
        %3155 = vrot.lane.b32.xlu0 %v3151, 126
        %v3156 = vpop.permute.xlu0 %3155
        %3157 = vrot.lane.b32.xlu0 %v3152, 126
        %v3158 = vpop.permute.xlu0 %3157
        %v3161 = vadd.f32 %v3049, %v3156
        %v3162 = vadd.f32 %v3050, %v3158
        %v3163 = vld [vmem:[%s2888 + $0x1] sm:$0xff]
        %v3164 = vld [vmem:[%s2888 + $0x9] sm:$0xff]
        %s3165 = sld [smem:[#allocation10 + $0x78]]
        %v3166 = vstv %s3165
        %v3167 = vmul.f32 %v3163, %v3166
        %v3168 = vmul.f32 %v3164, %v3166
        %v3169 = vadd.f32 %v3063, %v3167
        %v3170 = vadd.f32 %v3064, %v3168
        %s3171 = sld [smem:[#allocation10 + $0x79]]
        %v3172 = vstv %s3171
        %v3173 = vmul.f32 %v3163, %v3172
        %v3174 = vmul.f32 %v3164, %v3172
        %v3175 = vadd.f32 %v3077, %v3173
        %v3176 = vadd.f32 %v3078, %v3174
        %s3177 = sld [smem:[#allocation10 + $0x7a]]
        %v3178 = vstv %s3177
        %v3179 = vmul.f32 %v3163, %v3178
        %v3180 = vmul.f32 %v3164, %v3178
        %v3181 = vadd.f32 %v3091, %v3179
        %v3182 = vadd.f32 %v3092, %v3180
        %s3183 = sld [smem:[#allocation10 + $0x7b]]
        %v3184 = vstv %s3183
        %v3185 = vmul.f32 %v3163, %v3184
        %v3186 = vmul.f32 %v3164, %v3184
        %v3187 = vadd.f32 %v3105, %v3185
        %v3188 = vadd.f32 %v3106, %v3186
        %s3189 = sld [smem:[#allocation10 + $0x7c]]
        %v3190 = vstv %s3189
        %v3191 = vmul.f32 %v3163, %v3190
        %v3192 = vmul.f32 %v3164, %v3190
        %v3193 = vadd.f32 %v3119, %v3191
        %v3194 = vadd.f32 %v3120, %v3192
        %s3195 = sld [smem:[#allocation10 + $0x7d]]
        %v3196 = vstv %s3195
        %v3197 = vmul.f32 %v3163, %v3196
        %v3198 = vmul.f32 %v3164, %v3196
        %v3199 = vadd.f32 %v3133, %v3197
        %v3200 = vadd.f32 %v3134, %v3198
        %s3201 = sld [smem:[#allocation10 + $0x7e]]
        %v3202 = vstv %s3201
        %v3203 = vmul.f32 %v3163, %v3202
        %v3204 = vmul.f32 %v3164, %v3202
        %v3205 = vadd.f32 %v3147, %v3203
        %v3206 = vadd.f32 %v3148, %v3204
        %s3207 = sld [smem:[#allocation10 + $0x7f]]
        %v3208 = vstv %s3207
        %v3209 = vmul.f32 %v3163, %v3208
        %v3210 = vmul.f32 %v3164, %v3208
        %v3211 = vadd.f32 %v3161, %v3209
        %v3212 = vadd.f32 %v3162, %v3210
        %s3213 = sld [smem:[#allocation10 + $0x98]]
        %v3214 = vstv %s3213
        %v3215 = vmul.f32 %v3163, %v3214
        %v3216 = vmul.f32 %v3164, %v3214
        %3219 = vrot.lane.b32.xlu0 %v3215, 127
        %v3220 = vpop.permute.xlu0 %3219
        %3221 = vrot.lane.b32.xlu0 %v3216, 127
        %v3222 = vpop.permute.xlu0 %3221
        %v3225 = vadd.f32 %v3169, %v3220
        %v3226 = vadd.f32 %v3170, %v3222
        %s3227 = sld [smem:[#allocation10 + $0x99]]
        %v3228 = vstv %s3227
        %v3229 = vmul.f32 %v3163, %v3228
        %v3230 = vmul.f32 %v3164, %v3228
        %3233 = vrot.lane.b32.xlu0 %v3229, 127
        %v3234 = vpop.permute.xlu0 %3233
        %3235 = vrot.lane.b32.xlu0 %v3230, 127
        %v3236 = vpop.permute.xlu0 %3235
        %v3239 = vadd.f32 %v3175, %v3234
        %v3240 = vadd.f32 %v3176, %v3236
        %s3241 = sld [smem:[#allocation10 + $0x9a]]
        %v3242 = vstv %s3241
        %v3243 = vmul.f32 %v3163, %v3242
        %v3244 = vmul.f32 %v3164, %v3242
        %3247 = vrot.lane.b32.xlu0 %v3243, 127
        %v3248 = vpop.permute.xlu0 %3247
        %3249 = vrot.lane.b32.xlu0 %v3244, 127
        %v3250 = vpop.permute.xlu0 %3249
        %v3253 = vadd.f32 %v3181, %v3248
        %v3254 = vadd.f32 %v3182, %v3250
        %s3255 = sld [smem:[#allocation10 + $0x9b]]
        %v3256 = vstv %s3255
        %v3257 = vmul.f32 %v3163, %v3256
        %v3258 = vmul.f32 %v3164, %v3256
        %3261 = vrot.lane.b32.xlu0 %v3257, 127
        %v3262 = vpop.permute.xlu0 %3261
        %3263 = vrot.lane.b32.xlu0 %v3258, 127
        %v3264 = vpop.permute.xlu0 %3263
        %v3267 = vadd.f32 %v3187, %v3262
        %v3268 = vadd.f32 %v3188, %v3264
        %s3269 = sld [smem:[#allocation10 + $0x9c]]
        %v3270 = vstv %s3269
        %v3271 = vmul.f32 %v3163, %v3270
        %v3272 = vmul.f32 %v3164, %v3270
        %3275 = vrot.lane.b32.xlu0 %v3271, 127
        %v3276 = vpop.permute.xlu0 %3275
        %3277 = vrot.lane.b32.xlu0 %v3272, 127
        %v3278 = vpop.permute.xlu0 %3277
        %v3281 = vadd.f32 %v3193, %v3276
        %v3282 = vadd.f32 %v3194, %v3278
        %s3283 = sld [smem:[#allocation10 + $0x9d]]
        %v3284 = vstv %s3283
        %v3285 = vmul.f32 %v3163, %v3284
        %v3286 = vmul.f32 %v3164, %v3284
        %3289 = vrot.lane.b32.xlu0 %v3285, 127
        %v3290 = vpop.permute.xlu0 %3289
        %3291 = vrot.lane.b32.xlu0 %v3286, 127
        %v3292 = vpop.permute.xlu0 %3291
        %v3295 = vadd.f32 %v3199, %v3290
        %v3296 = vadd.f32 %v3200, %v3292
        %s3297 = sld [smem:[#allocation10 + $0x9e]]
        %v3298 = vstv %s3297
        %v3299 = vmul.f32 %v3163, %v3298
        %v3300 = vmul.f32 %v3164, %v3298
        %3303 = vrot.lane.b32.xlu0 %v3299, 127
        %v3304 = vpop.permute.xlu0 %3303
        %3305 = vrot.lane.b32.xlu0 %v3300, 127
        %v3306 = vpop.permute.xlu0 %3305
        %v3309 = vadd.f32 %v3205, %v3304
        %v3310 = vadd.f32 %v3206, %v3306
        %s3311 = sld [smem:[#allocation10 + $0x9f]]
        %v3312 = vstv %s3311
        %v3313 = vmul.f32 %v3163, %v3312
        %v3314 = vmul.f32 %v3164, %v3312
        %3317 = vrot.lane.b32.xlu0 %v3313, 127
        %v3318 = vpop.permute.xlu0 %3317
        %3319 = vrot.lane.b32.xlu0 %v3314, 127
        %v3320 = vpop.permute.xlu0 %3319
        %v3323 = vadd.f32 %v3211, %v3318
        %v3324 = vadd.f32 %v3212, %v3320
        %s3325 = sld [smem:[#allocation10 + $0xb8]]
        %v3326 = vstv %s3325
        %v3327 = vmul.f32 %v3163, %v3326
        %v3328 = vmul.f32 %v3164, %v3326
        %3331 = vrot.lane.b32.xlu0 %v3327, 126
        %v3332 = vpop.permute.xlu0 %3331
        %3333 = vrot.lane.b32.xlu0 %v3328, 126
        %v3334 = vpop.permute.xlu0 %3333
        %v3337 = vadd.f32 %v3225, %v3332
        %v3338 = vadd.f32 %v3226, %v3334
        %s3339 = sld [smem:[#allocation10 + $0xb9]]
        %v3340 = vstv %s3339
        %v3341 = vmul.f32 %v3163, %v3340
        %v3342 = vmul.f32 %v3164, %v3340
        %3345 = vrot.lane.b32.xlu0 %v3341, 126
        %v3346 = vpop.permute.xlu0 %3345
        %3347 = vrot.lane.b32.xlu0 %v3342, 126
        %v3348 = vpop.permute.xlu0 %3347
        %v3351 = vadd.f32 %v3239, %v3346
        %v3352 = vadd.f32 %v3240, %v3348
        %s3353 = sld [smem:[#allocation10 + $0xba]]
        %v3354 = vstv %s3353
        %v3355 = vmul.f32 %v3163, %v3354
        %v3356 = vmul.f32 %v3164, %v3354
        %3359 = vrot.lane.b32.xlu0 %v3355, 126
        %v3360 = vpop.permute.xlu0 %3359
        %3361 = vrot.lane.b32.xlu0 %v3356, 126
        %v3362 = vpop.permute.xlu0 %3361
        %v3365 = vadd.f32 %v3253, %v3360
        %v3366 = vadd.f32 %v3254, %v3362
        %s3367 = sld [smem:[#allocation10 + $0xbb]]
        %v3368 = vstv %s3367
        %v3369 = vmul.f32 %v3163, %v3368
        %v3370 = vmul.f32 %v3164, %v3368
        %3373 = vrot.lane.b32.xlu0 %v3369, 126
        %v3374 = vpop.permute.xlu0 %3373
        %3375 = vrot.lane.b32.xlu0 %v3370, 126
        %v3376 = vpop.permute.xlu0 %3375
        %v3379 = vadd.f32 %v3267, %v3374
        %v3380 = vadd.f32 %v3268, %v3376
        %s3381 = sld [smem:[#allocation10 + $0xbc]]
        %v3382 = vstv %s3381
        %v3383 = vmul.f32 %v3163, %v3382
        %v3384 = vmul.f32 %v3164, %v3382
        %3387 = vrot.lane.b32.xlu0 %v3383, 126
        %v3388 = vpop.permute.xlu0 %3387
        %3389 = vrot.lane.b32.xlu0 %v3384, 126
        %v3390 = vpop.permute.xlu0 %3389
        %v3393 = vadd.f32 %v3281, %v3388
        %v3394 = vadd.f32 %v3282, %v3390
        %s3395 = sld [smem:[#allocation10 + $0xbd]]
        %v3396 = vstv %s3395
        %v3397 = vmul.f32 %v3163, %v3396
        %v3398 = vmul.f32 %v3164, %v3396
        %3401 = vrot.lane.b32.xlu0 %v3397, 126
        %v3402 = vpop.permute.xlu0 %3401
        %3403 = vrot.lane.b32.xlu0 %v3398, 126
        %v3404 = vpop.permute.xlu0 %3403
        %v3407 = vadd.f32 %v3295, %v3402
        %v3408 = vadd.f32 %v3296, %v3404
        %s3409 = sld [smem:[#allocation10 + $0xbe]]
        %v3410 = vstv %s3409
        %v3411 = vmul.f32 %v3163, %v3410
        %v3412 = vmul.f32 %v3164, %v3410
        %3415 = vrot.lane.b32.xlu0 %v3411, 126
        %v3416 = vpop.permute.xlu0 %3415
        %3417 = vrot.lane.b32.xlu0 %v3412, 126
        %v3418 = vpop.permute.xlu0 %3417
        %v3421 = vadd.f32 %v3309, %v3416
        %v3422 = vadd.f32 %v3310, %v3418
        %s3423 = sld [smem:[#allocation10 + $0xbf]]
        %v3424 = vstv %s3423
        %v3425 = vmul.f32 %v3163, %v3424
        %v3426 = vmul.f32 %v3164, %v3424
        %3429 = vrot.lane.b32.xlu0 %v3425, 126
        %v3430 = vpop.permute.xlu0 %3429
        %3431 = vrot.lane.b32.xlu0 %v3426, 126
        %v3432 = vpop.permute.xlu0 %3431
        %v3435 = vadd.f32 %v3323, %v3430
        %v3436 = vadd.f32 %v3324, %v3432
        %v3437 = vld [vmem:[%s2888 + $0x2] sm:$0xff]
        %v3438 = vld [vmem:[%s2888 + $0xa] sm:$0xff]
        %s3439 = sld [smem:[#allocation10 + $0xd8]]
        %v3440 = vstv %s3439
        %v3441 = vmul.f32 %v3437, %v3440
        %v3442 = vmul.f32 %v3438, %v3440
        %v3443 = vadd.f32 %v3337, %v3441
        %v3444 = vadd.f32 %v3338, %v3442
        %s3445 = sld [smem:[#allocation10 + $0xd9]]
        %v3446 = vstv %s3445
        %v3447 = vmul.f32 %v3437, %v3446
        %v3448 = vmul.f32 %v3438, %v3446
        %v3449 = vadd.f32 %v3351, %v3447
        %v3450 = vadd.f32 %v3352, %v3448
        %s3451 = sld [smem:[#allocation10 + $0xda]]
        %v3452 = vstv %s3451
        %v3453 = vmul.f32 %v3437, %v3452
        %v3454 = vmul.f32 %v3438, %v3452
        %v3455 = vadd.f32 %v3365, %v3453
        %v3456 = vadd.f32 %v3366, %v3454
        %s3457 = sld [smem:[#allocation10 + $0xdb]]
        %v3458 = vstv %s3457
        %v3459 = vmul.f32 %v3437, %v3458
        %v3460 = vmul.f32 %v3438, %v3458
        %v3461 = vadd.f32 %v3379, %v3459
        %v3462 = vadd.f32 %v3380, %v3460
        %s3463 = sld [smem:[#allocation10 + $0xdc]]
        %v3464 = vstv %s3463
        %v3465 = vmul.f32 %v3437, %v3464
        %v3466 = vmul.f32 %v3438, %v3464
        %v3467 = vadd.f32 %v3393, %v3465
        %v3468 = vadd.f32 %v3394, %v3466
        %s3469 = sld [smem:[#allocation10 + $0xdd]]
        %v3470 = vstv %s3469
        %v3471 = vmul.f32 %v3437, %v3470
        %v3472 = vmul.f32 %v3438, %v3470
        %v3473 = vadd.f32 %v3407, %v3471
        %v3474 = vadd.f32 %v3408, %v3472
        %s3475 = sld [smem:[#allocation10 + $0xde]]
        %v3476 = vstv %s3475
        %v3477 = vmul.f32 %v3437, %v3476
        %v3478 = vmul.f32 %v3438, %v3476
        %v3479 = vadd.f32 %v3421, %v3477
        %v3480 = vadd.f32 %v3422, %v3478
        %s3481 = sld [smem:[#allocation10 + $0xdf]]
        %v3482 = vstv %s3481
        %v3483 = vmul.f32 %v3437, %v3482
        %v3484 = vmul.f32 %v3438, %v3482
        %v3485 = vadd.f32 %v3435, %v3483
        %v3486 = vadd.f32 %v3436, %v3484
        %s3487 = sld [smem:[#allocation10 + $0xf8]]
        %v3488 = vstv %s3487
        %v3489 = vmul.f32 %v3437, %v3488
        %v3490 = vmul.f32 %v3438, %v3488
        %3493 = vrot.lane.b32.xlu0 %v3489, 127
        %v3494 = vpop.permute.xlu0 %3493
        %3495 = vrot.lane.b32.xlu0 %v3490, 127
        %v3496 = vpop.permute.xlu0 %3495
        %v3499 = vadd.f32 %v3443, %v3494
        %v3500 = vadd.f32 %v3444, %v3496
        %s3501 = sld [smem:[#allocation10 + $0xf9]]
        %v3502 = vstv %s3501
        %v3503 = vmul.f32 %v3437, %v3502
        %v3504 = vmul.f32 %v3438, %v3502
        %3507 = vrot.lane.b32.xlu0 %v3503, 127
        %v3508 = vpop.permute.xlu0 %3507
        %3509 = vrot.lane.b32.xlu0 %v3504, 127
        %v3510 = vpop.permute.xlu0 %3509
        %v3513 = vadd.f32 %v3449, %v3508
        %v3514 = vadd.f32 %v3450, %v3510
        %s3515 = sld [smem:[#allocation10 + $0xfa]]
        %v3516 = vstv %s3515
        %v3517 = vmul.f32 %v3437, %v3516
        %v3518 = vmul.f32 %v3438, %v3516
        %3521 = vrot.lane.b32.xlu0 %v3517, 127
        %v3522 = vpop.permute.xlu0 %3521
        %3523 = vrot.lane.b32.xlu0 %v3518, 127
        %v3524 = vpop.permute.xlu0 %3523
        %v3527 = vadd.f32 %v3455, %v3522
        %v3528 = vadd.f32 %v3456, %v3524
        %s3529 = sld [smem:[#allocation10 + $0xfb]]
        %v3530 = vstv %s3529
        %v3531 = vmul.f32 %v3437, %v3530
        %v3532 = vmul.f32 %v3438, %v3530
        %3535 = vrot.lane.b32.xlu0 %v3531, 127
        %v3536 = vpop.permute.xlu0 %3535
        %3537 = vrot.lane.b32.xlu0 %v3532, 127
        %v3538 = vpop.permute.xlu0 %3537
        %v3541 = vadd.f32 %v3461, %v3536
        %v3542 = vadd.f32 %v3462, %v3538
        %s3543 = sld [smem:[#allocation10 + $0xfc]]
        %v3544 = vstv %s3543
        %v3545 = vmul.f32 %v3437, %v3544
        %v3546 = vmul.f32 %v3438, %v3544
        %3549 = vrot.lane.b32.xlu0 %v3545, 127
        %v3550 = vpop.permute.xlu0 %3549
        %3551 = vrot.lane.b32.xlu0 %v3546, 127
        %v3552 = vpop.permute.xlu0 %3551
        %v3555 = vadd.f32 %v3467, %v3550
        %v3556 = vadd.f32 %v3468, %v3552
        %s3557 = sld [smem:[#allocation10 + $0xfd]]
        %v3558 = vstv %s3557
        %v3559 = vmul.f32 %v3437, %v3558
        %v3560 = vmul.f32 %v3438, %v3558
        %3563 = vrot.lane.b32.xlu0 %v3559, 127
        %v3564 = vpop.permute.xlu0 %3563
        %3565 = vrot.lane.b32.xlu0 %v3560, 127
        %v3566 = vpop.permute.xlu0 %3565
        %v3569 = vadd.f32 %v3473, %v3564
        %v3570 = vadd.f32 %v3474, %v3566
        %s3571 = sld [smem:[#allocation10 + $0xfe]]
        %v3572 = vstv %s3571
        %v3573 = vmul.f32 %v3437, %v3572
        %v3574 = vmul.f32 %v3438, %v3572
        %3577 = vrot.lane.b32.xlu0 %v3573, 127
        %v3578 = vpop.permute.xlu0 %3577
        %3579 = vrot.lane.b32.xlu0 %v3574, 127
        %v3580 = vpop.permute.xlu0 %3579
        %v3583 = vadd.f32 %v3479, %v3578
        %v3584 = vadd.f32 %v3480, %v3580
        %s3585 = sld [smem:[#allocation10 + $0xff]]
        %v3586 = vstv %s3585
        %v3587 = vmul.f32 %v3437, %v3586
        %v3588 = vmul.f32 %v3438, %v3586
        %3591 = vrot.lane.b32.xlu0 %v3587, 127
        %v3592 = vpop.permute.xlu0 %3591
        %3593 = vrot.lane.b32.xlu0 %v3588, 127
        %v3594 = vpop.permute.xlu0 %3593
        %v3597 = vadd.f32 %v3485, %v3592
        %v3598 = vadd.f32 %v3486, %v3594
        %s3599 = sld [smem:[#allocation10 + $0x118]]
        %v3600 = vstv %s3599
        %v3601 = vmul.f32 %v3437, %v3600
        %v3602 = vmul.f32 %v3438, %v3600
        %3605 = vrot.lane.b32.xlu0 %v3601, 126
        %v3606 = vpop.permute.xlu0 %3605
        %3607 = vrot.lane.b32.xlu0 %v3602, 126
        %v3608 = vpop.permute.xlu0 %3607
        %v3611 = vadd.f32 %v3499, %v3606
        %v3612 = vadd.f32 %v3500, %v3608
        %s3613 = sld [smem:[#allocation10 + $0x119]]
        %v3614 = vstv %s3613
        %v3615 = vmul.f32 %v3437, %v3614
        %v3616 = vmul.f32 %v3438, %v3614
        %3619 = vrot.lane.b32.xlu0 %v3615, 126
        %v3620 = vpop.permute.xlu0 %3619
        %3621 = vrot.lane.b32.xlu0 %v3616, 126
        %v3622 = vpop.permute.xlu0 %3621
        %v3625 = vadd.f32 %v3513, %v3620
        %v3626 = vadd.f32 %v3514, %v3622
        %s3627 = sld [smem:[#allocation10 + $0x11a]]
        %v3628 = vstv %s3627
        %v3629 = vmul.f32 %v3437, %v3628
        %v3630 = vmul.f32 %v3438, %v3628
        %3633 = vrot.lane.b32.xlu0 %v3629, 126
        %v3634 = vpop.permute.xlu0 %3633
        %3635 = vrot.lane.b32.xlu0 %v3630, 126
        %v3636 = vpop.permute.xlu0 %3635
        %v3639 = vadd.f32 %v3527, %v3634
        %v3640 = vadd.f32 %v3528, %v3636
        %s3641 = sld [smem:[#allocation10 + $0x11b]]
        %v3642 = vstv %s3641
        %v3643 = vmul.f32 %v3437, %v3642
        %v3644 = vmul.f32 %v3438, %v3642
        %3647 = vrot.lane.b32.xlu0 %v3643, 126
        %v3648 = vpop.permute.xlu0 %3647
        %3649 = vrot.lane.b32.xlu0 %v3644, 126
        %v3650 = vpop.permute.xlu0 %3649
        %v3653 = vadd.f32 %v3541, %v3648
        %v3654 = vadd.f32 %v3542, %v3650
        %s3655 = sld [smem:[#allocation10 + $0x11c]]
        %v3656 = vstv %s3655
        %v3657 = vmul.f32 %v3437, %v3656
        %v3658 = vmul.f32 %v3438, %v3656
        %3661 = vrot.lane.b32.xlu0 %v3657, 126
        %v3662 = vpop.permute.xlu0 %3661
        %3663 = vrot.lane.b32.xlu0 %v3658, 126
        %v3664 = vpop.permute.xlu0 %3663
        %v3667 = vadd.f32 %v3555, %v3662
        %v3668 = vadd.f32 %v3556, %v3664
        %s3669 = sld [smem:[#allocation10 + $0x11d]]
        %v3670 = vstv %s3669
        %v3671 = vmul.f32 %v3437, %v3670
        %v3672 = vmul.f32 %v3438, %v3670
        %3675 = vrot.lane.b32.xlu0 %v3671, 126
        %v3676 = vpop.permute.xlu0 %3675
        %3677 = vrot.lane.b32.xlu0 %v3672, 126
        %v3678 = vpop.permute.xlu0 %3677
        %v3681 = vadd.f32 %v3569, %v3676
        %v3682 = vadd.f32 %v3570, %v3678
        %s3683 = sld [smem:[#allocation10 + $0x11e]]
        %v3684 = vstv %s3683
        %v3685 = vmul.f32 %v3437, %v3684
        %v3686 = vmul.f32 %v3438, %v3684
        %3689 = vrot.lane.b32.xlu0 %v3685, 126
        %v3690 = vpop.permute.xlu0 %3689
        %3691 = vrot.lane.b32.xlu0 %v3686, 126
        %v3692 = vpop.permute.xlu0 %3691
        %v3695 = vadd.f32 %v3583, %v3690
        %v3696 = vadd.f32 %v3584, %v3692
        %s3697 = sld [smem:[#allocation10 + $0x11f]]
        %v3698 = vstv %s3697
        %v3699 = vmul.f32 %v3437, %v3698
        %v3700 = vmul.f32 %v3438, %v3698
        %3703 = vrot.lane.b32.xlu0 %v3699, 126
        %v3704 = vpop.permute.xlu0 %3703
        %3705 = vrot.lane.b32.xlu0 %v3700, 126
        %v3706 = vpop.permute.xlu0 %3705
        %v3709 = vadd.f32 %v3597, %v3704
        %v3710 = vadd.f32 %v3598, %v3706
        %s3711 = sld [smem:[#allocation11]]
        %v3712 = vstv %s3711
        %v3713 = vadd.f32 %v3611, %v3712
        %v3714 = vadd.f32 %v3612, %v3712
        %v3715 = vmax.f32 %v3713, 0.0
        %v3716 = vmax.f32 %v3714, 0.0
        %3719 = vrot.lane.b32.xlu0 %v3715, 1
        %v3720 = vpop.permute.xlu0 %3719
        %3721 = vrot.lane.b32.xlu0 %v3716, 1
        %v3722 = vpop.permute.xlu0 %3721
        %3725 = vst.msk [vmem:[#allocation3 + $0x1] sm:$0xff] %vm427, %v3720
        %3726 = vst.msk [vmem:[#allocation3 + $0x9] sm:$0xff] %vm427, %v3722
        %s3727 = sld [smem:[#allocation11 + $0x1]]
        %v3728 = vstv %s3727
        %v3729 = vadd.f32 %v3625, %v3728
        %v3730 = vadd.f32 %v3626, %v3728
        %v3731 = vmax.f32 %v3729, 0.0
        %v3732 = vmax.f32 %v3730, 0.0
        %3735 = vrot.lane.b32.xlu0 %v3731, 1
        %v3736 = vpop.permute.xlu0 %3735
        %3737 = vrot.lane.b32.xlu0 %v3732, 1
        %v3738 = vpop.permute.xlu0 %3737
        %s3741 = scalar_lea.vmem [#allocation3], 24
        %3742 = vst.msk [vmem:[%s3741 + $0x1] sm:$0xff] %vm427, %v3736
        %3743 = vst.msk [vmem:[%s3741 + $0x9] sm:$0xff] %vm427, %v3738
        %s3744 = sld [smem:[#allocation11 + $0x2]]
        %v3745 = vstv %s3744
        %v3746 = vadd.f32 %v3639, %v3745
        %v3747 = vadd.f32 %v3640, %v3745
        %v3748 = vmax.f32 %v3746, 0.0
        %v3749 = vmax.f32 %v3747, 0.0
        %3752 = vrot.lane.b32.xlu0 %v3748, 1
        %v3753 = vpop.permute.xlu0 %3752
        %3754 = vrot.lane.b32.xlu0 %v3749, 1
        %v3755 = vpop.permute.xlu0 %3754
        %s3758 = scalar_lea.vmem [#allocation3], 48
        %3759 = vst.msk [vmem:[%s3758 + $0x1] sm:$0xff] %vm427, %v3753
        %3760 = vst.msk [vmem:[%s3758 + $0x9] sm:$0xff] %vm427, %v3755
        %s3761 = sld [smem:[#allocation11 + $0x3]]
        %v3762 = vstv %s3761
        %v3763 = vadd.f32 %v3653, %v3762
        %v3764 = vadd.f32 %v3654, %v3762
        %v3765 = vmax.f32 %v3763, 0.0
        %v3766 = vmax.f32 %v3764, 0.0
        %3769 = vrot.lane.b32.xlu0 %v3765, 1
        %v3770 = vpop.permute.xlu0 %3769
        %3771 = vrot.lane.b32.xlu0 %v3766, 1
        %v3772 = vpop.permute.xlu0 %3771
        %s3775 = scalar_lea.vmem [#allocation3], 72
        %3776 = vst.msk [vmem:[%s3775 + $0x1] sm:$0xff] %vm427, %v3770
        %3777 = vst.msk [vmem:[%s3775 + $0x9] sm:$0xff] %vm427, %v3772
        %s3778 = sld [smem:[#allocation11 + $0x4]]
        %v3779 = vstv %s3778
        %v3780 = vadd.f32 %v3667, %v3779
        %v3781 = vadd.f32 %v3668, %v3779
        %v3782 = vmax.f32 %v3780, 0.0
        %v3783 = vmax.f32 %v3781, 0.0
        %3786 = vrot.lane.b32.xlu0 %v3782, 1
        %v3787 = vpop.permute.xlu0 %3786
        %3788 = vrot.lane.b32.xlu0 %v3783, 1
        %v3789 = vpop.permute.xlu0 %3788
        %s3792 = scalar_lea.vmem [#allocation3], 96
        %3793 = vst.msk [vmem:[%s3792 + $0x1] sm:$0xff] %vm427, %v3787
        %3794 = vst.msk [vmem:[%s3792 + $0x9] sm:$0xff] %vm427, %v3789
        %s3795 = sld [smem:[#allocation11 + $0x5]]
        %v3796 = vstv %s3795
        %v3797 = vadd.f32 %v3681, %v3796
        %v3798 = vadd.f32 %v3682, %v3796
        %v3799 = vmax.f32 %v3797, 0.0
        %v3800 = vmax.f32 %v3798, 0.0
        %3803 = vrot.lane.b32.xlu0 %v3799, 1
        %v3804 = vpop.permute.xlu0 %3803
        %3805 = vrot.lane.b32.xlu0 %v3800, 1
        %v3806 = vpop.permute.xlu0 %3805
        %s3809 = scalar_lea.vmem [#allocation3], 120
        %3810 = vst.msk [vmem:[%s3809 + $0x1] sm:$0xff] %vm427, %v3804
        %3811 = vst.msk [vmem:[%s3809 + $0x9] sm:$0xff] %vm427, %v3806
        %s3812 = sld [smem:[#allocation11 + $0x6]]
        %v3813 = vstv %s3812
        %v3814 = vadd.f32 %v3695, %v3813
        %v3815 = vadd.f32 %v3696, %v3813
        %v3816 = vmax.f32 %v3814, 0.0
        %v3817 = vmax.f32 %v3815, 0.0
        %3820 = vrot.lane.b32.xlu0 %v3816, 1
        %v3821 = vpop.permute.xlu0 %3820
        %3822 = vrot.lane.b32.xlu0 %v3817, 1
        %v3823 = vpop.permute.xlu0 %3822
        %s3826 = scalar_lea.vmem [#allocation3], 144
        %3827 = vst.msk [vmem:[%s3826 + $0x1] sm:$0xff] %vm427, %v3821
        %3828 = vst.msk [vmem:[%s3826 + $0x9] sm:$0xff] %vm427, %v3823
        %s3829 = sld [smem:[#allocation11 + $0x7]]
        %v3830 = vstv %s3829
        %v3831 = vadd.f32 %v3709, %v3830
        %v3832 = vadd.f32 %v3710, %v3830
        %v3833 = vmax.f32 %v3831, 0.0
        %v3834 = vmax.f32 %v3832, 0.0
        %3837 = vrot.lane.b32.xlu0 %v3833, 1
        %v3838 = vpop.permute.xlu0 %3837
        %3839 = vrot.lane.b32.xlu0 %v3834, 1
        %v3840 = vpop.permute.xlu0 %3839
        %s3843 = scalar_lea.vmem [#allocation3], 168
        %3844 = vst.msk [vmem:[%s3843 + $0x1] sm:$0xff] %vm427, %v3838
        %3845 = vst.msk [vmem:[%s3843 + $0x9] sm:$0xff] %vm427, %v3840
        %v3846 = vld [vmem:[#allocation3] sm:$0xff]
        %v3847 = vld [vmem:[#allocation3 + $0x8] sm:$0xff]
        %s3848 = sld [smem:[#allocation12]]
        %v3849 = vstv %s3848
        %v3850 = vmul.f32 %v3846, %v3849
        %v3851 = vmul.f32 %v3847, %v3849
        %s3852 = sld [smem:[#allocation12 + $0x8]]
        %v3853 = vstv %s3852
        %v3854 = vmul.f32 %v3846, %v3853
        %v3855 = vmul.f32 %v3847, %v3853
        %3858 = vrot.lane.b32.xlu0 %v3854, 127
        %v3859 = vpop.permute.xlu0 %3858
        %3860 = vrot.lane.b32.xlu0 %v3855, 127
        %v3861 = vpop.permute.xlu0 %3860
        %v3864 = vadd.f32 %v3850, %v3859
        %v3865 = vadd.f32 %v3851, %v3861
        %s3866 = sld [smem:[#allocation12 + $0x10]]
        %v3867 = vstv %s3866
        %v3868 = vmul.f32 %v3846, %v3867
        %v3869 = vmul.f32 %v3847, %v3867
        %3872 = vrot.lane.b32.xlu0 %v3868, 126
        %v3873 = vpop.permute.xlu0 %3872
        %3874 = vrot.lane.b32.xlu0 %v3869, 126
        %v3875 = vpop.permute.xlu0 %3874
        %v3878 = vadd.f32 %v3864, %v3873
        %v3879 = vadd.f32 %v3865, %v3875
        %v3880 = vld [vmem:[#allocation3 + $0x1] sm:$0xff]
        %v3881 = vld [vmem:[#allocation3 + $0x9] sm:$0xff]
        %s3882 = sld [smem:[#allocation12 + $0x18]]
        %v3883 = vstv %s3882
        %v3884 = vmul.f32 %v3880, %v3883
        %v3885 = vmul.f32 %v3881, %v3883
        %v3886 = vadd.f32 %v3878, %v3884
        %v3887 = vadd.f32 %v3879, %v3885
        %s3888 = sld [smem:[#allocation12 + $0x20]]
        %v3889 = vstv %s3888
        %v3890 = vmul.f32 %v3880, %v3889
        %v3891 = vmul.f32 %v3881, %v3889
        %3894 = vrot.lane.b32.xlu0 %v3890, 127
        %v3895 = vpop.permute.xlu0 %3894
        %3896 = vrot.lane.b32.xlu0 %v3891, 127
        %v3897 = vpop.permute.xlu0 %3896
        %v3900 = vadd.f32 %v3886, %v3895
        %v3901 = vadd.f32 %v3887, %v3897
        %s3902 = sld [smem:[#allocation12 + $0x28]]
        %v3903 = vstv %s3902
        %v3904 = vmul.f32 %v3880, %v3903
        %v3905 = vmul.f32 %v3881, %v3903
        %3908 = vrot.lane.b32.xlu0 %v3904, 126
        %v3909 = vpop.permute.xlu0 %3908
        %3910 = vrot.lane.b32.xlu0 %v3905, 126
        %v3911 = vpop.permute.xlu0 %3910
        %v3914 = vadd.f32 %v3900, %v3909
        %v3915 = vadd.f32 %v3901, %v3911
        %v3916 = vld [vmem:[#allocation3 + $0x2] sm:$0xff]
        %v3917 = vld [vmem:[#allocation3 + $0xa] sm:$0xff]
        %s3918 = sld [smem:[#allocation12 + $0x30]]
        %v3919 = vstv %s3918
        %v3920 = vmul.f32 %v3916, %v3919
        %v3921 = vmul.f32 %v3917, %v3919
        %v3922 = vadd.f32 %v3914, %v3920
        %v3923 = vadd.f32 %v3915, %v3921
        %s3924 = sld [smem:[#allocation12 + $0x38]]
        %v3925 = vstv %s3924
        %v3926 = vmul.f32 %v3916, %v3925
        %v3927 = vmul.f32 %v3917, %v3925
        %3930 = vrot.lane.b32.xlu0 %v3926, 127
        %v3931 = vpop.permute.xlu0 %3930
        %3932 = vrot.lane.b32.xlu0 %v3927, 127
        %v3933 = vpop.permute.xlu0 %3932
        %v3936 = vadd.f32 %v3922, %v3931
        %v3937 = vadd.f32 %v3923, %v3933
        %s3938 = sld [smem:[#allocation12 + $0x40]]
        %v3939 = vstv %s3938
        %v3940 = vmul.f32 %v3916, %v3939
        %v3941 = vmul.f32 %v3917, %v3939
        %3944 = vrot.lane.b32.xlu0 %v3940, 126
        %v3945 = vpop.permute.xlu0 %3944
        %3946 = vrot.lane.b32.xlu0 %v3941, 126
        %v3947 = vpop.permute.xlu0 %3946
        %v3950 = vadd.f32 %v3936, %v3945
        %v3951 = vadd.f32 %v3937, %v3947
        %v3952 = vld [vmem:[%s3741] sm:$0xff]
        %v3953 = vld [vmem:[%s3741 + $0x8] sm:$0xff]
        %s3954 = sld [smem:[#allocation12 + $0x1]]
        %v3955 = vstv %s3954
        %v3956 = vmul.f32 %v3952, %v3955
        %v3957 = vmul.f32 %v3953, %v3955
        %v3958 = vadd.f32 %v3950, %v3956
        %v3959 = vadd.f32 %v3951, %v3957
        %s3960 = sld [smem:[#allocation12 + $0x9]]
        %v3961 = vstv %s3960
        %v3962 = vmul.f32 %v3952, %v3961
        %v3963 = vmul.f32 %v3953, %v3961
        %3966 = vrot.lane.b32.xlu0 %v3962, 127
        %v3967 = vpop.permute.xlu0 %3966
        %3968 = vrot.lane.b32.xlu0 %v3963, 127
        %v3969 = vpop.permute.xlu0 %3968
        %v3972 = vadd.f32 %v3958, %v3967
        %v3973 = vadd.f32 %v3959, %v3969
        %s3974 = sld [smem:[#allocation12 + $0x11]]
        %v3975 = vstv %s3974
        %v3976 = vmul.f32 %v3952, %v3975
        %v3977 = vmul.f32 %v3953, %v3975
        %3980 = vrot.lane.b32.xlu0 %v3976, 126
        %v3981 = vpop.permute.xlu0 %3980
        %3982 = vrot.lane.b32.xlu0 %v3977, 126
        %v3983 = vpop.permute.xlu0 %3982
        %v3986 = vadd.f32 %v3972, %v3981
        %v3987 = vadd.f32 %v3973, %v3983
        %v3988 = vld [vmem:[%s3741 + $0x1] sm:$0xff]
        %v3989 = vld [vmem:[%s3741 + $0x9] sm:$0xff]
        %s3990 = sld [smem:[#allocation12 + $0x19]]
        %v3991 = vstv %s3990
        %v3992 = vmul.f32 %v3988, %v3991
        %v3993 = vmul.f32 %v3989, %v3991
        %v3994 = vadd.f32 %v3986, %v3992
        %v3995 = vadd.f32 %v3987, %v3993
        %s3996 = sld [smem:[#allocation12 + $0x21]]
        %v3997 = vstv %s3996
        %v3998 = vmul.f32 %v3988, %v3997
        %v3999 = vmul.f32 %v3989, %v3997
        %4002 = vrot.lane.b32.xlu0 %v3998, 127
        %v4003 = vpop.permute.xlu0 %4002
        %4004 = vrot.lane.b32.xlu0 %v3999, 127
        %v4005 = vpop.permute.xlu0 %4004
        %v4008 = vadd.f32 %v3994, %v4003
        %v4009 = vadd.f32 %v3995, %v4005
        %s4010 = sld [smem:[#allocation12 + $0x29]]
        %v4011 = vstv %s4010
        %v4012 = vmul.f32 %v3988, %v4011
        %v4013 = vmul.f32 %v3989, %v4011
        %4016 = vrot.lane.b32.xlu0 %v4012, 126
        %v4017 = vpop.permute.xlu0 %4016
        %4018 = vrot.lane.b32.xlu0 %v4013, 126
        %v4019 = vpop.permute.xlu0 %4018
        %v4022 = vadd.f32 %v4008, %v4017
        %v4023 = vadd.f32 %v4009, %v4019
        %v4024 = vld [vmem:[%s3741 + $0x2] sm:$0xff]
        %v4025 = vld [vmem:[%s3741 + $0xa] sm:$0xff]
        %s4026 = sld [smem:[#allocation12 + $0x31]]
        %v4027 = vstv %s4026
        %v4028 = vmul.f32 %v4024, %v4027
        %v4029 = vmul.f32 %v4025, %v4027
        %v4030 = vadd.f32 %v4022, %v4028
        %v4031 = vadd.f32 %v4023, %v4029
        %s4032 = sld [smem:[#allocation12 + $0x39]]
        %v4033 = vstv %s4032
        %v4034 = vmul.f32 %v4024, %v4033
        %v4035 = vmul.f32 %v4025, %v4033
        %4038 = vrot.lane.b32.xlu0 %v4034, 127
        %v4039 = vpop.permute.xlu0 %4038
        %4040 = vrot.lane.b32.xlu0 %v4035, 127
        %v4041 = vpop.permute.xlu0 %4040
        %v4044 = vadd.f32 %v4030, %v4039
        %v4045 = vadd.f32 %v4031, %v4041
        %s4046 = sld [smem:[#allocation12 + $0x41]]
        %v4047 = vstv %s4046
        %v4048 = vmul.f32 %v4024, %v4047
        %v4049 = vmul.f32 %v4025, %v4047
        %4052 = vrot.lane.b32.xlu0 %v4048, 126
        %v4053 = vpop.permute.xlu0 %4052
        %4054 = vrot.lane.b32.xlu0 %v4049, 126
        %v4055 = vpop.permute.xlu0 %4054
        %v4058 = vadd.f32 %v4044, %v4053
        %v4059 = vadd.f32 %v4045, %v4055
        %v4060 = vld [vmem:[%s3758] sm:$0xff]
        %v4061 = vld [vmem:[%s3758 + $0x8] sm:$0xff]
        %s4062 = sld [smem:[#allocation12 + $0x2]]
        %v4063 = vstv %s4062
        %v4064 = vmul.f32 %v4060, %v4063
        %v4065 = vmul.f32 %v4061, %v4063
        %v4066 = vadd.f32 %v4058, %v4064
        %v4067 = vadd.f32 %v4059, %v4065
        %s4068 = sld [smem:[#allocation12 + $0xa]]
        %v4069 = vstv %s4068
        %v4070 = vmul.f32 %v4060, %v4069
        %v4071 = vmul.f32 %v4061, %v4069
        %4074 = vrot.lane.b32.xlu0 %v4070, 127
        %v4075 = vpop.permute.xlu0 %4074
        %4076 = vrot.lane.b32.xlu0 %v4071, 127
        %v4077 = vpop.permute.xlu0 %4076
        %v4080 = vadd.f32 %v4066, %v4075
        %v4081 = vadd.f32 %v4067, %v4077
        %s4082 = sld [smem:[#allocation12 + $0x12]]
        %v4083 = vstv %s4082
        %v4084 = vmul.f32 %v4060, %v4083
        %v4085 = vmul.f32 %v4061, %v4083
        %4088 = vrot.lane.b32.xlu0 %v4084, 126
        %v4089 = vpop.permute.xlu0 %4088
        %4090 = vrot.lane.b32.xlu0 %v4085, 126
        %v4091 = vpop.permute.xlu0 %4090
        %v4094 = vadd.f32 %v4080, %v4089
        %v4095 = vadd.f32 %v4081, %v4091
        %v4096 = vld [vmem:[%s3758 + $0x1] sm:$0xff]
        %v4097 = vld [vmem:[%s3758 + $0x9] sm:$0xff]
        %s4098 = sld [smem:[#allocation12 + $0x1a]]
        %v4099 = vstv %s4098
        %v4100 = vmul.f32 %v4096, %v4099
        %v4101 = vmul.f32 %v4097, %v4099
        %v4102 = vadd.f32 %v4094, %v4100
        %v4103 = vadd.f32 %v4095, %v4101
        %s4104 = sld [smem:[#allocation12 + $0x22]]
        %v4105 = vstv %s4104
        %v4106 = vmul.f32 %v4096, %v4105
        %v4107 = vmul.f32 %v4097, %v4105
        %4110 = vrot.lane.b32.xlu0 %v4106, 127
        %v4111 = vpop.permute.xlu0 %4110
        %4112 = vrot.lane.b32.xlu0 %v4107, 127
        %v4113 = vpop.permute.xlu0 %4112
        %v4116 = vadd.f32 %v4102, %v4111
        %v4117 = vadd.f32 %v4103, %v4113
        %s4118 = sld [smem:[#allocation12 + $0x2a]]
        %v4119 = vstv %s4118
        %v4120 = vmul.f32 %v4096, %v4119
        %v4121 = vmul.f32 %v4097, %v4119
        %4124 = vrot.lane.b32.xlu0 %v4120, 126
        %v4125 = vpop.permute.xlu0 %4124
        %4126 = vrot.lane.b32.xlu0 %v4121, 126
        %v4127 = vpop.permute.xlu0 %4126
        %v4130 = vadd.f32 %v4116, %v4125
        %v4131 = vadd.f32 %v4117, %v4127
        %v4132 = vld [vmem:[%s3758 + $0x2] sm:$0xff]
        %v4133 = vld [vmem:[%s3758 + $0xa] sm:$0xff]
        %s4134 = sld [smem:[#allocation12 + $0x32]]
        %v4135 = vstv %s4134
        %v4136 = vmul.f32 %v4132, %v4135
        %v4137 = vmul.f32 %v4133, %v4135
        %v4138 = vadd.f32 %v4130, %v4136
        %v4139 = vadd.f32 %v4131, %v4137
        %s4140 = sld [smem:[#allocation12 + $0x3a]]
        %v4141 = vstv %s4140
        %v4142 = vmul.f32 %v4132, %v4141
        %v4143 = vmul.f32 %v4133, %v4141
        %4146 = vrot.lane.b32.xlu0 %v4142, 127
        %v4147 = vpop.permute.xlu0 %4146
        %4148 = vrot.lane.b32.xlu0 %v4143, 127
        %v4149 = vpop.permute.xlu0 %4148
        %v4152 = vadd.f32 %v4138, %v4147
        %v4153 = vadd.f32 %v4139, %v4149
        %s4154 = sld [smem:[#allocation12 + $0x42]]
        %v4155 = vstv %s4154
        %v4156 = vmul.f32 %v4132, %v4155
        %v4157 = vmul.f32 %v4133, %v4155
        %4160 = vrot.lane.b32.xlu0 %v4156, 126
        %v4161 = vpop.permute.xlu0 %4160
        %4162 = vrot.lane.b32.xlu0 %v4157, 126
        %v4163 = vpop.permute.xlu0 %4162
        %v4166 = vadd.f32 %v4152, %v4161
        %v4167 = vadd.f32 %v4153, %v4163
        %v4168 = vld [vmem:[%s3775] sm:$0xff]
        %v4169 = vld [vmem:[%s3775 + $0x8] sm:$0xff]
        %s4170 = sld [smem:[#allocation12 + $0x3]]
        %v4171 = vstv %s4170
        %v4172 = vmul.f32 %v4168, %v4171
        %v4173 = vmul.f32 %v4169, %v4171
        %v4174 = vadd.f32 %v4166, %v4172
        %v4175 = vadd.f32 %v4167, %v4173
        %s4176 = sld [smem:[#allocation12 + $0xb]]
        %v4177 = vstv %s4176
        %v4178 = vmul.f32 %v4168, %v4177
        %v4179 = vmul.f32 %v4169, %v4177
        %4182 = vrot.lane.b32.xlu0 %v4178, 127
        %v4183 = vpop.permute.xlu0 %4182
        %4184 = vrot.lane.b32.xlu0 %v4179, 127
        %v4185 = vpop.permute.xlu0 %4184
        %v4188 = vadd.f32 %v4174, %v4183
        %v4189 = vadd.f32 %v4175, %v4185
        %s4190 = sld [smem:[#allocation12 + $0x13]]
        %v4191 = vstv %s4190
        %v4192 = vmul.f32 %v4168, %v4191
        %v4193 = vmul.f32 %v4169, %v4191
        %4196 = vrot.lane.b32.xlu0 %v4192, 126
        %v4197 = vpop.permute.xlu0 %4196
        %4198 = vrot.lane.b32.xlu0 %v4193, 126
        %v4199 = vpop.permute.xlu0 %4198
        %v4202 = vadd.f32 %v4188, %v4197
        %v4203 = vadd.f32 %v4189, %v4199
        %v4204 = vld [vmem:[%s3775 + $0x1] sm:$0xff]
        %v4205 = vld [vmem:[%s3775 + $0x9] sm:$0xff]
        %s4206 = sld [smem:[#allocation12 + $0x1b]]
        %v4207 = vstv %s4206
        %v4208 = vmul.f32 %v4204, %v4207
        %v4209 = vmul.f32 %v4205, %v4207
        %v4210 = vadd.f32 %v4202, %v4208
        %v4211 = vadd.f32 %v4203, %v4209
        %s4212 = sld [smem:[#allocation12 + $0x23]]
        %v4213 = vstv %s4212
        %v4214 = vmul.f32 %v4204, %v4213
        %v4215 = vmul.f32 %v4205, %v4213
        %4218 = vrot.lane.b32.xlu0 %v4214, 127
        %v4219 = vpop.permute.xlu0 %4218
        %4220 = vrot.lane.b32.xlu0 %v4215, 127
        %v4221 = vpop.permute.xlu0 %4220
        %v4224 = vadd.f32 %v4210, %v4219
        %v4225 = vadd.f32 %v4211, %v4221
        %s4226 = sld [smem:[#allocation12 + $0x2b]]
        %v4227 = vstv %s4226
        %v4228 = vmul.f32 %v4204, %v4227
        %v4229 = vmul.f32 %v4205, %v4227
        %4232 = vrot.lane.b32.xlu0 %v4228, 126
        %v4233 = vpop.permute.xlu0 %4232
        %4234 = vrot.lane.b32.xlu0 %v4229, 126
        %v4235 = vpop.permute.xlu0 %4234
        %v4238 = vadd.f32 %v4224, %v4233
        %v4239 = vadd.f32 %v4225, %v4235
        %v4240 = vld [vmem:[%s3775 + $0x2] sm:$0xff]
        %v4241 = vld [vmem:[%s3775 + $0xa] sm:$0xff]
        %s4242 = sld [smem:[#allocation12 + $0x33]]
        %v4243 = vstv %s4242
        %v4244 = vmul.f32 %v4240, %v4243
        %v4245 = vmul.f32 %v4241, %v4243
        %v4246 = vadd.f32 %v4238, %v4244
        %v4247 = vadd.f32 %v4239, %v4245
        %s4248 = sld [smem:[#allocation12 + $0x3b]]
        %v4249 = vstv %s4248
        %v4250 = vmul.f32 %v4240, %v4249
        %v4251 = vmul.f32 %v4241, %v4249
        %4254 = vrot.lane.b32.xlu0 %v4250, 127
        %v4255 = vpop.permute.xlu0 %4254
        %4256 = vrot.lane.b32.xlu0 %v4251, 127
        %v4257 = vpop.permute.xlu0 %4256
        %v4260 = vadd.f32 %v4246, %v4255
        %v4261 = vadd.f32 %v4247, %v4257
        %s4262 = sld [smem:[#allocation12 + $0x43]]
        %v4263 = vstv %s4262
        %v4264 = vmul.f32 %v4240, %v4263
        %v4265 = vmul.f32 %v4241, %v4263
        %4268 = vrot.lane.b32.xlu0 %v4264, 126
        %v4269 = vpop.permute.xlu0 %4268
        %4270 = vrot.lane.b32.xlu0 %v4265, 126
        %v4271 = vpop.permute.xlu0 %4270
        %v4274 = vadd.f32 %v4260, %v4269
        %v4275 = vadd.f32 %v4261, %v4271
        %v4276 = vld [vmem:[%s3792] sm:$0xff]
        %v4277 = vld [vmem:[%s3792 + $0x8] sm:$0xff]
        %s4278 = sld [smem:[#allocation12 + $0x4]]
        %v4279 = vstv %s4278
        %v4280 = vmul.f32 %v4276, %v4279
        %v4281 = vmul.f32 %v4277, %v4279
        %v4282 = vadd.f32 %v4274, %v4280
        %v4283 = vadd.f32 %v4275, %v4281
        %s4284 = sld [smem:[#allocation12 + $0xc]]
        %v4285 = vstv %s4284
        %v4286 = vmul.f32 %v4276, %v4285
        %v4287 = vmul.f32 %v4277, %v4285
        %4290 = vrot.lane.b32.xlu0 %v4286, 127
        %v4291 = vpop.permute.xlu0 %4290
        %4292 = vrot.lane.b32.xlu0 %v4287, 127
        %v4293 = vpop.permute.xlu0 %4292
        %v4296 = vadd.f32 %v4282, %v4291
        %v4297 = vadd.f32 %v4283, %v4293
        %s4298 = sld [smem:[#allocation12 + $0x14]]
        %v4299 = vstv %s4298
        %v4300 = vmul.f32 %v4276, %v4299
        %v4301 = vmul.f32 %v4277, %v4299
        %4304 = vrot.lane.b32.xlu0 %v4300, 126
        %v4305 = vpop.permute.xlu0 %4304
        %4306 = vrot.lane.b32.xlu0 %v4301, 126
        %v4307 = vpop.permute.xlu0 %4306
        %v4310 = vadd.f32 %v4296, %v4305
        %v4311 = vadd.f32 %v4297, %v4307
        %v4312 = vld [vmem:[%s3792 + $0x1] sm:$0xff]
        %v4313 = vld [vmem:[%s3792 + $0x9] sm:$0xff]
        %s4314 = sld [smem:[#allocation12 + $0x1c]]
        %v4315 = vstv %s4314
        %v4316 = vmul.f32 %v4312, %v4315
        %v4317 = vmul.f32 %v4313, %v4315
        %v4318 = vadd.f32 %v4310, %v4316
        %v4319 = vadd.f32 %v4311, %v4317
        %s4320 = sld [smem:[#allocation12 + $0x24]]
        %v4321 = vstv %s4320
        %v4322 = vmul.f32 %v4312, %v4321
        %v4323 = vmul.f32 %v4313, %v4321
        %4326 = vrot.lane.b32.xlu0 %v4322, 127
        %v4327 = vpop.permute.xlu0 %4326
        %4328 = vrot.lane.b32.xlu0 %v4323, 127
        %v4329 = vpop.permute.xlu0 %4328
        %v4332 = vadd.f32 %v4318, %v4327
        %v4333 = vadd.f32 %v4319, %v4329
        %s4334 = sld [smem:[#allocation12 + $0x2c]]
        %v4335 = vstv %s4334
        %v4336 = vmul.f32 %v4312, %v4335
        %v4337 = vmul.f32 %v4313, %v4335
        %4340 = vrot.lane.b32.xlu0 %v4336, 126
        %v4341 = vpop.permute.xlu0 %4340
        %4342 = vrot.lane.b32.xlu0 %v4337, 126
        %v4343 = vpop.permute.xlu0 %4342
        %v4346 = vadd.f32 %v4332, %v4341
        %v4347 = vadd.f32 %v4333, %v4343
        %v4348 = vld [vmem:[%s3792 + $0x2] sm:$0xff]
        %v4349 = vld [vmem:[%s3792 + $0xa] sm:$0xff]
        %s4350 = sld [smem:[#allocation12 + $0x34]]
        %v4351 = vstv %s4350
        %v4352 = vmul.f32 %v4348, %v4351
        %v4353 = vmul.f32 %v4349, %v4351
        %v4354 = vadd.f32 %v4346, %v4352
        %v4355 = vadd.f32 %v4347, %v4353
        %s4356 = sld [smem:[#allocation12 + $0x3c]]
        %v4357 = vstv %s4356
        %v4358 = vmul.f32 %v4348, %v4357
        %v4359 = vmul.f32 %v4349, %v4357
        %4362 = vrot.lane.b32.xlu0 %v4358, 127
        %v4363 = vpop.permute.xlu0 %4362
        %4364 = vrot.lane.b32.xlu0 %v4359, 127
        %v4365 = vpop.permute.xlu0 %4364
        %v4368 = vadd.f32 %v4354, %v4363
        %v4369 = vadd.f32 %v4355, %v4365
        %s4370 = sld [smem:[#allocation12 + $0x44]]
        %v4371 = vstv %s4370
        %v4372 = vmul.f32 %v4348, %v4371
        %v4373 = vmul.f32 %v4349, %v4371
        %4376 = vrot.lane.b32.xlu0 %v4372, 126
        %v4377 = vpop.permute.xlu0 %4376
        %4378 = vrot.lane.b32.xlu0 %v4373, 126
        %v4379 = vpop.permute.xlu0 %4378
        %v4382 = vadd.f32 %v4368, %v4377
        %v4383 = vadd.f32 %v4369, %v4379
        %v4384 = vld [vmem:[%s3809] sm:$0xff]
        %v4385 = vld [vmem:[%s3809 + $0x8] sm:$0xff]
        %s4386 = sld [smem:[#allocation12 + $0x5]]
        %v4387 = vstv %s4386
        %v4388 = vmul.f32 %v4384, %v4387
        %v4389 = vmul.f32 %v4385, %v4387
        %v4390 = vadd.f32 %v4382, %v4388
        %v4391 = vadd.f32 %v4383, %v4389
        %s4392 = sld [smem:[#allocation12 + $0xd]]
        %v4393 = vstv %s4392
        %v4394 = vmul.f32 %v4384, %v4393
        %v4395 = vmul.f32 %v4385, %v4393
        %4398 = vrot.lane.b32.xlu0 %v4394, 127
        %v4399 = vpop.permute.xlu0 %4398
        %4400 = vrot.lane.b32.xlu0 %v4395, 127
        %v4401 = vpop.permute.xlu0 %4400
        %v4404 = vadd.f32 %v4390, %v4399
        %v4405 = vadd.f32 %v4391, %v4401
        %s4406 = sld [smem:[#allocation12 + $0x15]]
        %v4407 = vstv %s4406
        %v4408 = vmul.f32 %v4384, %v4407
        %v4409 = vmul.f32 %v4385, %v4407
        %4412 = vrot.lane.b32.xlu0 %v4408, 126
        %v4413 = vpop.permute.xlu0 %4412
        %4414 = vrot.lane.b32.xlu0 %v4409, 126
        %v4415 = vpop.permute.xlu0 %4414
        %v4418 = vadd.f32 %v4404, %v4413
        %v4419 = vadd.f32 %v4405, %v4415
        %v4420 = vld [vmem:[%s3809 + $0x1] sm:$0xff]
        %v4421 = vld [vmem:[%s3809 + $0x9] sm:$0xff]
        %s4422 = sld [smem:[#allocation12 + $0x1d]]
        %v4423 = vstv %s4422
        %v4424 = vmul.f32 %v4420, %v4423
        %v4425 = vmul.f32 %v4421, %v4423
        %v4426 = vadd.f32 %v4418, %v4424
        %v4427 = vadd.f32 %v4419, %v4425
        %s4428 = sld [smem:[#allocation12 + $0x25]]
        %v4429 = vstv %s4428
        %v4430 = vmul.f32 %v4420, %v4429
        %v4431 = vmul.f32 %v4421, %v4429
        %4434 = vrot.lane.b32.xlu0 %v4430, 127
        %v4435 = vpop.permute.xlu0 %4434
        %4436 = vrot.lane.b32.xlu0 %v4431, 127
        %v4437 = vpop.permute.xlu0 %4436
        %v4440 = vadd.f32 %v4426, %v4435
        %v4441 = vadd.f32 %v4427, %v4437
        %s4442 = sld [smem:[#allocation12 + $0x2d]]
        %v4443 = vstv %s4442
        %v4444 = vmul.f32 %v4420, %v4443
        %v4445 = vmul.f32 %v4421, %v4443
        %4448 = vrot.lane.b32.xlu0 %v4444, 126
        %v4449 = vpop.permute.xlu0 %4448
        %4450 = vrot.lane.b32.xlu0 %v4445, 126
        %v4451 = vpop.permute.xlu0 %4450
        %v4454 = vadd.f32 %v4440, %v4449
        %v4455 = vadd.f32 %v4441, %v4451
        %v4456 = vld [vmem:[%s3809 + $0x2] sm:$0xff]
        %v4457 = vld [vmem:[%s3809 + $0xa] sm:$0xff]
        %s4458 = sld [smem:[#allocation12 + $0x35]]
        %v4459 = vstv %s4458
        %v4460 = vmul.f32 %v4456, %v4459
        %v4461 = vmul.f32 %v4457, %v4459
        %v4462 = vadd.f32 %v4454, %v4460
        %v4463 = vadd.f32 %v4455, %v4461
        %s4464 = sld [smem:[#allocation12 + $0x3d]]
        %v4465 = vstv %s4464
        %v4466 = vmul.f32 %v4456, %v4465
        %v4467 = vmul.f32 %v4457, %v4465
        %4470 = vrot.lane.b32.xlu0 %v4466, 127
        %v4471 = vpop.permute.xlu0 %4470
        %4472 = vrot.lane.b32.xlu0 %v4467, 127
        %v4473 = vpop.permute.xlu0 %4472
        %v4476 = vadd.f32 %v4462, %v4471
        %v4477 = vadd.f32 %v4463, %v4473
        %s4478 = sld [smem:[#allocation12 + $0x45]]
        %v4479 = vstv %s4478
        %v4480 = vmul.f32 %v4456, %v4479
        %v4481 = vmul.f32 %v4457, %v4479
        %4484 = vrot.lane.b32.xlu0 %v4480, 126
        %v4485 = vpop.permute.xlu0 %4484
        %4486 = vrot.lane.b32.xlu0 %v4481, 126
        %v4487 = vpop.permute.xlu0 %4486
        %v4490 = vadd.f32 %v4476, %v4485
        %v4491 = vadd.f32 %v4477, %v4487
        %v4492 = vld [vmem:[%s3826] sm:$0xff]
        %v4493 = vld [vmem:[%s3826 + $0x8] sm:$0xff]
        %s4494 = sld [smem:[#allocation12 + $0x6]]
        %v4495 = vstv %s4494
        %v4496 = vmul.f32 %v4492, %v4495
        %v4497 = vmul.f32 %v4493, %v4495
        %v4498 = vadd.f32 %v4490, %v4496
        %v4499 = vadd.f32 %v4491, %v4497
        %s4500 = sld [smem:[#allocation12 + $0xe]]
        %v4501 = vstv %s4500
        %v4502 = vmul.f32 %v4492, %v4501
        %v4503 = vmul.f32 %v4493, %v4501
        %4506 = vrot.lane.b32.xlu0 %v4502, 127
        %v4507 = vpop.permute.xlu0 %4506
        %4508 = vrot.lane.b32.xlu0 %v4503, 127
        %v4509 = vpop.permute.xlu0 %4508
        %v4512 = vadd.f32 %v4498, %v4507
        %v4513 = vadd.f32 %v4499, %v4509
        %s4514 = sld [smem:[#allocation12 + $0x16]]
        %v4515 = vstv %s4514
        %v4516 = vmul.f32 %v4492, %v4515
        %v4517 = vmul.f32 %v4493, %v4515
        %4520 = vrot.lane.b32.xlu0 %v4516, 126
        %v4521 = vpop.permute.xlu0 %4520
        %4522 = vrot.lane.b32.xlu0 %v4517, 126
        %v4523 = vpop.permute.xlu0 %4522
        %v4526 = vadd.f32 %v4512, %v4521
        %v4527 = vadd.f32 %v4513, %v4523
        %v4528 = vld [vmem:[%s3826 + $0x1] sm:$0xff]
        %v4529 = vld [vmem:[%s3826 + $0x9] sm:$0xff]
        %s4530 = sld [smem:[#allocation12 + $0x1e]]
        %v4531 = vstv %s4530
        %v4532 = vmul.f32 %v4528, %v4531
        %v4533 = vmul.f32 %v4529, %v4531
        %v4534 = vadd.f32 %v4526, %v4532
        %v4535 = vadd.f32 %v4527, %v4533
        %s4536 = sld [smem:[#allocation12 + $0x26]]
        %v4537 = vstv %s4536
        %v4538 = vmul.f32 %v4528, %v4537
        %v4539 = vmul.f32 %v4529, %v4537
        %4542 = vrot.lane.b32.xlu0 %v4538, 127
        %v4543 = vpop.permute.xlu0 %4542
        %4544 = vrot.lane.b32.xlu0 %v4539, 127
        %v4545 = vpop.permute.xlu0 %4544
        %v4548 = vadd.f32 %v4534, %v4543
        %v4549 = vadd.f32 %v4535, %v4545
        %s4550 = sld [smem:[#allocation12 + $0x2e]]
        %v4551 = vstv %s4550
        %v4552 = vmul.f32 %v4528, %v4551
        %v4553 = vmul.f32 %v4529, %v4551
        %4556 = vrot.lane.b32.xlu0 %v4552, 126
        %v4557 = vpop.permute.xlu0 %4556
        %4558 = vrot.lane.b32.xlu0 %v4553, 126
        %v4559 = vpop.permute.xlu0 %4558
        %v4562 = vadd.f32 %v4548, %v4557
        %v4563 = vadd.f32 %v4549, %v4559
        %v4564 = vld [vmem:[%s3826 + $0x2] sm:$0xff]
        %v4565 = vld [vmem:[%s3826 + $0xa] sm:$0xff]
        %s4566 = sld [smem:[#allocation12 + $0x36]]
        %v4567 = vstv %s4566
        %v4568 = vmul.f32 %v4564, %v4567
        %v4569 = vmul.f32 %v4565, %v4567
        %v4570 = vadd.f32 %v4562, %v4568
        %v4571 = vadd.f32 %v4563, %v4569
        %s4572 = sld [smem:[#allocation12 + $0x3e]]
        %v4573 = vstv %s4572
        %v4574 = vmul.f32 %v4564, %v4573
        %v4575 = vmul.f32 %v4565, %v4573
        %4578 = vrot.lane.b32.xlu0 %v4574, 127
        %v4579 = vpop.permute.xlu0 %4578
        %4580 = vrot.lane.b32.xlu0 %v4575, 127
        %v4581 = vpop.permute.xlu0 %4580
        %v4584 = vadd.f32 %v4570, %v4579
        %v4585 = vadd.f32 %v4571, %v4581
        %s4586 = sld [smem:[#allocation12 + $0x46]]
        %v4587 = vstv %s4586
        %v4588 = vmul.f32 %v4564, %v4587
        %v4589 = vmul.f32 %v4565, %v4587
        %4592 = vrot.lane.b32.xlu0 %v4588, 126
        %v4593 = vpop.permute.xlu0 %4592
        %4594 = vrot.lane.b32.xlu0 %v4589, 126
        %v4595 = vpop.permute.xlu0 %4594
        %v4598 = vadd.f32 %v4584, %v4593
        %v4599 = vadd.f32 %v4585, %v4595
        %v4600 = vld [vmem:[%s3843] sm:$0xff]
        %v4601 = vld [vmem:[%s3843 + $0x8] sm:$0xff]
        %s4602 = sld [smem:[#allocation12 + $0x7]]
        %v4603 = vstv %s4602
        %v4604 = vmul.f32 %v4600, %v4603
        %v4605 = vmul.f32 %v4601, %v4603
        %v4606 = vadd.f32 %v4598, %v4604
        %v4607 = vadd.f32 %v4599, %v4605
        %s4608 = sld [smem:[#allocation12 + $0xf]]
        %v4609 = vstv %s4608
        %v4610 = vmul.f32 %v4600, %v4609
        %v4611 = vmul.f32 %v4601, %v4609
        %4614 = vrot.lane.b32.xlu0 %v4610, 127
        %v4615 = vpop.permute.xlu0 %4614
        %4616 = vrot.lane.b32.xlu0 %v4611, 127
        %v4617 = vpop.permute.xlu0 %4616
        %v4620 = vadd.f32 %v4606, %v4615
        %v4621 = vadd.f32 %v4607, %v4617
        %s4622 = sld [smem:[#allocation12 + $0x17]]
        %v4623 = vstv %s4622
        %v4624 = vmul.f32 %v4600, %v4623
        %v4625 = vmul.f32 %v4601, %v4623
        %4628 = vrot.lane.b32.xlu0 %v4624, 126
        %v4629 = vpop.permute.xlu0 %4628
        %4630 = vrot.lane.b32.xlu0 %v4625, 126
        %v4631 = vpop.permute.xlu0 %4630
        %v4634 = vadd.f32 %v4620, %v4629
        %v4635 = vadd.f32 %v4621, %v4631
        %v4636 = vld [vmem:[%s3843 + $0x1] sm:$0xff]
        %v4637 = vld [vmem:[%s3843 + $0x9] sm:$0xff]
        %s4638 = sld [smem:[#allocation12 + $0x1f]]
        %v4639 = vstv %s4638
        %v4640 = vmul.f32 %v4636, %v4639
        %v4641 = vmul.f32 %v4637, %v4639
        %v4642 = vadd.f32 %v4634, %v4640
        %v4643 = vadd.f32 %v4635, %v4641
        %s4644 = sld [smem:[#allocation12 + $0x27]]
        %v4645 = vstv %s4644
        %v4646 = vmul.f32 %v4636, %v4645
        %v4647 = vmul.f32 %v4637, %v4645
        %4650 = vrot.lane.b32.xlu0 %v4646, 127
        %v4651 = vpop.permute.xlu0 %4650
        %4652 = vrot.lane.b32.xlu0 %v4647, 127
        %v4653 = vpop.permute.xlu0 %4652
        %v4656 = vadd.f32 %v4642, %v4651
        %v4657 = vadd.f32 %v4643, %v4653
        %s4658 = sld [smem:[#allocation12 + $0x2f]]
        %v4659 = vstv %s4658
        %v4660 = vmul.f32 %v4636, %v4659
        %v4661 = vmul.f32 %v4637, %v4659
        %4664 = vrot.lane.b32.xlu0 %v4660, 126
        %v4665 = vpop.permute.xlu0 %4664
        %4666 = vrot.lane.b32.xlu0 %v4661, 126
        %v4667 = vpop.permute.xlu0 %4666
        %v4670 = vadd.f32 %v4656, %v4665
        %v4671 = vadd.f32 %v4657, %v4667
        %v4672 = vld [vmem:[%s3843 + $0x2] sm:$0xff]
        %v4673 = vld [vmem:[%s3843 + $0xa] sm:$0xff]
        %s4674 = sld [smem:[#allocation12 + $0x37]]
        %v4675 = vstv %s4674
        %v4676 = vmul.f32 %v4672, %v4675
        %v4677 = vmul.f32 %v4673, %v4675
        %v4678 = vadd.f32 %v4670, %v4676
        %v4679 = vadd.f32 %v4671, %v4677
        %s4680 = sld [smem:[#allocation12 + $0x3f]]
        %v4681 = vstv %s4680
        %v4682 = vmul.f32 %v4672, %v4681
        %v4683 = vmul.f32 %v4673, %v4681
        %4686 = vrot.lane.b32.xlu0 %v4682, 127
        %v4687 = vpop.permute.xlu0 %4686
        %4688 = vrot.lane.b32.xlu0 %v4683, 127
        %v4689 = vpop.permute.xlu0 %4688
        %v4692 = vadd.f32 %v4678, %v4687
        %v4693 = vadd.f32 %v4679, %v4689
        %s4694 = sld [smem:[#allocation12 + $0x47]]
        %v4695 = vstv %s4694
        %v4696 = vmul.f32 %v4672, %v4695
        %v4697 = vmul.f32 %v4673, %v4695
        %4700 = vrot.lane.b32.xlu0 %v4696, 126
        %v4701 = vpop.permute.xlu0 %4700
        %4702 = vrot.lane.b32.xlu0 %v4697, 126
        %v4703 = vpop.permute.xlu0 %4702
        %v4706 = vadd.f32 %v4692, %v4701
        %v4707 = vadd.f32 %v4693, %v4703
        %s4708 = sld [smem:[#allocation4]]
        %v4709 = vstv %s4708
        %v4710 = vadd.f32 %v4706, %v4709
        %v4711 = vadd.f32 %v4707, %v4709
        %vm4712 = vcmask 130048
        %v4713 = vsel %vm4712, %v4710, -inf
        %v4714 = vsel %vm4712, %v4711, -inf
        %v4715 = vmax.f32 %v4713, %v4714
        %v4716 = vrot.slane %v4715, 4
        %v4717 = vmax.f32 %v4715, %v4716
        %v4718 = vrot.slane %v4717, 2
        %v4719 = vmax.f32 %v4717, %v4718
        %v4720 = vrot.slane %v4719, 1
        %v4721 = vmax.f32 %v4719, %v4720
        %v4722 = vsub.f32 %v4710, %v4721
        %v4723 = vsub.f32 %v4711, %v4721
        %v4724 = vmul.f32 %v4722, 1.442695
        %v4725 = vpow.pop %v4724
        %v4726 = vmul.f32 %v4723, 1.442695
        %v4727 = vpow.pop %v4726
        %v4728 = vsel %vm4712, %v4725, 0.0
        %v4729 = vsel %vm4712, %v4727, 0.0
        %v4730 = vadd.f32 %v4728, %v4729
        %v4731 = vrot.slane %v4730, 4
        %v4732 = vadd.f32 %v4730, %v4731
        %v4733 = vrot.slane %v4732, 2
        %v4734 = vadd.f32 %v4732, %v4733
        %v4735 = vrot.slane %v4734, 1
        %v4736 = vadd.f32 %v4734, %v4735
        %v4737 = vrcp.pop %v4736
        %v4738 = vmul.f32 %v4736, %v4737
        %v4739 = vsub.f32 1.0, %v4738
        %v4740 = vmul.f32 %v4737, %v4739
        %v4741 = vadd.f32 %v4737, %v4740
        %vm4742 = vweird.f32 %v4736
        %vm4743 = vweird.f32 %v4737
        %vm4744 = vmor %vm4742, %vm4743
        %v4745 = vsel %vm4744, %v4737, %v4741
        %v4746 = vand.u32 2147483647, %v4736
        %vm4747 = vcmp.eq.f32.partialorder %v4746, 8.507059e+37
        %v4748 = vand.u32 %v4736, 2147483648
        %v4749 = vor.u32 1.1754944e-38, %v4748
        %v4750 = vsel %vm4747, %v4749, %v4745
        %v4751 = vmul.f32 %v4725, %v4750
        %v4752 = vmul.f32 %v4727, %v4750
        %4753 = vst.msk [vmem:[%s285] sm:$0xff] %vm4712, %v4751
        %4754 = vst.msk [vmem:[%s285 + $0x8] sm:$0xff] %vm4712, %v4752
        %s4755 = sand.u32 %s144, 1
        %s4756 = scalar_lea.sflag [#allocation7], %s4755
        %s4757 = sand.u32 %s144, 1
        %s4758 = smul.addr %s4757, 16
        %s4759 = scalar_lea.vmem [#allocation14], %s4758
        // Predicated region
        $region57: #{tpu_custom_call.1} parent=39 // pred_check
          %p4760 = pneg %p154
        $region58: #{tpu_custom_call.1} parent=39 // pred_check_branch
          %4762 = sbr.rel (%p4760) target = $region60
        $region59: #{tpu_custom_call.1} parent=39 // pred_region
          %4764 = vsyncadd %s4756, 0
          %s4765 = smul.addr %s26, 2
          %s4766 = smul.addr %s4765, 8
          %s4767 = scalar_lea.hbm %s5, %s4766
          %s4768 = sshll.u32 %s4759, 4
          %s4769 = int_to_ptr.vmem [resolvable:$true] %s4768
          %s4770 = sshll.u32 %s4767, 4
          %s4771 = int_to_ptr.hbm [resolvable:$true] %s4770
          %4776 = dma.vmem_to_hbm [thread:$0]  %s4769, 256, %s4771, %s4756, 128, 128, 8
        $region60: #{tpu_custom_call.1} parent=39 // pred_fallthru
          _
      $region40: #{tpu_custom_call.1} parent=5 // pred_fallthru
        _
      %p4777 = scmp.le.s32.totalorder 2, %s21
      // Predicated region
      $region61: #{tpu_custom_call.1} parent=5 // pred_check
        %p4778 = pneg %p4777
      $region62: #{tpu_custom_call.1} parent=5 // pred_check_branch
        %4780 = sbr.rel (%p4778) target = $region64
      $region63: #{tpu_custom_call.1} parent=5 // pred_region
        %s4781 = ssub.s32 %s21, 2
        // Predicated region
        $region65: #{tpu_custom_call.1} parent=63 // pred_check
          %p4782 = pneg %p160
        $region66: #{tpu_custom_call.1} parent=63 // pred_check_branch
          %4784 = sbr.rel (%p4782) target = $region68
        $region67: #{tpu_custom_call.1} parent=63 // pred_region
          %s4785 = sand.u32 %s145, 1
          %s4786 = scalar_lea.sflag [#allocation7], %s4785
          %s4787 = sand.u32 %s145, 1
          %s4788 = smul.addr %s4787, 16
          %s4789 = scalar_lea.vmem [#allocation14], %s4788
          %4791 = dma.done %s4786, 256
        $region68: #{tpu_custom_call.1} parent=63 // pred_fallthru
          _
      $region64: #{tpu_custom_call.1} parent=5 // pred_fallthru
        _
    $region6: #{tpu_custom_call.1} parent=1 // loop_footer
      %s25 = sadd.s32 1, %s21
    $region7: #{tpu_custom_call.1} parent=1 // loop_footer_branch
      %20 = sbr.rel target = $region3
    $region8: #{tpu_custom_call.1} parent=1 // loop_exit
      _
    %4792 = vsyncpa [#allocation6], 1
    %s4793 = scalar_lea.sflag [#allocation6], 1
    %4794 = vsyncpa %s4793, 1
    %4795 = vsyncpa [#allocation7], 1
    %s4796 = scalar_lea.sflag [#allocation7], 1
    %4797 = vsyncpa %s4796, 1
    %4798 = vsyncpa [#allocation8], 1
    %s4799 = scalar_lea.sflag [#allocation8], 1
    %4800 = vsyncpa %s4799, 1
    %4801 = vsyncpa [#allocation9], 1
    %s4802 = scalar_lea.sflag [#allocation9], 1
    %4803 = vsyncpa %s4802, 1
    %4804 = vsyncpa [#allocation13], 1

</llo_original>
